<compile_context>
chip_gen: v7x
topology: tpu7x:2x2x1
jax: 0.10.0
libtpu: 0.0.40
codegen_flags: <defaults>
</compile_context>

<pallas_src>
import numpy as np
import jax
import jax.numpy as jnp
from jax import lax
from jax.experimental import pallas as pl
from jax.experimental.pallas import tpu as pltpu

_BN_EPS = 1e-5
_VMEM_LIMIT_BYTES = 64 * 1024 * 1024   # explicit scoped-VMEM ceiling


# ---------------------------------------------------------------------------
# Host-side weight folding: per-vertical-tap row-Toeplitz matrices
# ---------------------------------------------------------------------------
def _toeplitz_weights(w, W, scale=None, merge_kh=False):
    """Fold a (KH, KW, Cin, Cout) conv weight into row-Toeplitz matrices.

    Returns (KH, W*Cin, W*Cout) float32 T such that a whole `same` conv is
        out[h, :] = sum_kh  xpad[h + kh, :] @ T[kh]
    where xpad rows are lane-packed (W*Cin,) vectors with (KH-1)/2 zero rows
    of H padding.  Horizontal taps and W zero-padding are absorbed into T's
    block-banded structure.  `scale` (Cout,) optionally folds an eval-mode
    BatchNorm gamma / sqrt(var + eps).  With merge_kh=True the KH taps are
    stacked along the contraction: (KH*W*Cin, W*Cout), matching an LHS built
    by concatenating the KH shifted row windows along lanes.
    """
    w = np.asarray(w, np.float32)
    KH, KW, Cin, Cout = w.shape
    if scale is not None:
        w = w * np.asarray(scale, np.float32)[None, None, None, :]
    pw = (KW - 1) // 2
    T = np.zeros((KH, W * Cin, W * Cout), np.float32)
    for wo in range(W):
        for kw in range(KW):
            wi = wo + kw - pw
            if 0 <= wi < W:
                T[:, wi * Cin:(wi + 1) * Cin, wo * Cout:(wo + 1) * Cout] = w[:, kw]
    if merge_kh:
        T = T.reshape(KH * W * Cin, W * Cout)
    return T


# ---------------------------------------------------------------------------
# In-kernel helpers
# ---------------------------------------------------------------------------
def _zero_halo(pad_ref, H):
    """Zero only the top/bottom H-padding rows of a bf16 pad scratch (once);
    interior rows are fully overwritten before every conv."""
    ph = (pad_ref.shape[0] - H) // 2
    if ph > 0:
        zeros = jnp.zeros((ph, pad_ref.shape[1]), pad_ref.dtype)
        pad_ref[0:ph, :] = zeros
        pad_ref[ph + H:2 * ph + H, :] = zeros
    return ph


def _conv_taps(pad_ref, w_ref, H, w_pre=()):
    """`same` 2-D conv as KH lane-dense bf16 MXU matmuls, f32 accumulate.

    pad_ref : (H + KH - 1, W*Cin) bf16 scratch holding the H-padded rows.
    w_ref   : w_ref[w_pre + (kh,)] is the (W*Cin, W*Cout) bf16 row-Toeplitz
              matrix of vertical tap kh (KW taps / W padding folded in).
    """
    KH = w_ref.shape[len(w_pre)]
    out = None
    for kh in range(KH):
        part = jnp.dot(pad_ref[kh:kh + H, :], w_ref[w_pre + (kh,)],
                       preferred_element_type=jnp.float32)
        out = part if out is None else out + part
    return out


def _conv_merged(pad_ref, w_ref, H):
    """Same conv but with the KH vertical taps folded into the contraction
    (for thin-channel / K-starved convs): one matmul instead of KH."""
    KH = pad_ref.shape[0] - H + 1
    lhs = jnp.concatenate([pad_ref[kh:kh + H, :] for kh in range(KH)], axis=-1)
    return jnp.dot(lhs, w_ref[...], preferred_element_type=jnp.float32)


def _prelu(v, a):
    return jnp.where(v >= 0.0, v, a * v)


# ---------------------------------------------------------------------------
# Kernel 1: conv_block1 + trunk + conv_block2 + skip + upsample-conv #1
# ---------------------------------------------------------------------------
def _stem_kernel(x_ref, w9_ref, sh9_ref, w3_ref, sh3_ref, wup_ref, shup_ref,
                 alpha_ref, o_ref, pad9, pad3):
    nb = (w3_ref.shape[0] - 1) // 2                 # number of residual blocks
    H = x_ref.shape[1]
    ph9 = _zero_halo(pad9, H)
    ph3 = _zero_halo(pad3, H)

    # conv_block1: 9x9 conv (vertical taps folded into K) + bias + PReLU
    pad9[ph9:ph9 + H, :] = x_ref[0].astype(jnp.bfloat16)
    h = _conv_merged(pad9, w9_ref, H) + sh9_ref[...]
    out1 = _prelu(h, alpha_ref[0])                  # f32 (H, W*C1)

    # trunk: ResidualConvBlocks (conv+BN+PReLU+conv+BN + identity); eval-mode
    # BN folded into the Toeplitz weights / shift rows.
    out = out1
    for b in range(nb):
        identity = out
        pad3[ph3:ph3 + H, :] = out.astype(jnp.bfloat16)
        h = _conv_taps(pad3, w3_ref, H, (2 * b,)) + sh3_ref[2 * b:2 * b + 1, :]
        h = _prelu(h, alpha_ref[1 + b])
        pad3[ph3:ph3 + H, :] = h.astype(jnp.bfloat16)
        h = _conv_taps(pad3, w3_ref, H, (2 * b + 1,)) + sh3_ref[2 * b + 1:2 * b + 2, :]
        out = h + identity

    # conv_block2 (conv + BN), then skip from out1
    pad3[ph3:ph3 + H, :] = out.astype(jnp.bfloat16)
    h = _conv_taps(pad3, w3_ref, H, (2 * nb,)) + sh3_ref[2 * nb:2 * nb + 1, :]
    out = out1 + h

    # upsampling stage-0 conv + bias + PReLU (the scalar-slope PReLU commutes
    # with the PixelShuffle permutation applied by the wrapper afterwards)
    pad3[ph3:ph3 + H, :] = out.astype(jnp.bfloat16)
    h = _conv_taps(pad3, wup_ref, H) + shup_ref[...]
    o_ref[...] = _prelu(h, alpha_ref[1 + nb]).astype(o_ref.dtype)[None]


# ---------------------------------------------------------------------------
# Kernel 2: upsample-conv #2 + PReLU (PixelShuffle applied by the wrapper)
# ---------------------------------------------------------------------------
def _upsample_kernel(x_ref, w_ref, sh_ref, alpha_ref, o_ref, pad):
    H = x_ref.shape[1]
    ph = _zero_halo(pad, H)
    pad[ph:ph + H, :] = x_ref[0].astype(jnp.bfloat16)
    h = _conv_taps(pad, w_ref, H) + sh_ref[...]
    o_ref[...] = _prelu(h, alpha_ref[0]).astype(o_ref.dtype)[None]


# ---------------------------------------------------------------------------
# Kernel 3: conv_block3 head; torch.cat([out, x1], dim=1) fused as a
# split-input conv:  conv(cat([a, b])) == conv_a(a) + conv_b(b)
# ---------------------------------------------------------------------------
def _make_head_kernel(acts):
    n_layers = len(acts)

    def kernel(*refs):
        i = 0
        feat_ref, x1_ref = refs[i], refs[i + 1]; i += 2
        wA0, wB0, sh0 = refs[i], refs[i + 1], refs[i + 2]; i += 3
        rest = []
        for _ in range(n_layers - 1):
            rest.append((refs[i], refs[i + 1])); i += 2
        alpha_ref, o_ref = refs[i], refs[i + 1]; i += 2
        padA, padB = refs[i], refs[i + 1]; i += 2
        pads = refs[i:i + n_layers - 1]

        H = feat_ref.shape[1]
        phA = _zero_halo(padA, H)
        phB = _zero_halo(padB, H)
        phs = [_zero_halo(p, H) for p in pads]

        # first layer: feat branch (K = W_hr*C1, per-tap) + thin x1 branch
        # (K = W_hr*nin, KH taps folded into the contraction)
        padA[phA:phA + H, :] = feat_ref[0].astype(jnp.bfloat16)
        padB[phB:phB + H, :] = x1_ref[0].astype(jnp.bfloat16)
        h = (_conv_taps(padA, wA0, H)
             + _conv_merged(padB, wB0, H)
             + sh0[...])
        h = _prelu(h, alpha_ref[0]) if acts[0] == "prelu" else jnp.maximum(h, 0.0)

        for li in range(1, n_layers):
            w_ref, sh_ref = rest[li - 1]
            pad, ph = pads[li - 1], phs[li - 1]
            pad[ph:ph + H, :] = h.astype(jnp.bfloat16)
            h = _conv_taps(pad, w_ref, H) + sh_ref[...]
            h = _prelu(h, alpha_ref[li]) if acts[li] == "prelu" else jnp.maximum(h, 0.0)
        o_ref[...] = h[None]

    return kernel


# ---------------------------------------------------------------------------
# pallas_call wrappers
# ---------------------------------------------------------------------------
def _const_spec():
    # Whole array resident in VMEM for the duration of the call: constant
    # weights are single-buffered (no per-grid-step double-buffer copies).
    return pl.BlockSpec(memory_space=pltpu.MemorySpace.VMEM)


def _smem_spec():
    return pl.BlockSpec(memory_space=pltpu.MemorySpace.SMEM)


def _compiler_params():
    return pltpu.CompilerParams(dimension_semantics=("parallel",),
                                vmem_limit_bytes=_VMEM_LIMIT_BYTES)


def _stem_call(x2, kp):
    N, H, WCin = x2.shape
    WC1 = kp["w3"].shape[-1]
    WC4 = kp["wup1"].shape[-1]
    KH9 = kp["w9"].shape[0] // WCin
    KH3 = kp["w3"].shape[1]
    return pl.pallas_call(
        _stem_kernel,
        out_shape=jax.ShapeDtypeStruct((N, H, WC4), jnp.bfloat16),
        grid=(N,),
        in_specs=[pl.BlockSpec((1, H, WCin), lambda n: (n, 0, 0)),
                  _const_spec(), _const_spec(),
                  _const_spec(), _const_spec(),
                  _const_spec(), _const_spec(),
                  _smem_spec()],
        out_specs=pl.BlockSpec((1, H, WC4), lambda n: (n, 0, 0)),
        scratch_shapes=[pltpu.VMEM((H + KH9 - 1, WCin), jnp.bfloat16),
                        pltpu.VMEM((H + KH3 - 1, WC1), jnp.bfloat16)],
        compiler_params=_compiler_params(),
    )(x2, kp["w9"], kp["sh9"], kp["w3"], kp["sh3"], kp["wup1"], kp["shup1"],
      kp["stem_alphas"])


def _upsample_call(x, kp):
    N, H, WC = x.shape
    WCout = kp["wup2"].shape[-1]
    KH = kp["wup2"].shape[0]
    return pl.pallas_call(
        _upsample_kernel,
        out_shape=jax.ShapeDtypeStruct((N, H, WCout), jnp.bfloat16),
        grid=(N,),
        in_specs=[pl.BlockSpec((1, H, WC), lambda n: (n, 0, 0)),
                  _const_spec(), _const_spec(), _smem_spec()],
        out_specs=pl.BlockSpec((1, H, WCout), lambda n: (n, 0, 0)),
        scratch_shapes=[pltpu.VMEM((H + KH - 1, WC), jnp.bfloat16)],
        compiler_params=_compiler_params(),
    )(x, kp["wup2"], kp["shup2"], kp["up2_alpha"])


def _head_call(feat, x1, kp):
    N, H, WCf = feat.shape
    _, _, WCx = x1.shape
    layers = kp["head"]
    acts = kp["head_acts"]
    n_layers = len(layers)

    args = [feat, x1, layers[0]["wA"], layers[0]["wB"], layers[0]["sh"]]
    in_specs = [
        pl.BlockSpec((1, H, WCf), lambda n: (n, 0, 0)),
        pl.BlockSpec((1, H, WCx), lambda n: (n, 0, 0)),
        _const_spec(), _const_spec(), _const_spec(),
    ]
    for lyr in layers[1:]:
        args += [lyr["w"], lyr["sh"]]
        in_specs += [_const_spec(), _const_spec()]
    args.append(kp["head_alphas"])
    in_specs.append(_smem_spec())

    KH0 = layers[0]["wA"].shape[0]
    scratch = [pltpu.VMEM((H + KH0 - 1, WCf), jnp.bfloat16),
               pltpu.VMEM((H + KH0 - 1, WCx), jnp.bfloat16)]
    for lyr in layers[1:]:
        scratch.append(pltpu.VMEM((H + lyr["w"].shape[0] - 1, lyr["w"].shape[1]),
                                  jnp.bfloat16))

    WC_out = (layers[-1]["w"] if n_layers > 1 else layers[0]["wA"]).shape[-1]
    return pl.pallas_call(
        _make_head_kernel(acts),
        out_shape=jax.ShapeDtypeStruct((N, H, WC_out), jnp.float32),
        grid=(N,),
        in_specs=in_specs,
        out_specs=pl.BlockSpec((1, H, WC_out), lambda n: (n, 0, 0)),
        scratch_shapes=scratch,
        compiler_params=_compiler_params(),
    )(*args)


# ---------------------------------------------------------------------------
# JAX glue: PixelShuffle on lane-packed rows (torch channel ordering), bf16
# ---------------------------------------------------------------------------
def _pixel_shuffle_rows(y, W, C, r=2):
    """(N, H, W*(C*r*r)) -> (N, r*H, (r*W)*C); k = c*r*r + i*r + j (torch)."""
    N, H, _ = y.shape
    y = y.reshape(N, H, W, C, r, r)
    y = jnp.transpose(y, (0, 1, 4, 2, 5, 3))        # (N, H, r, W, r, C)
    return y.reshape(N, H * r, (W * r) * C)


# ---------------------------------------------------------------------------
# Parameter init (mirrors Generator._initialize_weights: kaiming_normal * 0.1,
# conv bias = 0, BN gamma = 0.1, BN beta = 0, PReLU slope = 0.25)
# ---------------------------------------------------------------------------
def _kaiming(key, kh, kw, cin, cout):
    fan_in = cin * kh * kw
    std = np.sqrt(2.0 / fan_in)
    return jax.random.normal(key, (kh, kw, cin, cout), jnp.float32) * (std * 0.1)


def init_generator_params(key, num_inp_chan, conf):
    C1 = conf["first_cnn_chan"]
    ks = iter(jax.random.split(key, 64))
    p = {}
    p["cb1_w"] = _kaiming(next(ks), 9, 9, num_inp_chan, C1)
    p["cb1_b"] = jnp.zeros((C1,), jnp.float32)
    p["cb1_alpha"] = 0.25

    p["trunk"] = []
    for _ in range(conf["num_resid_conv"]):
        p["trunk"].append({"w1": _kaiming(next(ks), 3, 3, C1, C1),
                           "alpha": 0.25,
                           "w2": _kaiming(next(ks), 3, 3, C1, C1)})

    p["cb2_w"] = _kaiming(next(ks), 3, 3, C1, C1)

    up_c = C1 * 2 * 2
    p["ups"] = []
    for _ in range(conf["num_upsamp_bits"]):
        p["ups"].append({"w": _kaiming(next(ks), 3, 3, C1, up_c),
                         "b": jnp.zeros((up_c,), jnp.float32),
                         "alpha": 0.25})

    cb3 = []
    inp_chan = C1 + num_inp_chan
    for out_chan, k in zip(conf["conv_block3"]["filter"],
                           conf["conv_block3"]["kernel"]):
        cb3.append({"w": _kaiming(next(ks), k, k, inp_chan, out_chan),
                    "b": jnp.zeros((out_chan,), jnp.float32),
                    "alpha": 0.25,
                    "act": "prelu" if out_chan == num_inp_chan else "relu"})
        inp_chan = out_chan
    p["cb3"] = cb3
    return p


# ---------------------------------------------------------------------------
# Prepare kernel-format parameters (Toeplitz bf16 weights, f32 shift rows)
# ---------------------------------------------------------------------------
def prepare_generator_params(params, conf, num_inp_chan, W_lr):
    C1 = conf["first_cnn_chan"]
    assert conf["num_upsamp_bits"] == 2
    W_mid, W_hr = 2 * W_lr, 4 * W_lr

    bn_scale = np.full((C1,), 0.1 / np.sqrt(1.0 + _BN_EPS), np.float32)
    bn_shift = np.zeros((C1,), np.float32)

    def tile_row(v, W):
        return jnp.asarray(np.tile(np.asarray(v, np.float32), W)[None, :],
                           jnp.float32)

    kp = {"C1": C1, "nin": num_inp_chan}

    # --- stem: conv_block1 (9x9 + bias), KH folded into the contraction -----
    kp["w9"] = jnp.asarray(
        _toeplitz_weights(params["cb1_w"], W_lr, merge_kh=True), jnp.bfloat16)
    kp["sh9"] = tile_row(params["cb1_b"], W_lr)

    # trunk convs + conv_block2 with eval-mode BN folded in
    w3, sh3 = [], []
    for blk in params["trunk"]:
        for w in (blk["w1"], blk["w2"]):
            w3.append(_toeplitz_weights(w, W_lr, scale=bn_scale))
            sh3.append(np.tile(bn_shift, W_lr))
    w3.append(_toeplitz_weights(params["cb2_w"], W_lr, scale=bn_scale))
    sh3.append(np.tile(bn_shift, W_lr))
    kp["w3"] = jnp.asarray(np.stack(w3), jnp.bfloat16)      # (2nb+1, 3, W*C1, W*C1)
    kp["sh3"] = jnp.asarray(np.stack(sh3), jnp.float32)     # (2nb+1, W*C1)

    up0, up1 = params["ups"]
    kp["wup1"] = jnp.asarray(_toeplitz_weights(up0["w"], W_lr), jnp.bfloat16)
    kp["shup1"] = tile_row(up0["b"], W_lr)
    kp["stem_alphas"] = jnp.asarray(
        np.array([params["cb1_alpha"]]
                 + [blk["alpha"] for blk in params["trunk"]]
                 + [up0["alpha"]], np.float32))

    # --- second upsample stage ----------------------------------------------
    kp["wup2"] = jnp.asarray(_toeplitz_weights(up1["w"], W_mid), jnp.bfloat16)
    kp["shup2"] = tile_row(up1["b"], W_mid)
    kp["up2_alpha"] = jnp.asarray(np.array([up1["alpha"]], np.float32))

    # --- conv_block3 head (concat fused as split-input conv) ----------------
    head, acts, alphas = [], [], []
    for li, lyr in enumerate(params["cb3"]):
        k = lyr["w"].shape[0]
        assert k % 2 == 1, "padding='same' only supported for odd kernels"
        acts.append(lyr["act"])
        alphas.append(lyr["alpha"] if lyr["act"] == "prelu" else 0.0)
        if li == 0:
            wA = lyr["w"][:, :, :C1, :]          # feat branch (per-tap)
            wB = lyr["w"][:, :, C1:, :]          # thin x1 branch (KH folded)
            head.append({"wA": jnp.asarray(_toeplitz_weights(wA, W_hr), jnp.bfloat16),
                         "wB": jnp.asarray(_toeplitz_weights(wB, W_hr, merge_kh=True),
                                           jnp.bfloat16),
                         "sh": tile_row(lyr["b"], W_hr)})
        else:
            head.append({"w": jnp.asarray(_toeplitz_weights(lyr["w"], W_hr),
                                          jnp.bfloat16),
                         "sh": tile_row(lyr["b"], W_hr)})
    kp["head"] = head
    kp["head_acts"] = tuple(acts)
    kp["head_alphas"] = jnp.asarray(np.array(alphas, np.float32))
    return kp


# ---------------------------------------------------------------------------
# Forward pass (Generator._forward_impl)
# ---------------------------------------------------------------------------
def generator_forward(x1_nchw, x2_nchw, kp):
    N, nin, H_lr, W_lr = x2_nchw.shape
    _, _, H_hr, W_hr = x1_nchw.shape
    C1 = kp["C1"]

    # NCHW -> lane-packed rows (N, H, W*C), bf16 at the kernel boundary
    x2 = jnp.transpose(x2_nchw, (0, 2, 3, 1)
                       ).reshape(N, H_lr, W_lr * nin).astype(jnp.bfloat16)
    x1 = jnp.transpose(x1_nchw, (0, 2, 3, 1)
                       ).reshape(N, H_hr, W_hr * nin).astype(jnp.bfloat16)

    y = _stem_call(x2, kp)                       # bf16 (N, H, W*4C1)
    y = _pixel_shuffle_rows(y, W_lr, C1)         # bf16 (N, 2H, 2W*C1)
    y = _upsample_call(y, kp)                    # bf16 (N, 2H, 2W*4C1)
    y = _pixel_shuffle_rows(y, 2 * W_lr, C1)     # bf16 (N, 4H, 4W*C1)
    out = _head_call(y, x1, kp)                  # f32  (N, 4H, 4W*Cout)

    Cout = out.shape[-1] // W_hr
    out = out.reshape(N, H_hr, W_hr, Cout)
    return jnp.transpose(out, (0, 3, 1, 2))      # back to NCHW


# ---------------------------------------------------------------------------
# Pure-JAX reference (same folded eval-mode BN), for a sanity check
# ---------------------------------------------------------------------------
def _ref_conv(x, w, b=None):
    KH, KW = w.shape[0], w.shape[1]
    y = lax.conv_general_dilated(
        x, w, window_strides=(1, 1),
        padding=[((KH - 1) // 2,) * 2, ((KW - 1) // 2,) * 2],
        dimension_numbers=("NHWC", "HWIO", "NHWC"),
        precision=lax.Precision.HIGHEST)
    return y if b is None else y + b


def _ref_pixel_shuffle(x, r=2):
    N, H, W, C = x.shape
    c = C // (r * r)
    x = x.reshape(N, H, W, c, r, r)
    x = jnp.transpose(x, (0, 1, 4, 2, 5, 3))
    return x.reshape(N, H * r, W * r, c)


def reference_forward(x1_nchw, x2_nchw, params):
    bn_scale = 0.1 / np.sqrt(1.0 + _BN_EPS)
    prelu = lambda v, a: jnp.where(v >= 0.0, v, a * v)
    x2 = jnp.transpose(x2_nchw, (0, 2, 3, 1))
    x1 = jnp.transpose(x1_nchw, (0, 2, 3, 1))

    out1 = prelu(_ref_conv(x2, params["cb1_w"], params["cb1_b"]),
                 params["cb1_alpha"])
    out = out1
    for blk in params["trunk"]:
        idn = out
        h = prelu(_ref_conv(out, blk["w1"]) * bn_scale, blk["alpha"])
        out = _ref_conv(h, blk["w2"]) * bn_scale + idn
    out = out1 + _ref_conv(out, params["cb2_w"]) * bn_scale
    for up in params["ups"]:
        h = _ref_pixel_shuffle(_ref_conv(out, up["w"], up["b"]), 2)
        out = prelu(h, up["alpha"])
    x = jnp.concatenate([out, x1], axis=-1)
    for lyr in params["cb3"]:
        h = _ref_conv(x, lyr["w"], lyr["b"])
        x = prelu(h, lyr["alpha"]) if lyr["act"] == "prelu" else jnp.maximum(h, 0.0)
    return jnp.transpose(x, (0, 3, 1, 2))


# ---------------------------------------------------------------------------
if __name__ == "__main__":
    conf = {
        "first_cnn_chan": 16,
        "num_resid_conv": 2,
        "num_upsamp_bits": 2,
        "conv_block3": {"filter": [8, 2], "kernel": [5, 3]},
    }
    num_inp_chan = 2
    N, H, W = 2, 8, 8

    key = jax.random.PRNGKey(0)
    kparam_key, k1, k2 = jax.random.split(key, 3)
    raw_params = init_generator_params(kparam_key, num_inp_chan, conf)
    kparams = prepare_generator_params(raw_params, conf, num_inp_chan, W)

    # x2: low-resolution input, x1: high-resolution skip (cat after 4x upsamp)
    x2 = jax.random.normal(k2, (N, num_inp_chan, H, W), jnp.float32)
    x1 = jax.random.normal(k1, (N, num_inp_chan, 4 * H, 4 * W), jnp.float32)

    fwd = jax.jit(lambda a, b: generator_forward(a, b, kparams))
    out = jax.block_until_ready(fwd(x1, x2))

    expected = (N, conf["conv_block3"]["filter"][-1], 4 * H, 4 * W)
    assert out.shape == expected, (out.shape, expected)
    assert out.dtype == jnp.float32
    assert bool(jnp.all(jnp.isfinite(out)))

    # numerical sanity check vs a pure-JAX reference (bf16 MXU tolerance)
    ref = jax.block_until_ready(reference_forward(x1, x2, raw_params))
    max_err = float(jnp.max(jnp.abs(out - ref)))
    tol = 1e-2 * float(jnp.max(jnp.abs(ref))) + 1e-3
    assert max_err <= tol, f"mismatch vs reference: {max_err} > {tol}"

    print("KERNEL_OK")
</pallas_src>

<mosaic_0001>
module attributes {stable_mosaic.version = 11 : i64} {
  func.func @_stem_kernel(%arg0: i32, %arg1: memref<1x8x16xbf16, #tpu.memory_space<vmem>>, %arg2: memref<144x128xbf16, #tpu.memory_space<vmem>>, %arg3: memref<1x128xf32, #tpu.memory_space<vmem>>, %arg4: memref<5x3x128x128xbf16, #tpu.memory_space<vmem>>, %arg5: memref<5x128xf32, #tpu.memory_space<vmem>>, %arg6: memref<3x128x512xbf16, #tpu.memory_space<vmem>>, %arg7: memref<1x512xf32, #tpu.memory_space<vmem>>, %arg8: memref<4xf32, #tpu.memory_space<smem>>, %arg9: memref<1x8x512xbf16, #tpu.memory_space<vmem>>, %arg10: memref<16x16xbf16, #tpu.memory_space<vmem>>, %arg11: memref<10x128xbf16, #tpu.memory_space<vmem>>) attributes {dimension_semantics = [#tpu.dimension_semantics<parallel>], iteration_bounds = array<i64: 2>, scalar_prefetch = 0 : i64, scratch_operands = 2 : i64, tpu.core_type = #tpu.core_type<tc>, window_params = [{transform_indices = @transform_0, window_bounds = array<i64: 1, 8, 16>}, {pipeline_mode = #tpu.pipeline_mode<synchronous>, transform_indices = @transform_1, window_bounds = array<i64: 144, 128>}, {pipeline_mode = #tpu.pipeline_mode<synchronous>, transform_indices = @transform_2, window_bounds = array<i64: 1, 128>}, {pipeline_mode = #tpu.pipeline_mode<synchronous>, transform_indices = @transform_3, window_bounds = array<i64: 5, 3, 128, 128>}, {pipeline_mode = #tpu.pipeline_mode<synchronous>, transform_indices = @transform_4, window_bounds = array<i64: 5, 128>}, {pipeline_mode = #tpu.pipeline_mode<synchronous>, transform_indices = @transform_5, window_bounds = array<i64: 3, 128, 512>}, {pipeline_mode = #tpu.pipeline_mode<synchronous>, transform_indices = @transform_6, window_bounds = array<i64: 1, 512>}, {transform_indices = @transform_7, window_bounds = array<i64: 4>}, {transform_indices = @transform_8, window_bounds = array<i64: 1, 8, 512>}]} {
    %cst = arith.constant 0.000000e+00 : bf16
    %0 = vector.broadcast %cst : bf16 to vector<4x16xbf16>
    %c0 = arith.constant 0 : index
    %c0_0 = arith.constant 0 : index
    %1 = vector.load %arg10[%c0, %c0_0] : memref<16x16xbf16, #tpu.memory_space<vmem>>, vector<4x16xbf16>
    tpu.vector_store %arg10[%c0, %c0_0], %0 {strides = array<i32>} : memref<16x16xbf16, #tpu.memory_space<vmem>>, vector<4x16xbf16>,
    %c12 = arith.constant 12 : index
    %c0_1 = arith.constant 0 : index
    %2 = vector.load %arg10[%c12, %c0_1] : memref<16x16xbf16, #tpu.memory_space<vmem>>, vector<4x16xbf16>
    tpu.vector_store %arg10[%c12, %c0_1], %0 {strides = array<i32>} : memref<16x16xbf16, #tpu.memory_space<vmem>>, vector<4x16xbf16>,
    %cst_2 = arith.constant 0.000000e+00 : bf16
    %3 = vector.broadcast %cst_2 : bf16 to vector<1x128xbf16>
    %c0_3 = arith.constant 0 : index
    %c0_4 = arith.constant 0 : index
    %4 = vector.load %arg11[%c0_3, %c0_4] : memref<10x128xbf16, #tpu.memory_space<vmem>>, vector<1x128xbf16>
    tpu.vector_store %arg11[%c0_3, %c0_4], %3 {strides = array<i32>} : memref<10x128xbf16, #tpu.memory_space<vmem>>, vector<1x128xbf16>,
    %c9 = arith.constant 9 : index
    %c0_5 = arith.constant 0 : index
    %5 = vector.load %arg11[%c9, %c0_5] : memref<10x128xbf16, #tpu.memory_space<vmem>>, vector<1x128xbf16>
    tpu.vector_store %arg11[%c9, %c0_5], %3 {strides = array<i32>} : memref<10x128xbf16, #tpu.memory_space<vmem>>, vector<1x128xbf16>,
    %c0_6 = arith.constant 0 : index
    %c0_7 = arith.constant 0 : index
    %c0_8 = arith.constant 0 : index
    %6 = vector.load %arg1[%c0_6, %c0_7, %c0_8] : memref<1x8x16xbf16, #tpu.memory_space<vmem>>, vector<1x8x16xbf16>
    %7 = vector.shape_cast %6 : vector<1x8x16xbf16> to vector<8x16xbf16>
    %c4 = arith.constant 4 : index
    %c0_9 = arith.constant 0 : index
    %8 = vector.load %arg10[%c4, %c0_9] : memref<16x16xbf16, #tpu.memory_space<vmem>>, vector<8x16xbf16>
    tpu.vector_store %arg10[%c4, %c0_9], %7 {strides = array<i32>} : memref<16x16xbf16, #tpu.memory_space<vmem>>, vector<8x16xbf16>,
    %c0_10 = arith.constant 0 : index
    %c0_11 = arith.constant 0 : index
    %9 = vector.load %arg10[%c0_10, %c0_11] : memref<16x16xbf16, #tpu.memory_space<vmem>>, vector<8x16xbf16>
    %c1 = arith.constant 1 : index
    %c0_12 = arith.constant 0 : index
    %10 = vector.load %arg10[%c1, %c0_12] : memref<16x16xbf16, #tpu.memory_space<vmem>>, vector<8x16xbf16>
    %c2 = arith.constant 2 : index
    %c0_13 = arith.constant 0 : index
    %11 = vector.load %arg10[%c2, %c0_13] : memref<16x16xbf16, #tpu.memory_space<vmem>>, vector<8x16xbf16>
    %c3 = arith.constant 3 : index
    %c0_14 = arith.constant 0 : index
    %12 = vector.load %arg10[%c3, %c0_14] : memref<16x16xbf16, #tpu.memory_space<vmem>>, vector<8x16xbf16>
    %c4_15 = arith.constant 4 : index
    %c0_16 = arith.constant 0 : index
    %13 = vector.load %arg10[%c4_15, %c0_16] : memref<16x16xbf16, #tpu.memory_space<vmem>>, vector<8x16xbf16>
    %c5 = arith.constant 5 : index
    %c0_17 = arith.constant 0 : index
    %14 = vector.load %arg10[%c5, %c0_17] : memref<16x16xbf16, #tpu.memory_space<vmem>>, vector<8x16xbf16>
    %c6 = arith.constant 6 : index
    %c0_18 = arith.constant 0 : index
    %15 = vector.load %arg10[%c6, %c0_18] : memref<16x16xbf16, #tpu.memory_space<vmem>>, vector<8x16xbf16>
    %c7 = arith.constant 7 : index
    %c0_19 = arith.constant 0 : index
    %16 = vector.load %arg10[%c7, %c0_19] : memref<16x16xbf16, #tpu.memory_space<vmem>>, vector<8x16xbf16>
    %c8 = arith.constant 8 : index
    %c0_20 = arith.constant 0 : index
    %17 = vector.load %arg10[%c8, %c0_20] : memref<16x16xbf16, #tpu.memory_space<vmem>>, vector<8x16xbf16>
    %18 = tpu.concatenate %9, %10, %11, %12, %13, %14, %15, %16, %17 in 1 : vector<8x16xbf16>, vector<8x16xbf16>, vector<8x16xbf16>, vector<8x16xbf16>, vector<8x16xbf16>, vector<8x16xbf16>, vector<8x16xbf16>, vector<8x16xbf16>, vector<8x16xbf16> -> vector<8x144xbf16>
    %c0_21 = arith.constant 0 : index
    %c0_22 = arith.constant 0 : index
    %19 = vector.load %arg2[%c0_21, %c0_22] : memref<144x128xbf16, #tpu.memory_space<vmem>>, vector<144x128xbf16>
    %cst_23 = arith.constant dense<0.000000e+00> : vector<8x128xf32>
    %20 = tpu.matmul %18, %19, %cst_23 {dimension_numbers = #tpu.dot_dimension_numbers<[1], [0], [0], [1], [0, 0, 1, 1], [], []>} : vector<8x144xbf16>, vector<144x128xbf16>, vector<8x128xf32> -> vector<8x128xf32>
    %c0_24 = arith.constant 0 : index
    %c0_25 = arith.constant 0 : index
    %21 = vector.load %arg3[%c0_24, %c0_25] : memref<1x128xf32, #tpu.memory_space<vmem>>, vector<1x128xf32>
    %22 = vector.broadcast %21 : vector<1x128xf32> to vector<8x128xf32>
    %23 = arith.addf %20, %22 : vector<8x128xf32>
    %c0_26 = arith.constant 0 : index
    %24 = memref.load %arg8[%c0_26] : memref<4xf32, #tpu.memory_space<smem>>
    %cst_27 = arith.constant 0.000000e+00 : f32
    %25 = vector.broadcast %cst_27 : f32 to vector<8x128xf32>
    %26 = arith.cmpf oge, %23, %25 : vector<8x128xf32>
    %27 = vector.broadcast %24 : f32 to vector<8x128xf32>
    %28 = arith.mulf %27, %23 : vector<8x128xf32>
    %29 = arith.select %26, %23, %28 : vector<8x128xi1>, vector<8x128xf32>
    %30 = arith.truncf %29 : vector<8x128xf32> to vector<8x128xbf16>
    %c1_28 = arith.constant 1 : index
    %c0_29 = arith.constant 0 : index
    %31 = vector.load %arg11[%c1_28, %c0_29] : memref<10x128xbf16, #tpu.memory_space<vmem>>, vector<8x128xbf16>
    tpu.vector_store %arg11[%c1_28, %c0_29], %30 {strides = array<i32>} : memref<10x128xbf16, #tpu.memory_space<vmem>>, vector<8x128xbf16>,
    %c0_30 = arith.constant 0 : index
    %c0_31 = arith.constant 0 : index
    %32 = vector.load %arg11[%c0_30, %c0_31] : memref<10x128xbf16, #tpu.memory_space<vmem>>, vector<8x128xbf16>
    %c0_32 = arith.constant 0 : index
    %c0_33 = arith.constant 0 : index
    %c0_34 = arith.constant 0 : index
    %c0_35 = arith.constant 0 : index
    %33 = vector.load %arg4[%c0_32, %c0_33, %c0_34, %c0_35] : memref<5x3x128x128xbf16, #tpu.memory_space<vmem>>, vector<1x1x128x128xbf16>
    %34 = vector.shape_cast %33 : vector<1x1x128x128xbf16> to vector<128x128xbf16>
    %cst_36 = arith.constant dense<0.000000e+00> : vector<8x128xf32>
    %35 = tpu.matmul %32, %34, %cst_36 {dimension_numbers = #tpu.dot_dimension_numbers<[1], [0], [0], [1], [0, 0, 1, 1], [], []>} : vector<8x128xbf16>, vector<128x128xbf16>, vector<8x128xf32> -> vector<8x128xf32>
    %c1_37 = arith.constant 1 : index
    %c0_38 = arith.constant 0 : index
    %36 = vector.load %arg11[%c1_37, %c0_38] : memref<10x128xbf16, #tpu.memory_space<vmem>>, vector<8x128xbf16>
    %c0_39 = arith.constant 0 : index
    %c1_40 = arith.constant 1 : index
    %c0_41 = arith.constant 0 : index
    %c0_42 = arith.constant 0 : index
    %37 = vector.load %arg4[%c0_39, %c1_40, %c0_41, %c0_42] : memref<5x3x128x128xbf16, #tpu.memory_space<vmem>>, vector<1x1x128x128xbf16>
    %38 = vector.shape_cast %37 : vector<1x1x128x128xbf16> to vector<128x128xbf16>
    %cst_43 = arith.constant dense<0.000000e+00> : vector<8x128xf32>
    %39 = tpu.matmul %36, %38, %cst_43 {dimension_numbers = #tpu.dot_dimension_numbers<[1], [0], [0], [1], [0, 0, 1, 1], [], []>} : vector<8x128xbf16>, vector<128x128xbf16>, vector<8x128xf32> -> vector<8x128xf32>
    %40 = arith.addf %35, %39 : vector<8x128xf32>
    %c2_44 = arith.constant 2 : index
    %c0_45 = arith.constant 0 : index
    %41 = vector.load %arg11[%c2_44, %c0_45] : memref<10x128xbf16, #tpu.memory_space<vmem>>, vector<8x128xbf16>
    %c0_46 = arith.constant 0 : index
    %c2_47 = arith.constant 2 : index
    %c0_48 = arith.constant 0 : index
    %c0_49 = arith.constant 0 : index
    %42 = vector.load %arg4[%c0_46, %c2_47, %c0_48, %c0_49] : memref<5x3x128x128xbf16, #tpu.memory_space<vmem>>, vector<1x1x128x128xbf16>
    %43 = vector.shape_cast %42 : vector<1x1x128x128xbf16> to vector<128x128xbf16>
    %cst_50 = arith.constant dense<0.000000e+00> : vector<8x128xf32>
    %44 = tpu.matmul %41, %43, %cst_50 {dimension_numbers = #tpu.dot_dimension_numbers<[1], [0], [0], [1], [0, 0, 1, 1], [], []>} : vector<8x128xbf16>, vector<128x128xbf16>, vector<8x128xf32> -> vector<8x128xf32>
    %45 = arith.addf %40, %44 : vector<8x128xf32>
    %c0_51 = arith.constant 0 : index
    %c0_52 = arith.constant 0 : index
    %46 = vector.load %arg5[%c0_51, %c0_52] : memref<5x128xf32, #tpu.memory_space<vmem>>, vector<1x128xf32>
    %47 = vector.broadcast %46 : vector<1x128xf32> to vector<8x128xf32>
    %48 = arith.addf %45, %47 : vector<8x128xf32>
    %c1_53 = arith.constant 1 : index
    %49 = memref.load %arg8[%c1_53] : memref<4xf32, #tpu.memory_space<smem>>
    %cst_54 = arith.constant 0.000000e+00 : f32
    %50 = vector.broadcast %cst_54 : f32 to vector<8x128xf32>
    %51 = arith.cmpf oge, %48, %50 : vector<8x128xf32>
    %52 = vector.broadcast %49 : f32 to vector<8x128xf32>
    %53 = arith.mulf %52, %48 : vector<8x128xf32>
    %54 = arith.select %51, %48, %53 : vector<8x128xi1>, vector<8x128xf32>
    %55 = arith.truncf %54 : vector<8x128xf32> to vector<8x128xbf16>
    %c1_55 = arith.constant 1 : index
    %c0_56 = arith.constant 0 : index
    %56 = vector.load %arg11[%c1_55, %c0_56] : memref<10x128xbf16, #tpu.memory_space<vmem>>, vector<8x128xbf16>
    tpu.vector_store %arg11[%c1_55, %c0_56], %55 {strides = array<i32>} : memref<10x128xbf16, #tpu.memory_space<vmem>>, vector<8x128xbf16>,
    %c0_57 = arith.constant 0 : index
    %c0_58 = arith.constant 0 : index
    %57 = vector.load %arg11[%c0_57, %c0_58] : memref<10x128xbf16, #tpu.memory_space<vmem>>, vector<8x128xbf16>
    %c1_59 = arith.constant 1 : index
    %c0_60 = arith.constant 0 : index
    %c0_61 = arith.constant 0 : index
    %c0_62 = arith.constant 0 : index
    %58 = vector.load %arg4[%c1_59, %c0_60, %c0_61, %c0_62] : memref<5x3x128x128xbf16, #tpu.memory_space<vmem>>, vector<1x1x128x128xbf16>
    %59 = vector.shape_cast %58 : vector<1x1x128x128xbf16> to vector<128x128xbf16>
    %cst_63 = arith.constant dense<0.000000e+00> : vector<8x128xf32>
    %60 = tpu.matmul %57, %59, %cst_63 {dimension_numbers = #tpu.dot_dimension_numbers<[1], [0], [0], [1], [0, 0, 1, 1], [], []>} : vector<8x128xbf16>, vector<128x128xbf16>, vector<8x128xf32> -> vector<8x128xf32>
    %c1_64 = arith.constant 1 : index
    %c0_65 = arith.constant 0 : index
    %61 = vector.load %arg11[%c1_64, %c0_65] : memref<10x128xbf16, #tpu.memory_space<vmem>>, vector<8x128xbf16>
    %c1_66 = arith.constant 1 : index
    %c1_67 = arith.constant 1 : index
    %c0_68 = arith.constant 0 : index
    %c0_69 = arith.constant 0 : index
    %62 = vector.load %arg4[%c1_66, %c1_67, %c0_68, %c0_69] : memref<5x3x128x128xbf16, #tpu.memory_space<vmem>>, vector<1x1x128x128xbf16>
    %63 = vector.shape_cast %62 : vector<1x1x128x128xbf16> to vector<128x128xbf16>
    %cst_70 = arith.constant dense<0.000000e+00> : vector<8x128xf32>
    %64 = tpu.matmul %61, %63, %cst_70 {dimension_numbers = #tpu.dot_dimension_numbers<[1], [0], [0], [1], [0, 0, 1, 1], [], []>} : vector<8x128xbf16>, vector<128x128xbf16>, vector<8x128xf32> -> vector<8x128xf32>
    %65 = arith.addf %60, %64 : vector<8x128xf32>
    %c2_71 = arith.constant 2 : index
    %c0_72 = arith.constant 0 : index
    %66 = vector.load %arg11[%c2_71, %c0_72] : memref<10x128xbf16, #tpu.memory_space<vmem>>, vector<8x128xbf16>
    %c1_73 = arith.constant 1 : index
    %c2_74 = arith.constant 2 : index
    %c0_75 = arith.constant 0 : index
    %c0_76 = arith.constant 0 : index
    %67 = vector.load %arg4[%c1_73, %c2_74, %c0_75, %c0_76] : memref<5x3x128x128xbf16, #tpu.memory_space<vmem>>, vector<1x1x128x128xbf16>
    %68 = vector.shape_cast %67 : vector<1x1x128x128xbf16> to vector<128x128xbf16>
    %cst_77 = arith.constant dense<0.000000e+00> : vector<8x128xf32>
    %69 = tpu.matmul %66, %68, %cst_77 {dimension_numbers = #tpu.dot_dimension_numbers<[1], [0], [0], [1], [0, 0, 1, 1], [], []>} : vector<8x128xbf16>, vector<128x128xbf16>, vector<8x128xf32> -> vector<8x128xf32>
    %70 = arith.addf %65, %69 : vector<8x128xf32>
    %c1_78 = arith.constant 1 : index
    %c0_79 = arith.constant 0 : index
    %71 = vector.load %arg5[%c1_78, %c0_79] : memref<5x128xf32, #tpu.memory_space<vmem>>, vector<1x128xf32>
    %72 = vector.broadcast %71 : vector<1x128xf32> to vector<8x128xf32>
    %73 = arith.addf %70, %72 : vector<8x128xf32>
    %74 = arith.addf %73, %29 : vector<8x128xf32>
    %75 = arith.truncf %74 : vector<8x128xf32> to vector<8x128xbf16>
    %c1_80 = arith.constant 1 : index
    %c0_81 = arith.constant 0 : index
    %76 = vector.load %arg11[%c1_80, %c0_81] : memref<10x128xbf16, #tpu.memory_space<vmem>>, vector<8x128xbf16>
    tpu.vector_store %arg11[%c1_80, %c0_81], %75 {strides = array<i32>} : memref<10x128xbf16, #tpu.memory_space<vmem>>, vector<8x128xbf16>,
    %c0_82 = arith.constant 0 : index
    %c0_83 = arith.constant 0 : index
    %77 = vector.load %arg11[%c0_82, %c0_83] : memref<10x128xbf16, #tpu.memory_space<vmem>>, vector<8x128xbf16>
    %c2_84 = arith.constant 2 : index
    %c0_85 = arith.constant 0 : index
    %c0_86 = arith.constant 0 : index
    %c0_87 = arith.constant 0 : index
    %78 = vector.load %arg4[%c2_84, %c0_85, %c0_86, %c0_87] : memref<5x3x128x128xbf16, #tpu.memory_space<vmem>>, vector<1x1x128x128xbf16>
    %79 = vector.shape_cast %78 : vector<1x1x128x128xbf16> to vector<128x128xbf16>
    %cst_88 = arith.constant dense<0.000000e+00> : vector<8x128xf32>
    %80 = tpu.matmul %77, %79, %cst_88 {dimension_numbers = #tpu.dot_dimension_numbers<[1], [0], [0], [1], [0, 0, 1, 1], [], []>} : vector<8x128xbf16>, vector<128x128xbf16>, vector<8x128xf32> -> vector<8x128xf32>
    %c1_89 = arith.constant 1 : index
    %c0_90 = arith.constant 0 : index
    %81 = vector.load %arg11[%c1_89, %c0_90] : memref<10x128xbf16, #tpu.memory_space<vmem>>, vector<8x128xbf16>
    %c2_91 = arith.constant 2 : index
    %c1_92 = arith.constant 1 : index
    %c0_93 = arith.constant 0 : index
    %c0_94 = arith.constant 0 : index
    %82 = vector.load %arg4[%c2_91, %c1_92, %c0_93, %c0_94] : memref<5x3x128x128xbf16, #tpu.memory_space<vmem>>, vector<1x1x128x128xbf16>
    %83 = vector.shape_cast %82 : vector<1x1x128x128xbf16> to vector<128x128xbf16>
    %cst_95 = arith.constant dense<0.000000e+00> : vector<8x128xf32>
    %84 = tpu.matmul %81, %83, %cst_95 {dimension_numbers = #tpu.dot_dimension_numbers<[1], [0], [0], [1], [0, 0, 1, 1], [], []>} : vector<8x128xbf16>, vector<128x128xbf16>, vector<8x128xf32> -> vector<8x128xf32>
    %85 = arith.addf %80, %84 : vector<8x128xf32>
    %c2_96 = arith.constant 2 : index
    %c0_97 = arith.constant 0 : index
    %86 = vector.load %arg11[%c2_96, %c0_97] : memref<10x128xbf16, #tpu.memory_space<vmem>>, vector<8x128xbf16>
    %c2_98 = arith.constant 2 : index
    %c2_99 = arith.constant 2 : index
    %c0_100 = arith.constant 0 : index
    %c0_101 = arith.constant 0 : index
    %87 = vector.load %arg4[%c2_98, %c2_99, %c0_100, %c0_101] : memref<5x3x128x128xbf16, #tpu.memory_space<vmem>>, vector<1x1x128x128xbf16>
    %88 = vector.shape_cast %87 : vector<1x1x128x128xbf16> to vector<128x128xbf16>
    %cst_102 = arith.constant dense<0.000000e+00> : vector<8x128xf32>
    %89 = tpu.matmul %86, %88, %cst_102 {dimension_numbers = #tpu.dot_dimension_numbers<[1], [0], [0], [1], [0, 0, 1, 1], [], []>} : vector<8x128xbf16>, vector<128x128xbf16>, vector<8x128xf32> -> vector<8x128xf32>
    %90 = arith.addf %85, %89 : vector<8x128xf32>
    %c2_103 = arith.constant 2 : index
    %c0_104 = arith.constant 0 : index
    %91 = vector.load %arg5[%c2_103, %c0_104] : memref<5x128xf32, #tpu.memory_space<vmem>>, vector<1x128xf32>
    %92 = vector.broadcast %91 : vector<1x128xf32> to vector<8x128xf32>
    %93 = arith.addf %90, %92 : vector<8x128xf32>
    %c2_105 = arith.constant 2 : index
    %94 = memref.load %arg8[%c2_105] : memref<4xf32, #tpu.memory_space<smem>>
    %cst_106 = arith.constant 0.000000e+00 : f32
    %95 = vector.broadcast %cst_106 : f32 to vector<8x128xf32>
    %96 = arith.cmpf oge, %93, %95 : vector<8x128xf32>
    %97 = vector.broadcast %94 : f32 to vector<8x128xf32>
    %98 = arith.mulf %97, %93 : vector<8x128xf32>
    %99 = arith.select %96, %93, %98 : vector<8x128xi1>, vector<8x128xf32>
    %100 = arith.truncf %99 : vector<8x128xf32> to vector<8x128xbf16>
    %c1_107 = arith.constant 1 : index
    %c0_108 = arith.constant 0 : index
    %101 = vector.load %arg11[%c1_107, %c0_108] : memref<10x128xbf16, #tpu.memory_space<vmem>>, vector<8x128xbf16>
    tpu.vector_store %arg11[%c1_107, %c0_108], %100 {strides = array<i32>} : memref<10x128xbf16, #tpu.memory_space<vmem>>, vector<8x128xbf16>,
    %c0_109 = arith.constant 0 : index
    %c0_110 = arith.constant 0 : index
    %102 = vector.load %arg11[%c0_109, %c0_110] : memref<10x128xbf16, #tpu.memory_space<vmem>>, vector<8x128xbf16>
    %c3_111 = arith.constant 3 : index
    %c0_112 = arith.constant 0 : index
    %c0_113 = arith.constant 0 : index
    %c0_114 = arith.constant 0 : index
    %103 = vector.load %arg4[%c3_111, %c0_112, %c0_113, %c0_114] : memref<5x3x128x128xbf16, #tpu.memory_space<vmem>>, vector<1x1x128x128xbf16>
    %104 = vector.shape_cast %103 : vector<1x1x128x128xbf16> to vector<128x128xbf16>
    %cst_115 = arith.constant dense<0.000000e+00> : vector<8x128xf32>
    %105 = tpu.matmul %102, %104, %cst_115 {dimension_numbers = #tpu.dot_dimension_numbers<[1], [0], [0], [1], [0, 0, 1, 1], [], []>} : vector<8x128xbf16>, vector<128x128xbf16>, vector<8x128xf32> -> vector<8x128xf32>
    %c1_116 = arith.constant 1 : index
    %c0_117 = arith.constant 0 : index
    %106 = vector.load %arg11[%c1_116, %c0_117] : memref<10x128xbf16, #tpu.memory_space<vmem>>, vector<8x128xbf16>
    %c3_118 = arith.constant 3 : index
    %c1_119 = arith.constant 1 : index
    %c0_120 = arith.constant 0 : index
    %c0_121 = arith.constant 0 : index
    %107 = vector.load %arg4[%c3_118, %c1_119, %c0_120, %c0_121] : memref<5x3x128x128xbf16, #tpu.memory_space<vmem>>, vector<1x1x128x128xbf16>
    %108 = vector.shape_cast %107 : vector<1x1x128x128xbf16> to vector<128x128xbf16>
    %cst_122 = arith.constant dense<0.000000e+00> : vector<8x128xf32>
    %109 = tpu.matmul %106, %108, %cst_122 {dimension_numbers = #tpu.dot_dimension_numbers<[1], [0], [0], [1], [0, 0, 1, 1], [], []>} : vector<8x128xbf16>, vector<128x128xbf16>, vector<8x128xf32> -> vector<8x128xf32>
    %110 = arith.addf %105, %109 : vector<8x128xf32>
    %c2_123 = arith.constant 2 : index
    %c0_124 = arith.constant 0 : index
    %111 = vector.load %arg11[%c2_123, %c0_124] : memref<10x128xbf16, #tpu.memory_space<vmem>>, vector<8x128xbf16>
    %c3_125 = arith.constant 3 : index
    %c2_126 = arith.constant 2 : index
    %c0_127 = arith.constant 0 : index
    %c0_128 = arith.constant 0 : index
    %112 = vector.load %arg4[%c3_125, %c2_126, %c0_127, %c0_128] : memref<5x3x128x128xbf16, #tpu.memory_space<vmem>>, vector<1x1x128x128xbf16>
    %113 = vector.shape_cast %112 : vector<1x1x128x128xbf16> to vector<128x128xbf16>
    %cst_129 = arith.constant dense<0.000000e+00> : vector<8x128xf32>
    %114 = tpu.matmul %111, %113, %cst_129 {dimension_numbers = #tpu.dot_dimension_numbers<[1], [0], [0], [1], [0, 0, 1, 1], [], []>} : vector<8x128xbf16>, vector<128x128xbf16>, vector<8x128xf32> -> vector<8x128xf32>
    %115 = arith.addf %110, %114 : vector<8x128xf32>
    %c3_130 = arith.constant 3 : index
    %c0_131 = arith.constant 0 : index
    %116 = vector.load %arg5[%c3_130, %c0_131] : memref<5x128xf32, #tpu.memory_space<vmem>>, vector<1x128xf32>
    %117 = vector.broadcast %116 : vector<1x128xf32> to vector<8x128xf32>
    %118 = arith.addf %115, %117 : vector<8x128xf32>
    %119 = arith.addf %118, %74 : vector<8x128xf32>
    %120 = arith.truncf %119 : vector<8x128xf32> to vector<8x128xbf16>
    %c1_132 = arith.constant 1 : index
    %c0_133 = arith.constant 0 : index
    %121 = vector.load %arg11[%c1_132, %c0_133] : memref<10x128xbf16, #tpu.memory_space<vmem>>, vector<8x128xbf16>
    tpu.vector_store %arg11[%c1_132, %c0_133], %120 {strides = array<i32>} : memref<10x128xbf16, #tpu.memory_space<vmem>>, vector<8x128xbf16>,
    %c0_134 = arith.constant 0 : index
    %c0_135 = arith.constant 0 : index
    %122 = vector.load %arg11[%c0_134, %c0_135] : memref<10x128xbf16, #tpu.memory_space<vmem>>, vector<8x128xbf16>
    %c4_136 = arith.constant 4 : index
    %c0_137 = arith.constant 0 : index
    %c0_138 = arith.constant 0 : index
    %c0_139 = arith.constant 0 : index
    %123 = vector.load %arg4[%c4_136, %c0_137, %c0_138, %c0_139] : memref<5x3x128x128xbf16, #tpu.memory_space<vmem>>, vector<1x1x128x128xbf16>
    %124 = vector.shape_cast %123 : vector<1x1x128x128xbf16> to vector<128x128xbf16>
    %cst_140 = arith.constant dense<0.000000e+00> : vector<8x128xf32>
    %125 = tpu.matmul %122, %124, %cst_140 {dimension_numbers = #tpu.dot_dimension_numbers<[1], [0], [0], [1], [0, 0, 1, 1], [], []>} : vector<8x128xbf16>, vector<128x128xbf16>, vector<8x128xf32> -> vector<8x128xf32>
    %c1_141 = arith.constant 1 : index
    %c0_142 = arith.constant 0 : index
    %126 = vector.load %arg11[%c1_141, %c0_142] : memref<10x128xbf16, #tpu.memory_space<vmem>>, vector<8x128xbf16>
    %c4_143 = arith.constant 4 : index
    %c1_144 = arith.constant 1 : index
    %c0_145 = arith.constant 0 : index
    %c0_146 = arith.constant 0 : index
    %127 = vector.load %arg4[%c4_143, %c1_144, %c0_145, %c0_146] : memref<5x3x128x128xbf16, #tpu.memory_space<vmem>>, vector<1x1x128x128xbf16>
    %128 = vector.shape_cast %127 : vector<1x1x128x128xbf16> to vector<128x128xbf16>
    %cst_147 = arith.constant dense<0.000000e+00> : vector<8x128xf32>
    %129 = tpu.matmul %126, %128, %cst_147 {dimension_numbers = #tpu.dot_dimension_numbers<[1], [0], [0], [1], [0, 0, 1, 1], [], []>} : vector<8x128xbf16>, vector<128x128xbf16>, vector<8x128xf32> -> vector<8x128xf32>
    %130 = arith.addf %125, %129 : vector<8x128xf32>
    %c2_148 = arith.constant 2 : index
    %c0_149 = arith.constant 0 : index
    %131 = vector.load %arg11[%c2_148, %c0_149] : memref<10x128xbf16, #tpu.memory_space<vmem>>, vector<8x128xbf16>
    %c4_150 = arith.constant 4 : index
    %c2_151 = arith.constant 2 : index
    %c0_152 = arith.constant 0 : index
    %c0_153 = arith.constant 0 : index
    %132 = vector.load %arg4[%c4_150, %c2_151, %c0_152, %c0_153] : memref<5x3x128x128xbf16, #tpu.memory_space<vmem>>, vector<1x1x128x128xbf16>
    %133 = vector.shape_cast %132 : vector<1x1x128x128xbf16> to vector<128x128xbf16>
    %cst_154 = arith.constant dense<0.000000e+00> : vector<8x128xf32>
    %134 = tpu.matmul %131, %133, %cst_154 {dimension_numbers = #tpu.dot_dimension_numbers<[1], [0], [0], [1], [0, 0, 1, 1], [], []>} : vector<8x128xbf16>, vector<128x128xbf16>, vector<8x128xf32> -> vector<8x128xf32>
    %135 = arith.addf %130, %134 : vector<8x128xf32>
    %c4_155 = arith.constant 4 : index
    %c0_156 = arith.constant 0 : index
    %136 = vector.load %arg5[%c4_155, %c0_156] : memref<5x128xf32, #tpu.memory_space<vmem>>, vector<1x128xf32>
    %137 = vector.broadcast %136 : vector<1x128xf32> to vector<8x128xf32>
    %138 = arith.addf %135, %137 : vector<8x128xf32>
    %139 = arith.addf %29, %138 : vector<8x128xf32>
    %140 = arith.truncf %139 : vector<8x128xf32> to vector<8x128xbf16>
    %c1_157 = arith.constant 1 : index
    %c0_158 = arith.constant 0 : index
    %141 = vector.load %arg11[%c1_157, %c0_158] : memref<10x128xbf16, #tpu.memory_space<vmem>>, vector<8x128xbf16>
    tpu.vector_store %arg11[%c1_157, %c0_158], %140 {strides = array<i32>} : memref<10x128xbf16, #tpu.memory_space<vmem>>, vector<8x128xbf16>,
    %c0_159 = arith.constant 0 : index
    %c0_160 = arith.constant 0 : index
    %142 = vector.load %arg11[%c0_159, %c0_160] : memref<10x128xbf16, #tpu.memory_space<vmem>>, vector<8x128xbf16>
    %c0_161 = arith.constant 0 : index
    %c0_162 = arith.constant 0 : index
    %c0_163 = arith.constant 0 : index
    %143 = vector.load %arg6[%c0_161, %c0_162, %c0_163] : memref<3x128x512xbf16, #tpu.memory_space<vmem>>, vector<1x128x512xbf16>
    %144 = vector.shape_cast %143 : vector<1x128x512xbf16> to vector<128x512xbf16>
    %cst_164 = arith.constant dense<0.000000e+00> : vector<8x512xf32>
    %145 = tpu.matmul %142, %144, %cst_164 {dimension_numbers = #tpu.dot_dimension_numbers<[1], [0], [0], [1], [0, 0, 1, 1], [], []>} : vector<8x128xbf16>, vector<128x512xbf16>, vector<8x512xf32> -> vector<8x512xf32>
    %c1_165 = arith.constant 1 : index
    %c0_166 = arith.constant 0 : index
    %146 = vector.load %arg11[%c1_165, %c0_166] : memref<10x128xbf16, #tpu.memory_space<vmem>>, vector<8x128xbf16>
    %c1_167 = arith.constant 1 : index
    %c0_168 = arith.constant 0 : index
    %c0_169 = arith.constant 0 : index
    %147 = vector.load %arg6[%c1_167, %c0_168, %c0_169] : memref<3x128x512xbf16, #tpu.memory_space<vmem>>, vector<1x128x512xbf16>
    %148 = vector.shape_cast %147 : vector<1x128x512xbf16> to vector<128x512xbf16>
    %cst_170 = arith.constant dense<0.000000e+00> : vector<8x512xf32>
    %149 = tpu.matmul %146, %148, %cst_170 {dimension_numbers = #tpu.dot_dimension_numbers<[1], [0], [0], [1], [0, 0, 1, 1], [], []>} : vector<8x128xbf16>, vector<128x512xbf16>, vector<8x512xf32> -> vector<8x512xf32>
    %150 = arith.addf %145, %149 : vector<8x512xf32>
    %c2_171 = arith.constant 2 : index
    %c0_172 = arith.constant 0 : index
    %151 = vector.load %arg11[%c2_171, %c0_172] : memref<10x128xbf16, #tpu.memory_space<vmem>>, vector<8x128xbf16>
    %c2_173 = arith.constant 2 : index
    %c0_174 = arith.constant 0 : index
    %c0_175 = arith.constant 0 : index
    %152 = vector.load %arg6[%c2_173, %c0_174, %c0_175] : memref<3x128x512xbf16, #tpu.memory_space<vmem>>, vector<1x128x512xbf16>
    %153 = vector.shape_cast %152 : vector<1x128x512xbf16> to vector<128x512xbf16>
    %cst_176 = arith.constant dense<0.000000e+00> : vector<8x512xf32>
    %154 = tpu.matmul %151, %153, %cst_176 {dimension_numbers = #tpu.dot_dimension_numbers<[1], [0], [0], [1], [0, 0, 1, 1], [], []>} : vector<8x128xbf16>, vector<128x512xbf16>, vector<8x512xf32> -> vector<8x512xf32>
    %155 = arith.addf %150, %154 : vector<8x512xf32>
    %c0_177 = arith.constant 0 : index
    %c0_178 = arith.constant 0 : index
    %156 = vector.load %arg7[%c0_177, %c0_178] : memref<1x512xf32, #tpu.memory_space<vmem>>, vector<1x512xf32>
    %157 = vector.broadcast %156 : vector<1x512xf32> to vector<8x512xf32>
    %158 = arith.addf %155, %157 : vector<8x512xf32>
    %c3_179 = arith.constant 3 : index
    %159 = memref.load %arg8[%c3_179] : memref<4xf32, #tpu.memory_space<smem>>
    %cst_180 = arith.constant 0.000000e+00 : f32
    %160 = vector.broadcast %cst_180 : f32 to vector<8x512xf32>
    %161 = arith.cmpf oge, %158, %160 : vector<8x512xf32>
    %162 = vector.broadcast %159 : f32 to vector<8x512xf32>
    %163 = arith.mulf %162, %158 : vector<8x512xf32>
    %164 = arith.select %161, %158, %163 : vector<8x512xi1>, vector<8x512xf32>
    %165 = arith.truncf %164 : vector<8x512xf32> to vector<8x512xbf16>
    %166 = vector.shape_cast %165 : vector<8x512xbf16> to vector<1x8x512xbf16>
    %c0_181 = arith.constant 0 : index
    %c0_182 = arith.constant 0 : index
    %c0_183 = arith.constant 0 : index
    %167 = vector.load %arg9[%c0_181, %c0_182, %c0_183] : memref<1x8x512xbf16, #tpu.memory_space<vmem>>, vector<1x8x512xbf16>
    tpu.vector_store %arg9[%c0_181, %c0_182, %c0_183], %166 {strides = array<i32>} : memref<1x8x512xbf16, #tpu.memory_space<vmem>>, vector<1x8x512xbf16>,
    return
  }
  func.func @transform_0(%arg0: i32) -> (i32, i32, i32) {
    %c0_i32 = arith.constant 0 : i32
    %c0_i32_0 = arith.constant 0 : i32
    %c0_i32_1 = arith.constant 0 : i32
    return %arg0, %c0_i32, %c0_i32_0 : i32, i32, i32
  }
  func.func @transform_1(%arg0: i32) -> (i32, i32) {
    %c0_i32 = arith.constant 0 : i32
    %c0_i32_0 = arith.constant 0 : i32
    %c0_i32_1 = arith.constant 0 : i32
    return %c0_i32, %c0_i32_0 : i32, i32
  }
  func.func @transform_2(%arg0: i32) -> (i32, i32) {
    %c0_i32 = arith.constant 0 : i32
    %c0_i32_0 = arith.constant 0 : i32
    %c0_i32_1 = arith.constant 0 : i32
    return %c0_i32, %c0_i32_0 : i32, i32
  }
  func.func @transform_3(%arg0: i32) -> (i32, i32, i32, i32) {
    %c0_i32 = arith.constant 0 : i32
    %c0_i32_0 = arith.constant 0 : i32
    %c0_i32_1 = arith.constant 0 : i32
    %c0_i32_2 = arith.constant 0 : i32
    %c0_i32_3 = arith.constant 0 : i32
    return %c0_i32, %c0_i32_0, %c0_i32_1, %c0_i32_2 : i32, i32, i32, i32
  }
  func.func @transform_4(%arg0: i32) -> (i32, i32) {
    %c0_i32 = arith.constant 0 : i32
    %c0_i32_0 = arith.constant 0 : i32
    %c0_i32_1 = arith.constant 0 : i32
    return %c0_i32, %c0_i32_0 : i32, i32
  }
  func.func @transform_5(%arg0: i32) -> (i32, i32, i32) {
    %c0_i32 = arith.constant 0 : i32
    %c0_i32_0 = arith.constant 0 : i32
    %c0_i32_1 = arith.constant 0 : i32
    %c0_i32_2 = arith.constant 0 : i32
    return %c0_i32, %c0_i32_0, %c0_i32_1 : i32, i32, i32
  }
  func.func @transform_6(%arg0: i32) -> (i32, i32) {
    %c0_i32 = arith.constant 0 : i32
    %c0_i32_0 = arith.constant 0 : i32
    %c0_i32_1 = arith.constant 0 : i32
    return %c0_i32, %c0_i32_0 : i32, i32
  }
  func.func @transform_7(%arg0: i32) -> i32 {
    %c0_i32 = arith.constant 0 : i32
    %c0_i32_0 = arith.constant 0 : i32
    return %c0_i32 : i32
  }
  func.func @transform_8(%arg0: i32) -> (i32, i32, i32) {
    %c0_i32 = arith.constant 0 : i32
    %c0_i32_0 = arith.constant 0 : i32
    %c0_i32_1 = arith.constant 0 : i32
    return %arg0, %c0_i32, %c0_i32_0 : i32, i32, i32
  }
}

module attributes {stable_mosaic.version = 11 : i64} {
  func.func @_upsample_kernel(%arg0: i32, %arg1: memref<1x16x256xbf16, #tpu.memory_space<vmem>>, %arg2: memref<3x256x1024xbf16, #tpu.memory_space<vmem>>, %arg3: memref<1x1024xf32, #tpu.memory_space<vmem>>, %arg4: memref<1xf32, #tpu.memory_space<smem>>, %arg5: memref<1x16x1024xbf16, #tpu.memory_space<vmem>>, %arg6: memref<18x256xbf16, #tpu.memory_space<vmem>>) attributes {dimension_semantics = [#tpu.dimension_semantics<parallel>], iteration_bounds = array<i64: 2>, scalar_prefetch = 0 : i64, scratch_operands = 1 : i64, tpu.core_type = #tpu.core_type<tc>, window_params = [{transform_indices = @transform_0, window_bounds = array<i64: 1, 16, 256>}, {pipeline_mode = #tpu.pipeline_mode<synchronous>, transform_indices = @transform_1, window_bounds = array<i64: 3, 256, 1024>}, {pipeline_mode = #tpu.pipeline_mode<synchronous>, transform_indices = @transform_2, window_bounds = array<i64: 1, 1024>}, {transform_indices = @transform_3, window_bounds = array<i64: 1>}, {transform_indices = @transform_4, window_bounds = array<i64: 1, 16, 1024>}]} {
    %cst = arith.constant 0.000000e+00 : bf16
    %0 = vector.broadcast %cst : bf16 to vector<1x256xbf16>
    %c0 = arith.constant 0 : index
    %c0_0 = arith.constant 0 : index
    %1 = vector.load %arg6[%c0, %c0_0] : memref<18x256xbf16, #tpu.memory_space<vmem>>, vector<1x256xbf16>
    tpu.vector_store %arg6[%c0, %c0_0], %0 {strides = array<i32>} : memref<18x256xbf16, #tpu.memory_space<vmem>>, vector<1x256xbf16>,
    %c17 = arith.constant 17 : index
    %c0_1 = arith.constant 0 : index
    %2 = vector.load %arg6[%c17, %c0_1] : memref<18x256xbf16, #tpu.memory_space<vmem>>, vector<1x256xbf16>
    tpu.vector_store %arg6[%c17, %c0_1], %0 {strides = array<i32>} : memref<18x256xbf16, #tpu.memory_space<vmem>>, vector<1x256xbf16>,
    %c0_2 = arith.constant 0 : index
    %c0_3 = arith.constant 0 : index
    %c0_4 = arith.constant 0 : index
    %3 = vector.load %arg1[%c0_2, %c0_3, %c0_4] : memref<1x16x256xbf16, #tpu.memory_space<vmem>>, vector<1x16x256xbf16>
    %4 = vector.shape_cast %3 : vector<1x16x256xbf16> to vector<16x256xbf16>
    %c1 = arith.constant 1 : index
    %c0_5 = arith.constant 0 : index
    %5 = vector.load %arg6[%c1, %c0_5] : memref<18x256xbf16, #tpu.memory_space<vmem>>, vector<16x256xbf16>
    tpu.vector_store %arg6[%c1, %c0_5], %4 {strides = array<i32>} : memref<18x256xbf16, #tpu.memory_space<vmem>>, vector<16x256xbf16>,
    %c0_6 = arith.constant 0 : index
    %c0_7 = arith.constant 0 : index
    %6 = vector.load %arg6[%c0_6, %c0_7] : memref<18x256xbf16, #tpu.memory_space<vmem>>, vector<16x256xbf16>
    %c0_8 = arith.constant 0 : index
    %c0_9 = arith.constant 0 : index
    %c0_10 = arith.constant 0 : index
    %7 = vector.load %arg2[%c0_8, %c0_9, %c0_10] : memref<3x256x1024xbf16, #tpu.memory_space<vmem>>, vector<1x256x1024xbf16>
    %8 = vector.shape_cast %7 : vector<1x256x1024xbf16> to vector<256x1024xbf16>
    %cst_11 = arith.constant dense<0.000000e+00> : vector<16x1024xf32>
    %9 = tpu.matmul %6, %8, %cst_11 {dimension_numbers = #tpu.dot_dimension_numbers<[1], [0], [0], [1], [0, 0, 1, 1], [], []>} : vector<16x256xbf16>, vector<256x1024xbf16>, vector<16x1024xf32> -> vector<16x1024xf32>
    %c1_12 = arith.constant 1 : index
    %c0_13 = arith.constant 0 : index
    %10 = vector.load %arg6[%c1_12, %c0_13] : memref<18x256xbf16, #tpu.memory_space<vmem>>, vector<16x256xbf16>
    %c1_14 = arith.constant 1 : index
    %c0_15 = arith.constant 0 : index
    %c0_16 = arith.constant 0 : index
    %11 = vector.load %arg2[%c1_14, %c0_15, %c0_16] : memref<3x256x1024xbf16, #tpu.memory_space<vmem>>, vector<1x256x1024xbf16>
    %12 = vector.shape_cast %11 : vector<1x256x1024xbf16> to vector<256x1024xbf16>
    %cst_17 = arith.constant dense<0.000000e+00> : vector<16x1024xf32>
    %13 = tpu.matmul %10, %12, %cst_17 {dimension_numbers = #tpu.dot_dimension_numbers<[1], [0], [0], [1], [0, 0, 1, 1], [], []>} : vector<16x256xbf16>, vector<256x1024xbf16>, vector<16x1024xf32> -> vector<16x1024xf32>
    %14 = arith.addf %9, %13 : vector<16x1024xf32>
    %c2 = arith.constant 2 : index
    %c0_18 = arith.constant 0 : index
    %15 = vector.load %arg6[%c2, %c0_18] : memref<18x256xbf16, #tpu.memory_space<vmem>>, vector<16x256xbf16>
    %c2_19 = arith.constant 2 : index
    %c0_20 = arith.constant 0 : index
    %c0_21 = arith.constant 0 : index
    %16 = vector.load %arg2[%c2_19, %c0_20, %c0_21] : memref<3x256x1024xbf16, #tpu.memory_space<vmem>>, vector<1x256x1024xbf16>
    %17 = vector.shape_cast %16 : vector<1x256x1024xbf16> to vector<256x1024xbf16>
    %cst_22 = arith.constant dense<0.000000e+00> : vector<16x1024xf32>
    %18 = tpu.matmul %15, %17, %cst_22 {dimension_numbers = #tpu.dot_dimension_numbers<[1], [0], [0], [1], [0, 0, 1, 1], [], []>} : vector<16x256xbf16>, vector<256x1024xbf16>, vector<16x1024xf32> -> vector<16x1024xf32>
    %19 = arith.addf %14, %18 : vector<16x1024xf32>
    %c0_23 = arith.constant 0 : index
    %c0_24 = arith.constant 0 : index
    %20 = vector.load %arg3[%c0_23, %c0_24] : memref<1x1024xf32, #tpu.memory_space<vmem>>, vector<1x1024xf32>
    %21 = vector.broadcast %20 : vector<1x1024xf32> to vector<16x1024xf32>
    %22 = arith.addf %19, %21 : vector<16x1024xf32>
    %c0_25 = arith.constant 0 : index
    %23 = memref.load %arg4[%c0_25] : memref<1xf32, #tpu.memory_space<smem>>
    %cst_26 = arith.constant 0.000000e+00 : f32
    %24 = vector.broadcast %cst_26 : f32 to vector<16x1024xf32>
    %25 = arith.cmpf oge, %22, %24 : vector<16x1024xf32>
    %26 = vector.broadcast %23 : f32 to vector<16x1024xf32>
    %27 = arith.mulf %26, %22 : vector<16x1024xf32>
    %28 = arith.select %25, %22, %27 : vector<16x1024xi1>, vector<16x1024xf32>
    %29 = arith.truncf %28 : vector<16x1024xf32> to vector<16x1024xbf16>
    %30 = vector.shape_cast %29 : vector<16x1024xbf16> to vector<1x16x1024xbf16>
    %c0_27 = arith.constant 0 : index
    %c0_28 = arith.constant 0 : index
    %c0_29 = arith.constant 0 : index
    %31 = vector.load %arg5[%c0_27, %c0_28, %c0_29] : memref<1x16x1024xbf16, #tpu.memory_space<vmem>>, vector<1x16x1024xbf16>
    tpu.vector_store %arg5[%c0_27, %c0_28, %c0_29], %30 {strides = array<i32>} : memref<1x16x1024xbf16, #tpu.memory_space<vmem>>, vector<1x16x1024xbf16>,
    return
  }
  func.func @transform_0(%arg0: i32) -> (i32, i32, i32) {
    %c0_i32 = arith.constant 0 : i32
    %c0_i32_0 = arith.constant 0 : i32
    %c0_i32_1 = arith.constant 0 : i32
    return %arg0, %c0_i32, %c0_i32_0 : i32, i32, i32
  }
  func.func @transform_1(%arg0: i32) -> (i32, i32, i32) {
    %c0_i32 = arith.constant 0 : i32
    %c0_i32_0 = arith.constant 0 : i32
    %c0_i32_1 = arith.constant 0 : i32
    %c0_i32_2 = arith.constant 0 : i32
    return %c0_i32, %c0_i32_0, %c0_i32_1 : i32, i32, i32
  }
  func.func @transform_2(%arg0: i32) -> (i32, i32) {
    %c0_i32 = arith.constant 0 : i32
    %c0_i32_0 = arith.constant 0 : i32
    %c0_i32_1 = arith.constant 0 : i32
    return %c0_i32, %c0_i32_0 : i32, i32
  }
  func.func @transform_3(%arg0: i32) -> i32 {
    %c0_i32 = arith.constant 0 : i32
    %c0_i32_0 = arith.constant 0 : i32
    return %c0_i32 : i32
  }
  func.func @transform_4(%arg0: i32) -> (i32, i32, i32) {
    %c0_i32 = arith.constant 0 : i32
    %c0_i32_0 = arith.constant 0 : i32
    %c0_i32_1 = arith.constant 0 : i32
    return %arg0, %c0_i32, %c0_i32_0 : i32, i32, i32
  }
}

module attributes {stable_mosaic.version = 11 : i64} {
  func.func @kernel(%arg0: i32, %arg1: memref<1x32x512xbf16, #tpu.memory_space<vmem>>, %arg2: memref<1x32x64xbf16, #tpu.memory_space<vmem>>, %arg3: memref<5x512x256xbf16, #tpu.memory_space<vmem>>, %arg4: memref<320x256xbf16, #tpu.memory_space<vmem>>, %arg5: memref<1x256xf32, #tpu.memory_space<vmem>>, %arg6: memref<3x256x64xbf16, #tpu.memory_space<vmem>>, %arg7: memref<1x64xf32, #tpu.memory_space<vmem>>, %arg8: memref<2xf32, #tpu.memory_space<smem>>, %arg9: memref<1x32x64xf32, #tpu.memory_space<vmem>>, %arg10: memref<36x512xbf16, #tpu.memory_space<vmem>>, %arg11: memref<36x64xbf16, #tpu.memory_space<vmem>>, %arg12: memref<34x256xbf16, #tpu.memory_space<vmem>>) attributes {dimension_semantics = [#tpu.dimension_semantics<parallel>], iteration_bounds = array<i64: 2>, scalar_prefetch = 0 : i64, scratch_operands = 3 : i64, tpu.core_type = #tpu.core_type<tc>, window_params = [{transform_indices = @transform_0, window_bounds = array<i64: 1, 32, 512>}, {transform_indices = @transform_1, window_bounds = array<i64: 1, 32, 64>}, {pipeline_mode = #tpu.pipeline_mode<synchronous>, transform_indices = @transform_2, window_bounds = array<i64: 5, 512, 256>}, {pipeline_mode = #tpu.pipeline_mode<synchronous>, transform_indices = @transform_3, window_bounds = array<i64: 320, 256>}, {pipeline_mode = #tpu.pipeline_mode<synchronous>, transform_indices = @transform_4, window_bounds = array<i64: 1, 256>}, {pipeline_mode = #tpu.pipeline_mode<synchronous>, transform_indices = @transform_5, window_bounds = array<i64: 3, 256, 64>}, {pipeline_mode = #tpu.pipeline_mode<synchronous>, transform_indices = @transform_6, window_bounds = array<i64: 1, 64>}, {transform_indices = @transform_7, window_bounds = array<i64: 2>}, {transform_indices = @transform_8, window_bounds = array<i64: 1, 32, 64>}]} {
    %cst = arith.constant 0.000000e+00 : bf16
    %0 = vector.broadcast %cst : bf16 to vector<2x512xbf16>
    %c0 = arith.constant 0 : index
    %c0_0 = arith.constant 0 : index
    %1 = vector.load %arg10[%c0, %c0_0] : memref<36x512xbf16, #tpu.memory_space<vmem>>, vector<2x512xbf16>
    tpu.vector_store %arg10[%c0, %c0_0], %0 {strides = array<i32>} : memref<36x512xbf16, #tpu.memory_space<vmem>>, vector<2x512xbf16>,
    %c34 = arith.constant 34 : index
    %c0_1 = arith.constant 0 : index
    %2 = vector.load %arg10[%c34, %c0_1] : memref<36x512xbf16, #tpu.memory_space<vmem>>, vector<2x512xbf16>
    tpu.vector_store %arg10[%c34, %c0_1], %0 {strides = array<i32>} : memref<36x512xbf16, #tpu.memory_space<vmem>>, vector<2x512xbf16>,
    %cst_2 = arith.constant 0.000000e+00 : bf16
    %3 = vector.broadcast %cst_2 : bf16 to vector<2x64xbf16>
    %c0_3 = arith.constant 0 : index
    %c0_4 = arith.constant 0 : index
    %4 = vector.load %arg11[%c0_3, %c0_4] : memref<36x64xbf16, #tpu.memory_space<vmem>>, vector<2x64xbf16>
    tpu.vector_store %arg11[%c0_3, %c0_4], %3 {strides = array<i32>} : memref<36x64xbf16, #tpu.memory_space<vmem>>, vector<2x64xbf16>,
    %c34_5 = arith.constant 34 : index
    %c0_6 = arith.constant 0 : index
    %5 = vector.load %arg11[%c34_5, %c0_6] : memref<36x64xbf16, #tpu.memory_space<vmem>>, vector<2x64xbf16>
    tpu.vector_store %arg11[%c34_5, %c0_6], %3 {strides = array<i32>} : memref<36x64xbf16, #tpu.memory_space<vmem>>, vector<2x64xbf16>,
    %cst_7 = arith.constant 0.000000e+00 : bf16
    %6 = vector.broadcast %cst_7 : bf16 to vector<1x256xbf16>
    %c0_8 = arith.constant 0 : index
    %c0_9 = arith.constant 0 : index
    %7 = vector.load %arg12[%c0_8, %c0_9] : memref<34x256xbf16, #tpu.memory_space<vmem>>, vector<1x256xbf16>
    tpu.vector_store %arg12[%c0_8, %c0_9], %6 {strides = array<i32>} : memref<34x256xbf16, #tpu.memory_space<vmem>>, vector<1x256xbf16>,
    %c33 = arith.constant 33 : index
    %c0_10 = arith.constant 0 : index
    %8 = vector.load %arg12[%c33, %c0_10] : memref<34x256xbf16, #tpu.memory_space<vmem>>, vector<1x256xbf16>
    tpu.vector_store %arg12[%c33, %c0_10], %6 {strides = array<i32>} : memref<34x256xbf16, #tpu.memory_space<vmem>>, vector<1x256xbf16>,
    %c0_11 = arith.constant 0 : index
    %c0_12 = arith.constant 0 : index
    %c0_13 = arith.constant 0 : index
    %9 = vector.load %arg1[%c0_11, %c0_12, %c0_13] : memref<1x32x512xbf16, #tpu.memory_space<vmem>>, vector<1x32x512xbf16>
    %10 = vector.shape_cast %9 : vector<1x32x512xbf16> to vector<32x512xbf16>
    %c2 = arith.constant 2 : index
    %c0_14 = arith.constant 0 : index
    %11 = vector.load %arg10[%c2, %c0_14] : memref<36x512xbf16, #tpu.memory_space<vmem>>, vector<32x512xbf16>
    tpu.vector_store %arg10[%c2, %c0_14], %10 {strides = array<i32>} : memref<36x512xbf16, #tpu.memory_space<vmem>>, vector<32x512xbf16>,
    %c0_15 = arith.constant 0 : index
    %c0_16 = arith.constant 0 : index
    %c0_17 = arith.constant 0 : index
    %12 = vector.load %arg2[%c0_15, %c0_16, %c0_17] : memref<1x32x64xbf16, #tpu.memory_space<vmem>>, vector<1x32x64xbf16>
    %13 = vector.shape_cast %12 : vector<1x32x64xbf16> to vector<32x64xbf16>
    %c2_18 = arith.constant 2 : index
    %c0_19 = arith.constant 0 : index
    %14 = vector.load %arg11[%c2_18, %c0_19] : memref<36x64xbf16, #tpu.memory_space<vmem>>, vector<32x64xbf16>
    tpu.vector_store %arg11[%c2_18, %c0_19], %13 {strides = array<i32>} : memref<36x64xbf16, #tpu.memory_space<vmem>>, vector<32x64xbf16>,
    %c0_20 = arith.constant 0 : index
    %c0_21 = arith.constant 0 : index
    %15 = vector.load %arg10[%c0_20, %c0_21] : memref<36x512xbf16, #tpu.memory_space<vmem>>, vector<32x512xbf16>
    %c0_22 = arith.constant 0 : index
    %c0_23 = arith.constant 0 : index
    %c0_24 = arith.constant 0 : index
    %16 = vector.load %arg3[%c0_22, %c0_23, %c0_24] : memref<5x512x256xbf16, #tpu.memory_space<vmem>>, vector<1x512x256xbf16>
    %17 = vector.shape_cast %16 : vector<1x512x256xbf16> to vector<512x256xbf16>
    %cst_25 = arith.constant dense<0.000000e+00> : vector<32x256xf32>
    %18 = tpu.matmul %15, %17, %cst_25 {dimension_numbers = #tpu.dot_dimension_numbers<[1], [0], [0], [1], [0, 0, 1, 1], [], []>} : vector<32x512xbf16>, vector<512x256xbf16>, vector<32x256xf32> -> vector<32x256xf32>
    %c1 = arith.constant 1 : index
    %c0_26 = arith.constant 0 : index
    %19 = vector.load %arg10[%c1, %c0_26] : memref<36x512xbf16, #tpu.memory_space<vmem>>, vector<32x512xbf16>
    %c1_27 = arith.constant 1 : index
    %c0_28 = arith.constant 0 : index
    %c0_29 = arith.constant 0 : index
    %20 = vector.load %arg3[%c1_27, %c0_28, %c0_29] : memref<5x512x256xbf16, #tpu.memory_space<vmem>>, vector<1x512x256xbf16>
    %21 = vector.shape_cast %20 : vector<1x512x256xbf16> to vector<512x256xbf16>
    %cst_30 = arith.constant dense<0.000000e+00> : vector<32x256xf32>
    %22 = tpu.matmul %19, %21, %cst_30 {dimension_numbers = #tpu.dot_dimension_numbers<[1], [0], [0], [1], [0, 0, 1, 1], [], []>} : vector<32x512xbf16>, vector<512x256xbf16>, vector<32x256xf32> -> vector<32x256xf32>
    %23 = arith.addf %18, %22 : vector<32x256xf32>
    %c2_31 = arith.constant 2 : index
    %c0_32 = arith.constant 0 : index
    %24 = vector.load %arg10[%c2_31, %c0_32] : memref<36x512xbf16, #tpu.memory_space<vmem>>, vector<32x512xbf16>
    %c2_33 = arith.constant 2 : index
    %c0_34 = arith.constant 0 : index
    %c0_35 = arith.constant 0 : index
    %25 = vector.load %arg3[%c2_33, %c0_34, %c0_35] : memref<5x512x256xbf16, #tpu.memory_space<vmem>>, vector<1x512x256xbf16>
    %26 = vector.shape_cast %25 : vector<1x512x256xbf16> to vector<512x256xbf16>
    %cst_36 = arith.constant dense<0.000000e+00> : vector<32x256xf32>
    %27 = tpu.matmul %24, %26, %cst_36 {dimension_numbers = #tpu.dot_dimension_numbers<[1], [0], [0], [1], [0, 0, 1, 1], [], []>} : vector<32x512xbf16>, vector<512x256xbf16>, vector<32x256xf32> -> vector<32x256xf32>
    %28 = arith.addf %23, %27 : vector<32x256xf32>
    %c3 = arith.constant 3 : index
    %c0_37 = arith.constant 0 : index
    %29 = vector.load %arg10[%c3, %c0_37] : memref<36x512xbf16, #tpu.memory_space<vmem>>, vector<32x512xbf16>
    %c3_38 = arith.constant 3 : index
    %c0_39 = arith.constant 0 : index
    %c0_40 = arith.constant 0 : index
    %30 = vector.load %arg3[%c3_38, %c0_39, %c0_40] : memref<5x512x256xbf16, #tpu.memory_space<vmem>>, vector<1x512x256xbf16>
    %31 = vector.shape_cast %30 : vector<1x512x256xbf16> to vector<512x256xbf16>
    %cst_41 = arith.constant dense<0.000000e+00> : vector<32x256xf32>
    %32 = tpu.matmul %29, %31, %cst_41 {dimension_numbers = #tpu.dot_dimension_numbers<[1], [0], [0], [1], [0, 0, 1, 1], [], []>} : vector<32x512xbf16>, vector<512x256xbf16>, vector<32x256xf32> -> vector<32x256xf32>
    %33 = arith.addf %28, %32 : vector<32x256xf32>
    %c4 = arith.constant 4 : index
    %c0_42 = arith.constant 0 : index
    %34 = vector.load %arg10[%c4, %c0_42] : memref<36x512xbf16, #tpu.memory_space<vmem>>, vector<32x512xbf16>
    %c4_43 = arith.constant 4 : index
    %c0_44 = arith.constant 0 : index
    %c0_45 = arith.constant 0 : index
    %35 = vector.load %arg3[%c4_43, %c0_44, %c0_45] : memref<5x512x256xbf16, #tpu.memory_space<vmem>>, vector<1x512x256xbf16>
    %36 = vector.shape_cast %35 : vector<1x512x256xbf16> to vector<512x256xbf16>
    %cst_46 = arith.constant dense<0.000000e+00> : vector<32x256xf32>
    %37 = tpu.matmul %34, %36, %cst_46 {dimension_numbers = #tpu.dot_dimension_numbers<[1], [0], [0], [1], [0, 0, 1, 1], [], []>} : vector<32x512xbf16>, vector<512x256xbf16>, vector<32x256xf32> -> vector<32x256xf32>
    %38 = arith.addf %33, %37 : vector<32x256xf32>
    %c0_47 = arith.constant 0 : index
    %c0_48 = arith.constant 0 : index
    %39 = vector.load %arg11[%c0_47, %c0_48] : memref<36x64xbf16, #tpu.memory_space<vmem>>, vector<32x64xbf16>
    %c1_49 = arith.constant 1 : index
    %c0_50 = arith.constant 0 : index
    %40 = vector.load %arg11[%c1_49, %c0_50] : memref<36x64xbf16, #tpu.memory_space<vmem>>, vector<32x64xbf16>
    %c2_51 = arith.constant 2 : index
    %c0_52 = arith.constant 0 : index
    %41 = vector.load %arg11[%c2_51, %c0_52] : memref<36x64xbf16, #tpu.memory_space<vmem>>, vector<32x64xbf16>
    %c3_53 = arith.constant 3 : index
    %c0_54 = arith.constant 0 : index
    %42 = vector.load %arg11[%c3_53, %c0_54] : memref<36x64xbf16, #tpu.memory_space<vmem>>, vector<32x64xbf16>
    %c4_55 = arith.constant 4 : index
    %c0_56 = arith.constant 0 : index
    %43 = vector.load %arg11[%c4_55, %c0_56] : memref<36x64xbf16, #tpu.memory_space<vmem>>, vector<32x64xbf16>
    %44 = tpu.concatenate %39, %40, %41, %42, %43 in 1 : vector<32x64xbf16>, vector<32x64xbf16>, vector<32x64xbf16>, vector<32x64xbf16>, vector<32x64xbf16> -> vector<32x320xbf16>
    %c0_57 = arith.constant 0 : index
    %c0_58 = arith.constant 0 : index
    %45 = vector.load %arg4[%c0_57, %c0_58] : memref<320x256xbf16, #tpu.memory_space<vmem>>, vector<320x256xbf16>
    %cst_59 = arith.constant dense<0.000000e+00> : vector<32x256xf32>
    %46 = tpu.matmul %44, %45, %cst_59 {dimension_numbers = #tpu.dot_dimension_numbers<[1], [0], [0], [1], [0, 0, 1, 1], [], []>} : vector<32x320xbf16>, vector<320x256xbf16>, vector<32x256xf32> -> vector<32x256xf32>
    %47 = arith.addf %38, %46 : vector<32x256xf32>
    %c0_60 = arith.constant 0 : index
    %c0_61 = arith.constant 0 : index
    %48 = vector.load %arg5[%c0_60, %c0_61] : memref<1x256xf32, #tpu.memory_space<vmem>>, vector<1x256xf32>
    %49 = vector.broadcast %48 : vector<1x256xf32> to vector<32x256xf32>
    %50 = arith.addf %47, %49 : vector<32x256xf32>
    %cst_62 = arith.constant 0.000000e+00 : f32
    %51 = vector.broadcast %cst_62 : f32 to vector<32x256xf32>
    %52 = arith.maximumf %50, %51 : vector<32x256xf32>
    %53 = arith.truncf %52 : vector<32x256xf32> to vector<32x256xbf16>
    %c1_63 = arith.constant 1 : index
    %c0_64 = arith.constant 0 : index
    %54 = vector.load %arg12[%c1_63, %c0_64] : memref<34x256xbf16, #tpu.memory_space<vmem>>, vector<32x256xbf16>
    tpu.vector_store %arg12[%c1_63, %c0_64], %53 {strides = array<i32>} : memref<34x256xbf16, #tpu.memory_space<vmem>>, vector<32x256xbf16>,
    %c0_65 = arith.constant 0 : index
    %c0_66 = arith.constant 0 : index
    %55 = vector.load %arg12[%c0_65, %c0_66] : memref<34x256xbf16, #tpu.memory_space<vmem>>, vector<32x256xbf16>
    %c0_67 = arith.constant 0 : index
    %c0_68 = arith.constant 0 : index
    %c0_69 = arith.constant 0 : index
    %56 = vector.load %arg6[%c0_67, %c0_68, %c0_69] : memref<3x256x64xbf16, #tpu.memory_space<vmem>>, vector<1x256x64xbf16>
    %57 = vector.shape_cast %56 : vector<1x256x64xbf16> to vector<256x64xbf16>
    %cst_70 = arith.constant dense<0.000000e+00> : vector<32x64xf32>
    %58 = tpu.matmul %55, %57, %cst_70 {dimension_numbers = #tpu.dot_dimension_numbers<[1], [0], [0], [1], [0, 0, 1, 1], [], []>} : vector<32x256xbf16>, vector<256x64xbf16>, vector<32x64xf32> -> vector<32x64xf32>
    %c1_71 = arith.constant 1 : index
    %c0_72 = arith.constant 0 : index
    %59 = vector.load %arg12[%c1_71, %c0_72] : memref<34x256xbf16, #tpu.memory_space<vmem>>, vector<32x256xbf16>
    %c1_73 = arith.constant 1 : index
    %c0_74 = arith.constant 0 : index
    %c0_75 = arith.constant 0 : index
    %60 = vector.load %arg6[%c1_73, %c0_74, %c0_75] : memref<3x256x64xbf16, #tpu.memory_space<vmem>>, vector<1x256x64xbf16>
    %61 = vector.shape_cast %60 : vector<1x256x64xbf16> to vector<256x64xbf16>
    %cst_76 = arith.constant dense<0.000000e+00> : vector<32x64xf32>
    %62 = tpu.matmul %59, %61, %cst_76 {dimension_numbers = #tpu.dot_dimension_numbers<[1], [0], [0], [1], [0, 0, 1, 1], [], []>} : vector<32x256xbf16>, vector<256x64xbf16>, vector<32x64xf32> -> vector<32x64xf32>
    %63 = arith.addf %58, %62 : vector<32x64xf32>
    %c2_77 = arith.constant 2 : index
    %c0_78 = arith.constant 0 : index
    %64 = vector.load %arg12[%c2_77, %c0_78] : memref<34x256xbf16, #tpu.memory_space<vmem>>, vector<32x256xbf16>
    %c2_79 = arith.constant 2 : index
    %c0_80 = arith.constant 0 : index
    %c0_81 = arith.constant 0 : index
    %65 = vector.load %arg6[%c2_79, %c0_80, %c0_81] : memref<3x256x64xbf16, #tpu.memory_space<vmem>>, vector<1x256x64xbf16>
    %66 = vector.shape_cast %65 : vector<1x256x64xbf16> to vector<256x64xbf16>
    %cst_82 = arith.constant dense<0.000000e+00> : vector<32x64xf32>
    %67 = tpu.matmul %64, %66, %cst_82 {dimension_numbers = #tpu.dot_dimension_numbers<[1], [0], [0], [1], [0, 0, 1, 1], [], []>} : vector<32x256xbf16>, vector<256x64xbf16>, vector<32x64xf32> -> vector<32x64xf32>
    %68 = arith.addf %63, %67 : vector<32x64xf32>
    %c0_83 = arith.constant 0 : index
    %c0_84 = arith.constant 0 : index
    %69 = vector.load %arg7[%c0_83, %c0_84] : memref<1x64xf32, #tpu.memory_space<vmem>>, vector<1x64xf32>
    %70 = vector.broadcast %69 : vector<1x64xf32> to vector<32x64xf32>
    %71 = arith.addf %68, %70 : vector<32x64xf32>
    %c1_85 = arith.constant 1 : index
    %72 = memref.load %arg8[%c1_85] : memref<2xf32, #tpu.memory_space<smem>>
    %cst_86 = arith.constant 0.000000e+00 : f32
    %73 = vector.broadcast %cst_86 : f32 to vector<32x64xf32>
    %74 = arith.cmpf oge, %71, %73 : vector<32x64xf32>
    %75 = vector.broadcast %72 : f32 to vector<32x64xf32>
    %76 = arith.mulf %75, %71 : vector<32x64xf32>
    %77 = arith.select %74, %71, %76 : vector<32x64xi1>, vector<32x64xf32>
    %78 = vector.shape_cast %77 : vector<32x64xf32> to vector<1x32x64xf32>
    %c0_87 = arith.constant 0 : index
    %c0_88 = arith.constant 0 : index
    %c0_89 = arith.constant 0 : index
    %79 = vector.load %arg9[%c0_87, %c0_88, %c0_89] : memref<1x32x64xf32, #tpu.memory_space<vmem>>, vector<1x32x64xf32>
    tpu.vector_store %arg9[%c0_87, %c0_88, %c0_89], %78 {strides = array<i32>} : memref<1x32x64xf32, #tpu.memory_space<vmem>>, vector<1x32x64xf32>,
    return
  }
  func.func @transform_0(%arg0: i32) -> (i32, i32, i32) {
    %c0_i32 = arith.constant 0 : i32
    %c0_i32_0 = arith.constant 0 : i32
    %c0_i32_1 = arith.constant 0 : i32
    return %arg0, %c0_i32, %c0_i32_0 : i32, i32, i32
  }
  func.func @transform_1(%arg0: i32) -> (i32, i32, i32) {
    %c0_i32 = arith.constant 0 : i32
    %c0_i32_0 = arith.constant 0 : i32
    %c0_i32_1 = arith.constant 0 : i32
    return %arg0, %c0_i32, %c0_i32_0 : i32, i32, i32
  }
  func.func @transform_2(%arg0: i32) -> (i32, i32, i32) {
    %c0_i32 = arith.constant 0 : i32
    %c0_i32_0 = arith.constant 0 : i32
    %c0_i32_1 = arith.constant 0 : i32
    %c0_i32_2 = arith.constant 0 : i32
    return %c0_i32, %c0_i32_0, %c0_i32_1 : i32, i32, i32
  }
  func.func @transform_3(%arg0: i32) -> (i32, i32) {
    %c0_i32 = arith.constant 0 : i32
    %c0_i32_0 = arith.constant 0 : i32
    %c0_i32_1 = arith.constant 0 : i32
    return %c0_i32, %c0_i32_0 : i32, i32
  }
  func.func @transform_4(%arg0: i32) -> (i32, i32) {
    %c0_i32 = arith.constant 0 : i32
    %c0_i32_0 = arith.constant 0 : i32
    %c0_i32_1 = arith.constant 0 : i32
    return %c0_i32, %c0_i32_0 : i32, i32
  }
  func.func @transform_5(%arg0: i32) -> (i32, i32, i32) {
    %c0_i32 = arith.constant 0 : i32
    %c0_i32_0 = arith.constant 0 : i32
    %c0_i32_1 = arith.constant 0 : i32
    %c0_i32_2 = arith.constant 0 : i32
    return %c0_i32, %c0_i32_0, %c0_i32_1 : i32, i32, i32
  }
  func.func @transform_6(%arg0: i32) -> (i32, i32) {
    %c0_i32 = arith.constant 0 : i32
    %c0_i32_0 = arith.constant 0 : i32
    %c0_i32_1 = arith.constant 0 : i32
    return %c0_i32, %c0_i32_0 : i32, i32
  }
  func.func @transform_7(%arg0: i32) -> i32 {
    %c0_i32 = arith.constant 0 : i32
    %c0_i32_0 = arith.constant 0 : i32
    return %c0_i32 : i32
  }
  func.func @transform_8(%arg0: i32) -> (i32, i32, i32) {
    %c0_i32 = arith.constant 0 : i32
    %c0_i32_0 = arith.constant 0 : i32
    %c0_i32_1 = arith.constant 0 : i32
    return %arg0, %c0_i32, %c0_i32_0 : i32, i32, i32
  }
}

</mosaic_0001>

<llo_original>
// kernel: _lambda_.3
$region0: #{_lambda_.3}
  #allocation0 [shape = 'u32[]', space=smem, size = 0x4, offset = 0x4, fixed_abs, tag = 'smem constant byte address 0x4 - core index']
  #allocation1 [shape = 'u32[144,128]{1,0:T(1,128)}', space=vmem, size = 0x12000, scoped, tag = 'internal scratch']
  #allocation2 [shape = 'bf16[16,16]{1,0:T(16,128)(2,1)}', space=vmem, size = 0x1000, scoped, tag = 'scratch operand']
  #allocation3 [shape = 'bf16[10,128]{1,0:T(8,128)(2,1)}', space=vmem, size = 0x1000, scoped, tag = 'scratch operand']
  %s0 = inlined_call_operand.hbm [shape: bf16[2,8,16], index: 0, kind: input, shape index: {}]
  %s1 = inlined_call_operand.hbm [shape: bf16[144,128], index: 1, kind: input, shape index: {}]
  %s2 = inlined_call_operand.hbm [shape: f32[1,128], index: 2, kind: input, shape index: {}]
  %s3 = inlined_call_operand.hbm [shape: bf16[5,3,128,128], index: 3, kind: input, shape index: {}]
  %s4 = inlined_call_operand.hbm [shape: f32[5,128], index: 4, kind: input, shape index: {}]
  %s5 = inlined_call_operand.hbm [shape: bf16[3,128,512], index: 5, kind: input, shape index: {}]
  %s6 = inlined_call_operand.hbm [shape: f32[1,512], index: 6, kind: input, shape index: {}]
  %s7 = inlined_call_operand.hbm [shape: f32[4], index: 7, kind: input, shape index: {}]
  %s8 = inlined_call_operand.hbm [shape: bf16[2,8,512], index: 8, kind: output, shape index: {}]
  %s9 = sld [smem:[#allocation0]]
  $region97: #{_lambda_.3} parent=0
    _
  %s11 = ssub.s32 1, %s9
  %s12 = scalar_select 0, %s11, %s9
  $region1: #{_lambda_.3} parent=0
    #allocation4 [shape = 'u8[4096]{0}', space=vmem, size = 0x1000, scoped, tag = 'input window, operand 0']
    #allocation5 [shape = 's32[2]{0}', space=sflag, size = 0x8, scoped, tag = 'scoped memory for _lambda_.3']
    #allocation6 [shape = 's32[2]{0}', space=sflag, size = 0x8, scoped, tag = 'scoped memory for _lambda_.3']
    #allocation7 [shape = 's32[2]{0}', space=sflag, size = 0x8, scoped, tag = 'scoped memory for _lambda_.3']
    #allocation8 [shape = 'u8[36864]{0}', space=vmem, size = 0x9000, scoped, tag = 'input window, operand 1, single buffered']
    #allocation9 [shape = 's32[1]{0}', space=sflag, size = 0x4, scoped, tag = 'scoped memory for _lambda_.3']
    #allocation10 [shape = 'u8[512]{0}', space=vmem, size = 0x400, scoped, tag = 'input window, operand 2, single buffered']
    #allocation11 [shape = 'u8[491520]{0}', space=vmem, size = 0x78000, scoped, tag = 'input window, operand 3, single buffered']
    #allocation12 [shape = 's32[1]{0}', space=sflag, size = 0x4, scoped, tag = 'scoped memory for _lambda_.3']
    #allocation13 [shape = 'u8[4096]{0}', space=vmem, size = 0x1000, scoped, tag = 'input window, operand 4, single buffered']
    #allocation14 [shape = 'u8[393216]{0}', space=vmem, size = 0x60000, scoped, tag = 'input window, operand 5, single buffered']
    #allocation15 [shape = 's32[1]{0}', space=sflag, size = 0x4, scoped, tag = 'scoped memory for _lambda_.3']
    #allocation16 [shape = 'u8[2048]{0}', space=vmem, size = 0x800, scoped, tag = 'input window, operand 6, single buffered']
    #allocation17 [shape = 'u8[512]{0}', space=smem, size = 0x200, scoped, tag = 'input window, operand 7, single buffered']
    #allocation18 [shape = 'u8[16384]{0}', space=vmem, size = 0x4000, scoped, tag = 'output window, operand 0']
    %13 = vsyncpa [#allocation5], 0
    %s14 = scalar_lea.sflag [#allocation5], 1
    %15 = vsyncpa %s14, 0
    %16 = vsyncpa [#allocation9], 0
    %17 = vsyncpa [#allocation12], 0
    %18 = vsyncpa [#allocation15], 0
    %19 = vsyncpa [#allocation7], 0
    %20 = vsyncpa [#allocation6], 0
    %s21 = scalar_lea.sflag [#allocation6], 1
    %22 = vsyncpa %s21, 0
    loop: start=0, step=1, limit=4
    $region2: #{_lambda_.3} parent=1 // loop_pre_header
      _
    $region3: #{_lambda_.3} parent=1 // loop_header
      %s24 = sphi 0, %s28
      %p25 = scmp.ge.s32.totalorder %s24, 4
      %s34 = sphi 0, %s36
      %s37 = sphi 0, %s34
      %s38 = sphi 0, %s37
      %s54 = sphi 0, %s38
      %s58 = sphi 0, %s58
      %s60 = sphi 0, %s58
      %s61 = sphi 0, %s60
      %s75 = sphi 0, %s61
      %s79 = sphi 0, %s79
      %s81 = sphi 0, %s79
      %s82 = sphi 0, %s81
      %s96 = sphi 0, %s82
      %s100 = sphi 0, %s100
      %s102 = sphi 0, %s100
      %s103 = sphi 0, %s102
      %s117 = sphi 0, %s103
      %s121 = sphi 0, %s121
      %s123 = sphi 0, %s121
      %s124 = sphi 0, %s123
      %s138 = sphi 0, %s124
      %s142 = sphi 0, %s142
      %s144 = sphi 0, %s142
      %s145 = sphi 0, %s144
      %s159 = sphi 0, %s145
      %s163 = sphi 0, %s163
      %s165 = sphi 0, %s163
      %s166 = sphi 0, %s165
      %s180 = sphi 0, %s166
      %s184 = sphi 0, %s184
      %s186 = sphi 0, %s184
      %s187 = sphi 0, %s186
      %s201 = sphi 0, %s187
      %s207 = sphi 0, %s209
      %s210 = sphi 0, %s207
      %s211 = sphi 0, %s210
      %s227 = sphi 0, %s211
    $region4: #{_lambda_.3} parent=1 // loop_header_branch
      %27 = sbr.rel (%p25) target = $region8
    $region5: #{_lambda_.3} parent=1 // loop_body
      %s29 = ssub.s32 %s24, 1
      %s30 = ssub.s32 %s24, 2
      %s31 = sadd.s32 %s24, 1
      %s32 = ssub.s32 %s24, %s31
      %p33 = scmp.eq.s32.totalorder %s32, 0
      %s35 = sadd.s32 %s34, 1
      %s36 = scalar_select %p33, %s34, %s35
      %p39 = pneg %p33
      %p40 = scmp.eq.s32.totalorder %s24, 1
      %p41 = por %p39, %p40
      %p42 = scmp.ne.s32.totalorder %s34, %s37
      %p43 = scmp.eq.s32.totalorder %s24, 0
      %p44 = por %p42, %p43
      %p45 = scmp.ne.s32.totalorder %s34, %s37
      %p46 = scmp.eq.s32.totalorder %s29, 1
      %p47 = por %p45, %p46
      %p48 = scmp.ne.s32.totalorder %s37, %s38
      %p49 = scmp.eq.s32.totalorder %s29, 0
      %p50 = por %p48, %p49
      %p51 = scmp.ne.s32.totalorder %s37, %s38
      %p52 = scmp.eq.s32.totalorder %s30, 1
      %p53 = por %p51, %p52
      %p55 = scmp.ne.s32.totalorder %s38, %s54
      %p56 = scmp.eq.s32.totalorder %s30, 0
      %p57 = por %p55, %p56
      %s59 = sadd.s32 %s58, 1
      %p62 = scmp.eq.s32.totalorder %s24, 1
      %p63 = scmp.ne.s32.totalorder %s58, %s60
      %p64 = scmp.eq.s32.totalorder %s24, 0
      %p65 = por %p63, %p64
      %p66 = scmp.ne.s32.totalorder %s58, %s60
      %p67 = scmp.eq.s32.totalorder %s29, 1
      %p68 = por %p66, %p67
      %p69 = scmp.ne.s32.totalorder %s60, %s61
      %p70 = scmp.eq.s32.totalorder %s29, 0
      %p71 = por %p69, %p70
      %p72 = scmp.ne.s32.totalorder %s60, %s61
      %p73 = scmp.eq.s32.totalorder %s30, 1
      %p74 = por %p72, %p73
      %p76 = scmp.ne.s32.totalorder %s61, %s75
      %p77 = scmp.eq.s32.totalorder %s30, 0
      %p78 = por %p76, %p77
      %s80 = sadd.s32 %s79, 1
      %p83 = scmp.eq.s32.totalorder %s24, 1
      %p84 = scmp.ne.s32.totalorder %s79, %s81
      %p85 = scmp.eq.s32.totalorder %s24, 0
      %p86 = por %p84, %p85
      %p87 = scmp.ne.s32.totalorder %s79, %s81
      %p88 = scmp.eq.s32.totalorder %s29, 1
      %p89 = por %p87, %p88
      %p90 = scmp.ne.s32.totalorder %s81, %s82
      %p91 = scmp.eq.s32.totalorder %s29, 0
      %p92 = por %p90, %p91
      %p93 = scmp.ne.s32.totalorder %s81, %s82
      %p94 = scmp.eq.s32.totalorder %s30, 1
      %p95 = por %p93, %p94
      %p97 = scmp.ne.s32.totalorder %s82, %s96
      %p98 = scmp.eq.s32.totalorder %s30, 0
      %p99 = por %p97, %p98
      %s101 = sadd.s32 %s100, 1
      %p104 = scmp.eq.s32.totalorder %s24, 1
      %p105 = scmp.ne.s32.totalorder %s100, %s102
      %p106 = scmp.eq.s32.totalorder %s24, 0
      %p107 = por %p105, %p106
      %p108 = scmp.ne.s32.totalorder %s100, %s102
      %p109 = scmp.eq.s32.totalorder %s29, 1
      %p110 = por %p108, %p109
      %p111 = scmp.ne.s32.totalorder %s102, %s103
      %p112 = scmp.eq.s32.totalorder %s29, 0
      %p113 = por %p111, %p112
      %p114 = scmp.ne.s32.totalorder %s102, %s103
      %p115 = scmp.eq.s32.totalorder %s30, 1
      %p116 = por %p114, %p115
      %p118 = scmp.ne.s32.totalorder %s103, %s117
      %p119 = scmp.eq.s32.totalorder %s30, 0
      %p120 = por %p118, %p119
      %s122 = sadd.s32 %s121, 1
      %p125 = scmp.eq.s32.totalorder %s24, 1
      %p126 = scmp.ne.s32.totalorder %s121, %s123
      %p127 = scmp.eq.s32.totalorder %s24, 0
      %p128 = por %p126, %p127
      %p129 = scmp.ne.s32.totalorder %s121, %s123
      %p130 = scmp.eq.s32.totalorder %s29, 1
      %p131 = por %p129, %p130
      %p132 = scmp.ne.s32.totalorder %s123, %s124
      %p133 = scmp.eq.s32.totalorder %s29, 0
      %p134 = por %p132, %p133
      %p135 = scmp.ne.s32.totalorder %s123, %s124
      %p136 = scmp.eq.s32.totalorder %s30, 1
      %p137 = por %p135, %p136
      %p139 = scmp.ne.s32.totalorder %s124, %s138
      %p140 = scmp.eq.s32.totalorder %s30, 0
      %p141 = por %p139, %p140
      %s143 = sadd.s32 %s142, 1
      %p146 = scmp.eq.s32.totalorder %s24, 1
      %p147 = scmp.ne.s32.totalorder %s142, %s144
      %p148 = scmp.eq.s32.totalorder %s24, 0
      %p149 = por %p147, %p148
      %p150 = scmp.ne.s32.totalorder %s142, %s144
      %p151 = scmp.eq.s32.totalorder %s29, 1
      %p152 = por %p150, %p151
      %p153 = scmp.ne.s32.totalorder %s144, %s145
      %p154 = scmp.eq.s32.totalorder %s29, 0
      %p155 = por %p153, %p154
      %p156 = scmp.ne.s32.totalorder %s144, %s145
      %p157 = scmp.eq.s32.totalorder %s30, 1
      %p158 = por %p156, %p157
      %p160 = scmp.ne.s32.totalorder %s145, %s159
      %p161 = scmp.eq.s32.totalorder %s30, 0
      %p162 = por %p160, %p161
      %s164 = sadd.s32 %s163, 1
      %p167 = scmp.eq.s32.totalorder %s24, 1
      %p168 = scmp.ne.s32.totalorder %s163, %s165
      %p169 = scmp.eq.s32.totalorder %s24, 0
      %p170 = por %p168, %p169
      %p171 = scmp.ne.s32.totalorder %s163, %s165
      %p172 = scmp.eq.s32.totalorder %s29, 1
      %p173 = por %p171, %p172
      %p174 = scmp.ne.s32.totalorder %s165, %s166
      %p175 = scmp.eq.s32.totalorder %s29, 0
      %p176 = por %p174, %p175
      %p177 = scmp.ne.s32.totalorder %s165, %s166
      %p178 = scmp.eq.s32.totalorder %s30, 1
      %p179 = por %p177, %p178
      %p181 = scmp.ne.s32.totalorder %s166, %s180
      %p182 = scmp.eq.s32.totalorder %s30, 0
      %p183 = por %p181, %p182
      %s185 = sadd.s32 %s184, 1
      %p188 = scmp.eq.s32.totalorder %s24, 1
      %p189 = scmp.ne.s32.totalorder %s184, %s186
      %p190 = scmp.eq.s32.totalorder %s24, 0
      %p191 = por %p189, %p190
      %p192 = scmp.ne.s32.totalorder %s184, %s186
      %p193 = scmp.eq.s32.totalorder %s29, 1
      %p194 = por %p192, %p193
      %p195 = scmp.ne.s32.totalorder %s186, %s187
      %p196 = scmp.eq.s32.totalorder %s29, 0
      %p197 = por %p195, %p196
      %p198 = scmp.ne.s32.totalorder %s186, %s187
      %p199 = scmp.eq.s32.totalorder %s30, 1
      %p200 = por %p198, %p199
      %p202 = scmp.ne.s32.totalorder %s187, %s201
      %p203 = scmp.eq.s32.totalorder %s30, 0
      %p204 = por %p202, %p203
      %s205 = ssub.s32 %s24, %s31
      %p206 = scmp.eq.s32.totalorder %s205, 0
      %s208 = sadd.s32 %s207, 1
      %s209 = scalar_select %p206, %s207, %s208
      %p212 = pneg %p206
      %p213 = scmp.eq.s32.totalorder %s24, 1
      %p214 = por %p212, %p213
      %p215 = scmp.ne.s32.totalorder %s207, %s210
      %p216 = scmp.eq.s32.totalorder %s24, 0
      %p217 = por %p215, %p216
      %p218 = scmp.ne.s32.totalorder %s207, %s210
      %p219 = scmp.eq.s32.totalorder %s29, 1
      %p220 = por %p218, %p219
      %p221 = scmp.ne.s32.totalorder %s210, %s211
      %p222 = scmp.eq.s32.totalorder %s29, 0
      %p223 = por %p221, %p222
      %p224 = scmp.ne.s32.totalorder %s210, %s211
      %p225 = scmp.eq.s32.totalorder %s30, 1
      %p226 = por %p224, %p225
      %p228 = scmp.ne.s32.totalorder %s211, %s227
      %p229 = scmp.eq.s32.totalorder %s30, 0
      %p230 = por %p228, %p229
      %p231 = scmp.le.s32.totalorder 1, %s24
      %p232 = scmp.lt.s32.totalorder %s24, 3
      %p233 = pnand %p231, %p232
      %p234 = pneg %p233
      // Predicated region
      $region9: #{_lambda_.3} parent=5 // pred_check
        _
      $region10: #{_lambda_.3} parent=5 // pred_check_branch
        %236 = sbr.rel (%p233) target = $region12
      $region11: #{_lambda_.3} parent=5 // pred_region
        %s237 = ssub.s32 %s24, 1
        // Predicated region
        $region13: #{_lambda_.3} parent=11 // pred_check
          %p238 = pneg %p71
        $region14: #{_lambda_.3} parent=11 // pred_check_branch
          %240 = sbr.rel (%p238) target = $region16
        $region15: #{_lambda_.3} parent=11 // pred_region
          %s242 = ssub.s32 1152, 1152
          %243 = vsyncadd [#allocation9], %s242
          %s244 = sshll.u32 [#allocation8], 4
          %s245 = int_to_ptr.vmem [resolvable:$true] %s244
          %250 = dma.hbm_to_vmem [thread:$0]  %s1, 1152, %s245, [#allocation9], 64, 64, 4
        $region16: #{_lambda_.3} parent=11 // pred_fallthru
          _
        // Predicated region
        $region17: #{_lambda_.3} parent=11 // pred_check
          %p251 = pneg %p92
        $region18: #{_lambda_.3} parent=11 // pred_check_branch
          %253 = sbr.rel (%p251) target = $region20
        $region19: #{_lambda_.3} parent=11 // pred_region
          %s255 = ssub.s32 16, 16
          %256 = vsyncadd [#allocation9], %s255
          %s258 = sshll.u32 [#allocation10], 4
          %s259 = int_to_ptr.vmem [resolvable:$true] %s258
          %261 = dma.hbm_to_vmem [thread:$0]  %s2, 16, %s259, [#allocation9]
        $region20: #{_lambda_.3} parent=11 // pred_fallthru
          _
        // Predicated region
        $region21: #{_lambda_.3} parent=11 // pred_check
          %p262 = pneg %p113
        $region22: #{_lambda_.3} parent=11 // pred_check_branch
          %264 = sbr.rel (%p262) target = $region24
        $region23: #{_lambda_.3} parent=11 // pred_region
          %s266 = ssub.s32 15360, 15360
          %267 = vsyncadd [#allocation12], %s266
          %s268 = sshll.u32 [#allocation11], 4
          %s269 = int_to_ptr.vmem [resolvable:$true] %s268
          %274 = dma.hbm_to_vmem [thread:$0]  %s3, 15360, %s269, [#allocation12], 64, 64, 4
        $region24: #{_lambda_.3} parent=11 // pred_fallthru
          _
        // Predicated region
        $region25: #{_lambda_.3} parent=11 // pred_check
          %p275 = pneg %p134
        $region26: #{_lambda_.3} parent=11 // pred_check_branch
          %277 = sbr.rel (%p275) target = $region28
        $region27: #{_lambda_.3} parent=11 // pred_region
          %s279 = ssub.s32 128, 128
          %280 = vsyncadd [#allocation12], %s279
          %s282 = sshll.u32 [#allocation13], 4
          %s283 = int_to_ptr.vmem [resolvable:$true] %s282
          %285 = dma.hbm_to_vmem [thread:$0]  %s4, 128, %s283, [#allocation12]
        $region28: #{_lambda_.3} parent=11 // pred_fallthru
          _
        // Predicated region
        $region29: #{_lambda_.3} parent=11 // pred_check
          %p286 = pneg %p155
        $region30: #{_lambda_.3} parent=11 // pred_check_branch
          %288 = sbr.rel (%p286) target = $region32
        $region31: #{_lambda_.3} parent=11 // pred_region
          %s290 = ssub.s32 12288, 12288
          %291 = vsyncadd [#allocation15], %s290
          %s292 = sshll.u32 [#allocation14], 4
          %s293 = int_to_ptr.vmem [resolvable:$true] %s292
          %298 = dma.hbm_to_vmem [thread:$0]  %s5, 12288, %s293, [#allocation15], 256, 256, 16
        $region32: #{_lambda_.3} parent=11 // pred_fallthru
          _
        // Predicated region
        $region33: #{_lambda_.3} parent=11 // pred_check
          %p299 = pneg %p176
        $region34: #{_lambda_.3} parent=11 // pred_check_branch
          %301 = sbr.rel (%p299) target = $region36
        $region35: #{_lambda_.3} parent=11 // pred_region
          %s303 = ssub.s32 64, 64
          %304 = vsyncadd [#allocation15], %s303
          %s306 = sshll.u32 [#allocation16], 4
          %s307 = int_to_ptr.vmem [resolvable:$true] %s306
          %309 = dma.hbm_to_vmem [thread:$0]  %s6, 64, %s307, [#allocation15]
        $region36: #{_lambda_.3} parent=11 // pred_fallthru
          _
        // Predicated region
        $region37: #{_lambda_.3} parent=11 // pred_check
          %p310 = pneg %p197
        $region38: #{_lambda_.3} parent=11 // pred_check_branch
          %312 = sbr.rel (%p310) target = $region40
        $region39: #{_lambda_.3} parent=11 // pred_region
          %s314 = ssub.s32 16, 16
          %315 = vsyncadd [#allocation7], %s314
          %318 = dma.hbm_to_smem %s7, 16, [#allocation17], [#allocation7]
        $region40: #{_lambda_.3} parent=11 // pred_fallthru
          _
      $region12: #{_lambda_.3} parent=5 // pred_fallthru
        _
      %p319 = scmp.lt.s32.totalorder %s24, 2
      // Predicated region
      $region41: #{_lambda_.3} parent=5 // pred_check
        %p320 = pneg %p319
      $region42: #{_lambda_.3} parent=5 // pred_check_branch
        %322 = sbr.rel (%p320) target = $region44
      $region43: #{_lambda_.3} parent=5 // pred_region
        // Predicated region
        $region45: #{_lambda_.3} parent=43 // pred_check
          %p323 = pneg %p44
        $region46: #{_lambda_.3} parent=43 // pred_check_branch
          %325 = sbr.rel (%p323) target = $region48
        $region47: #{_lambda_.3} parent=43 // pred_region
          %s326 = sand.u32 %s34, 1
          %s327 = scalar_lea.sflag [#allocation5], %s326
          %s328 = sand.u32 %s34, 1
          %s329 = smul.addr %s328, 4
          %s330 = scalar_lea.vmem [#allocation4], %s329
          %s332 = ssub.s32 64, 64
          %333 = vsyncadd %s327, %s332
          %s334 = smul.addr %s24, 64
          %s335 = scalar_lea.hbm %s0, %s334
          %s337 = sshll.u32 %s330, 4
          %s338 = int_to_ptr.vmem [resolvable:$true] %s337
          %340 = dma.hbm_to_vmem [thread:$0]  %s335, 64, %s338, %s327
        $region48: #{_lambda_.3} parent=43 // pred_fallthru
          _
      $region44: #{_lambda_.3} parent=5 // pred_fallthru
        _
      %p341 = scmp.le.s32.totalorder 1, %s24
      %p342 = scmp.lt.s32.totalorder %s24, 3
      %p343 = pnand %p341, %p342
      %p344 = pneg %p343
      // Predicated region
      $region49: #{_lambda_.3} parent=5 // pred_check
        _
      $region50: #{_lambda_.3} parent=5 // pred_check_branch
        %346 = sbr.rel (%p343) target = $region52
      $region51: #{_lambda_.3} parent=5 // pred_region
        %s347 = ssub.s32 %s24, 1
        %s348 = sand.u32 %s37, 1
        %s349 = scalar_lea.sflag [#allocation5], %s348
        %s350 = sand.u32 %s37, 1
        %s351 = smul.addr %s350, 4
        %s352 = scalar_lea.vmem [#allocation4], %s351
        // Predicated region
        $region53: #{_lambda_.3} parent=51 // pred_check
          %p353 = pneg %p50
        $region54: #{_lambda_.3} parent=51 // pred_check_branch
          %355 = sbr.rel (%p353) target = $region56
        $region55: #{_lambda_.3} parent=51 // pred_region
          %356 = dma.done %s349, 64
        $region56: #{_lambda_.3} parent=51 // pred_fallthru
          _
        // Predicated region
        $region57: #{_lambda_.3} parent=51 // pred_check
          %p357 = pneg %p71
        $region58: #{_lambda_.3} parent=51 // pred_check_branch
          %359 = sbr.rel (%p357) target = $region60
        $region59: #{_lambda_.3} parent=51 // pred_region
          %360 = dma.done [#allocation9], 1152
        $region60: #{_lambda_.3} parent=51 // pred_fallthru
          _
        // Predicated region
        $region61: #{_lambda_.3} parent=51 // pred_check
          %p361 = pneg %p92
        $region62: #{_lambda_.3} parent=51 // pred_check_branch
          %363 = sbr.rel (%p361) target = $region64
        $region63: #{_lambda_.3} parent=51 // pred_region
          %364 = dma.done [#allocation9], 16
        $region64: #{_lambda_.3} parent=51 // pred_fallthru
          _
        // Predicated region
        $region65: #{_lambda_.3} parent=51 // pred_check
          %p365 = pneg %p113
        $region66: #{_lambda_.3} parent=51 // pred_check_branch
          %367 = sbr.rel (%p365) target = $region68
        $region67: #{_lambda_.3} parent=51 // pred_region
          %368 = dma.done [#allocation12], 15360
        $region68: #{_lambda_.3} parent=51 // pred_fallthru
          _
        // Predicated region
        $region69: #{_lambda_.3} parent=51 // pred_check
          %p369 = pneg %p134
        $region70: #{_lambda_.3} parent=51 // pred_check_branch
          %371 = sbr.rel (%p369) target = $region72
        $region71: #{_lambda_.3} parent=51 // pred_region
          %372 = dma.done [#allocation12], 128
        $region72: #{_lambda_.3} parent=51 // pred_fallthru
          _
        // Predicated region
        $region73: #{_lambda_.3} parent=51 // pred_check
          %p373 = pneg %p155
        $region74: #{_lambda_.3} parent=51 // pred_check_branch
          %375 = sbr.rel (%p373) target = $region76
        $region75: #{_lambda_.3} parent=51 // pred_region
          %376 = dma.done [#allocation15], 12288
        $region76: #{_lambda_.3} parent=51 // pred_fallthru
          _
        // Predicated region
        $region77: #{_lambda_.3} parent=51 // pred_check
          %p377 = pneg %p176
        $region78: #{_lambda_.3} parent=51 // pred_check_branch
          %379 = sbr.rel (%p377) target = $region80
        $region79: #{_lambda_.3} parent=51 // pred_region
          %380 = dma.done [#allocation15], 64
        $region80: #{_lambda_.3} parent=51 // pred_fallthru
          _
        // Predicated region
        $region81: #{_lambda_.3} parent=51 // pred_check
          %p381 = pneg %p197
        $region82: #{_lambda_.3} parent=51 // pred_check_branch
          %383 = sbr.rel (%p381) target = $region84
        $region83: #{_lambda_.3} parent=51 // pred_region
          %384 = dma.done [#allocation7], 16
        $region84: #{_lambda_.3} parent=51 // pred_fallthru
          _
        %385 = sfence
        %s386 = sand.u32 %s37, 1
        %s387 = scalar_lea.sflag [#allocation5], %s386
        %s388 = sand.u32 %s37, 1
        %s389 = smul.addr %s388, 4
        %s390 = scalar_lea.vmem [#allocation4], %s389
        %p391 = pneg %p50
        %p392 = pneg %p47
        %p393 = pneg %p71
        %p394 = pneg %p68
        %p395 = pneg %p92
        %p396 = pneg %p89
        %p397 = pneg %p113
        %p398 = pneg %p110
        %p399 = pneg %p134
        %p400 = pneg %p131
        %p401 = pneg %p155
        %p402 = pneg %p152
        %p403 = pneg %p176
        %p404 = pneg %p173
        %p405 = pneg %p197
        %p406 = pneg %p194
        %p407 = pneg %p223
        %p408 = pneg %p220
        %s409 = sand.u32 %s210, 1
        %s410 = scalar_lea.sflag [#allocation6], %s409
        %s411 = sand.u32 %s210, 1
        %s412 = smul.addr %s411, 16
        %s413 = scalar_lea.vmem [#allocation18], %s412
        %vm415 = vcmask 123904
        %416 = vst.msk [vmem:[#allocation2] sm:$0x3] %vm415, 0
        %vm417 = vcmask 130054
        %418 = vst.msk [vmem:[#allocation2] sm:$0xc0] %vm417, 0
        %vm419 = vcmask 1040384
        %vm420 = vsmask.f32 256
        %vm421 = vmand %vm419, %vm420
        %v422 = vld [vmem:[#allocation3] sm:$0x1]
        %v423 = vsel %vm421, 0, %v422
        %424 = vst [vmem:[#allocation3] sm:$0x1] %v423
        %vm425 = vsmask.f32 7938
        %vm426 = vmand %vm419, %vm425
        %v427 = vld [vmem:[#allocation3 + $0x4] sm:$0x1]
        %v428 = vsel %vm426, 0, %v427
        %429 = vst [vmem:[#allocation3 + $0x4] sm:$0x1] %v428
        %v430 = vld [vmem:[%s352] sm:$0xf]
        %v432 = vunpack.c.l.b16 %v430
        %v433 = vpack.c.b16 %v432, %v432
        %v434 = vrot.slane %v433, 6
        %vm436 = vcmask 128002
        %437 = vst.msk [vmem:[#allocation2] sm:$0x3c] %vm436, %v434
        %v438 = vld [vmem:[#allocation2] sm:$0xf]
        %v439 = vld [vmem:[#allocation2] sm:$0x1f]
        %v440 = vld [vmem:[#allocation2] sm:$0x1e]
        %v441 = vld [vmem:[#allocation2] sm:$0x3e]
        %v442 = vld [vmem:[#allocation2] sm:$0x3c]
        %v443 = vld [vmem:[#allocation2] sm:$0x7c]
        %v444 = vld [vmem:[#allocation2] sm:$0x78]
        %v445 = vld [vmem:[#allocation2] sm:$0xf8]
        %v446 = vld [vmem:[#allocation2] sm:$0xf0]
        %v448 = vshrl.u32 %v439, 16
        %v450 = vshll.u32 %v439, 16
        %v452 = vrot.slane %v450, 1
        %v453 = vor.u32 %v448, %v452
        %454 = vrot.lane.b32.xlu0 %v453, 16
        %v455 = vpop.permute.xlu0 %454
        %v457 = vrot.slane %v440, 1
        %458 = vrot.lane.b32.xlu0 %v457, 32
        %v459 = vpop.permute.xlu0 %458
        %v461 = vshrl.u32 %v441, 16
        %v463 = vrot.slane %v461, 1
        %v464 = vshll.u32 %v441, 16
        %v466 = vrot.slane %v464, 2
        %v467 = vor.u32 %v463, %v466
        %468 = vrot.lane.b32.xlu0 %v467, 48
        %v469 = vpop.permute.xlu0 %468
        %v471 = vrot.slane %v442, 2
        %472 = vrot.lane.b32.xlu0 %v471, 64
        %v473 = vpop.permute.xlu0 %472
        %v475 = vshrl.u32 %v443, 16
        %v477 = vrot.slane %v475, 2
        %v478 = vshll.u32 %v443, 16
        %v480 = vrot.slane %v478, 3
        %v481 = vor.u32 %v477, %v480
        %482 = vrot.lane.b32.xlu0 %v481, 80
        %v483 = vpop.permute.xlu0 %482
        %v485 = vrot.slane %v444, 3
        %486 = vrot.lane.b32.xlu0 %v485, 96
        %v487 = vpop.permute.xlu0 %486
        %v489 = vshrl.u32 %v445, 16
        %v491 = vrot.slane %v489, 3
        %v492 = vshll.u32 %v445, 16
        %v494 = vrot.slane %v492, 4
        %v495 = vor.u32 %v491, %v494
        %496 = vrot.lane.b32.xlu0 %v495, 112
        %v497 = vpop.permute.xlu0 %496
        %v499 = vrot.slane %v446, 4
        %vm500 = vcmask 130048
        %v503 = vsel %vm500, %v438, %v455
        %vm504 = vcmask 261120
        %v506 = vsel %vm504, %v503, %v459
        %vm507 = vcmask 392192
        %v509 = vsel %vm507, %v506, %v469
        %vm510 = vcmask 523264
        %v512 = vsel %vm510, %v509, %v473
        %vm513 = vcmask 654336
        %v515 = vsel %vm513, %v512, %v483
        %vm516 = vcmask 785408
        %v518 = vsel %vm516, %v515, %v487
        %vm519 = vcmask 916480
        %v521 = vsel %vm519, %v518, %v497
        %v523 = vld [vmem:[#allocation8] sm:$0xf]
        %v524 = vld [vmem:[#allocation8 + $0x4] sm:$0xf]
        %v525 = vld [vmem:[#allocation8 + $0x8] sm:$0xf]
        %v526 = vld [vmem:[#allocation8 + $0xc] sm:$0xf]
        %v527 = vld [vmem:[#allocation8 + $0x10] sm:$0xf]
        %v528 = vld [vmem:[#allocation8 + $0x14] sm:$0xf]
        %v529 = vld [vmem:[#allocation8 + $0x18] sm:$0xf]
        %v530 = vld [vmem:[#allocation8 + $0x1c] sm:$0xf]
        %v531 = vld [vmem:[#allocation8 + $0x20] sm:$0xf]
        %v532 = vld [vmem:[#allocation8 + $0x24] sm:$0xf]
        %v533 = vld [vmem:[#allocation8 + $0x28] sm:$0xf]
        %v534 = vld [vmem:[#allocation8 + $0x2c] sm:$0xf]
        %v535 = vld [vmem:[#allocation8 + $0x30] sm:$0xf]
        %v536 = vld [vmem:[#allocation8 + $0x34] sm:$0xf]
        %v537 = vld [vmem:[#allocation8 + $0x38] sm:$0xf]
        %v538 = vld [vmem:[#allocation8 + $0x3c] sm:$0xf]
        %v539 = vld [vmem:[#allocation8 + $0x40] sm:$0xf]
        %v540 = vld [vmem:[#allocation8 + $0x44] sm:$0xf]
        %v541 = vld [vmem:[#allocation10] sm:$0x1]
        %v543 = vlaneseq
        %v544 = vshrl.u32 %v543, 7
        %v545 = vsub.s32 0, %v544
        %v546 = vrot.slane %v541, %v545
        %v566 = vunpack.c.l.b16 %v523
        %v567 = vunpack.c.l.b16 %v524
        %v568 = vunpack.c.l.b16 %v525
        %v569 = vunpack.c.l.b16 %v526
        %v570 = vunpack.c.l.b16 %v527
        %v571 = vunpack.c.l.b16 %v528
        %v572 = vunpack.c.l.b16 %v529
        %v573 = vunpack.c.l.b16 %v530
        %v574 = vunpack.c.l.b16 %v531
        %v575 = vunpack.c.l.b16 %v532
        %v576 = vunpack.c.l.b16 %v533
        %v577 = vunpack.c.l.b16 %v534
        %v578 = vunpack.c.l.b16 %v535
        %v579 = vunpack.c.l.b16 %v536
        %v580 = vunpack.c.l.b16 %v537
        %v581 = vunpack.c.l.b16 %v538
        %v582 = vunpack.c.l.b16 %v539
        %v583 = vunpack.c.l.b16 %v540
        %v584 = vpack.c.b16 %v567, %v566
        %v585 = vpack.c.b16 %v569, %v568
        %v586 = vpack.c.b16 %v571, %v570
        %v587 = vpack.c.b16 %v573, %v572
        %v588 = vpack.c.b16 %v575, %v574
        %v589 = vpack.c.b16 %v577, %v576
        %v590 = vpack.c.b16 %v579, %v578
        %v591 = vpack.c.b16 %v581, %v580
        %v592 = vpack.c.b16 %v583, %v582
        %v603 = vsel %vm500, %v499, 0
        %605 = vmatprep.subr.bf16.mxu0 0
        %606 = vmatpush1.bf16.msra.mxu0 %v584
        %607 = vmatprep.subr.bf16.mxu0 0
        %608 = vmatpush1.bf16.msra.mxu0 %v585
        %609 = vmatprep.subr.bf16.mxu0 0
        %610 = vmatpush1.bf16.msra.mxu0 %v586
        %611 = vmatprep.subr.bf16.mxu0 0
        %612 = vmatpush1.bf16.msra.mxu0 %v587
        %613 = vmatprep.subr.bf16.mxu0 0
        %614 = vmatpush1.bf16.msra.mxu0 %v588
        %615 = vmatprep.subr.bf16.mxu0 0
        %616 = vmatpush1.bf16.msra.mxu0 %v589
        %617 = vmatprep.subr.bf16.mxu0 0
        %618 = vmatpush1.bf16.msra.mxu0 %v590
        %619 = vmatprep.subr.bf16.mxu0 0
        %620 = vmatpush1.bf16.msra.mxu0 %v591
        %621 = vmatprep.subr.bf16.mxu0 0
        %622 = vmatpush1.bf16.msra.mxu0 %v592
        %623 = vmatprep.subr.bf16.mxu0 0
        %624 = vmatpush1.bf16.msra.mxu0 0
        %625 = vmatprep.subr.bf16.mxu0 0
        %626 = vmatpush1.bf16.msra.mxu0 0
        %627 = vmatprep.subr.bf16.mxu0 0
        %628 = vmatpush1.bf16.msra.mxu0 0
        %629 = vmatprep.subr.bf16.mxu0 0
        %630 = vmatpush1.bf16.msra.mxu0 0
        %631 = vmatprep.subr.bf16.mxu0 0
        %632 = vmatpush1.bf16.msra.mxu0 0
        %633 = vmatprep.subr.bf16.mxu0 0
        %634 = vmatpush1.bf16.msra.mxu0 0
        %635 = vmatprep.subr.bf16.mxu0 0
        %636 = vmatpush1.bf16.msra.mxu0 0
        %637 = vmatprep.mubr.bf16.mxu0 %v603
        %638 = vmatmul.mubr.bf16.gmra.mrb[0].mxu0 %v521
        %v639 = vpop.f32.mrb[0].mxu0
        %v640 = vadd.f32 %v546, %v639
        %v641 = vpop.f32.mrb[0].mxu0
        %v642 = vpop.f32.mrb[0].mxu0
        %v643 = vpop.f32.mrb[0].mxu0
        %644 = vdwg.mxu0
        %s645 = sld [smem:[#allocation17]]
        %vm646 = vcmp.ge.f32.partialorder %v640, 0.0
        %v647 = vstv %s645
        %v648 = vmul.f32 %v647, %v640
        %v649 = vsel %vm646, %v640, %v648
        %v650 = vpack.c.bf16 %v649, %v649
        %v652 = vunpack.c.l.b16 %v650
        %v653 = vpack.c.b16 %v652, %v652
        %v655 = vshrl.u32 %v653, 16
        %v657 = vrot.slane %v655, 7
        %v658 = vshll.u32 %v653, 16
        %v660 = vor.u32 %v657, %v658
        %v661 = vrot.slane %v657, 4
        %vm664 = vcmask 1043456
        %vm665 = vmand %vm664, %vm425
        %v666 = vld [vmem:[#allocation3] sm:$0xf]
        %v667 = vsel %vm665, %v660, %v666
        %668 = vst [vmem:[#allocation3] sm:$0xf] %v667
        %v669 = vld [vmem:[#allocation3 + $0x4] sm:$0x1]
        %v670 = vsel %vm421, %v661, %v669
        %671 = vst [vmem:[#allocation3 + $0x4] sm:$0x1] %v670
        %v672 = vld [vmem:[#allocation3] sm:$0xf]
        %v673 = vld [vmem:[#allocation11] sm:$0xf]
        %v674 = vld [vmem:[#allocation11 + $0x4] sm:$0xf]
        %v675 = vld [vmem:[#allocation11 + $0x8] sm:$0xf]
        %v676 = vld [vmem:[#allocation11 + $0xc] sm:$0xf]
        %v677 = vld [vmem:[#allocation11 + $0x10] sm:$0xf]
        %v678 = vld [vmem:[#allocation11 + $0x14] sm:$0xf]
        %v679 = vld [vmem:[#allocation11 + $0x18] sm:$0xf]
        %v680 = vld [vmem:[#allocation11 + $0x1c] sm:$0xf]
        %v681 = vld [vmem:[#allocation11 + $0x20] sm:$0xf]
        %v682 = vld [vmem:[#allocation11 + $0x24] sm:$0xf]
        %v683 = vld [vmem:[#allocation11 + $0x28] sm:$0xf]
        %v684 = vld [vmem:[#allocation11 + $0x2c] sm:$0xf]
        %v685 = vld [vmem:[#allocation11 + $0x30] sm:$0xf]
        %v686 = vld [vmem:[#allocation11 + $0x34] sm:$0xf]
        %v687 = vld [vmem:[#allocation11 + $0x38] sm:$0xf]
        %v688 = vld [vmem:[#allocation11 + $0x3c] sm:$0xf]
        %v689 = vld [vmem:[#allocation3 + $0x4] sm:$0x1]
        %s690 = scalar_lea.vmem [#allocation11], 64
        %v691 = vld [vmem:[%s690] sm:$0xf]
        %v692 = vld [vmem:[%s690 + $0x4] sm:$0xf]
        %v693 = vld [vmem:[%s690 + $0x8] sm:$0xf]
        %v694 = vld [vmem:[%s690 + $0xc] sm:$0xf]
        %v695 = vld [vmem:[%s690 + $0x10] sm:$0xf]
        %v696 = vld [vmem:[%s690 + $0x14] sm:$0xf]
        %v697 = vld [vmem:[%s690 + $0x18] sm:$0xf]
        %v698 = vld [vmem:[%s690 + $0x1c] sm:$0xf]
        %v699 = vld [vmem:[%s690 + $0x20] sm:$0xf]
        %v700 = vld [vmem:[%s690 + $0x24] sm:$0xf]
        %v701 = vld [vmem:[%s690 + $0x28] sm:$0xf]
        %v702 = vld [vmem:[%s690 + $0x2c] sm:$0xf]
        %v703 = vld [vmem:[%s690 + $0x30] sm:$0xf]
        %v704 = vld [vmem:[%s690 + $0x34] sm:$0xf]
        %v705 = vld [vmem:[%s690 + $0x38] sm:$0xf]
        %v706 = vld [vmem:[%s690 + $0x3c] sm:$0xf]
        %v709 = vunpack.c.l.b16 %v672
        %v710 = vunpack.c.l.b16 %v689
        %v711 = vpack.c.b16 %v710, %v709
        %v713 = vshrl.u32 %v711, 16
        %v715 = vshll.u32 %v711, 16
        %v717 = vrot.slane %v715, 1
        %v718 = vor.u32 %v713, %v717
        %v736 = vunpack.c.l.b16 %v691
        %v737 = vunpack.c.l.b16 %v692
        %v738 = vunpack.c.l.b16 %v693
        %v739 = vunpack.c.l.b16 %v694
        %v740 = vunpack.c.l.b16 %v695
        %v741 = vunpack.c.l.b16 %v696
        %v742 = vunpack.c.l.b16 %v697
        %v743 = vunpack.c.l.b16 %v698
        %v744 = vunpack.c.l.b16 %v699
        %v745 = vunpack.c.l.b16 %v700
        %v746 = vunpack.c.l.b16 %v701
        %v747 = vunpack.c.l.b16 %v702
        %v748 = vunpack.c.l.b16 %v703
        %v749 = vunpack.c.l.b16 %v704
        %v750 = vunpack.c.l.b16 %v705
        %v751 = vunpack.c.l.b16 %v706
        %v752 = vpack.c.b16 %v737, %v736
        %v753 = vpack.c.b16 %v739, %v738
        %v754 = vpack.c.b16 %v741, %v740
        %v755 = vpack.c.b16 %v743, %v742
        %v756 = vpack.c.b16 %v745, %v744
        %v757 = vpack.c.b16 %v747, %v746
        %v758 = vpack.c.b16 %v749, %v748
        %v759 = vpack.c.b16 %v751, %v750
        %768 = vmatprep.subr.bf16.mxu0 0
        %769 = vmatpush1.bf16.msra.mxu0 %v752
        %770 = vmatprep.subr.bf16.mxu0 0
        %771 = vmatpush1.bf16.msra.mxu0 %v753
        %772 = vmatprep.subr.bf16.mxu0 0
        %773 = vmatpush1.bf16.msra.mxu0 %v754
        %774 = vmatprep.subr.bf16.mxu0 0
        %775 = vmatpush1.bf16.msra.mxu0 %v755
        %776 = vmatprep.subr.bf16.mxu0 0
        %777 = vmatpush1.bf16.msra.mxu0 %v756
        %778 = vmatprep.subr.bf16.mxu0 0
        %779 = vmatpush1.bf16.msra.mxu0 %v757
        %780 = vmatprep.subr.bf16.mxu0 0
        %781 = vmatpush1.bf16.msra.mxu0 %v758
        %782 = vmatprep.subr.bf16.mxu0 0
        %783 = vmatpush1.bf16.msra.mxu0 %v759
        %784 = vmatprep.subr.bf16.mxu0 0
        %785 = vmatpush1.bf16.msra.mxu0 0
        %786 = vmatprep.subr.bf16.mxu0 0
        %787 = vmatpush1.bf16.msra.mxu0 0
        %788 = vmatprep.subr.bf16.mxu0 0
        %789 = vmatpush1.bf16.msra.mxu0 0
        %790 = vmatprep.subr.bf16.mxu0 0
        %791 = vmatpush1.bf16.msra.mxu0 0
        %792 = vmatprep.subr.bf16.mxu0 0
        %793 = vmatpush1.bf16.msra.mxu0 0
        %794 = vmatprep.subr.bf16.mxu0 0
        %795 = vmatpush1.bf16.msra.mxu0 0
        %796 = vmatprep.subr.bf16.mxu0 0
        %797 = vmatpush1.bf16.msra.mxu0 0
        %798 = vmatprep.subr.bf16.mxu0 0
        %799 = vmatpush1.bf16.msra.mxu0 0
        %800 = vmatprep.mubr.bf16.mxu0 0
        %801 = vmatmul.mubr.bf16.gmra.mrb[0].mxu0 %v718
        %v802 = vpop.f32.mrb[0].mxu0
        %v803 = vadd.f32 0.0, %v802
        %v804 = vpop.f32.mrb[0].mxu0
        %v805 = vpop.f32.mrb[0].mxu0
        %v806 = vpop.f32.mrb[0].mxu0
        %807 = vdwg.mxu0
        %v824 = vunpack.c.l.b16 %v673
        %v825 = vunpack.c.l.b16 %v674
        %v826 = vunpack.c.l.b16 %v675
        %v827 = vunpack.c.l.b16 %v676
        %v828 = vunpack.c.l.b16 %v677
        %v829 = vunpack.c.l.b16 %v678
        %v830 = vunpack.c.l.b16 %v679
        %v831 = vunpack.c.l.b16 %v680
        %v832 = vunpack.c.l.b16 %v681
        %v833 = vunpack.c.l.b16 %v682
        %v834 = vunpack.c.l.b16 %v683
        %v835 = vunpack.c.l.b16 %v684
        %v836 = vunpack.c.l.b16 %v685
        %v837 = vunpack.c.l.b16 %v686
        %v838 = vunpack.c.l.b16 %v687
        %v839 = vunpack.c.l.b16 %v688
        %v840 = vpack.c.b16 %v825, %v824
        %v841 = vpack.c.b16 %v827, %v826
        %v842 = vpack.c.b16 %v829, %v828
        %v843 = vpack.c.b16 %v831, %v830
        %v844 = vpack.c.b16 %v833, %v832
        %v845 = vpack.c.b16 %v835, %v834
        %v846 = vpack.c.b16 %v837, %v836
        %v847 = vpack.c.b16 %v839, %v838
        %856 = vmatprep.subr.bf16.mxu0 0
        %857 = vmatpush1.bf16.msra.mxu0 %v840
        %858 = vmatprep.subr.bf16.mxu0 0
        %859 = vmatpush1.bf16.msra.mxu0 %v841
        %860 = vmatprep.subr.bf16.mxu0 0
        %861 = vmatpush1.bf16.msra.mxu0 %v842
        %862 = vmatprep.subr.bf16.mxu0 0
        %863 = vmatpush1.bf16.msra.mxu0 %v843
        %864 = vmatprep.subr.bf16.mxu0 0
        %865 = vmatpush1.bf16.msra.mxu0 %v844
        %866 = vmatprep.subr.bf16.mxu0 0
        %867 = vmatpush1.bf16.msra.mxu0 %v845
        %868 = vmatprep.subr.bf16.mxu0 0
        %869 = vmatpush1.bf16.msra.mxu0 %v846
        %870 = vmatprep.subr.bf16.mxu0 0
        %871 = vmatpush1.bf16.msra.mxu0 %v847
        %872 = vmatprep.subr.bf16.mxu0 0
        %873 = vmatpush1.bf16.msra.mxu0 0
        %874 = vmatprep.subr.bf16.mxu0 0
        %875 = vmatpush1.bf16.msra.mxu0 0
        %876 = vmatprep.subr.bf16.mxu0 0
        %877 = vmatpush1.bf16.msra.mxu0 0
        %878 = vmatprep.subr.bf16.mxu0 0
        %879 = vmatpush1.bf16.msra.mxu0 0
        %880 = vmatprep.subr.bf16.mxu0 0
        %881 = vmatpush1.bf16.msra.mxu0 0
        %882 = vmatprep.subr.bf16.mxu0 0
        %883 = vmatpush1.bf16.msra.mxu0 0
        %884 = vmatprep.subr.bf16.mxu0 0
        %885 = vmatpush1.bf16.msra.mxu0 0
        %886 = vmatprep.subr.bf16.mxu0 0
        %887 = vmatpush1.bf16.msra.mxu0 0
        %888 = vmatprep.mubr.bf16.mxu0 0
        %889 = vmatmul.mubr.bf16.gmra.mrb[0].mxu0 %v672
        %v890 = vpop.f32.mrb[0].mxu0
        %v891 = vadd.f32 %v803, %v890
        %v892 = vpop.f32.mrb[0].mxu0
        %v893 = vpop.f32.mrb[0].mxu0
        %v894 = vpop.f32.mrb[0].mxu0
        %895 = vdwg.mxu0
        %v896 = vld [vmem:[#allocation3] sm:$0xe]
        %s897 = scalar_lea.vmem [#allocation11], 128
        %v898 = vld [vmem:[%s897] sm:$0xf]
        %v899 = vld [vmem:[%s897 + $0x4] sm:$0xf]
        %v900 = vld [vmem:[%s897 + $0x8] sm:$0xf]
        %v901 = vld [vmem:[%s897 + $0xc] sm:$0xf]
        %v902 = vld [vmem:[%s897 + $0x10] sm:$0xf]
        %v903 = vld [vmem:[%s897 + $0x14] sm:$0xf]
        %v904 = vld [vmem:[%s897 + $0x18] sm:$0xf]
        %v905 = vld [vmem:[%s897 + $0x1c] sm:$0xf]
        %v906 = vld [vmem:[%s897 + $0x20] sm:$0xf]
        %v907 = vld [vmem:[%s897 + $0x24] sm:$0xf]
        %v908 = vld [vmem:[%s897 + $0x28] sm:$0xf]
        %v909 = vld [vmem:[%s897 + $0x2c] sm:$0xf]
        %v910 = vld [vmem:[%s897 + $0x30] sm:$0xf]
        %v911 = vld [vmem:[%s897 + $0x34] sm:$0xf]
        %v912 = vld [vmem:[%s897 + $0x38] sm:$0xf]
        %v913 = vld [vmem:[%s897 + $0x3c] sm:$0xf]
        %v915 = vunpack.c.l.b16 %v896
        %v916 = vpack.c.b16 %v710, %v915
        %v917 = vrot.slane %v916, 1
        %v935 = vunpack.c.l.b16 %v898
        %v936 = vunpack.c.l.b16 %v899
        %v937 = vunpack.c.l.b16 %v900
        %v938 = vunpack.c.l.b16 %v901
        %v939 = vunpack.c.l.b16 %v902
        %v940 = vunpack.c.l.b16 %v903
        %v941 = vunpack.c.l.b16 %v904
        %v942 = vunpack.c.l.b16 %v905
        %v943 = vunpack.c.l.b16 %v906
        %v944 = vunpack.c.l.b16 %v907
        %v945 = vunpack.c.l.b16 %v908
        %v946 = vunpack.c.l.b16 %v909
        %v947 = vunpack.c.l.b16 %v910
        %v948 = vunpack.c.l.b16 %v911
        %v949 = vunpack.c.l.b16 %v912
        %v950 = vunpack.c.l.b16 %v913
        %v951 = vpack.c.b16 %v936, %v935
        %v952 = vpack.c.b16 %v938, %v937
        %v953 = vpack.c.b16 %v940, %v939
        %v954 = vpack.c.b16 %v942, %v941
        %v955 = vpack.c.b16 %v944, %v943
        %v956 = vpack.c.b16 %v946, %v945
        %v957 = vpack.c.b16 %v948, %v947
        %v958 = vpack.c.b16 %v950, %v949
        %967 = vmatprep.subr.bf16.mxu0 0
        %968 = vmatpush1.bf16.msra.mxu0 %v951
        %969 = vmatprep.subr.bf16.mxu0 0
        %970 = vmatpush1.bf16.msra.mxu0 %v952
        %971 = vmatprep.subr.bf16.mxu0 0
        %972 = vmatpush1.bf16.msra.mxu0 %v953
        %973 = vmatprep.subr.bf16.mxu0 0
        %974 = vmatpush1.bf16.msra.mxu0 %v954
        %975 = vmatprep.subr.bf16.mxu0 0
        %976 = vmatpush1.bf16.msra.mxu0 %v955
        %977 = vmatprep.subr.bf16.mxu0 0
        %978 = vmatpush1.bf16.msra.mxu0 %v956
        %979 = vmatprep.subr.bf16.mxu0 0
        %980 = vmatpush1.bf16.msra.mxu0 %v957
        %981 = vmatprep.subr.bf16.mxu0 0
        %982 = vmatpush1.bf16.msra.mxu0 %v958
        %983 = vmatprep.subr.bf16.mxu0 0
        %984 = vmatpush1.bf16.msra.mxu0 0
        %985 = vmatprep.subr.bf16.mxu0 0
        %986 = vmatpush1.bf16.msra.mxu0 0
        %987 = vmatprep.subr.bf16.mxu0 0
        %988 = vmatpush1.bf16.msra.mxu0 0
        %989 = vmatprep.subr.bf16.mxu0 0
        %990 = vmatpush1.bf16.msra.mxu0 0
        %991 = vmatprep.subr.bf16.mxu0 0
        %992 = vmatpush1.bf16.msra.mxu0 0
        %993 = vmatprep.subr.bf16.mxu0 0
        %994 = vmatpush1.bf16.msra.mxu0 0
        %995 = vmatprep.subr.bf16.mxu0 0
        %996 = vmatpush1.bf16.msra.mxu0 0
        %997 = vmatprep.subr.bf16.mxu0 0
        %998 = vmatpush1.bf16.msra.mxu0 0
        %999 = vmatprep.mubr.bf16.mxu0 0
        %1000 = vmatmul.mubr.bf16.gmra.mrb[0].mxu0 %v917
        %v1001 = vpop.f32.mrb[0].mxu0
        %v1002 = vadd.f32 0.0, %v1001
        %v1003 = vpop.f32.mrb[0].mxu0
        %v1004 = vpop.f32.mrb[0].mxu0
        %v1005 = vpop.f32.mrb[0].mxu0
        %1006 = vdwg.mxu0
        %v1007 = vadd.f32 %v891, %v1002
        %v1008 = vld [vmem:[#allocation13] sm:$0x1]
        %v1009 = vlaneseq
        %v1010 = vshrl.u32 %v1009, 7
        %v1011 = vsub.s32 0, %v1010
        %v1012 = vrot.slane %v1008, %v1011
        %v1013 = vadd.f32 %v1007, %v1012
        %s1014 = sld [smem:[#allocation17 + $0x1]]
        %vm1015 = vcmp.ge.f32.partialorder %v1013, 0.0
        %v1016 = vstv %s1014
        %v1017 = vmul.f32 %v1016, %v1013
        %v1018 = vsel %vm1015, %v1013, %v1017
        %v1019 = vpack.c.bf16 %v1018, %v1018
        %v1021 = vunpack.c.l.b16 %v1019
        %v1022 = vpack.c.b16 %v1021, %v1021
        %v1024 = vshrl.u32 %v1022, 16
        %v1026 = vrot.slane %v1024, 7
        %v1027 = vshll.u32 %v1022, 16
        %v1029 = vor.u32 %v1026, %v1027
        %v1030 = vrot.slane %v1026, 4
        %v1033 = vsel %vm665, %v1029, %v672
        %1034 = vst [vmem:[#allocation3] sm:$0xf] %v1033
        %v1035 = vld [vmem:[#allocation3 + $0x4] sm:$0x1]
        %v1036 = vsel %vm421, %v1030, %v1035
        %1037 = vst [vmem:[#allocation3 + $0x4] sm:$0x1] %v1036
        %v1038 = vld [vmem:[#allocation3] sm:$0xf]
        %s1039 = scalar_lea.vmem [#allocation11], 192
        %v1040 = vld [vmem:[%s1039] sm:$0xf]
        %v1041 = vld [vmem:[%s1039 + $0x4] sm:$0xf]
        %v1042 = vld [vmem:[%s1039 + $0x8] sm:$0xf]
        %v1043 = vld [vmem:[%s1039 + $0xc] sm:$0xf]
        %v1044 = vld [vmem:[%s1039 + $0x10] sm:$0xf]
        %v1045 = vld [vmem:[%s1039 + $0x14] sm:$0xf]
        %v1046 = vld [vmem:[%s1039 + $0x18] sm:$0xf]
        %v1047 = vld [vmem:[%s1039 + $0x1c] sm:$0xf]
        %v1048 = vld [vmem:[%s1039 + $0x20] sm:$0xf]
        %v1049 = vld [vmem:[%s1039 + $0x24] sm:$0xf]
        %v1050 = vld [vmem:[%s1039 + $0x28] sm:$0xf]
        %v1051 = vld [vmem:[%s1039 + $0x2c] sm:$0xf]
        %v1052 = vld [vmem:[%s1039 + $0x30] sm:$0xf]
        %v1053 = vld [vmem:[%s1039 + $0x34] sm:$0xf]
        %v1054 = vld [vmem:[%s1039 + $0x38] sm:$0xf]
        %v1055 = vld [vmem:[%s1039 + $0x3c] sm:$0xf]
        %v1056 = vld [vmem:[#allocation3 + $0x4] sm:$0x1]
        %s1057 = scalar_lea.vmem [#allocation11], 256
        %v1058 = vld [vmem:[%s1057] sm:$0xf]
        %v1059 = vld [vmem:[%s1057 + $0x4] sm:$0xf]
        %v1060 = vld [vmem:[%s1057 + $0x8] sm:$0xf]
        %v1061 = vld [vmem:[%s1057 + $0xc] sm:$0xf]
        %v1062 = vld [vmem:[%s1057 + $0x10] sm:$0xf]
        %v1063 = vld [vmem:[%s1057 + $0x14] sm:$0xf]
        %v1064 = vld [vmem:[%s1057 + $0x18] sm:$0xf]
        %v1065 = vld [vmem:[%s1057 + $0x1c] sm:$0xf]
        %v1066 = vld [vmem:[%s1057 + $0x20] sm:$0xf]
        %v1067 = vld [vmem:[%s1057 + $0x24] sm:$0xf]
        %v1068 = vld [vmem:[%s1057 + $0x28] sm:$0xf]
        %v1069 = vld [vmem:[%s1057 + $0x2c] sm:$0xf]
        %v1070 = vld [vmem:[%s1057 + $0x30] sm:$0xf]
        %v1071 = vld [vmem:[%s1057 + $0x34] sm:$0xf]
        %v1072 = vld [vmem:[%s1057 + $0x38] sm:$0xf]
        %v1073 = vld [vmem:[%s1057 + $0x3c] sm:$0xf]
        %v1076 = vunpack.c.l.b16 %v1038
        %v1077 = vunpack.c.l.b16 %v1056
        %v1078 = vpack.c.b16 %v1077, %v1076
        %v1080 = vshrl.u32 %v1078, 16
        %v1082 = vshll.u32 %v1078, 16
        %v1084 = vrot.slane %v1082, 1
        %v1085 = vor.u32 %v1080, %v1084
        %v1103 = vunpack.c.l.b16 %v1058
        %v1104 = vunpack.c.l.b16 %v1059
        %v1105 = vunpack.c.l.b16 %v1060
        %v1106 = vunpack.c.l.b16 %v1061
        %v1107 = vunpack.c.l.b16 %v1062
        %v1108 = vunpack.c.l.b16 %v1063
        %v1109 = vunpack.c.l.b16 %v1064
        %v1110 = vunpack.c.l.b16 %v1065
        %v1111 = vunpack.c.l.b16 %v1066
        %v1112 = vunpack.c.l.b16 %v1067
        %v1113 = vunpack.c.l.b16 %v1068
        %v1114 = vunpack.c.l.b16 %v1069
        %v1115 = vunpack.c.l.b16 %v1070
        %v1116 = vunpack.c.l.b16 %v1071
        %v1117 = vunpack.c.l.b16 %v1072
        %v1118 = vunpack.c.l.b16 %v1073
        %v1119 = vpack.c.b16 %v1104, %v1103
        %v1120 = vpack.c.b16 %v1106, %v1105
        %v1121 = vpack.c.b16 %v1108, %v1107
        %v1122 = vpack.c.b16 %v1110, %v1109
        %v1123 = vpack.c.b16 %v1112, %v1111
        %v1124 = vpack.c.b16 %v1114, %v1113
        %v1125 = vpack.c.b16 %v1116, %v1115
        %v1126 = vpack.c.b16 %v1118, %v1117
        %1135 = vmatprep.subr.bf16.mxu0 0
        %1136 = vmatpush1.bf16.msra.mxu0 %v1119
        %1137 = vmatprep.subr.bf16.mxu0 0
        %1138 = vmatpush1.bf16.msra.mxu0 %v1120
        %1139 = vmatprep.subr.bf16.mxu0 0
        %1140 = vmatpush1.bf16.msra.mxu0 %v1121
        %1141 = vmatprep.subr.bf16.mxu0 0
        %1142 = vmatpush1.bf16.msra.mxu0 %v1122
        %1143 = vmatprep.subr.bf16.mxu0 0
        %1144 = vmatpush1.bf16.msra.mxu0 %v1123
        %1145 = vmatprep.subr.bf16.mxu0 0
        %1146 = vmatpush1.bf16.msra.mxu0 %v1124
        %1147 = vmatprep.subr.bf16.mxu0 0
        %1148 = vmatpush1.bf16.msra.mxu0 %v1125
        %1149 = vmatprep.subr.bf16.mxu0 0
        %1150 = vmatpush1.bf16.msra.mxu0 %v1126
        %1151 = vmatprep.subr.bf16.mxu0 0
        %1152 = vmatpush1.bf16.msra.mxu0 0
        %1153 = vmatprep.subr.bf16.mxu0 0
        %1154 = vmatpush1.bf16.msra.mxu0 0
        %1155 = vmatprep.subr.bf16.mxu0 0
        %1156 = vmatpush1.bf16.msra.mxu0 0
        %1157 = vmatprep.subr.bf16.mxu0 0
        %1158 = vmatpush1.bf16.msra.mxu0 0
        %1159 = vmatprep.subr.bf16.mxu0 0
        %1160 = vmatpush1.bf16.msra.mxu0 0
        %1161 = vmatprep.subr.bf16.mxu0 0
        %1162 = vmatpush1.bf16.msra.mxu0 0
        %1163 = vmatprep.subr.bf16.mxu0 0
        %1164 = vmatpush1.bf16.msra.mxu0 0
        %1165 = vmatprep.subr.bf16.mxu0 0
        %1166 = vmatpush1.bf16.msra.mxu0 0
        %1167 = vmatprep.mubr.bf16.mxu0 0
        %1168 = vmatmul.mubr.bf16.gmra.mrb[0].mxu0 %v1085
        %v1169 = vpop.f32.mrb[0].mxu0
        %v1170 = vadd.f32 0.0, %v1169
        %v1171 = vpop.f32.mrb[0].mxu0
        %v1172 = vpop.f32.mrb[0].mxu0
        %v1173 = vpop.f32.mrb[0].mxu0
        %1174 = vdwg.mxu0
        %v1191 = vunpack.c.l.b16 %v1040
        %v1192 = vunpack.c.l.b16 %v1041
        %v1193 = vunpack.c.l.b16 %v1042
        %v1194 = vunpack.c.l.b16 %v1043
        %v1195 = vunpack.c.l.b16 %v1044
        %v1196 = vunpack.c.l.b16 %v1045
        %v1197 = vunpack.c.l.b16 %v1046
        %v1198 = vunpack.c.l.b16 %v1047
        %v1199 = vunpack.c.l.b16 %v1048
        %v1200 = vunpack.c.l.b16 %v1049
        %v1201 = vunpack.c.l.b16 %v1050
        %v1202 = vunpack.c.l.b16 %v1051
        %v1203 = vunpack.c.l.b16 %v1052
        %v1204 = vunpack.c.l.b16 %v1053
        %v1205 = vunpack.c.l.b16 %v1054
        %v1206 = vunpack.c.l.b16 %v1055
        %v1207 = vpack.c.b16 %v1192, %v1191
        %v1208 = vpack.c.b16 %v1194, %v1193
        %v1209 = vpack.c.b16 %v1196, %v1195
        %v1210 = vpack.c.b16 %v1198, %v1197
        %v1211 = vpack.c.b16 %v1200, %v1199
        %v1212 = vpack.c.b16 %v1202, %v1201
        %v1213 = vpack.c.b16 %v1204, %v1203
        %v1214 = vpack.c.b16 %v1206, %v1205
        %1223 = vmatprep.subr.bf16.mxu0 0
        %1224 = vmatpush1.bf16.msra.mxu0 %v1207
        %1225 = vmatprep.subr.bf16.mxu0 0
        %1226 = vmatpush1.bf16.msra.mxu0 %v1208
        %1227 = vmatprep.subr.bf16.mxu0 0
        %1228 = vmatpush1.bf16.msra.mxu0 %v1209
        %1229 = vmatprep.subr.bf16.mxu0 0
        %1230 = vmatpush1.bf16.msra.mxu0 %v1210
        %1231 = vmatprep.subr.bf16.mxu0 0
        %1232 = vmatpush1.bf16.msra.mxu0 %v1211
        %1233 = vmatprep.subr.bf16.mxu0 0
        %1234 = vmatpush1.bf16.msra.mxu0 %v1212
        %1235 = vmatprep.subr.bf16.mxu0 0
        %1236 = vmatpush1.bf16.msra.mxu0 %v1213
        %1237 = vmatprep.subr.bf16.mxu0 0
        %1238 = vmatpush1.bf16.msra.mxu0 %v1214
        %1239 = vmatprep.subr.bf16.mxu0 0
        %1240 = vmatpush1.bf16.msra.mxu0 0
        %1241 = vmatprep.subr.bf16.mxu0 0
        %1242 = vmatpush1.bf16.msra.mxu0 0
        %1243 = vmatprep.subr.bf16.mxu0 0
        %1244 = vmatpush1.bf16.msra.mxu0 0
        %1245 = vmatprep.subr.bf16.mxu0 0
        %1246 = vmatpush1.bf16.msra.mxu0 0
        %1247 = vmatprep.subr.bf16.mxu0 0
        %1248 = vmatpush1.bf16.msra.mxu0 0
        %1249 = vmatprep.subr.bf16.mxu0 0
        %1250 = vmatpush1.bf16.msra.mxu0 0
        %1251 = vmatprep.subr.bf16.mxu0 0
        %1252 = vmatpush1.bf16.msra.mxu0 0
        %1253 = vmatprep.subr.bf16.mxu0 0
        %1254 = vmatpush1.bf16.msra.mxu0 0
        %1255 = vmatprep.mubr.bf16.mxu0 0
        %1256 = vmatmul.mubr.bf16.gmra.mrb[0].mxu0 %v1038
        %v1257 = vpop.f32.mrb[0].mxu0
        %v1258 = vadd.f32 %v1170, %v1257
        %v1259 = vpop.f32.mrb[0].mxu0
        %v1260 = vpop.f32.mrb[0].mxu0
        %v1261 = vpop.f32.mrb[0].mxu0
        %1262 = vdwg.mxu0
        %v1263 = vld [vmem:[#allocation3] sm:$0xe]
        %s1264 = scalar_lea.vmem [#allocation11], 320
        %v1265 = vld [vmem:[%s1264] sm:$0xf]
        %v1266 = vld [vmem:[%s1264 + $0x4] sm:$0xf]
        %v1267 = vld [vmem:[%s1264 + $0x8] sm:$0xf]
        %v1268 = vld [vmem:[%s1264 + $0xc] sm:$0xf]
        %v1269 = vld [vmem:[%s1264 + $0x10] sm:$0xf]
        %v1270 = vld [vmem:[%s1264 + $0x14] sm:$0xf]
        %v1271 = vld [vmem:[%s1264 + $0x18] sm:$0xf]
        %v1272 = vld [vmem:[%s1264 + $0x1c] sm:$0xf]
        %v1273 = vld [vmem:[%s1264 + $0x20] sm:$0xf]
        %v1274 = vld [vmem:[%s1264 + $0x24] sm:$0xf]
        %v1275 = vld [vmem:[%s1264 + $0x28] sm:$0xf]
        %v1276 = vld [vmem:[%s1264 + $0x2c] sm:$0xf]
        %v1277 = vld [vmem:[%s1264 + $0x30] sm:$0xf]
        %v1278 = vld [vmem:[%s1264 + $0x34] sm:$0xf]
        %v1279 = vld [vmem:[%s1264 + $0x38] sm:$0xf]
        %v1280 = vld [vmem:[%s1264 + $0x3c] sm:$0xf]
        %v1282 = vunpack.c.l.b16 %v1263
        %v1283 = vpack.c.b16 %v1077, %v1282
        %v1284 = vrot.slane %v1283, 1
        %v1302 = vunpack.c.l.b16 %v1265
        %v1303 = vunpack.c.l.b16 %v1266
        %v1304 = vunpack.c.l.b16 %v1267
        %v1305 = vunpack.c.l.b16 %v1268
        %v1306 = vunpack.c.l.b16 %v1269
        %v1307 = vunpack.c.l.b16 %v1270
        %v1308 = vunpack.c.l.b16 %v1271
        %v1309 = vunpack.c.l.b16 %v1272
        %v1310 = vunpack.c.l.b16 %v1273
        %v1311 = vunpack.c.l.b16 %v1274
        %v1312 = vunpack.c.l.b16 %v1275
        %v1313 = vunpack.c.l.b16 %v1276
        %v1314 = vunpack.c.l.b16 %v1277
        %v1315 = vunpack.c.l.b16 %v1278
        %v1316 = vunpack.c.l.b16 %v1279
        %v1317 = vunpack.c.l.b16 %v1280
        %v1318 = vpack.c.b16 %v1303, %v1302
        %v1319 = vpack.c.b16 %v1305, %v1304
        %v1320 = vpack.c.b16 %v1307, %v1306
        %v1321 = vpack.c.b16 %v1309, %v1308
        %v1322 = vpack.c.b16 %v1311, %v1310
        %v1323 = vpack.c.b16 %v1313, %v1312
        %v1324 = vpack.c.b16 %v1315, %v1314
        %v1325 = vpack.c.b16 %v1317, %v1316
        %1334 = vmatprep.subr.bf16.mxu0 0
        %1335 = vmatpush1.bf16.msra.mxu0 %v1318
        %1336 = vmatprep.subr.bf16.mxu0 0
        %1337 = vmatpush1.bf16.msra.mxu0 %v1319
        %1338 = vmatprep.subr.bf16.mxu0 0
        %1339 = vmatpush1.bf16.msra.mxu0 %v1320
        %1340 = vmatprep.subr.bf16.mxu0 0
        %1341 = vmatpush1.bf16.msra.mxu0 %v1321
        %1342 = vmatprep.subr.bf16.mxu0 0
        %1343 = vmatpush1.bf16.msra.mxu0 %v1322
        %1344 = vmatprep.subr.bf16.mxu0 0
        %1345 = vmatpush1.bf16.msra.mxu0 %v1323
        %1346 = vmatprep.subr.bf16.mxu0 0
        %1347 = vmatpush1.bf16.msra.mxu0 %v1324
        %1348 = vmatprep.subr.bf16.mxu0 0
        %1349 = vmatpush1.bf16.msra.mxu0 %v1325
        %1350 = vmatprep.subr.bf16.mxu0 0
        %1351 = vmatpush1.bf16.msra.mxu0 0
        %1352 = vmatprep.subr.bf16.mxu0 0
        %1353 = vmatpush1.bf16.msra.mxu0 0
        %1354 = vmatprep.subr.bf16.mxu0 0
        %1355 = vmatpush1.bf16.msra.mxu0 0
        %1356 = vmatprep.subr.bf16.mxu0 0
        %1357 = vmatpush1.bf16.msra.mxu0 0
        %1358 = vmatprep.subr.bf16.mxu0 0
        %1359 = vmatpush1.bf16.msra.mxu0 0
        %1360 = vmatprep.subr.bf16.mxu0 0
        %1361 = vmatpush1.bf16.msra.mxu0 0
        %1362 = vmatprep.subr.bf16.mxu0 0
        %1363 = vmatpush1.bf16.msra.mxu0 0
        %1364 = vmatprep.subr.bf16.mxu0 0
        %1365 = vmatpush1.bf16.msra.mxu0 0
        %1366 = vmatprep.mubr.bf16.mxu0 0
        %1367 = vmatmul.mubr.bf16.gmra.mrb[0].mxu0 %v1284
        %v1368 = vpop.f32.mrb[0].mxu0
        %v1369 = vadd.f32 0.0, %v1368
        %v1370 = vpop.f32.mrb[0].mxu0
        %v1371 = vpop.f32.mrb[0].mxu0
        %v1372 = vpop.f32.mrb[0].mxu0
        %1373 = vdwg.mxu0
        %v1374 = vadd.f32 %v1258, %v1369
        %v1375 = vld [vmem:[#allocation13 + $0x1] sm:$0x1]
        %v1376 = vlaneseq
        %v1377 = vshrl.u32 %v1376, 7
        %v1378 = vsub.s32 0, %v1377
        %v1379 = vrot.slane %v1375, %v1378
        %v1380 = vadd.f32 %v1374, %v1379
        %v1381 = vadd.f32 %v1380, %v649
        %v1382 = vpack.c.bf16 %v1381, %v1381
        %v1384 = vunpack.c.l.b16 %v1382
        %v1385 = vpack.c.b16 %v1384, %v1384
        %v1387 = vshrl.u32 %v1385, 16
        %v1389 = vrot.slane %v1387, 7
        %v1390 = vshll.u32 %v1385, 16
        %v1392 = vor.u32 %v1389, %v1390
        %v1393 = vrot.slane %v1389, 4
        %v1396 = vsel %vm665, %v1392, %v1038
        %1397 = vst [vmem:[#allocation3] sm:$0xf] %v1396
        %v1398 = vld [vmem:[#allocation3 + $0x4] sm:$0x1]
        %v1399 = vsel %vm421, %v1393, %v1398
        %1400 = vst [vmem:[#allocation3 + $0x4] sm:$0x1] %v1399
        %v1401 = vld [vmem:[#allocation3] sm:$0xf]
        %s1402 = scalar_lea.vmem [#allocation11], 384
        %v1403 = vld [vmem:[%s1402] sm:$0xf]
        %v1404 = vld [vmem:[%s1402 + $0x4] sm:$0xf]
        %v1405 = vld [vmem:[%s1402 + $0x8] sm:$0xf]
        %v1406 = vld [vmem:[%s1402 + $0xc] sm:$0xf]
        %v1407 = vld [vmem:[%s1402 + $0x10] sm:$0xf]
        %v1408 = vld [vmem:[%s1402 + $0x14] sm:$0xf]
        %v1409 = vld [vmem:[%s1402 + $0x18] sm:$0xf]
        %v1410 = vld [vmem:[%s1402 + $0x1c] sm:$0xf]
        %v1411 = vld [vmem:[%s1402 + $0x20] sm:$0xf]
        %v1412 = vld [vmem:[%s1402 + $0x24] sm:$0xf]
        %v1413 = vld [vmem:[%s1402 + $0x28] sm:$0xf]
        %v1414 = vld [vmem:[%s1402 + $0x2c] sm:$0xf]
        %v1415 = vld [vmem:[%s1402 + $0x30] sm:$0xf]
        %v1416 = vld [vmem:[%s1402 + $0x34] sm:$0xf]
        %v1417 = vld [vmem:[%s1402 + $0x38] sm:$0xf]
        %v1418 = vld [vmem:[%s1402 + $0x3c] sm:$0xf]
        %v1419 = vld [vmem:[#allocation3 + $0x4] sm:$0x1]
        %s1420 = scalar_lea.vmem [#allocation11], 448
        %v1421 = vld [vmem:[%s1420] sm:$0xf]
        %v1422 = vld [vmem:[%s1420 + $0x4] sm:$0xf]
        %v1423 = vld [vmem:[%s1420 + $0x8] sm:$0xf]
        %v1424 = vld [vmem:[%s1420 + $0xc] sm:$0xf]
        %v1425 = vld [vmem:[%s1420 + $0x10] sm:$0xf]
        %v1426 = vld [vmem:[%s1420 + $0x14] sm:$0xf]
        %v1427 = vld [vmem:[%s1420 + $0x18] sm:$0xf]
        %v1428 = vld [vmem:[%s1420 + $0x1c] sm:$0xf]
        %v1429 = vld [vmem:[%s1420 + $0x20] sm:$0xf]
        %v1430 = vld [vmem:[%s1420 + $0x24] sm:$0xf]
        %v1431 = vld [vmem:[%s1420 + $0x28] sm:$0xf]
        %v1432 = vld [vmem:[%s1420 + $0x2c] sm:$0xf]
        %v1433 = vld [vmem:[%s1420 + $0x30] sm:$0xf]
        %v1434 = vld [vmem:[%s1420 + $0x34] sm:$0xf]
        %v1435 = vld [vmem:[%s1420 + $0x38] sm:$0xf]
        %v1436 = vld [vmem:[%s1420 + $0x3c] sm:$0xf]
        %v1439 = vunpack.c.l.b16 %v1401
        %v1440 = vunpack.c.l.b16 %v1419
        %v1441 = vpack.c.b16 %v1440, %v1439
        %v1443 = vshrl.u32 %v1441, 16
        %v1445 = vshll.u32 %v1441, 16
        %v1447 = vrot.slane %v1445, 1
        %v1448 = vor.u32 %v1443, %v1447
        %v1466 = vunpack.c.l.b16 %v1421
        %v1467 = vunpack.c.l.b16 %v1422
        %v1468 = vunpack.c.l.b16 %v1423
        %v1469 = vunpack.c.l.b16 %v1424
        %v1470 = vunpack.c.l.b16 %v1425
        %v1471 = vunpack.c.l.b16 %v1426
        %v1472 = vunpack.c.l.b16 %v1427
        %v1473 = vunpack.c.l.b16 %v1428
        %v1474 = vunpack.c.l.b16 %v1429
        %v1475 = vunpack.c.l.b16 %v1430
        %v1476 = vunpack.c.l.b16 %v1431
        %v1477 = vunpack.c.l.b16 %v1432
        %v1478 = vunpack.c.l.b16 %v1433
        %v1479 = vunpack.c.l.b16 %v1434
        %v1480 = vunpack.c.l.b16 %v1435
        %v1481 = vunpack.c.l.b16 %v1436
        %v1482 = vpack.c.b16 %v1467, %v1466
        %v1483 = vpack.c.b16 %v1469, %v1468
        %v1484 = vpack.c.b16 %v1471, %v1470
        %v1485 = vpack.c.b16 %v1473, %v1472
        %v1486 = vpack.c.b16 %v1475, %v1474
        %v1487 = vpack.c.b16 %v1477, %v1476
        %v1488 = vpack.c.b16 %v1479, %v1478
        %v1489 = vpack.c.b16 %v1481, %v1480
        %1498 = vmatprep.subr.bf16.mxu0 0
        %1499 = vmatpush1.bf16.msra.mxu0 %v1482
        %1500 = vmatprep.subr.bf16.mxu0 0
        %1501 = vmatpush1.bf16.msra.mxu0 %v1483
        %1502 = vmatprep.subr.bf16.mxu0 0
        %1503 = vmatpush1.bf16.msra.mxu0 %v1484
        %1504 = vmatprep.subr.bf16.mxu0 0
        %1505 = vmatpush1.bf16.msra.mxu0 %v1485
        %1506 = vmatprep.subr.bf16.mxu0 0
        %1507 = vmatpush1.bf16.msra.mxu0 %v1486
        %1508 = vmatprep.subr.bf16.mxu0 0
        %1509 = vmatpush1.bf16.msra.mxu0 %v1487
        %1510 = vmatprep.subr.bf16.mxu0 0
        %1511 = vmatpush1.bf16.msra.mxu0 %v1488
        %1512 = vmatprep.subr.bf16.mxu0 0
        %1513 = vmatpush1.bf16.msra.mxu0 %v1489
        %1514 = vmatprep.subr.bf16.mxu0 0
        %1515 = vmatpush1.bf16.msra.mxu0 0
        %1516 = vmatprep.subr.bf16.mxu0 0
        %1517 = vmatpush1.bf16.msra.mxu0 0
        %1518 = vmatprep.subr.bf16.mxu0 0
        %1519 = vmatpush1.bf16.msra.mxu0 0
        %1520 = vmatprep.subr.bf16.mxu0 0
        %1521 = vmatpush1.bf16.msra.mxu0 0
        %1522 = vmatprep.subr.bf16.mxu0 0
        %1523 = vmatpush1.bf16.msra.mxu0 0
        %1524 = vmatprep.subr.bf16.mxu0 0
        %1525 = vmatpush1.bf16.msra.mxu0 0
        %1526 = vmatprep.subr.bf16.mxu0 0
        %1527 = vmatpush1.bf16.msra.mxu0 0
        %1528 = vmatprep.subr.bf16.mxu0 0
        %1529 = vmatpush1.bf16.msra.mxu0 0
        %1530 = vmatprep.mubr.bf16.mxu0 0
        %1531 = vmatmul.mubr.bf16.gmra.mrb[0].mxu0 %v1448
        %v1532 = vpop.f32.mrb[0].mxu0
        %v1533 = vadd.f32 0.0, %v1532
        %v1534 = vpop.f32.mrb[0].mxu0
        %v1535 = vpop.f32.mrb[0].mxu0
        %v1536 = vpop.f32.mrb[0].mxu0
        %1537 = vdwg.mxu0
        %v1554 = vunpack.c.l.b16 %v1403
        %v1555 = vunpack.c.l.b16 %v1404
        %v1556 = vunpack.c.l.b16 %v1405
        %v1557 = vunpack.c.l.b16 %v1406
        %v1558 = vunpack.c.l.b16 %v1407
        %v1559 = vunpack.c.l.b16 %v1408
        %v1560 = vunpack.c.l.b16 %v1409
        %v1561 = vunpack.c.l.b16 %v1410
        %v1562 = vunpack.c.l.b16 %v1411
        %v1563 = vunpack.c.l.b16 %v1412
        %v1564 = vunpack.c.l.b16 %v1413
        %v1565 = vunpack.c.l.b16 %v1414
        %v1566 = vunpack.c.l.b16 %v1415
        %v1567 = vunpack.c.l.b16 %v1416
        %v1568 = vunpack.c.l.b16 %v1417
        %v1569 = vunpack.c.l.b16 %v1418
        %v1570 = vpack.c.b16 %v1555, %v1554
        %v1571 = vpack.c.b16 %v1557, %v1556
        %v1572 = vpack.c.b16 %v1559, %v1558
        %v1573 = vpack.c.b16 %v1561, %v1560
        %v1574 = vpack.c.b16 %v1563, %v1562
        %v1575 = vpack.c.b16 %v1565, %v1564
        %v1576 = vpack.c.b16 %v1567, %v1566
        %v1577 = vpack.c.b16 %v1569, %v1568
        %1586 = vmatprep.subr.bf16.mxu0 0
        %1587 = vmatpush1.bf16.msra.mxu0 %v1570
        %1588 = vmatprep.subr.bf16.mxu0 0
        %1589 = vmatpush1.bf16.msra.mxu0 %v1571
        %1590 = vmatprep.subr.bf16.mxu0 0
        %1591 = vmatpush1.bf16.msra.mxu0 %v1572
        %1592 = vmatprep.subr.bf16.mxu0 0
        %1593 = vmatpush1.bf16.msra.mxu0 %v1573
        %1594 = vmatprep.subr.bf16.mxu0 0
        %1595 = vmatpush1.bf16.msra.mxu0 %v1574
        %1596 = vmatprep.subr.bf16.mxu0 0
        %1597 = vmatpush1.bf16.msra.mxu0 %v1575
        %1598 = vmatprep.subr.bf16.mxu0 0
        %1599 = vmatpush1.bf16.msra.mxu0 %v1576
        %1600 = vmatprep.subr.bf16.mxu0 0
        %1601 = vmatpush1.bf16.msra.mxu0 %v1577
        %1602 = vmatprep.subr.bf16.mxu0 0
        %1603 = vmatpush1.bf16.msra.mxu0 0
        %1604 = vmatprep.subr.bf16.mxu0 0
        %1605 = vmatpush1.bf16.msra.mxu0 0
        %1606 = vmatprep.subr.bf16.mxu0 0
        %1607 = vmatpush1.bf16.msra.mxu0 0
        %1608 = vmatprep.subr.bf16.mxu0 0
        %1609 = vmatpush1.bf16.msra.mxu0 0
        %1610 = vmatprep.subr.bf16.mxu0 0
        %1611 = vmatpush1.bf16.msra.mxu0 0
        %1612 = vmatprep.subr.bf16.mxu0 0
        %1613 = vmatpush1.bf16.msra.mxu0 0
        %1614 = vmatprep.subr.bf16.mxu0 0
        %1615 = vmatpush1.bf16.msra.mxu0 0
        %1616 = vmatprep.subr.bf16.mxu0 0
        %1617 = vmatpush1.bf16.msra.mxu0 0
        %1618 = vmatprep.mubr.bf16.mxu0 0
        %1619 = vmatmul.mubr.bf16.gmra.mrb[0].mxu0 %v1401
        %v1620 = vpop.f32.mrb[0].mxu0
        %v1621 = vadd.f32 %v1533, %v1620
        %v1622 = vpop.f32.mrb[0].mxu0
        %v1623 = vpop.f32.mrb[0].mxu0
        %v1624 = vpop.f32.mrb[0].mxu0
        %1625 = vdwg.mxu0
        %v1626 = vld [vmem:[#allocation3] sm:$0xe]
        %s1627 = scalar_lea.vmem [#allocation11], 512
        %v1628 = vld [vmem:[%s1627] sm:$0xf]
        %v1629 = vld [vmem:[%s1627 + $0x4] sm:$0xf]
        %v1630 = vld [vmem:[%s1627 + $0x8] sm:$0xf]
        %v1631 = vld [vmem:[%s1627 + $0xc] sm:$0xf]
        %v1632 = vld [vmem:[%s1627 + $0x10] sm:$0xf]
        %v1633 = vld [vmem:[%s1627 + $0x14] sm:$0xf]
        %v1634 = vld [vmem:[%s1627 + $0x18] sm:$0xf]
        %v1635 = vld [vmem:[%s1627 + $0x1c] sm:$0xf]
        %v1636 = vld [vmem:[%s1627 + $0x20] sm:$0xf]
        %v1637 = vld [vmem:[%s1627 + $0x24] sm:$0xf]
        %v1638 = vld [vmem:[%s1627 + $0x28] sm:$0xf]
        %v1639 = vld [vmem:[%s1627 + $0x2c] sm:$0xf]
        %v1640 = vld [vmem:[%s1627 + $0x30] sm:$0xf]
        %v1641 = vld [vmem:[%s1627 + $0x34] sm:$0xf]
        %v1642 = vld [vmem:[%s1627 + $0x38] sm:$0xf]
        %v1643 = vld [vmem:[%s1627 + $0x3c] sm:$0xf]
        %v1645 = vunpack.c.l.b16 %v1626
        %v1646 = vpack.c.b16 %v1440, %v1645
        %v1647 = vrot.slane %v1646, 1
        %v1665 = vunpack.c.l.b16 %v1628
        %v1666 = vunpack.c.l.b16 %v1629
        %v1667 = vunpack.c.l.b16 %v1630
        %v1668 = vunpack.c.l.b16 %v1631
        %v1669 = vunpack.c.l.b16 %v1632
        %v1670 = vunpack.c.l.b16 %v1633
        %v1671 = vunpack.c.l.b16 %v1634
        %v1672 = vunpack.c.l.b16 %v1635
        %v1673 = vunpack.c.l.b16 %v1636
        %v1674 = vunpack.c.l.b16 %v1637
        %v1675 = vunpack.c.l.b16 %v1638
        %v1676 = vunpack.c.l.b16 %v1639
        %v1677 = vunpack.c.l.b16 %v1640
        %v1678 = vunpack.c.l.b16 %v1641
        %v1679 = vunpack.c.l.b16 %v1642
        %v1680 = vunpack.c.l.b16 %v1643
        %v1681 = vpack.c.b16 %v1666, %v1665
        %v1682 = vpack.c.b16 %v1668, %v1667
        %v1683 = vpack.c.b16 %v1670, %v1669
        %v1684 = vpack.c.b16 %v1672, %v1671
        %v1685 = vpack.c.b16 %v1674, %v1673
        %v1686 = vpack.c.b16 %v1676, %v1675
        %v1687 = vpack.c.b16 %v1678, %v1677
        %v1688 = vpack.c.b16 %v1680, %v1679
        %1697 = vmatprep.subr.bf16.mxu0 0
        %1698 = vmatpush1.bf16.msra.mxu0 %v1681
        %1699 = vmatprep.subr.bf16.mxu0 0
        %1700 = vmatpush1.bf16.msra.mxu0 %v1682
        %1701 = vmatprep.subr.bf16.mxu0 0
        %1702 = vmatpush1.bf16.msra.mxu0 %v1683
        %1703 = vmatprep.subr.bf16.mxu0 0
        %1704 = vmatpush1.bf16.msra.mxu0 %v1684
        %1705 = vmatprep.subr.bf16.mxu0 0
        %1706 = vmatpush1.bf16.msra.mxu0 %v1685
        %1707 = vmatprep.subr.bf16.mxu0 0
        %1708 = vmatpush1.bf16.msra.mxu0 %v1686
        %1709 = vmatprep.subr.bf16.mxu0 0
        %1710 = vmatpush1.bf16.msra.mxu0 %v1687
        %1711 = vmatprep.subr.bf16.mxu0 0
        %1712 = vmatpush1.bf16.msra.mxu0 %v1688
        %1713 = vmatprep.subr.bf16.mxu0 0
        %1714 = vmatpush1.bf16.msra.mxu0 0
        %1715 = vmatprep.subr.bf16.mxu0 0
        %1716 = vmatpush1.bf16.msra.mxu0 0
        %1717 = vmatprep.subr.bf16.mxu0 0
        %1718 = vmatpush1.bf16.msra.mxu0 0
        %1719 = vmatprep.subr.bf16.mxu0 0
        %1720 = vmatpush1.bf16.msra.mxu0 0
        %1721 = vmatprep.subr.bf16.mxu0 0
        %1722 = vmatpush1.bf16.msra.mxu0 0
        %1723 = vmatprep.subr.bf16.mxu0 0
        %1724 = vmatpush1.bf16.msra.mxu0 0
        %1725 = vmatprep.subr.bf16.mxu0 0
        %1726 = vmatpush1.bf16.msra.mxu0 0
        %1727 = vmatprep.subr.bf16.mxu0 0
        %1728 = vmatpush1.bf16.msra.mxu0 0
        %1729 = vmatprep.mubr.bf16.mxu0 0
        %1730 = vmatmul.mubr.bf16.gmra.mrb[0].mxu0 %v1647
        %v1731 = vpop.f32.mrb[0].mxu0
        %v1732 = vadd.f32 0.0, %v1731
        %v1733 = vpop.f32.mrb[0].mxu0
        %v1734 = vpop.f32.mrb[0].mxu0
        %v1735 = vpop.f32.mrb[0].mxu0
        %1736 = vdwg.mxu0
        %v1737 = vadd.f32 %v1621, %v1732
        %v1738 = vld [vmem:[#allocation13 + $0x2] sm:$0x1]
        %v1739 = vlaneseq
        %v1740 = vshrl.u32 %v1739, 7
        %v1741 = vsub.s32 0, %v1740
        %v1742 = vrot.slane %v1738, %v1741
        %v1743 = vadd.f32 %v1737, %v1742
        %s1744 = sld [smem:[#allocation17 + $0x2]]
        %vm1745 = vcmp.ge.f32.partialorder %v1743, 0.0
        %v1746 = vstv %s1744
        %v1747 = vmul.f32 %v1746, %v1743
        %v1748 = vsel %vm1745, %v1743, %v1747
        %v1749 = vpack.c.bf16 %v1748, %v1748
        %v1751 = vunpack.c.l.b16 %v1749
        %v1752 = vpack.c.b16 %v1751, %v1751
        %v1754 = vshrl.u32 %v1752, 16
        %v1756 = vrot.slane %v1754, 7
        %v1757 = vshll.u32 %v1752, 16
        %v1759 = vor.u32 %v1756, %v1757
        %v1760 = vrot.slane %v1756, 4
        %v1763 = vsel %vm665, %v1759, %v1401
        %1764 = vst [vmem:[#allocation3] sm:$0xf] %v1763
        %v1765 = vld [vmem:[#allocation3 + $0x4] sm:$0x1]
        %v1766 = vsel %vm421, %v1760, %v1765
        %1767 = vst [vmem:[#allocation3 + $0x4] sm:$0x1] %v1766
        %v1768 = vld [vmem:[#allocation3] sm:$0xf]
        %s1769 = scalar_lea.vmem [#allocation11], 576
        %v1770 = vld [vmem:[%s1769] sm:$0xf]
        %v1771 = vld [vmem:[%s1769 + $0x4] sm:$0xf]
        %v1772 = vld [vmem:[%s1769 + $0x8] sm:$0xf]
        %v1773 = vld [vmem:[%s1769 + $0xc] sm:$0xf]
        %v1774 = vld [vmem:[%s1769 + $0x10] sm:$0xf]
        %v1775 = vld [vmem:[%s1769 + $0x14] sm:$0xf]
        %v1776 = vld [vmem:[%s1769 + $0x18] sm:$0xf]
        %v1777 = vld [vmem:[%s1769 + $0x1c] sm:$0xf]
        %v1778 = vld [vmem:[%s1769 + $0x20] sm:$0xf]
        %v1779 = vld [vmem:[%s1769 + $0x24] sm:$0xf]
        %v1780 = vld [vmem:[%s1769 + $0x28] sm:$0xf]
        %v1781 = vld [vmem:[%s1769 + $0x2c] sm:$0xf]
        %v1782 = vld [vmem:[%s1769 + $0x30] sm:$0xf]
        %v1783 = vld [vmem:[%s1769 + $0x34] sm:$0xf]
        %v1784 = vld [vmem:[%s1769 + $0x38] sm:$0xf]
        %v1785 = vld [vmem:[%s1769 + $0x3c] sm:$0xf]
        %v1786 = vld [vmem:[#allocation3 + $0x4] sm:$0x1]
        %s1787 = scalar_lea.vmem [#allocation11], 640
        %v1788 = vld [vmem:[%s1787] sm:$0xf]
        %v1789 = vld [vmem:[%s1787 + $0x4] sm:$0xf]
        %v1790 = vld [vmem:[%s1787 + $0x8] sm:$0xf]
        %v1791 = vld [vmem:[%s1787 + $0xc] sm:$0xf]
        %v1792 = vld [vmem:[%s1787 + $0x10] sm:$0xf]
        %v1793 = vld [vmem:[%s1787 + $0x14] sm:$0xf]
        %v1794 = vld [vmem:[%s1787 + $0x18] sm:$0xf]
        %v1795 = vld [vmem:[%s1787 + $0x1c] sm:$0xf]
        %v1796 = vld [vmem:[%s1787 + $0x20] sm:$0xf]
        %v1797 = vld [vmem:[%s1787 + $0x24] sm:$0xf]
        %v1798 = vld [vmem:[%s1787 + $0x28] sm:$0xf]
        %v1799 = vld [vmem:[%s1787 + $0x2c] sm:$0xf]
        %v1800 = vld [vmem:[%s1787 + $0x30] sm:$0xf]
        %v1801 = vld [vmem:[%s1787 + $0x34] sm:$0xf]
        %v1802 = vld [vmem:[%s1787 + $0x38] sm:$0xf]
        %v1803 = vld [vmem:[%s1787 + $0x3c] sm:$0xf]
        %v1806 = vunpack.c.l.b16 %v1768
        %v1807 = vunpack.c.l.b16 %v1786
        %v1808 = vpack.c.b16 %v1807, %v1806
        %v1810 = vshrl.u32 %v1808, 16
        %v1812 = vshll.u32 %v1808, 16
        %v1814 = vrot.slane %v1812, 1
        %v1815 = vor.u32 %v1810, %v1814
        %v1833 = vunpack.c.l.b16 %v1788
        %v1834 = vunpack.c.l.b16 %v1789
        %v1835 = vunpack.c.l.b16 %v1790
        %v1836 = vunpack.c.l.b16 %v1791
        %v1837 = vunpack.c.l.b16 %v1792
        %v1838 = vunpack.c.l.b16 %v1793
        %v1839 = vunpack.c.l.b16 %v1794
        %v1840 = vunpack.c.l.b16 %v1795
        %v1841 = vunpack.c.l.b16 %v1796
        %v1842 = vunpack.c.l.b16 %v1797
        %v1843 = vunpack.c.l.b16 %v1798
        %v1844 = vunpack.c.l.b16 %v1799
        %v1845 = vunpack.c.l.b16 %v1800
        %v1846 = vunpack.c.l.b16 %v1801
        %v1847 = vunpack.c.l.b16 %v1802
        %v1848 = vunpack.c.l.b16 %v1803
        %v1849 = vpack.c.b16 %v1834, %v1833
        %v1850 = vpack.c.b16 %v1836, %v1835
        %v1851 = vpack.c.b16 %v1838, %v1837
        %v1852 = vpack.c.b16 %v1840, %v1839
        %v1853 = vpack.c.b16 %v1842, %v1841
        %v1854 = vpack.c.b16 %v1844, %v1843
        %v1855 = vpack.c.b16 %v1846, %v1845
        %v1856 = vpack.c.b16 %v1848, %v1847
        %1865 = vmatprep.subr.bf16.mxu0 0
        %1866 = vmatpush1.bf16.msra.mxu0 %v1849
        %1867 = vmatprep.subr.bf16.mxu0 0
        %1868 = vmatpush1.bf16.msra.mxu0 %v1850
        %1869 = vmatprep.subr.bf16.mxu0 0
        %1870 = vmatpush1.bf16.msra.mxu0 %v1851
        %1871 = vmatprep.subr.bf16.mxu0 0
        %1872 = vmatpush1.bf16.msra.mxu0 %v1852
        %1873 = vmatprep.subr.bf16.mxu0 0
        %1874 = vmatpush1.bf16.msra.mxu0 %v1853
        %1875 = vmatprep.subr.bf16.mxu0 0
        %1876 = vmatpush1.bf16.msra.mxu0 %v1854
        %1877 = vmatprep.subr.bf16.mxu0 0
        %1878 = vmatpush1.bf16.msra.mxu0 %v1855
        %1879 = vmatprep.subr.bf16.mxu0 0
        %1880 = vmatpush1.bf16.msra.mxu0 %v1856
        %1881 = vmatprep.subr.bf16.mxu0 0
        %1882 = vmatpush1.bf16.msra.mxu0 0
        %1883 = vmatprep.subr.bf16.mxu0 0
        %1884 = vmatpush1.bf16.msra.mxu0 0
        %1885 = vmatprep.subr.bf16.mxu0 0
        %1886 = vmatpush1.bf16.msra.mxu0 0
        %1887 = vmatprep.subr.bf16.mxu0 0
        %1888 = vmatpush1.bf16.msra.mxu0 0
        %1889 = vmatprep.subr.bf16.mxu0 0
        %1890 = vmatpush1.bf16.msra.mxu0 0
        %1891 = vmatprep.subr.bf16.mxu0 0
        %1892 = vmatpush1.bf16.msra.mxu0 0
        %1893 = vmatprep.subr.bf16.mxu0 0
        %1894 = vmatpush1.bf16.msra.mxu0 0
        %1895 = vmatprep.subr.bf16.mxu0 0
        %1896 = vmatpush1.bf16.msra.mxu0 0
        %1897 = vmatprep.mubr.bf16.mxu0 0
        %1898 = vmatmul.mubr.bf16.gmra.mrb[0].mxu0 %v1815
        %v1899 = vpop.f32.mrb[0].mxu0
        %v1900 = vadd.f32 0.0, %v1899
        %v1901 = vpop.f32.mrb[0].mxu0
        %v1902 = vpop.f32.mrb[0].mxu0
        %v1903 = vpop.f32.mrb[0].mxu0
        %1904 = vdwg.mxu0
        %v1921 = vunpack.c.l.b16 %v1770
        %v1922 = vunpack.c.l.b16 %v1771
        %v1923 = vunpack.c.l.b16 %v1772
        %v1924 = vunpack.c.l.b16 %v1773
        %v1925 = vunpack.c.l.b16 %v1774
        %v1926 = vunpack.c.l.b16 %v1775
        %v1927 = vunpack.c.l.b16 %v1776
        %v1928 = vunpack.c.l.b16 %v1777
        %v1929 = vunpack.c.l.b16 %v1778
        %v1930 = vunpack.c.l.b16 %v1779
        %v1931 = vunpack.c.l.b16 %v1780
        %v1932 = vunpack.c.l.b16 %v1781
        %v1933 = vunpack.c.l.b16 %v1782
        %v1934 = vunpack.c.l.b16 %v1783
        %v1935 = vunpack.c.l.b16 %v1784
        %v1936 = vunpack.c.l.b16 %v1785
        %v1937 = vpack.c.b16 %v1922, %v1921
        %v1938 = vpack.c.b16 %v1924, %v1923
        %v1939 = vpack.c.b16 %v1926, %v1925
        %v1940 = vpack.c.b16 %v1928, %v1927
        %v1941 = vpack.c.b16 %v1930, %v1929
        %v1942 = vpack.c.b16 %v1932, %v1931
        %v1943 = vpack.c.b16 %v1934, %v1933
        %v1944 = vpack.c.b16 %v1936, %v1935
        %1953 = vmatprep.subr.bf16.mxu0 0
        %1954 = vmatpush1.bf16.msra.mxu0 %v1937
        %1955 = vmatprep.subr.bf16.mxu0 0
        %1956 = vmatpush1.bf16.msra.mxu0 %v1938
        %1957 = vmatprep.subr.bf16.mxu0 0
        %1958 = vmatpush1.bf16.msra.mxu0 %v1939
        %1959 = vmatprep.subr.bf16.mxu0 0
        %1960 = vmatpush1.bf16.msra.mxu0 %v1940
        %1961 = vmatprep.subr.bf16.mxu0 0
        %1962 = vmatpush1.bf16.msra.mxu0 %v1941
        %1963 = vmatprep.subr.bf16.mxu0 0
        %1964 = vmatpush1.bf16.msra.mxu0 %v1942
        %1965 = vmatprep.subr.bf16.mxu0 0
        %1966 = vmatpush1.bf16.msra.mxu0 %v1943
        %1967 = vmatprep.subr.bf16.mxu0 0
        %1968 = vmatpush1.bf16.msra.mxu0 %v1944
        %1969 = vmatprep.subr.bf16.mxu0 0
        %1970 = vmatpush1.bf16.msra.mxu0 0
        %1971 = vmatprep.subr.bf16.mxu0 0
        %1972 = vmatpush1.bf16.msra.mxu0 0
        %1973 = vmatprep.subr.bf16.mxu0 0
        %1974 = vmatpush1.bf16.msra.mxu0 0
        %1975 = vmatprep.subr.bf16.mxu0 0
        %1976 = vmatpush1.bf16.msra.mxu0 0
        %1977 = vmatprep.subr.bf16.mxu0 0
        %1978 = vmatpush1.bf16.msra.mxu0 0
        %1979 = vmatprep.subr.bf16.mxu0 0
        %1980 = vmatpush1.bf16.msra.mxu0 0
        %1981 = vmatprep.subr.bf16.mxu0 0
        %1982 = vmatpush1.bf16.msra.mxu0 0
        %1983 = vmatprep.subr.bf16.mxu0 0
        %1984 = vmatpush1.bf16.msra.mxu0 0
        %1985 = vmatprep.mubr.bf16.mxu0 0
        %1986 = vmatmul.mubr.bf16.gmra.mrb[0].mxu0 %v1768
        %v1987 = vpop.f32.mrb[0].mxu0
        %v1988 = vadd.f32 %v1900, %v1987
        %v1989 = vpop.f32.mrb[0].mxu0
        %v1990 = vpop.f32.mrb[0].mxu0
        %v1991 = vpop.f32.mrb[0].mxu0
        %1992 = vdwg.mxu0
        %v1993 = vld [vmem:[#allocation3] sm:$0xe]
        %s1994 = scalar_lea.vmem [#allocation11], 704
        %v1995 = vld [vmem:[%s1994] sm:$0xf]
        %v1996 = vld [vmem:[%s1994 + $0x4] sm:$0xf]
        %v1997 = vld [vmem:[%s1994 + $0x8] sm:$0xf]
        %v1998 = vld [vmem:[%s1994 + $0xc] sm:$0xf]
        %v1999 = vld [vmem:[%s1994 + $0x10] sm:$0xf]
        %v2000 = vld [vmem:[%s1994 + $0x14] sm:$0xf]
        %v2001 = vld [vmem:[%s1994 + $0x18] sm:$0xf]
        %v2002 = vld [vmem:[%s1994 + $0x1c] sm:$0xf]
        %v2003 = vld [vmem:[%s1994 + $0x20] sm:$0xf]
        %v2004 = vld [vmem:[%s1994 + $0x24] sm:$0xf]
        %v2005 = vld [vmem:[%s1994 + $0x28] sm:$0xf]
        %v2006 = vld [vmem:[%s1994 + $0x2c] sm:$0xf]
        %v2007 = vld [vmem:[%s1994 + $0x30] sm:$0xf]
        %v2008 = vld [vmem:[%s1994 + $0x34] sm:$0xf]
        %v2009 = vld [vmem:[%s1994 + $0x38] sm:$0xf]
        %v2010 = vld [vmem:[%s1994 + $0x3c] sm:$0xf]
        %v2012 = vunpack.c.l.b16 %v1993
        %v2013 = vpack.c.b16 %v1807, %v2012
        %v2014 = vrot.slane %v2013, 1
        %v2032 = vunpack.c.l.b16 %v1995
        %v2033 = vunpack.c.l.b16 %v1996
        %v2034 = vunpack.c.l.b16 %v1997
        %v2035 = vunpack.c.l.b16 %v1998
        %v2036 = vunpack.c.l.b16 %v1999
        %v2037 = vunpack.c.l.b16 %v2000
        %v2038 = vunpack.c.l.b16 %v2001
        %v2039 = vunpack.c.l.b16 %v2002
        %v2040 = vunpack.c.l.b16 %v2003
        %v2041 = vunpack.c.l.b16 %v2004
        %v2042 = vunpack.c.l.b16 %v2005
        %v2043 = vunpack.c.l.b16 %v2006
        %v2044 = vunpack.c.l.b16 %v2007
        %v2045 = vunpack.c.l.b16 %v2008
        %v2046 = vunpack.c.l.b16 %v2009
        %v2047 = vunpack.c.l.b16 %v2010
        %v2048 = vpack.c.b16 %v2033, %v2032
        %v2049 = vpack.c.b16 %v2035, %v2034
        %v2050 = vpack.c.b16 %v2037, %v2036
        %v2051 = vpack.c.b16 %v2039, %v2038
        %v2052 = vpack.c.b16 %v2041, %v2040
        %v2053 = vpack.c.b16 %v2043, %v2042
        %v2054 = vpack.c.b16 %v2045, %v2044
        %v2055 = vpack.c.b16 %v2047, %v2046
        %2064 = vmatprep.subr.bf16.mxu0 0
        %2065 = vmatpush1.bf16.msra.mxu0 %v2048
        %2066 = vmatprep.subr.bf16.mxu0 0
        %2067 = vmatpush1.bf16.msra.mxu0 %v2049
        %2068 = vmatprep.subr.bf16.mxu0 0
        %2069 = vmatpush1.bf16.msra.mxu0 %v2050
        %2070 = vmatprep.subr.bf16.mxu0 0
        %2071 = vmatpush1.bf16.msra.mxu0 %v2051
        %2072 = vmatprep.subr.bf16.mxu0 0
        %2073 = vmatpush1.bf16.msra.mxu0 %v2052
        %2074 = vmatprep.subr.bf16.mxu0 0
        %2075 = vmatpush1.bf16.msra.mxu0 %v2053
        %2076 = vmatprep.subr.bf16.mxu0 0
        %2077 = vmatpush1.bf16.msra.mxu0 %v2054
        %2078 = vmatprep.subr.bf16.mxu0 0
        %2079 = vmatpush1.bf16.msra.mxu0 %v2055
        %2080 = vmatprep.subr.bf16.mxu0 0
        %2081 = vmatpush1.bf16.msra.mxu0 0
        %2082 = vmatprep.subr.bf16.mxu0 0
        %2083 = vmatpush1.bf16.msra.mxu0 0
        %2084 = vmatprep.subr.bf16.mxu0 0
        %2085 = vmatpush1.bf16.msra.mxu0 0
        %2086 = vmatprep.subr.bf16.mxu0 0
        %2087 = vmatpush1.bf16.msra.mxu0 0
        %2088 = vmatprep.subr.bf16.mxu0 0
        %2089 = vmatpush1.bf16.msra.mxu0 0
        %2090 = vmatprep.subr.bf16.mxu0 0
        %2091 = vmatpush1.bf16.msra.mxu0 0
        %2092 = vmatprep.subr.bf16.mxu0 0
        %2093 = vmatpush1.bf16.msra.mxu0 0
        %2094 = vmatprep.subr.bf16.mxu0 0
        %2095 = vmatpush1.bf16.msra.mxu0 0
        %2096 = vmatprep.mubr.bf16.mxu0 0
        %2097 = vmatmul.mubr.bf16.gmra.mrb[0].mxu0 %v2014
        %v2098 = vpop.f32.mrb[0].mxu0
        %v2099 = vadd.f32 0.0, %v2098
        %v2100 = vpop.f32.mrb[0].mxu0
        %v2101 = vpop.f32.mrb[0].mxu0
        %v2102 = vpop.f32.mrb[0].mxu0
        %2103 = vdwg.mxu0
        %v2104 = vadd.f32 %v1988, %v2099
        %v2105 = vld [vmem:[#allocation13 + $0x3] sm:$0x1]
        %v2106 = vlaneseq
        %v2107 = vshrl.u32 %v2106, 7
        %v2108 = vsub.s32 0, %v2107
        %v2109 = vrot.slane %v2105, %v2108
        %v2110 = vadd.f32 %v2104, %v2109
        %v2111 = vadd.f32 %v2110, %v1381
        %v2112 = vpack.c.bf16 %v2111, %v2111
        %v2114 = vunpack.c.l.b16 %v2112
        %v2115 = vpack.c.b16 %v2114, %v2114
        %v2117 = vshrl.u32 %v2115, 16
        %v2119 = vrot.slane %v2117, 7
        %v2120 = vshll.u32 %v2115, 16
        %v2122 = vor.u32 %v2119, %v2120
        %v2123 = vrot.slane %v2119, 4
        %v2126 = vsel %vm665, %v2122, %v1768
        %2127 = vst [vmem:[#allocation3] sm:$0xf] %v2126
        %v2128 = vld [vmem:[#allocation3 + $0x4] sm:$0x1]
        %v2129 = vsel %vm421, %v2123, %v2128
        %2130 = vst [vmem:[#allocation3 + $0x4] sm:$0x1] %v2129
        %v2131 = vld [vmem:[#allocation3] sm:$0xf]
        %s2132 = scalar_lea.vmem [#allocation11], 768
        %v2133 = vld [vmem:[%s2132] sm:$0xf]
        %v2134 = vld [vmem:[%s2132 + $0x4] sm:$0xf]
        %v2135 = vld [vmem:[%s2132 + $0x8] sm:$0xf]
        %v2136 = vld [vmem:[%s2132 + $0xc] sm:$0xf]
        %v2137 = vld [vmem:[%s2132 + $0x10] sm:$0xf]
        %v2138 = vld [vmem:[%s2132 + $0x14] sm:$0xf]
        %v2139 = vld [vmem:[%s2132 + $0x18] sm:$0xf]
        %v2140 = vld [vmem:[%s2132 + $0x1c] sm:$0xf]
        %v2141 = vld [vmem:[%s2132 + $0x20] sm:$0xf]
        %v2142 = vld [vmem:[%s2132 + $0x24] sm:$0xf]
        %v2143 = vld [vmem:[%s2132 + $0x28] sm:$0xf]
        %v2144 = vld [vmem:[%s2132 + $0x2c] sm:$0xf]
        %v2145 = vld [vmem:[%s2132 + $0x30] sm:$0xf]
        %v2146 = vld [vmem:[%s2132 + $0x34] sm:$0xf]
        %v2147 = vld [vmem:[%s2132 + $0x38] sm:$0xf]
        %v2148 = vld [vmem:[%s2132 + $0x3c] sm:$0xf]
        %v2149 = vld [vmem:[#allocation3 + $0x4] sm:$0x1]
        %s2150 = scalar_lea.vmem [#allocation11], 832
        %v2151 = vld [vmem:[%s2150] sm:$0xf]
        %v2152 = vld [vmem:[%s2150 + $0x4] sm:$0xf]
        %v2153 = vld [vmem:[%s2150 + $0x8] sm:$0xf]
        %v2154 = vld [vmem:[%s2150 + $0xc] sm:$0xf]
        %v2155 = vld [vmem:[%s2150 + $0x10] sm:$0xf]
        %v2156 = vld [vmem:[%s2150 + $0x14] sm:$0xf]
        %v2157 = vld [vmem:[%s2150 + $0x18] sm:$0xf]
        %v2158 = vld [vmem:[%s2150 + $0x1c] sm:$0xf]
        %v2159 = vld [vmem:[%s2150 + $0x20] sm:$0xf]
        %v2160 = vld [vmem:[%s2150 + $0x24] sm:$0xf]
        %v2161 = vld [vmem:[%s2150 + $0x28] sm:$0xf]
        %v2162 = vld [vmem:[%s2150 + $0x2c] sm:$0xf]
        %v2163 = vld [vmem:[%s2150 + $0x30] sm:$0xf]
        %v2164 = vld [vmem:[%s2150 + $0x34] sm:$0xf]
        %v2165 = vld [vmem:[%s2150 + $0x38] sm:$0xf]
        %v2166 = vld [vmem:[%s2150 + $0x3c] sm:$0xf]
        %v2169 = vunpack.c.l.b16 %v2131
        %v2170 = vunpack.c.l.b16 %v2149
        %v2171 = vpack.c.b16 %v2170, %v2169
        %v2173 = vshrl.u32 %v2171, 16
        %v2175 = vshll.u32 %v2171, 16
        %v2177 = vrot.slane %v2175, 1
        %v2178 = vor.u32 %v2173, %v2177
        %v2196 = vunpack.c.l.b16 %v2151
        %v2197 = vunpack.c.l.b16 %v2152
        %v2198 = vunpack.c.l.b16 %v2153
        %v2199 = vunpack.c.l.b16 %v2154
        %v2200 = vunpack.c.l.b16 %v2155
        %v2201 = vunpack.c.l.b16 %v2156
        %v2202 = vunpack.c.l.b16 %v2157
        %v2203 = vunpack.c.l.b16 %v2158
        %v2204 = vunpack.c.l.b16 %v2159
        %v2205 = vunpack.c.l.b16 %v2160
        %v2206 = vunpack.c.l.b16 %v2161
        %v2207 = vunpack.c.l.b16 %v2162
        %v2208 = vunpack.c.l.b16 %v2163
        %v2209 = vunpack.c.l.b16 %v2164
        %v2210 = vunpack.c.l.b16 %v2165
        %v2211 = vunpack.c.l.b16 %v2166
        %v2212 = vpack.c.b16 %v2197, %v2196
        %v2213 = vpack.c.b16 %v2199, %v2198
        %v2214 = vpack.c.b16 %v2201, %v2200
        %v2215 = vpack.c.b16 %v2203, %v2202
        %v2216 = vpack.c.b16 %v2205, %v2204
        %v2217 = vpack.c.b16 %v2207, %v2206
        %v2218 = vpack.c.b16 %v2209, %v2208
        %v2219 = vpack.c.b16 %v2211, %v2210
        %2228 = vmatprep.subr.bf16.mxu0 0
        %2229 = vmatpush1.bf16.msra.mxu0 %v2212
        %2230 = vmatprep.subr.bf16.mxu0 0
        %2231 = vmatpush1.bf16.msra.mxu0 %v2213
        %2232 = vmatprep.subr.bf16.mxu0 0
        %2233 = vmatpush1.bf16.msra.mxu0 %v2214
        %2234 = vmatprep.subr.bf16.mxu0 0
        %2235 = vmatpush1.bf16.msra.mxu0 %v2215
        %2236 = vmatprep.subr.bf16.mxu0 0
        %2237 = vmatpush1.bf16.msra.mxu0 %v2216
        %2238 = vmatprep.subr.bf16.mxu0 0
        %2239 = vmatpush1.bf16.msra.mxu0 %v2217
        %2240 = vmatprep.subr.bf16.mxu0 0
        %2241 = vmatpush1.bf16.msra.mxu0 %v2218
        %2242 = vmatprep.subr.bf16.mxu0 0
        %2243 = vmatpush1.bf16.msra.mxu0 %v2219
        %2244 = vmatprep.subr.bf16.mxu0 0
        %2245 = vmatpush1.bf16.msra.mxu0 0
        %2246 = vmatprep.subr.bf16.mxu0 0
        %2247 = vmatpush1.bf16.msra.mxu0 0
        %2248 = vmatprep.subr.bf16.mxu0 0
        %2249 = vmatpush1.bf16.msra.mxu0 0
        %2250 = vmatprep.subr.bf16.mxu0 0
        %2251 = vmatpush1.bf16.msra.mxu0 0
        %2252 = vmatprep.subr.bf16.mxu0 0
        %2253 = vmatpush1.bf16.msra.mxu0 0
        %2254 = vmatprep.subr.bf16.mxu0 0
        %2255 = vmatpush1.bf16.msra.mxu0 0
        %2256 = vmatprep.subr.bf16.mxu0 0
        %2257 = vmatpush1.bf16.msra.mxu0 0
        %2258 = vmatprep.subr.bf16.mxu0 0
        %2259 = vmatpush1.bf16.msra.mxu0 0
        %2260 = vmatprep.mubr.bf16.mxu0 0
        %2261 = vmatmul.mubr.bf16.gmra.mrb[0].mxu0 %v2178
        %v2262 = vpop.f32.mrb[0].mxu0
        %v2263 = vadd.f32 0.0, %v2262
        %v2264 = vpop.f32.mrb[0].mxu0
        %v2265 = vpop.f32.mrb[0].mxu0
        %v2266 = vpop.f32.mrb[0].mxu0
        %2267 = vdwg.mxu0
        %v2284 = vunpack.c.l.b16 %v2133
        %v2285 = vunpack.c.l.b16 %v2134
        %v2286 = vunpack.c.l.b16 %v2135
        %v2287 = vunpack.c.l.b16 %v2136
        %v2288 = vunpack.c.l.b16 %v2137
        %v2289 = vunpack.c.l.b16 %v2138
        %v2290 = vunpack.c.l.b16 %v2139
        %v2291 = vunpack.c.l.b16 %v2140
        %v2292 = vunpack.c.l.b16 %v2141
        %v2293 = vunpack.c.l.b16 %v2142
        %v2294 = vunpack.c.l.b16 %v2143
        %v2295 = vunpack.c.l.b16 %v2144
        %v2296 = vunpack.c.l.b16 %v2145
        %v2297 = vunpack.c.l.b16 %v2146
        %v2298 = vunpack.c.l.b16 %v2147
        %v2299 = vunpack.c.l.b16 %v2148
        %v2300 = vpack.c.b16 %v2285, %v2284
        %v2301 = vpack.c.b16 %v2287, %v2286
        %v2302 = vpack.c.b16 %v2289, %v2288
        %v2303 = vpack.c.b16 %v2291, %v2290
        %v2304 = vpack.c.b16 %v2293, %v2292
        %v2305 = vpack.c.b16 %v2295, %v2294
        %v2306 = vpack.c.b16 %v2297, %v2296
        %v2307 = vpack.c.b16 %v2299, %v2298
        %2316 = vmatprep.subr.bf16.mxu0 0
        %2317 = vmatpush1.bf16.msra.mxu0 %v2300
        %2318 = vmatprep.subr.bf16.mxu0 0
        %2319 = vmatpush1.bf16.msra.mxu0 %v2301
        %2320 = vmatprep.subr.bf16.mxu0 0
        %2321 = vmatpush1.bf16.msra.mxu0 %v2302
        %2322 = vmatprep.subr.bf16.mxu0 0
        %2323 = vmatpush1.bf16.msra.mxu0 %v2303
        %2324 = vmatprep.subr.bf16.mxu0 0
        %2325 = vmatpush1.bf16.msra.mxu0 %v2304
        %2326 = vmatprep.subr.bf16.mxu0 0
        %2327 = vmatpush1.bf16.msra.mxu0 %v2305
        %2328 = vmatprep.subr.bf16.mxu0 0
        %2329 = vmatpush1.bf16.msra.mxu0 %v2306
        %2330 = vmatprep.subr.bf16.mxu0 0
        %2331 = vmatpush1.bf16.msra.mxu0 %v2307
        %2332 = vmatprep.subr.bf16.mxu0 0
        %2333 = vmatpush1.bf16.msra.mxu0 0
        %2334 = vmatprep.subr.bf16.mxu0 0
        %2335 = vmatpush1.bf16.msra.mxu0 0
        %2336 = vmatprep.subr.bf16.mxu0 0
        %2337 = vmatpush1.bf16.msra.mxu0 0
        %2338 = vmatprep.subr.bf16.mxu0 0
        %2339 = vmatpush1.bf16.msra.mxu0 0
        %2340 = vmatprep.subr.bf16.mxu0 0
        %2341 = vmatpush1.bf16.msra.mxu0 0
        %2342 = vmatprep.subr.bf16.mxu0 0
        %2343 = vmatpush1.bf16.msra.mxu0 0
        %2344 = vmatprep.subr.bf16.mxu0 0
        %2345 = vmatpush1.bf16.msra.mxu0 0
        %2346 = vmatprep.subr.bf16.mxu0 0
        %2347 = vmatpush1.bf16.msra.mxu0 0
        %2348 = vmatprep.mubr.bf16.mxu0 0
        %2349 = vmatmul.mubr.bf16.gmra.mrb[0].mxu0 %v2131
        %v2350 = vpop.f32.mrb[0].mxu0
        %v2351 = vadd.f32 %v2263, %v2350
        %v2352 = vpop.f32.mrb[0].mxu0
        %v2353 = vpop.f32.mrb[0].mxu0
        %v2354 = vpop.f32.mrb[0].mxu0
        %2355 = vdwg.mxu0
        %v2356 = vld [vmem:[#allocation3] sm:$0xe]
        %s2357 = scalar_lea.vmem [#allocation11], 896
        %v2358 = vld [vmem:[%s2357] sm:$0xf]
        %v2359 = vld [vmem:[%s2357 + $0x4] sm:$0xf]
        %v2360 = vld [vmem:[%s2357 + $0x8] sm:$0xf]
        %v2361 = vld [vmem:[%s2357 + $0xc] sm:$0xf]
        %v2362 = vld [vmem:[%s2357 + $0x10] sm:$0xf]
        %v2363 = vld [vmem:[%s2357 + $0x14] sm:$0xf]
        %v2364 = vld [vmem:[%s2357 + $0x18] sm:$0xf]
        %v2365 = vld [vmem:[%s2357 + $0x1c] sm:$0xf]
        %v2366 = vld [vmem:[%s2357 + $0x20] sm:$0xf]
        %v2367 = vld [vmem:[%s2357 + $0x24] sm:$0xf]
        %v2368 = vld [vmem:[%s2357 + $0x28] sm:$0xf]
        %v2369 = vld [vmem:[%s2357 + $0x2c] sm:$0xf]
        %v2370 = vld [vmem:[%s2357 + $0x30] sm:$0xf]
        %v2371 = vld [vmem:[%s2357 + $0x34] sm:$0xf]
        %v2372 = vld [vmem:[%s2357 + $0x38] sm:$0xf]
        %v2373 = vld [vmem:[%s2357 + $0x3c] sm:$0xf]
        %v2375 = vunpack.c.l.b16 %v2356
        %v2376 = vpack.c.b16 %v2170, %v2375
        %v2377 = vrot.slane %v2376, 1
        %v2395 = vunpack.c.l.b16 %v2358
        %v2396 = vunpack.c.l.b16 %v2359
        %v2397 = vunpack.c.l.b16 %v2360
        %v2398 = vunpack.c.l.b16 %v2361
        %v2399 = vunpack.c.l.b16 %v2362
        %v2400 = vunpack.c.l.b16 %v2363
        %v2401 = vunpack.c.l.b16 %v2364
        %v2402 = vunpack.c.l.b16 %v2365
        %v2403 = vunpack.c.l.b16 %v2366
        %v2404 = vunpack.c.l.b16 %v2367
        %v2405 = vunpack.c.l.b16 %v2368
        %v2406 = vunpack.c.l.b16 %v2369
        %v2407 = vunpack.c.l.b16 %v2370
        %v2408 = vunpack.c.l.b16 %v2371
        %v2409 = vunpack.c.l.b16 %v2372
        %v2410 = vunpack.c.l.b16 %v2373
        %v2411 = vpack.c.b16 %v2396, %v2395
        %v2412 = vpack.c.b16 %v2398, %v2397
        %v2413 = vpack.c.b16 %v2400, %v2399
        %v2414 = vpack.c.b16 %v2402, %v2401
        %v2415 = vpack.c.b16 %v2404, %v2403
        %v2416 = vpack.c.b16 %v2406, %v2405
        %v2417 = vpack.c.b16 %v2408, %v2407
        %v2418 = vpack.c.b16 %v2410, %v2409
        %2427 = vmatprep.subr.bf16.mxu0 0
        %2428 = vmatpush1.bf16.msra.mxu0 %v2411
        %2429 = vmatprep.subr.bf16.mxu0 0
        %2430 = vmatpush1.bf16.msra.mxu0 %v2412
        %2431 = vmatprep.subr.bf16.mxu0 0
        %2432 = vmatpush1.bf16.msra.mxu0 %v2413
        %2433 = vmatprep.subr.bf16.mxu0 0
        %2434 = vmatpush1.bf16.msra.mxu0 %v2414
        %2435 = vmatprep.subr.bf16.mxu0 0
        %2436 = vmatpush1.bf16.msra.mxu0 %v2415
        %2437 = vmatprep.subr.bf16.mxu0 0
        %2438 = vmatpush1.bf16.msra.mxu0 %v2416
        %2439 = vmatprep.subr.bf16.mxu0 0
        %2440 = vmatpush1.bf16.msra.mxu0 %v2417
        %2441 = vmatprep.subr.bf16.mxu0 0
        %2442 = vmatpush1.bf16.msra.mxu0 %v2418
        %2443 = vmatprep.subr.bf16.mxu0 0
        %2444 = vmatpush1.bf16.msra.mxu0 0
        %2445 = vmatprep.subr.bf16.mxu0 0
        %2446 = vmatpush1.bf16.msra.mxu0 0
        %2447 = vmatprep.subr.bf16.mxu0 0
        %2448 = vmatpush1.bf16.msra.mxu0 0
        %2449 = vmatprep.subr.bf16.mxu0 0
        %2450 = vmatpush1.bf16.msra.mxu0 0
        %2451 = vmatprep.subr.bf16.mxu0 0
        %2452 = vmatpush1.bf16.msra.mxu0 0
        %2453 = vmatprep.subr.bf16.mxu0 0
        %2454 = vmatpush1.bf16.msra.mxu0 0
        %2455 = vmatprep.subr.bf16.mxu0 0
        %2456 = vmatpush1.bf16.msra.mxu0 0
        %2457 = vmatprep.subr.bf16.mxu0 0
        %2458 = vmatpush1.bf16.msra.mxu0 0
        %2459 = vmatprep.mubr.bf16.mxu0 0
        %2460 = vmatmul.mubr.bf16.gmra.mrb[0].mxu0 %v2377
        %v2461 = vpop.f32.mrb[0].mxu0
        %v2462 = vadd.f32 0.0, %v2461
        %v2463 = vpop.f32.mrb[0].mxu0
        %v2464 = vpop.f32.mrb[0].mxu0
        %v2465 = vpop.f32.mrb[0].mxu0
        %2466 = vdwg.mxu0
        %v2467 = vadd.f32 %v2351, %v2462
        %v2468 = vld [vmem:[#allocation13 + $0x4] sm:$0x1]
        %v2469 = vlaneseq
        %v2470 = vshrl.u32 %v2469, 7
        %v2471 = vsub.s32 0, %v2470
        %v2472 = vrot.slane %v2468, %v2471
        %v2473 = vadd.f32 %v2467, %v2472
        %v2474 = vadd.f32 %v649, %v2473
        %v2475 = vpack.c.bf16 %v2474, %v2474
        %v2477 = vunpack.c.l.b16 %v2475
        %v2478 = vpack.c.b16 %v2477, %v2477
        %v2480 = vshrl.u32 %v2478, 16
        %v2482 = vrot.slane %v2480, 7
        %v2483 = vshll.u32 %v2478, 16
        %v2485 = vor.u32 %v2482, %v2483
        %v2486 = vrot.slane %v2482, 4
        %v2489 = vsel %vm665, %v2485, %v2131
        %2490 = vst [vmem:[#allocation3] sm:$0xf] %v2489
        %v2491 = vld [vmem:[#allocation3 + $0x4] sm:$0x1]
        %v2492 = vsel %vm421, %v2486, %v2491
        %2493 = vst [vmem:[#allocation3 + $0x4] sm:$0x1] %v2492
        %v2494 = vld [vmem:[#allocation3] sm:$0xf]
        %v2495 = vld [vmem:[#allocation14] sm:$0xff]
        %v2496 = vld [vmem:[#allocation14 + $0x8] sm:$0xff]
        %v2497 = vld [vmem:[#allocation14 + $0x10] sm:$0xff]
        %v2498 = vld [vmem:[#allocation14 + $0x18] sm:$0xff]
        %v2499 = vld [vmem:[#allocation14 + $0x20] sm:$0xff]
        %v2500 = vld [vmem:[#allocation14 + $0x28] sm:$0xff]
        %v2501 = vld [vmem:[#allocation14 + $0x30] sm:$0xff]
        %v2502 = vld [vmem:[#allocation14 + $0x38] sm:$0xff]
        %v2503 = vld [vmem:[#allocation14 + $0x40] sm:$0xff]
        %v2504 = vld [vmem:[#allocation14 + $0x48] sm:$0xff]
        %v2505 = vld [vmem:[#allocation14 + $0x50] sm:$0xff]
        %v2506 = vld [vmem:[#allocation14 + $0x58] sm:$0xff]
        %v2507 = vld [vmem:[#allocation14 + $0x60] sm:$0xff]
        %v2508 = vld [vmem:[#allocation14 + $0x68] sm:$0xff]
        %v2509 = vld [vmem:[#allocation14 + $0x70] sm:$0xff]
        %v2510 = vld [vmem:[#allocation14 + $0x78] sm:$0xff]
        %v2511 = vld [vmem:[#allocation14 + $0x80] sm:$0xff]
        %v2512 = vld [vmem:[#allocation14 + $0x88] sm:$0xff]
        %v2513 = vld [vmem:[#allocation14 + $0x90] sm:$0xff]
        %v2514 = vld [vmem:[#allocation14 + $0x98] sm:$0xff]
        %v2515 = vld [vmem:[#allocation14 + $0xa0] sm:$0xff]
        %v2516 = vld [vmem:[#allocation14 + $0xa8] sm:$0xff]
        %v2517 = vld [vmem:[#allocation14 + $0xb0] sm:$0xff]
        %v2518 = vld [vmem:[#allocation14 + $0xb8] sm:$0xff]
        %v2519 = vld [vmem:[#allocation14 + $0xc0] sm:$0xff]
        %v2520 = vld [vmem:[#allocation14 + $0xc8] sm:$0xff]
        %v2521 = vld [vmem:[#allocation14 + $0xd0] sm:$0xff]
        %v2522 = vld [vmem:[#allocation14 + $0xd8] sm:$0xff]
        %v2523 = vld [vmem:[#allocation14 + $0xe0] sm:$0xff]
        %v2524 = vld [vmem:[#allocation14 + $0xe8] sm:$0xff]
        %v2525 = vld [vmem:[#allocation14 + $0xf0] sm:$0xff]
        %v2526 = vld [vmem:[#allocation14 + $0xf8] sm:$0xff]
        %v2527 = vld [vmem:[#allocation3 + $0x4] sm:$0x1]
        %s2528 = scalar_lea.vmem [#allocation14], 256
        %v2529 = vld [vmem:[%s2528] sm:$0xff]
        %v2530 = vld [vmem:[%s2528 + $0x8] sm:$0xff]
        %v2531 = vld [vmem:[%s2528 + $0x10] sm:$0xff]
        %v2532 = vld [vmem:[%s2528 + $0x18] sm:$0xff]
        %v2533 = vld [vmem:[%s2528 + $0x20] sm:$0xff]
        %v2534 = vld [vmem:[%s2528 + $0x28] sm:$0xff]
        %v2535 = vld [vmem:[%s2528 + $0x30] sm:$0xff]
        %v2536 = vld [vmem:[%s2528 + $0x38] sm:$0xff]
        %v2537 = vld [vmem:[%s2528 + $0x40] sm:$0xff]
        %v2538 = vld [vmem:[%s2528 + $0x48] sm:$0xff]
        %v2539 = vld [vmem:[%s2528 + $0x50] sm:$0xff]
        %v2540 = vld [vmem:[%s2528 + $0x58] sm:$0xff]
        %v2541 = vld [vmem:[%s2528 + $0x60] sm:$0xff]
        %v2542 = vld [vmem:[%s2528 + $0x68] sm:$0xff]
        %v2543 = vld [vmem:[%s2528 + $0x70] sm:$0xff]
        %v2544 = vld [vmem:[%s2528 + $0x78] sm:$0xff]
        %v2545 = vld [vmem:[%s2528 + $0x80] sm:$0xff]
        %v2546 = vld [vmem:[%s2528 + $0x88] sm:$0xff]
        %v2547 = vld [vmem:[%s2528 + $0x90] sm:$0xff]
        %v2548 = vld [vmem:[%s2528 + $0x98] sm:$0xff]
        %v2549 = vld [vmem:[%s2528 + $0xa0] sm:$0xff]
        %v2550 = vld [vmem:[%s2528 + $0xa8] sm:$0xff]
        %v2551 = vld [vmem:[%s2528 + $0xb0] sm:$0xff]
        %v2552 = vld [vmem:[%s2528 + $0xb8] sm:$0xff]
        %v2553 = vld [vmem:[%s2528 + $0xc0] sm:$0xff]
        %v2554 = vld [vmem:[%s2528 + $0xc8] sm:$0xff]
        %v2555 = vld [vmem:[%s2528 + $0xd0] sm:$0xff]
        %v2556 = vld [vmem:[%s2528 + $0xd8] sm:$0xff]
        %v2557 = vld [vmem:[%s2528 + $0xe0] sm:$0xff]
        %v2558 = vld [vmem:[%s2528 + $0xe8] sm:$0xff]
        %v2559 = vld [vmem:[%s2528 + $0xf0] sm:$0xff]
        %v2560 = vld [vmem:[%s2528 + $0xf8] sm:$0xff]
        %v2563 = vunpack.c.l.b16 %v2494
        %v2564 = vunpack.c.l.b16 %v2527
        %v2565 = vpack.c.b16 %v2564, %v2563
        %v2567 = vshrl.u32 %v2565, 16
        %v2569 = vshll.u32 %v2565, 16
        %v2571 = vrot.slane %v2569, 1
        %v2572 = vor.u32 %v2567, %v2571
        %v2606 = vunpack.c.l.b16 %v2529
        %v2607 = vunpack.c.h.b16 %v2529
        %v2608 = vunpack.c.l.b16 %v2530
        %v2609 = vunpack.c.h.b16 %v2530
        %v2610 = vunpack.c.l.b16 %v2531
        %v2611 = vunpack.c.h.b16 %v2531
        %v2612 = vunpack.c.l.b16 %v2532
        %v2613 = vunpack.c.h.b16 %v2532
        %v2614 = vunpack.c.l.b16 %v2533
        %v2615 = vunpack.c.h.b16 %v2533
        %v2616 = vunpack.c.l.b16 %v2534
        %v2617 = vunpack.c.h.b16 %v2534
        %v2618 = vunpack.c.l.b16 %v2535
        %v2619 = vunpack.c.h.b16 %v2535
        %v2620 = vunpack.c.l.b16 %v2536
        %v2621 = vunpack.c.h.b16 %v2536
        %v2622 = vunpack.c.l.b16 %v2537
        %v2623 = vunpack.c.h.b16 %v2537
        %v2624 = vunpack.c.l.b16 %v2538
        %v2625 = vunpack.c.h.b16 %v2538
        %v2626 = vunpack.c.l.b16 %v2539
        %v2627 = vunpack.c.h.b16 %v2539
        %v2628 = vunpack.c.l.b16 %v2540
        %v2629 = vunpack.c.h.b16 %v2540
        %v2630 = vunpack.c.l.b16 %v2541
        %v2631 = vunpack.c.h.b16 %v2541
        %v2632 = vunpack.c.l.b16 %v2542
        %v2633 = vunpack.c.h.b16 %v2542
        %v2634 = vunpack.c.l.b16 %v2543
        %v2635 = vunpack.c.h.b16 %v2543
        %v2636 = vunpack.c.l.b16 %v2544
        %v2637 = vunpack.c.h.b16 %v2544
        %v2638 = vunpack.c.l.b16 %v2545
        %v2639 = vunpack.c.h.b16 %v2545
        %v2640 = vunpack.c.l.b16 %v2546
        %v2641 = vunpack.c.h.b16 %v2546
        %v2642 = vunpack.c.l.b16 %v2547
        %v2643 = vunpack.c.h.b16 %v2547
        %v2644 = vunpack.c.l.b16 %v2548
        %v2645 = vunpack.c.h.b16 %v2548
        %v2646 = vunpack.c.l.b16 %v2549
        %v2647 = vunpack.c.h.b16 %v2549
        %v2648 = vunpack.c.l.b16 %v2550
        %v2649 = vunpack.c.h.b16 %v2550
        %v2650 = vunpack.c.l.b16 %v2551
        %v2651 = vunpack.c.h.b16 %v2551
        %v2652 = vunpack.c.l.b16 %v2552
        %v2653 = vunpack.c.h.b16 %v2552
        %v2654 = vunpack.c.l.b16 %v2553
        %v2655 = vunpack.c.h.b16 %v2553
        %v2656 = vunpack.c.l.b16 %v2554
        %v2657 = vunpack.c.h.b16 %v2554
        %v2658 = vunpack.c.l.b16 %v2555
        %v2659 = vunpack.c.h.b16 %v2555
        %v2660 = vunpack.c.l.b16 %v2556
        %v2661 = vunpack.c.h.b16 %v2556
        %v2662 = vunpack.c.l.b16 %v2557
        %v2663 = vunpack.c.h.b16 %v2557
        %v2664 = vunpack.c.l.b16 %v2558
        %v2665 = vunpack.c.h.b16 %v2558
        %v2666 = vunpack.c.l.b16 %v2559
        %v2667 = vunpack.c.h.b16 %v2559
        %v2668 = vunpack.c.l.b16 %v2560
        %v2669 = vunpack.c.h.b16 %v2560
        %v2670 = vpack.c.b16 %v2610, %v2606
        %v2671 = vpack.c.b16 %v2611, %v2607
        %v2672 = vpack.c.b16 %v2612, %v2608
        %v2673 = vpack.c.b16 %v2613, %v2609
        %v2674 = vpack.c.b16 %v2618, %v2614
        %v2675 = vpack.c.b16 %v2619, %v2615
        %v2676 = vpack.c.b16 %v2620, %v2616
        %v2677 = vpack.c.b16 %v2621, %v2617
        %v2678 = vpack.c.b16 %v2626, %v2622
        %v2679 = vpack.c.b16 %v2627, %v2623
        %v2680 = vpack.c.b16 %v2628, %v2624
        %v2681 = vpack.c.b16 %v2629, %v2625
        %v2682 = vpack.c.b16 %v2634, %v2630
        %v2683 = vpack.c.b16 %v2635, %v2631
        %v2684 = vpack.c.b16 %v2636, %v2632
        %v2685 = vpack.c.b16 %v2637, %v2633
        %v2686 = vpack.c.b16 %v2642, %v2638
        %v2687 = vpack.c.b16 %v2643, %v2639
        %v2688 = vpack.c.b16 %v2644, %v2640
        %v2689 = vpack.c.b16 %v2645, %v2641
        %v2690 = vpack.c.b16 %v2650, %v2646
        %v2691 = vpack.c.b16 %v2651, %v2647
        %v2692 = vpack.c.b16 %v2652, %v2648
        %v2693 = vpack.c.b16 %v2653, %v2649
        %v2694 = vpack.c.b16 %v2658, %v2654
        %v2695 = vpack.c.b16 %v2659, %v2655
        %v2696 = vpack.c.b16 %v2660, %v2656
        %v2697 = vpack.c.b16 %v2661, %v2657
        %v2698 = vpack.c.b16 %v2666, %v2662
        %v2699 = vpack.c.b16 %v2667, %v2663
        %v2700 = vpack.c.b16 %v2668, %v2664
        %v2701 = vpack.c.b16 %v2669, %v2665
        %2734 = vmatprep.subr.bf16.mxu0 %v2671
        %2735 = vmatpush1.bf16.msra.mxu0 %v2670
        %2736 = vmatprep.subr.bf16.mxu0 %v2675
        %2737 = vmatpush1.bf16.msra.mxu0 %v2674
        %2738 = vmatprep.subr.bf16.mxu0 %v2679
        %2739 = vmatpush1.bf16.msra.mxu0 %v2678
        %2740 = vmatprep.subr.bf16.mxu0 %v2683
        %2741 = vmatpush1.bf16.msra.mxu0 %v2682
        %2742 = vmatprep.subr.bf16.mxu0 %v2687
        %2743 = vmatpush1.bf16.msra.mxu0 %v2686
        %2744 = vmatprep.subr.bf16.mxu0 %v2691
        %2745 = vmatpush1.bf16.msra.mxu0 %v2690
        %2746 = vmatprep.subr.bf16.mxu0 %v2695
        %2747 = vmatpush1.bf16.msra.mxu0 %v2694
        %2748 = vmatprep.subr.bf16.mxu0 %v2699
        %2749 = vmatpush1.bf16.msra.mxu0 %v2698
        %2750 = vmatprep.subr.bf16.mxu0 0
        %2751 = vmatpush1.bf16.msra.mxu0 0
        %2752 = vmatprep.subr.bf16.mxu0 0
        %2753 = vmatpush1.bf16.msra.mxu0 0
        %2754 = vmatprep.subr.bf16.mxu0 0
        %2755 = vmatpush1.bf16.msra.mxu0 0
        %2756 = vmatprep.subr.bf16.mxu0 0
        %2757 = vmatpush1.bf16.msra.mxu0 0
        %2758 = vmatprep.subr.bf16.mxu0 0
        %2759 = vmatpush1.bf16.msra.mxu0 0
        %2760 = vmatprep.subr.bf16.mxu0 0
        %2761 = vmatpush1.bf16.msra.mxu0 0
        %2762 = vmatprep.subr.bf16.mxu0 0
        %2763 = vmatpush1.bf16.msra.mxu0 0
        %2764 = vmatprep.subr.bf16.mxu0 0
        %2765 = vmatpush1.bf16.msra.mxu0 0
        %2766 = vmatprep.mubr.bf16.mxu0 0
        %2767 = vmatmul.mubr.bf16.gmra.mrb[0].mxu0 %v2572
        %v2768 = vpop.f32.mrb[0].mxu0
        %v2769 = vadd.f32 0.0, %v2768
        %v2770 = vpop.f32.mrb[0].mxu0
        %v2771 = vadd.f32 0.0, %v2770
        %v2772 = vpop.f32.mrb[0].mxu0
        %v2773 = vpop.f32.mrb[0].mxu0
        %2774 = vdwg.mxu0
        %2775 = vmatprep.subr.bf16.mxu0 %v2673
        %2776 = vmatpush1.bf16.msra.mxu0 %v2672
        %2777 = vmatprep.subr.bf16.mxu0 %v2677
        %2778 = vmatpush1.bf16.msra.mxu0 %v2676
        %2779 = vmatprep.subr.bf16.mxu0 %v2681
        %2780 = vmatpush1.bf16.msra.mxu0 %v2680
        %2781 = vmatprep.subr.bf16.mxu0 %v2685
        %2782 = vmatpush1.bf16.msra.mxu0 %v2684
        %2783 = vmatprep.subr.bf16.mxu0 %v2689
        %2784 = vmatpush1.bf16.msra.mxu0 %v2688
        %2785 = vmatprep.subr.bf16.mxu0 %v2693
        %2786 = vmatpush1.bf16.msra.mxu0 %v2692
        %2787 = vmatprep.subr.bf16.mxu0 %v2697
        %2788 = vmatpush1.bf16.msra.mxu0 %v2696
        %2789 = vmatprep.subr.bf16.mxu0 %v2701
        %2790 = vmatpush1.bf16.msra.mxu0 %v2700
        %2791 = vmatprep.subr.bf16.mxu0 0
        %2792 = vmatpush1.bf16.msra.mxu0 0
        %2793 = vmatprep.subr.bf16.mxu0 0
        %2794 = vmatpush1.bf16.msra.mxu0 0
        %2795 = vmatprep.subr.bf16.mxu0 0
        %2796 = vmatpush1.bf16.msra.mxu0 0
        %2797 = vmatprep.subr.bf16.mxu0 0
        %2798 = vmatpush1.bf16.msra.mxu0 0
        %2799 = vmatprep.subr.bf16.mxu0 0
        %2800 = vmatpush1.bf16.msra.mxu0 0
        %2801 = vmatprep.subr.bf16.mxu0 0
        %2802 = vmatpush1.bf16.msra.mxu0 0
        %2803 = vmatprep.subr.bf16.mxu0 0
        %2804 = vmatpush1.bf16.msra.mxu0 0
        %2805 = vmatprep.subr.bf16.mxu0 0
        %2806 = vmatpush1.bf16.msra.mxu0 0
        %2807 = vmatprep.mubr.bf16.mxu0 0
        %2808 = vmatmul.mubr.bf16.gmra.mrb[0].mxu0 %v2572
        %v2809 = vpop.f32.mrb[0].mxu0
        %v2810 = vadd.f32 0.0, %v2809
        %v2811 = vpop.f32.mrb[0].mxu0
        %v2812 = vadd.f32 0.0, %v2811
        %v2813 = vpop.f32.mrb[0].mxu0
        %v2814 = vpop.f32.mrb[0].mxu0
        %2815 = vdwg.mxu0
        %v2848 = vunpack.c.l.b16 %v2495
        %v2849 = vunpack.c.h.b16 %v2495
        %v2850 = vunpack.c.l.b16 %v2496
        %v2851 = vunpack.c.h.b16 %v2496
        %v2852 = vunpack.c.l.b16 %v2497
        %v2853 = vunpack.c.h.b16 %v2497
        %v2854 = vunpack.c.l.b16 %v2498
        %v2855 = vunpack.c.h.b16 %v2498
        %v2856 = vunpack.c.l.b16 %v2499
        %v2857 = vunpack.c.h.b16 %v2499
        %v2858 = vunpack.c.l.b16 %v2500
        %v2859 = vunpack.c.h.b16 %v2500
        %v2860 = vunpack.c.l.b16 %v2501
        %v2861 = vunpack.c.h.b16 %v2501
        %v2862 = vunpack.c.l.b16 %v2502
        %v2863 = vunpack.c.h.b16 %v2502
        %v2864 = vunpack.c.l.b16 %v2503
        %v2865 = vunpack.c.h.b16 %v2503
        %v2866 = vunpack.c.l.b16 %v2504
        %v2867 = vunpack.c.h.b16 %v2504
        %v2868 = vunpack.c.l.b16 %v2505
        %v2869 = vunpack.c.h.b16 %v2505
        %v2870 = vunpack.c.l.b16 %v2506
        %v2871 = vunpack.c.h.b16 %v2506
        %v2872 = vunpack.c.l.b16 %v2507
        %v2873 = vunpack.c.h.b16 %v2507
        %v2874 = vunpack.c.l.b16 %v2508
        %v2875 = vunpack.c.h.b16 %v2508
        %v2876 = vunpack.c.l.b16 %v2509
        %v2877 = vunpack.c.h.b16 %v2509
        %v2878 = vunpack.c.l.b16 %v2510
        %v2879 = vunpack.c.h.b16 %v2510
        %v2880 = vunpack.c.l.b16 %v2511
        %v2881 = vunpack.c.h.b16 %v2511
        %v2882 = vunpack.c.l.b16 %v2512
        %v2883 = vunpack.c.h.b16 %v2512
        %v2884 = vunpack.c.l.b16 %v2513
        %v2885 = vunpack.c.h.b16 %v2513
        %v2886 = vunpack.c.l.b16 %v2514
        %v2887 = vunpack.c.h.b16 %v2514
        %v2888 = vunpack.c.l.b16 %v2515
        %v2889 = vunpack.c.h.b16 %v2515
        %v2890 = vunpack.c.l.b16 %v2516
        %v2891 = vunpack.c.h.b16 %v2516
        %v2892 = vunpack.c.l.b16 %v2517
        %v2893 = vunpack.c.h.b16 %v2517
        %v2894 = vunpack.c.l.b16 %v2518
        %v2895 = vunpack.c.h.b16 %v2518
        %v2896 = vunpack.c.l.b16 %v2519
        %v2897 = vunpack.c.h.b16 %v2519
        %v2898 = vunpack.c.l.b16 %v2520
        %v2899 = vunpack.c.h.b16 %v2520
        %v2900 = vunpack.c.l.b16 %v2521
        %v2901 = vunpack.c.h.b16 %v2521
        %v2902 = vunpack.c.l.b16 %v2522
        %v2903 = vunpack.c.h.b16 %v2522
        %v2904 = vunpack.c.l.b16 %v2523
        %v2905 = vunpack.c.h.b16 %v2523
        %v2906 = vunpack.c.l.b16 %v2524
        %v2907 = vunpack.c.h.b16 %v2524
        %v2908 = vunpack.c.l.b16 %v2525
        %v2909 = vunpack.c.h.b16 %v2525
        %v2910 = vunpack.c.l.b16 %v2526
        %v2911 = vunpack.c.h.b16 %v2526
        %v2912 = vpack.c.b16 %v2852, %v2848
        %v2913 = vpack.c.b16 %v2853, %v2849
        %v2914 = vpack.c.b16 %v2854, %v2850
        %v2915 = vpack.c.b16 %v2855, %v2851
        %v2916 = vpack.c.b16 %v2860, %v2856
        %v2917 = vpack.c.b16 %v2861, %v2857
        %v2918 = vpack.c.b16 %v2862, %v2858
        %v2919 = vpack.c.b16 %v2863, %v2859
        %v2920 = vpack.c.b16 %v2868, %v2864
        %v2921 = vpack.c.b16 %v2869, %v2865
        %v2922 = vpack.c.b16 %v2870, %v2866
        %v2923 = vpack.c.b16 %v2871, %v2867
        %v2924 = vpack.c.b16 %v2876, %v2872
        %v2925 = vpack.c.b16 %v2877, %v2873
        %v2926 = vpack.c.b16 %v2878, %v2874
        %v2927 = vpack.c.b16 %v2879, %v2875
        %v2928 = vpack.c.b16 %v2884, %v2880
        %v2929 = vpack.c.b16 %v2885, %v2881
        %v2930 = vpack.c.b16 %v2886, %v2882
        %v2931 = vpack.c.b16 %v2887, %v2883
        %v2932 = vpack.c.b16 %v2892, %v2888
        %v2933 = vpack.c.b16 %v2893, %v2889
        %v2934 = vpack.c.b16 %v2894, %v2890
        %v2935 = vpack.c.b16 %v2895, %v2891
        %v2936 = vpack.c.b16 %v2900, %v2896
        %v2937 = vpack.c.b16 %v2901, %v2897
        %v2938 = vpack.c.b16 %v2902, %v2898
        %v2939 = vpack.c.b16 %v2903, %v2899
        %v2940 = vpack.c.b16 %v2908, %v2904
        %v2941 = vpack.c.b16 %v2909, %v2905
        %v2942 = vpack.c.b16 %v2910, %v2906
        %v2943 = vpack.c.b16 %v2911, %v2907
        %2976 = vmatprep.subr.bf16.mxu0 %v2913
        %2977 = vmatpush1.bf16.msra.mxu0 %v2912
        %2978 = vmatprep.subr.bf16.mxu0 %v2917
        %2979 = vmatpush1.bf16.msra.mxu0 %v2916
        %2980 = vmatprep.subr.bf16.mxu0 %v2921
        %2981 = vmatpush1.bf16.msra.mxu0 %v2920
        %2982 = vmatprep.subr.bf16.mxu0 %v2925
        %2983 = vmatpush1.bf16.msra.mxu0 %v2924
        %2984 = vmatprep.subr.bf16.mxu0 %v2929
        %2985 = vmatpush1.bf16.msra.mxu0 %v2928
        %2986 = vmatprep.subr.bf16.mxu0 %v2933
        %2987 = vmatpush1.bf16.msra.mxu0 %v2932
        %2988 = vmatprep.subr.bf16.mxu0 %v2937
        %2989 = vmatpush1.bf16.msra.mxu0 %v2936
        %2990 = vmatprep.subr.bf16.mxu0 %v2941
        %2991 = vmatpush1.bf16.msra.mxu0 %v2940
        %2992 = vmatprep.subr.bf16.mxu0 0
        %2993 = vmatpush1.bf16.msra.mxu0 0
        %2994 = vmatprep.subr.bf16.mxu0 0
        %2995 = vmatpush1.bf16.msra.mxu0 0
        %2996 = vmatprep.subr.bf16.mxu0 0
        %2997 = vmatpush1.bf16.msra.mxu0 0
        %2998 = vmatprep.subr.bf16.mxu0 0
        %2999 = vmatpush1.bf16.msra.mxu0 0
        %3000 = vmatprep.subr.bf16.mxu0 0
        %3001 = vmatpush1.bf16.msra.mxu0 0
        %3002 = vmatprep.subr.bf16.mxu0 0
        %3003 = vmatpush1.bf16.msra.mxu0 0
        %3004 = vmatprep.subr.bf16.mxu0 0
        %3005 = vmatpush1.bf16.msra.mxu0 0
        %3006 = vmatprep.subr.bf16.mxu0 0
        %3007 = vmatpush1.bf16.msra.mxu0 0
        %3008 = vmatprep.mubr.bf16.mxu0 0
        %3009 = vmatmul.mubr.bf16.gmra.mrb[0].mxu0 %v2494
        %v3010 = vpop.f32.mrb[0].mxu0
        %v3011 = vadd.f32 %v2769, %v3010
        %v3012 = vpop.f32.mrb[0].mxu0
        %v3013 = vadd.f32 %v2771, %v3012
        %v3014 = vpop.f32.mrb[0].mxu0
        %v3015 = vpop.f32.mrb[0].mxu0
        %3016 = vdwg.mxu0
        %3017 = vmatprep.subr.bf16.mxu0 %v2915
        %3018 = vmatpush1.bf16.msra.mxu0 %v2914
        %3019 = vmatprep.subr.bf16.mxu0 %v2919
        %3020 = vmatpush1.bf16.msra.mxu0 %v2918
        %3021 = vmatprep.subr.bf16.mxu0 %v2923
        %3022 = vmatpush1.bf16.msra.mxu0 %v2922
        %3023 = vmatprep.subr.bf16.mxu0 %v2927
        %3024 = vmatpush1.bf16.msra.mxu0 %v2926
        %3025 = vmatprep.subr.bf16.mxu0 %v2931
        %3026 = vmatpush1.bf16.msra.mxu0 %v2930
        %3027 = vmatprep.subr.bf16.mxu0 %v2935
        %3028 = vmatpush1.bf16.msra.mxu0 %v2934
        %3029 = vmatprep.subr.bf16.mxu0 %v2939
        %3030 = vmatpush1.bf16.msra.mxu0 %v2938
        %3031 = vmatprep.subr.bf16.mxu0 %v2943
        %3032 = vmatpush1.bf16.msra.mxu0 %v2942
        %3033 = vmatprep.subr.bf16.mxu0 0
        %3034 = vmatpush1.bf16.msra.mxu0 0
        %3035 = vmatprep.subr.bf16.mxu0 0
        %3036 = vmatpush1.bf16.msra.mxu0 0
        %3037 = vmatprep.subr.bf16.mxu0 0
        %3038 = vmatpush1.bf16.msra.mxu0 0
        %3039 = vmatprep.subr.bf16.mxu0 0
        %3040 = vmatpush1.bf16.msra.mxu0 0
        %3041 = vmatprep.subr.bf16.mxu0 0
        %3042 = vmatpush1.bf16.msra.mxu0 0
        %3043 = vmatprep.subr.bf16.mxu0 0
        %3044 = vmatpush1.bf16.msra.mxu0 0
        %3045 = vmatprep.subr.bf16.mxu0 0
        %3046 = vmatpush1.bf16.msra.mxu0 0
        %3047 = vmatprep.subr.bf16.mxu0 0
        %3048 = vmatpush1.bf16.msra.mxu0 0
        %3049 = vmatprep.mubr.bf16.mxu0 0
        %3050 = vmatmul.mubr.bf16.gmra.mrb[0].mxu0 %v2494
        %v3051 = vpop.f32.mrb[0].mxu0
        %v3052 = vadd.f32 %v2810, %v3051
        %v3053 = vpop.f32.mrb[0].mxu0
        %v3054 = vadd.f32 %v2812, %v3053
        %v3055 = vpop.f32.mrb[0].mxu0
        %v3056 = vpop.f32.mrb[0].mxu0
        %3057 = vdwg.mxu0
        %v3058 = vld [vmem:[#allocation3] sm:$0xe]
        %s3059 = scalar_lea.vmem [#allocation14], 512
        %v3060 = vld [vmem:[%s3059] sm:$0xff]
        %v3061 = vld [vmem:[%s3059 + $0x8] sm:$0xff]
        %v3062 = vld [vmem:[%s3059 + $0x10] sm:$0xff]
        %v3063 = vld [vmem:[%s3059 + $0x18] sm:$0xff]
        %v3064 = vld [vmem:[%s3059 + $0x20] sm:$0xff]
        %v3065 = vld [vmem:[%s3059 + $0x28] sm:$0xff]
        %v3066 = vld [vmem:[%s3059 + $0x30] sm:$0xff]
        %v3067 = vld [vmem:[%s3059 + $0x38] sm:$0xff]
        %v3068 = vld [vmem:[%s3059 + $0x40] sm:$0xff]
        %v3069 = vld [vmem:[%s3059 + $0x48] sm:$0xff]
        %v3070 = vld [vmem:[%s3059 + $0x50] sm:$0xff]
        %v3071 = vld [vmem:[%s3059 + $0x58] sm:$0xff]
        %v3072 = vld [vmem:[%s3059 + $0x60] sm:$0xff]
        %v3073 = vld [vmem:[%s3059 + $0x68] sm:$0xff]
        %v3074 = vld [vmem:[%s3059 + $0x70] sm:$0xff]
        %v3075 = vld [vmem:[%s3059 + $0x78] sm:$0xff]
        %v3076 = vld [vmem:[%s3059 + $0x80] sm:$0xff]
        %v3077 = vld [vmem:[%s3059 + $0x88] sm:$0xff]
        %v3078 = vld [vmem:[%s3059 + $0x90] sm:$0xff]
        %v3079 = vld [vmem:[%s3059 + $0x98] sm:$0xff]
        %v3080 = vld [vmem:[%s3059 + $0xa0] sm:$0xff]
        %v3081 = vld [vmem:[%s3059 + $0xa8] sm:$0xff]
        %v3082 = vld [vmem:[%s3059 + $0xb0] sm:$0xff]
        %v3083 = vld [vmem:[%s3059 + $0xb8] sm:$0xff]
        %v3084 = vld [vmem:[%s3059 + $0xc0] sm:$0xff]
        %v3085 = vld [vmem:[%s3059 + $0xc8] sm:$0xff]
        %v3086 = vld [vmem:[%s3059 + $0xd0] sm:$0xff]
        %v3087 = vld [vmem:[%s3059 + $0xd8] sm:$0xff]
        %v3088 = vld [vmem:[%s3059 + $0xe0] sm:$0xff]
        %v3089 = vld [vmem:[%s3059 + $0xe8] sm:$0xff]
        %v3090 = vld [vmem:[%s3059 + $0xf0] sm:$0xff]
        %v3091 = vld [vmem:[%s3059 + $0xf8] sm:$0xff]
        %v3093 = vunpack.c.l.b16 %v3058
        %v3094 = vpack.c.b16 %v2564, %v3093
        %v3095 = vrot.slane %v3094, 1
        %v3129 = vunpack.c.l.b16 %v3060
        %v3130 = vunpack.c.h.b16 %v3060
        %v3131 = vunpack.c.l.b16 %v3061
        %v3132 = vunpack.c.h.b16 %v3061
        %v3133 = vunpack.c.l.b16 %v3062
        %v3134 = vunpack.c.h.b16 %v3062
        %v3135 = vunpack.c.l.b16 %v3063
        %v3136 = vunpack.c.h.b16 %v3063
        %v3137 = vunpack.c.l.b16 %v3064
        %v3138 = vunpack.c.h.b16 %v3064
        %v3139 = vunpack.c.l.b16 %v3065
        %v3140 = vunpack.c.h.b16 %v3065
        %v3141 = vunpack.c.l.b16 %v3066
        %v3142 = vunpack.c.h.b16 %v3066
        %v3143 = vunpack.c.l.b16 %v3067
        %v3144 = vunpack.c.h.b16 %v3067
        %v3145 = vunpack.c.l.b16 %v3068
        %v3146 = vunpack.c.h.b16 %v3068
        %v3147 = vunpack.c.l.b16 %v3069
        %v3148 = vunpack.c.h.b16 %v3069
        %v3149 = vunpack.c.l.b16 %v3070
        %v3150 = vunpack.c.h.b16 %v3070
        %v3151 = vunpack.c.l.b16 %v3071
        %v3152 = vunpack.c.h.b16 %v3071
        %v3153 = vunpack.c.l.b16 %v3072
        %v3154 = vunpack.c.h.b16 %v3072
        %v3155 = vunpack.c.l.b16 %v3073
        %v3156 = vunpack.c.h.b16 %v3073
        %v3157 = vunpack.c.l.b16 %v3074
        %v3158 = vunpack.c.h.b16 %v3074
        %v3159 = vunpack.c.l.b16 %v3075
        %v3160 = vunpack.c.h.b16 %v3075
        %v3161 = vunpack.c.l.b16 %v3076
        %v3162 = vunpack.c.h.b16 %v3076
        %v3163 = vunpack.c.l.b16 %v3077
        %v3164 = vunpack.c.h.b16 %v3077
        %v3165 = vunpack.c.l.b16 %v3078
        %v3166 = vunpack.c.h.b16 %v3078
        %v3167 = vunpack.c.l.b16 %v3079
        %v3168 = vunpack.c.h.b16 %v3079
        %v3169 = vunpack.c.l.b16 %v3080
        %v3170 = vunpack.c.h.b16 %v3080
        %v3171 = vunpack.c.l.b16 %v3081
        %v3172 = vunpack.c.h.b16 %v3081
        %v3173 = vunpack.c.l.b16 %v3082
        %v3174 = vunpack.c.h.b16 %v3082
        %v3175 = vunpack.c.l.b16 %v3083
        %v3176 = vunpack.c.h.b16 %v3083
        %v3177 = vunpack.c.l.b16 %v3084
        %v3178 = vunpack.c.h.b16 %v3084
        %v3179 = vunpack.c.l.b16 %v3085
        %v3180 = vunpack.c.h.b16 %v3085
        %v3181 = vunpack.c.l.b16 %v3086
        %v3182 = vunpack.c.h.b16 %v3086
        %v3183 = vunpack.c.l.b16 %v3087
        %v3184 = vunpack.c.h.b16 %v3087
        %v3185 = vunpack.c.l.b16 %v3088
        %v3186 = vunpack.c.h.b16 %v3088
        %v3187 = vunpack.c.l.b16 %v3089
        %v3188 = vunpack.c.h.b16 %v3089
        %v3189 = vunpack.c.l.b16 %v3090
        %v3190 = vunpack.c.h.b16 %v3090
        %v3191 = vunpack.c.l.b16 %v3091
        %v3192 = vunpack.c.h.b16 %v3091
        %v3193 = vpack.c.b16 %v3133, %v3129
        %v3194 = vpack.c.b16 %v3134, %v3130
        %v3195 = vpack.c.b16 %v3135, %v3131
        %v3196 = vpack.c.b16 %v3136, %v3132
        %v3197 = vpack.c.b16 %v3141, %v3137
        %v3198 = vpack.c.b16 %v3142, %v3138
        %v3199 = vpack.c.b16 %v3143, %v3139
        %v3200 = vpack.c.b16 %v3144, %v3140
        %v3201 = vpack.c.b16 %v3149, %v3145
        %v3202 = vpack.c.b16 %v3150, %v3146
        %v3203 = vpack.c.b16 %v3151, %v3147
        %v3204 = vpack.c.b16 %v3152, %v3148
        %v3205 = vpack.c.b16 %v3157, %v3153
        %v3206 = vpack.c.b16 %v3158, %v3154
        %v3207 = vpack.c.b16 %v3159, %v3155
        %v3208 = vpack.c.b16 %v3160, %v3156
        %v3209 = vpack.c.b16 %v3165, %v3161
        %v3210 = vpack.c.b16 %v3166, %v3162
        %v3211 = vpack.c.b16 %v3167, %v3163
        %v3212 = vpack.c.b16 %v3168, %v3164
        %v3213 = vpack.c.b16 %v3173, %v3169
        %v3214 = vpack.c.b16 %v3174, %v3170
        %v3215 = vpack.c.b16 %v3175, %v3171
        %v3216 = vpack.c.b16 %v3176, %v3172
        %v3217 = vpack.c.b16 %v3181, %v3177
        %v3218 = vpack.c.b16 %v3182, %v3178
        %v3219 = vpack.c.b16 %v3183, %v3179
        %v3220 = vpack.c.b16 %v3184, %v3180
        %v3221 = vpack.c.b16 %v3189, %v3185
        %v3222 = vpack.c.b16 %v3190, %v3186
        %v3223 = vpack.c.b16 %v3191, %v3187
        %v3224 = vpack.c.b16 %v3192, %v3188
        %3257 = vmatprep.subr.bf16.mxu0 %v3194
        %3258 = vmatpush1.bf16.msra.mxu0 %v3193
        %3259 = vmatprep.subr.bf16.mxu0 %v3198
        %3260 = vmatpush1.bf16.msra.mxu0 %v3197
        %3261 = vmatprep.subr.bf16.mxu0 %v3202
        %3262 = vmatpush1.bf16.msra.mxu0 %v3201
        %3263 = vmatprep.subr.bf16.mxu0 %v3206
        %3264 = vmatpush1.bf16.msra.mxu0 %v3205
        %3265 = vmatprep.subr.bf16.mxu0 %v3210
        %3266 = vmatpush1.bf16.msra.mxu0 %v3209
        %3267 = vmatprep.subr.bf16.mxu0 %v3214
        %3268 = vmatpush1.bf16.msra.mxu0 %v3213
        %3269 = vmatprep.subr.bf16.mxu0 %v3218
        %3270 = vmatpush1.bf16.msra.mxu0 %v3217
        %3271 = vmatprep.subr.bf16.mxu0 %v3222
        %3272 = vmatpush1.bf16.msra.mxu0 %v3221
        %3273 = vmatprep.subr.bf16.mxu0 0
        %3274 = vmatpush1.bf16.msra.mxu0 0
        %3275 = vmatprep.subr.bf16.mxu0 0
        %3276 = vmatpush1.bf16.msra.mxu0 0
        %3277 = vmatprep.subr.bf16.mxu0 0
        %3278 = vmatpush1.bf16.msra.mxu0 0
        %3279 = vmatprep.subr.bf16.mxu0 0
        %3280 = vmatpush1.bf16.msra.mxu0 0
        %3281 = vmatprep.subr.bf16.mxu0 0
        %3282 = vmatpush1.bf16.msra.mxu0 0
        %3283 = vmatprep.subr.bf16.mxu0 0
        %3284 = vmatpush1.bf16.msra.mxu0 0
        %3285 = vmatprep.subr.bf16.mxu0 0
        %3286 = vmatpush1.bf16.msra.mxu0 0
        %3287 = vmatprep.subr.bf16.mxu0 0
        %3288 = vmatpush1.bf16.msra.mxu0 0
        %3289 = vmatprep.mubr.bf16.mxu0 0
        %3290 = vmatmul.mubr.bf16.gmra.mrb[0].mxu0 %v3095
        %v3291 = vpop.f32.mrb[0].mxu0
        %v3292 = vadd.f32 0.0, %v3291
        %v3293 = vpop.f32.mrb[0].mxu0
        %v3294 = vadd.f32 0.0, %v3293
        %v3295 = vpop.f32.mrb[0].mxu0
        %v3296 = vpop.f32.mrb[0].mxu0
        %3297 = vdwg.mxu0
        %3298 = vmatprep.subr.bf16.mxu0 %v3196
        %3299 = vmatpush1.bf16.msra.mxu0 %v3195
        %3300 = vmatprep.subr.bf16.mxu0 %v3200
        %3301 = vmatpush1.bf16.msra.mxu0 %v3199
        %3302 = vmatprep.subr.bf16.mxu0 %v3204
        %3303 = vmatpush1.bf16.msra.mxu0 %v3203
        %3304 = vmatprep.subr.bf16.mxu0 %v3208
        %3305 = vmatpush1.bf16.msra.mxu0 %v3207
        %3306 = vmatprep.subr.bf16.mxu0 %v3212
        %3307 = vmatpush1.bf16.msra.mxu0 %v3211
        %3308 = vmatprep.subr.bf16.mxu0 %v3216
        %3309 = vmatpush1.bf16.msra.mxu0 %v3215
        %3310 = vmatprep.subr.bf16.mxu0 %v3220
        %3311 = vmatpush1.bf16.msra.mxu0 %v3219
        %3312 = vmatprep.subr.bf16.mxu0 %v3224
        %3313 = vmatpush1.bf16.msra.mxu0 %v3223
        %3314 = vmatprep.subr.bf16.mxu0 0
        %3315 = vmatpush1.bf16.msra.mxu0 0
        %3316 = vmatprep.subr.bf16.mxu0 0
        %3317 = vmatpush1.bf16.msra.mxu0 0
        %3318 = vmatprep.subr.bf16.mxu0 0
        %3319 = vmatpush1.bf16.msra.mxu0 0
        %3320 = vmatprep.subr.bf16.mxu0 0
        %3321 = vmatpush1.bf16.msra.mxu0 0
        %3322 = vmatprep.subr.bf16.mxu0 0
        %3323 = vmatpush1.bf16.msra.mxu0 0
        %3324 = vmatprep.subr.bf16.mxu0 0
        %3325 = vmatpush1.bf16.msra.mxu0 0
        %3326 = vmatprep.subr.bf16.mxu0 0
        %3327 = vmatpush1.bf16.msra.mxu0 0
        %3328 = vmatprep.subr.bf16.mxu0 0
        %3329 = vmatpush1.bf16.msra.mxu0 0
        %3330 = vmatprep.mubr.bf16.mxu0 0
        %3331 = vmatmul.mubr.bf16.gmra.mrb[0].mxu0 %v3095
        %v3332 = vpop.f32.mrb[0].mxu0
        %v3333 = vadd.f32 0.0, %v3332
        %v3334 = vpop.f32.mrb[0].mxu0
        %v3335 = vadd.f32 0.0, %v3334
        %v3336 = vpop.f32.mrb[0].mxu0
        %v3337 = vpop.f32.mrb[0].mxu0
        %3338 = vdwg.mxu0
        %v3339 = vadd.f32 %v3011, %v3292
        %v3340 = vadd.f32 %v3013, %v3294
        %v3341 = vadd.f32 %v3052, %v3333
        %v3342 = vadd.f32 %v3054, %v3335
        %v3343 = vld [vmem:[#allocation16] sm:$0xf]
        %v3345 = vlaneseq
        %v3346 = vshrl.u32 %v3345, 7
        %v3347 = vsub.s32 0, %v3346
        %v3348 = vrot.slane %v3343, %v3347
        %v3349 = vlaneseq
        %v3350 = vshrl.u32 %v3349, 7
        %v3351 = vsub.s32 1, %v3350
        %v3352 = vrot.slane %v3343, %v3351
        %v3353 = vlaneseq
        %v3354 = vshrl.u32 %v3353, 7
        %v3355 = vsub.s32 2, %v3354
        %v3356 = vrot.slane %v3343, %v3355
        %v3357 = vlaneseq
        %v3358 = vshrl.u32 %v3357, 7
        %v3359 = vsub.s32 3, %v3358
        %v3360 = vrot.slane %v3343, %v3359
        %v3365 = vadd.f32 %v3339, %v3348
        %v3366 = vadd.f32 %v3340, %v3352
        %v3367 = vadd.f32 %v3341, %v3356
        %v3368 = vadd.f32 %v3342, %v3360
        %s3369 = sld [smem:[#allocation17 + $0x3]]
        %vm3370 = vcmp.ge.f32.partialorder %v3365, 0.0
        %vm3371 = vcmp.ge.f32.partialorder %v3366, 0.0
        %vm3372 = vcmp.ge.f32.partialorder %v3367, 0.0
        %vm3373 = vcmp.ge.f32.partialorder %v3368, 0.0
        %v3374 = vstv %s3369
        %v3375 = vmul.f32 %v3374, %v3365
        %v3376 = vmul.f32 %v3374, %v3366
        %v3377 = vmul.f32 %v3374, %v3367
        %v3378 = vmul.f32 %v3374, %v3368
        %v3379 = vsel %vm3370, %v3365, %v3375
        %v3380 = vsel %vm3371, %v3366, %v3376
        %v3381 = vsel %vm3372, %v3367, %v3377
        %v3382 = vsel %vm3373, %v3368, %v3378
        %v3383 = vpack.c.bf16 %v3379, %v3379
        %v3384 = vpack.c.bf16 %v3380, %v3380
        %v3385 = vpack.c.bf16 %v3381, %v3381
        %v3386 = vpack.c.bf16 %v3382, %v3382
        %v3391 = vunpack.c.l.b16 %v3383
        %v3392 = vunpack.c.l.b16 %v3384
        %v3393 = vunpack.c.l.b16 %v3385
        %v3394 = vunpack.c.l.b16 %v3386
        %v3395 = vpack.c.b16 %v3392, %v3391
        %v3396 = vpack.c.b16 %v3394, %v3393
        %3399 = vst [vmem:[%s413] sm:$0xff] %v3395
        %3400 = vst [vmem:[%s413 + $0x8] sm:$0xff] %v3396
        %s3401 = sand.u32 %s210, 1
        %s3402 = scalar_lea.sflag [#allocation6], %s3401
        %s3403 = sand.u32 %s210, 1
        %s3404 = smul.addr %s3403, 16
        %s3405 = scalar_lea.vmem [#allocation18], %s3404
        // Predicated region
        $region85: #{_lambda_.3} parent=51 // pred_check
          %p3406 = pneg %p220
        $region86: #{_lambda_.3} parent=51 // pred_check_branch
          %3408 = sbr.rel (%p3406) target = $region88
        $region87: #{_lambda_.3} parent=51 // pred_region
          %s3410 = ssub.s32 256, 256
          %3411 = vsyncadd %s3402, %s3410
          %s3412 = smul.addr %s29, 4
          %s3413 = smul.addr %s3412, 64
          %s3414 = scalar_lea.hbm %s8, %s3413
          %s3416 = sshll.u32 %s3405, 4
          %s3417 = int_to_ptr.vmem [resolvable:$true] %s3416
          %3419 = dma.vmem_to_hbm [thread:$0]  %s3417, 256, %s3414, %s3402
        $region88: #{_lambda_.3} parent=51 // pred_fallthru
          _
      $region52: #{_lambda_.3} parent=5 // pred_fallthru
        _
      %p3420 = scmp.le.s32.totalorder 2, %s24
      // Predicated region
      $region89: #{_lambda_.3} parent=5 // pred_check
        %p3421 = pneg %p3420
      $region90: #{_lambda_.3} parent=5 // pred_check_branch
        %3423 = sbr.rel (%p3421) target = $region92
      $region91: #{_lambda_.3} parent=5 // pred_region
        %s3424 = ssub.s32 %s24, 2
        // Predicated region
        $region93: #{_lambda_.3} parent=91 // pred_check
          %p3425 = pneg %p226
        $region94: #{_lambda_.3} parent=91 // pred_check_branch
          %3427 = sbr.rel (%p3425) target = $region96
        $region95: #{_lambda_.3} parent=91 // pred_region
          %s3428 = sand.u32 %s211, 1
          %s3429 = scalar_lea.sflag [#allocation6], %s3428
          %s3430 = sand.u32 %s211, 1
          %s3431 = smul.addr %s3430, 16
          %s3432 = scalar_lea.vmem [#allocation18], %s3431
          %3433 = dma.done %s3429, 256
        $region96: #{_lambda_.3} parent=91 // pred_fallthru
          _
      $region92: #{_lambda_.3} parent=5 // pred_fallthru
        _
    $region6: #{_lambda_.3} parent=1 // loop_footer
      %s28 = sadd.s32 1, %s24
    $region7: #{_lambda_.3} parent=1 // loop_footer_branch
      %23 = sbr.rel target = $region3
    $region8: #{_lambda_.3} parent=1 // loop_exit
      _
    %3434 = vsyncpa [#allocation5], 1
    %s3435 = scalar_lea.sflag [#allocation5], 1
    %3436 = vsyncpa %s3435, 1
    %3437 = vsyncpa [#allocation9], 1
    %3438 = vsyncpa [#allocation12], 1
    %3439 = vsyncpa [#allocation15], 1
    %3440 = vsyncpa [#allocation6], 1
    %s3441 = scalar_lea.sflag [#allocation6], 1
    %3442 = vsyncpa %s3441, 1
    %3443 = vsyncpa [#allocation7], 1
    %s3444 = scalar_lea.sflag [#allocation7], 1
    %3445 = vsyncpa %s3444, 1

// kernel: _lambda_.4
$region0: #{_lambda_.4}
  #allocation0 [shape = 'u32[]', space=smem, size = 0x4, offset = 0x4, fixed_abs, tag = 'smem constant byte address 0x4 - core index']
  #allocation1 [shape = 'u32[144,128]{1,0:T(1,128)}', space=vmem, size = 0x12000, scoped, tag = 'internal scratch']
  #allocation2 [shape = 'bf16[18,256]{1,0:T(8,128)(2,1)}', space=vmem, size = 0x3000, scoped, tag = 'scratch operand']
  #allocation3 [shape = 'f32[1]{0:T(128)S(6)}', space=smem, size = 0x200, scoped, tag = 'scoped memory for _lambda_.4']
  %s0 = inlined_call_operand.hbm [shape: bf16[2,16,256], index: 0, kind: input, shape index: {}]
  %s1 = inlined_call_operand.hbm [shape: bf16[3,256,1024], index: 1, kind: input, shape index: {}]
  %s2 = inlined_call_operand.hbm [shape: f32[1,1024], index: 2, kind: input, shape index: {}]
  %s3 = inlined_call_operand.<no memory space> [shape: f32[1], index: 3, kind: input, shape index: {}]
  %s4 = inlined_call_operand.hbm [shape: bf16[2,16,1024], index: 4, kind: output, shape index: {}]
  %s5 = sld [smem:[#allocation0]]
  $region61: #{_lambda_.4} parent=0
    _
  %s7 = ssub.s32 1, %s5
  %s8 = scalar_select 0, %s7, %s5
  %9 = sst [smem:[#allocation3]] %s3
  $region1: #{_lambda_.4} parent=0
    #allocation4 [shape = 'u8[16384]{0}', space=vmem, size = 0x4000, scoped, tag = 'input window, operand 0']
    #allocation5 [shape = 's32[2]{0}', space=sflag, size = 0x8, scoped, tag = 'scoped memory for _lambda_.4']
    #allocation6 [shape = 's32[2]{0}', space=sflag, size = 0x8, scoped, tag = 'scoped memory for _lambda_.4']
    #allocation7 [shape = 'u8[1572864]{0}', space=vmem, size = 0x180000, scoped, tag = 'input window, operand 1, single buffered']
    #allocation8 [shape = 's32[1]{0}', space=sflag, size = 0x4, scoped, tag = 'scoped memory for _lambda_.4']
    #allocation9 [shape = 'u8[4096]{0}', space=vmem, size = 0x1000, scoped, tag = 'input window, operand 2, single buffered']
    #allocation10 [shape = 'u8[65536]{0}', space=vmem, size = 0x10000, scoped, tag = 'output window, operand 0']
    %10 = vsyncpa [#allocation5], 0
    %s11 = scalar_lea.sflag [#allocation5], 1
    %12 = vsyncpa %s11, 0
    %13 = vsyncpa [#allocation8], 0
    %14 = vsyncpa [#allocation6], 0
    %s15 = scalar_lea.sflag [#allocation6], 1
    %16 = vsyncpa %s15, 0
    loop: start=0, step=1, limit=4
    $region2: #{_lambda_.4} parent=1 // loop_pre_header
      _
    $region3: #{_lambda_.4} parent=1 // loop_header
      %s18 = sphi 0, %s22
      %p19 = scmp.ge.s32.totalorder %s18, 4
      %s28 = sphi 0, %s30
      %s31 = sphi 0, %s28
      %s32 = sphi 0, %s31
      %s48 = sphi 0, %s32
      %s52 = sphi 0, %s52
      %s54 = sphi 0, %s52
      %s55 = sphi 0, %s54
      %s69 = sphi 0, %s55
      %s73 = sphi 0, %s73
      %s75 = sphi 0, %s73
      %s76 = sphi 0, %s75
      %s90 = sphi 0, %s76
      %s94 = sphi 0, %s94
      %s96 = sphi 0, %s94
      %s97 = sphi 0, %s96
      %s111 = sphi 0, %s97
      %s117 = sphi 0, %s119
      %s120 = sphi 0, %s117
      %s121 = sphi 0, %s120
      %s137 = sphi 0, %s121
    $region4: #{_lambda_.4} parent=1 // loop_header_branch
      %21 = sbr.rel (%p19) target = $region8
    $region5: #{_lambda_.4} parent=1 // loop_body
      %s23 = ssub.s32 %s18, 1
      %s24 = ssub.s32 %s18, 2
      %s25 = sadd.s32 %s18, 1
      %s26 = ssub.s32 %s18, %s25
      %p27 = scmp.eq.s32.totalorder %s26, 0
      %s29 = sadd.s32 %s28, 1
      %s30 = scalar_select %p27, %s28, %s29
      %p33 = pneg %p27
      %p34 = scmp.eq.s32.totalorder %s18, 1
      %p35 = por %p33, %p34
      %p36 = scmp.ne.s32.totalorder %s28, %s31
      %p37 = scmp.eq.s32.totalorder %s18, 0
      %p38 = por %p36, %p37
      %p39 = scmp.ne.s32.totalorder %s28, %s31
      %p40 = scmp.eq.s32.totalorder %s23, 1
      %p41 = por %p39, %p40
      %p42 = scmp.ne.s32.totalorder %s31, %s32
      %p43 = scmp.eq.s32.totalorder %s23, 0
      %p44 = por %p42, %p43
      %p45 = scmp.ne.s32.totalorder %s31, %s32
      %p46 = scmp.eq.s32.totalorder %s24, 1
      %p47 = por %p45, %p46
      %p49 = scmp.ne.s32.totalorder %s32, %s48
      %p50 = scmp.eq.s32.totalorder %s24, 0
      %p51 = por %p49, %p50
      %s53 = sadd.s32 %s52, 1
      %p56 = scmp.eq.s32.totalorder %s18, 1
      %p57 = scmp.ne.s32.totalorder %s52, %s54
      %p58 = scmp.eq.s32.totalorder %s18, 0
      %p59 = por %p57, %p58
      %p60 = scmp.ne.s32.totalorder %s52, %s54
      %p61 = scmp.eq.s32.totalorder %s23, 1
      %p62 = por %p60, %p61
      %p63 = scmp.ne.s32.totalorder %s54, %s55
      %p64 = scmp.eq.s32.totalorder %s23, 0
      %p65 = por %p63, %p64
      %p66 = scmp.ne.s32.totalorder %s54, %s55
      %p67 = scmp.eq.s32.totalorder %s24, 1
      %p68 = por %p66, %p67
      %p70 = scmp.ne.s32.totalorder %s55, %s69
      %p71 = scmp.eq.s32.totalorder %s24, 0
      %p72 = por %p70, %p71
      %s74 = sadd.s32 %s73, 1
      %p77 = scmp.eq.s32.totalorder %s18, 1
      %p78 = scmp.ne.s32.totalorder %s73, %s75
      %p79 = scmp.eq.s32.totalorder %s18, 0
      %p80 = por %p78, %p79
      %p81 = scmp.ne.s32.totalorder %s73, %s75
      %p82 = scmp.eq.s32.totalorder %s23, 1
      %p83 = por %p81, %p82
      %p84 = scmp.ne.s32.totalorder %s75, %s76
      %p85 = scmp.eq.s32.totalorder %s23, 0
      %p86 = por %p84, %p85
      %p87 = scmp.ne.s32.totalorder %s75, %s76
      %p88 = scmp.eq.s32.totalorder %s24, 1
      %p89 = por %p87, %p88
      %p91 = scmp.ne.s32.totalorder %s76, %s90
      %p92 = scmp.eq.s32.totalorder %s24, 0
      %p93 = por %p91, %p92
      %s95 = sadd.s32 %s94, 1
      %p98 = scmp.eq.s32.totalorder %s18, 1
      %p99 = scmp.ne.s32.totalorder %s94, %s96
      %p100 = scmp.eq.s32.totalorder %s18, 0
      %p101 = por %p99, %p100
      %p102 = scmp.ne.s32.totalorder %s94, %s96
      %p103 = scmp.eq.s32.totalorder %s23, 1
      %p104 = por %p102, %p103
      %p105 = scmp.ne.s32.totalorder %s96, %s97
      %p106 = scmp.eq.s32.totalorder %s23, 0
      %p107 = por %p105, %p106
      %p108 = scmp.ne.s32.totalorder %s96, %s97
      %p109 = scmp.eq.s32.totalorder %s24, 1
      %p110 = por %p108, %p109
      %p112 = scmp.ne.s32.totalorder %s97, %s111
      %p113 = scmp.eq.s32.totalorder %s24, 0
      %p114 = por %p112, %p113
      %s115 = ssub.s32 %s18, %s25
      %p116 = scmp.eq.s32.totalorder %s115, 0
      %s118 = sadd.s32 %s117, 1
      %s119 = scalar_select %p116, %s117, %s118
      %p122 = pneg %p116
      %p123 = scmp.eq.s32.totalorder %s18, 1
      %p124 = por %p122, %p123
      %p125 = scmp.ne.s32.totalorder %s117, %s120
      %p126 = scmp.eq.s32.totalorder %s18, 0
      %p127 = por %p125, %p126
      %p128 = scmp.ne.s32.totalorder %s117, %s120
      %p129 = scmp.eq.s32.totalorder %s23, 1
      %p130 = por %p128, %p129
      %p131 = scmp.ne.s32.totalorder %s120, %s121
      %p132 = scmp.eq.s32.totalorder %s23, 0
      %p133 = por %p131, %p132
      %p134 = scmp.ne.s32.totalorder %s120, %s121
      %p135 = scmp.eq.s32.totalorder %s24, 1
      %p136 = por %p134, %p135
      %p138 = scmp.ne.s32.totalorder %s121, %s137
      %p139 = scmp.eq.s32.totalorder %s24, 0
      %p140 = por %p138, %p139
      %p141 = scmp.le.s32.totalorder 1, %s18
      %p142 = scmp.lt.s32.totalorder %s18, 3
      %p143 = pnand %p141, %p142
      %p144 = pneg %p143
      // Predicated region
      $region9: #{_lambda_.4} parent=5 // pred_check
        _
      $region10: #{_lambda_.4} parent=5 // pred_check_branch
        %146 = sbr.rel (%p143) target = $region12
      $region11: #{_lambda_.4} parent=5 // pred_region
        %s147 = ssub.s32 %s18, 1
        // Predicated region
        $region13: #{_lambda_.4} parent=11 // pred_check
          %p148 = pneg %p65
        $region14: #{_lambda_.4} parent=11 // pred_check_branch
          %150 = sbr.rel (%p148) target = $region16
        $region15: #{_lambda_.4} parent=11 // pred_region
          %s152 = ssub.s32 49152, 49152
          %153 = vsyncadd [#allocation8], %s152
          %s154 = sshll.u32 [#allocation7], 4
          %s155 = int_to_ptr.vmem [resolvable:$true] %s154
          %160 = dma.hbm_to_vmem [thread:$0]  %s1, 49152, %s155, [#allocation8], 512, 512, 32
        $region16: #{_lambda_.4} parent=11 // pred_fallthru
          _
        // Predicated region
        $region17: #{_lambda_.4} parent=11 // pred_check
          %p161 = pneg %p86
        $region18: #{_lambda_.4} parent=11 // pred_check_branch
          %163 = sbr.rel (%p161) target = $region20
        $region19: #{_lambda_.4} parent=11 // pred_region
          %s165 = ssub.s32 128, 128
          %166 = vsyncadd [#allocation8], %s165
          %s168 = sshll.u32 [#allocation9], 4
          %s169 = int_to_ptr.vmem [resolvable:$true] %s168
          %171 = dma.hbm_to_vmem [thread:$0]  %s2, 128, %s169, [#allocation8]
        $region20: #{_lambda_.4} parent=11 // pred_fallthru
          _
        // Predicated region
        $region21: #{_lambda_.4} parent=11 // pred_check
          %p172 = pneg %p107
        $region22: #{_lambda_.4} parent=11 // pred_check_branch
          %174 = sbr.rel (%p172) target = $region24
        $region23: #{_lambda_.4} parent=11 // pred_region
          _
        $region24: #{_lambda_.4} parent=11 // pred_fallthru
          _
      $region12: #{_lambda_.4} parent=5 // pred_fallthru
        _
      %p175 = scmp.lt.s32.totalorder %s18, 2
      // Predicated region
      $region25: #{_lambda_.4} parent=5 // pred_check
        %p176 = pneg %p175
      $region26: #{_lambda_.4} parent=5 // pred_check_branch
        %178 = sbr.rel (%p176) target = $region28
      $region27: #{_lambda_.4} parent=5 // pred_region
        // Predicated region
        $region29: #{_lambda_.4} parent=27 // pred_check
          %p179 = pneg %p38
        $region30: #{_lambda_.4} parent=27 // pred_check_branch
          %181 = sbr.rel (%p179) target = $region32
        $region31: #{_lambda_.4} parent=27 // pred_region
          %s182 = sand.u32 %s28, 1
          %s183 = scalar_lea.sflag [#allocation5], %s182
          %s184 = sand.u32 %s28, 1
          %s185 = smul.addr %s184, 16
          %s186 = scalar_lea.vmem [#allocation4], %s185
          %s188 = ssub.s32 256, 256
          %189 = vsyncadd %s183, %s188
          %s190 = smul.addr %s18, 4
          %s191 = smul.addr %s190, 64
          %s192 = scalar_lea.hbm %s0, %s191
          %s193 = sshll.u32 %s186, 4
          %s194 = int_to_ptr.vmem [resolvable:$true] %s193
          %199 = dma.hbm_to_vmem [thread:$0]  %s192, 256, %s194, %s183, 128, 128, 8
        $region32: #{_lambda_.4} parent=27 // pred_fallthru
          _
      $region28: #{_lambda_.4} parent=5 // pred_fallthru
        _
      %p200 = scmp.le.s32.totalorder 1, %s18
      %p201 = scmp.lt.s32.totalorder %s18, 3
      %p202 = pnand %p200, %p201
      %p203 = pneg %p202
      // Predicated region
      $region33: #{_lambda_.4} parent=5 // pred_check
        _
      $region34: #{_lambda_.4} parent=5 // pred_check_branch
        %205 = sbr.rel (%p202) target = $region36
      $region35: #{_lambda_.4} parent=5 // pred_region
        %s206 = ssub.s32 %s18, 1
        %s207 = sand.u32 %s31, 1
        %s208 = scalar_lea.sflag [#allocation5], %s207
        %s209 = sand.u32 %s31, 1
        %s210 = smul.addr %s209, 16
        %s211 = scalar_lea.vmem [#allocation4], %s210
        // Predicated region
        $region37: #{_lambda_.4} parent=35 // pred_check
          %p212 = pneg %p44
        $region38: #{_lambda_.4} parent=35 // pred_check_branch
          %214 = sbr.rel (%p212) target = $region40
        $region39: #{_lambda_.4} parent=35 // pred_region
          %215 = dma.done %s208, 256
        $region40: #{_lambda_.4} parent=35 // pred_fallthru
          _
        // Predicated region
        $region41: #{_lambda_.4} parent=35 // pred_check
          %p216 = pneg %p65
        $region42: #{_lambda_.4} parent=35 // pred_check_branch
          %218 = sbr.rel (%p216) target = $region44
        $region43: #{_lambda_.4} parent=35 // pred_region
          %219 = dma.done [#allocation8], 49152
        $region44: #{_lambda_.4} parent=35 // pred_fallthru
          _
        // Predicated region
        $region45: #{_lambda_.4} parent=35 // pred_check
          %p220 = pneg %p86
        $region46: #{_lambda_.4} parent=35 // pred_check_branch
          %222 = sbr.rel (%p220) target = $region48
        $region47: #{_lambda_.4} parent=35 // pred_region
          %223 = dma.done [#allocation8], 128
        $region48: #{_lambda_.4} parent=35 // pred_fallthru
          _
        %s224 = sand.u32 %s31, 1
        %s225 = scalar_lea.sflag [#allocation5], %s224
        %s226 = sand.u32 %s31, 1
        %s227 = smul.addr %s226, 16
        %s228 = scalar_lea.vmem [#allocation4], %s227
        %p229 = pneg %p44
        %p230 = pneg %p41
        %p231 = pneg %p65
        %p232 = pneg %p62
        %p233 = pneg %p86
        %p234 = pneg %p83
        %p235 = pneg %p107
        %p236 = pneg %p104
        %p237 = pneg %p133
        %p238 = pneg %p130
        %s239 = sand.u32 %s120, 1
        %s240 = scalar_lea.sflag [#allocation6], %s239
        %s241 = sand.u32 %s120, 1
        %s242 = smul.addr %s241, 64
        %s243 = scalar_lea.vmem [#allocation10], %s242
        %vm245 = vcmask 1040384
        %vm246 = vsmask.f32 256
        %vm247 = vmand %vm245, %vm246
        %vm248 = vcmask 1044484
        %vm249 = vsmask.f32 4352
        %vm250 = vmand %vm248, %vm249
        %vm251 = vmor %vm250, %vm247
        %v252 = vld [vmem:[#allocation2] sm:$0x11]
        %v253 = vsel %vm251, 0, %v252
        %254 = vst [vmem:[#allocation2] sm:$0x11] %v253
        %vm255 = vsmask.f32 7938
        %vm256 = vmand %vm245, %vm255
        %vm257 = vsmask.f32 7954
        %vm258 = vmand %vm248, %vm257
        %vm259 = vmor %vm258, %vm256
        %v260 = vld [vmem:[#allocation2 + $0x10] sm:$0x11]
        %v261 = vsel %vm259, 0, %v260
        %262 = vst [vmem:[#allocation2 + $0x10] sm:$0x11] %v261
        %v263 = vld [vmem:[%s211] sm:$0xff]
        %v264 = vld [vmem:[%s211 + $0x8] sm:$0xff]
        %vm265 = vsmask.f32 4368
        %vm266 = vmor %vm246, %vm265
        %v268 = vshrl.u32 %v263, 16
        %v270 = vrot.slane %v268, 7
        %v271 = vshll.u32 %v263, 16
        %v273 = vor.u32 %v270, %v271
        %v274 = vrot.slane %v270, 4
        %v276 = vshrl.u32 %v264, 16
        %v278 = vrot.slane %v276, 7
        %v279 = vshll.u32 %v264, 16
        %v281 = vor.u32 %v278, %v279
        %v282 = vsel %vm266, %v274, %v281
        %v283 = vrot.slane %v278, 4
        %vm287 = vcmask 1043456
        %vm288 = vmand %vm287, %vm255
        %vm289 = vcmask 1047556
        %vm290 = vmand %vm289, %vm257
        %vm291 = vmor %vm290, %vm288
        %v292 = vld [vmem:[#allocation2] sm:$0xff]
        %v293 = vsel %vm291, %v273, %v292
        %294 = vst [vmem:[#allocation2] sm:$0xff] %v293
        %295 = vst [vmem:[#allocation2 + $0x8] sm:$0xff] %v282
        %v296 = vld [vmem:[#allocation2 + $0x10] sm:$0x11]
        %v297 = vsel %vm251, %v283, %v296
        %298 = vst [vmem:[#allocation2 + $0x10] sm:$0x11] %v297
        %v299 = vld [vmem:[#allocation2] sm:$0xff]
        %v300 = vld [vmem:[#allocation2 + $0x8] sm:$0xff]
        %v301 = vld [vmem:[#allocation7] sm:$0xff]
        %v302 = vld [vmem:[#allocation7 + $0x8] sm:$0xff]
        %v303 = vld [vmem:[#allocation7 + $0x10] sm:$0xff]
        %v304 = vld [vmem:[#allocation7 + $0x18] sm:$0xff]
        %v305 = vld [vmem:[#allocation7 + $0x20] sm:$0xff]
        %v306 = vld [vmem:[#allocation7 + $0x28] sm:$0xff]
        %v307 = vld [vmem:[#allocation7 + $0x30] sm:$0xff]
        %v308 = vld [vmem:[#allocation7 + $0x38] sm:$0xff]
        %v309 = vld [vmem:[#allocation7 + $0x40] sm:$0xff]
        %v310 = vld [vmem:[#allocation7 + $0x48] sm:$0xff]
        %v311 = vld [vmem:[#allocation7 + $0x50] sm:$0xff]
        %v312 = vld [vmem:[#allocation7 + $0x58] sm:$0xff]
        %v313 = vld [vmem:[#allocation7 + $0x60] sm:$0xff]
        %v314 = vld [vmem:[#allocation7 + $0x68] sm:$0xff]
        %v315 = vld [vmem:[#allocation7 + $0x70] sm:$0xff]
        %v316 = vld [vmem:[#allocation7 + $0x78] sm:$0xff]
        %v317 = vld [vmem:[#allocation7 + $0x80] sm:$0xff]
        %v318 = vld [vmem:[#allocation7 + $0x88] sm:$0xff]
        %v319 = vld [vmem:[#allocation7 + $0x90] sm:$0xff]
        %v320 = vld [vmem:[#allocation7 + $0x98] sm:$0xff]
        %v321 = vld [vmem:[#allocation7 + $0xa0] sm:$0xff]
        %v322 = vld [vmem:[#allocation7 + $0xa8] sm:$0xff]
        %v323 = vld [vmem:[#allocation7 + $0xb0] sm:$0xff]
        %v324 = vld [vmem:[#allocation7 + $0xb8] sm:$0xff]
        %v325 = vld [vmem:[#allocation7 + $0xc0] sm:$0xff]
        %v326 = vld [vmem:[#allocation7 + $0xc8] sm:$0xff]
        %v327 = vld [vmem:[#allocation7 + $0xd0] sm:$0xff]
        %v328 = vld [vmem:[#allocation7 + $0xd8] sm:$0xff]
        %v329 = vld [vmem:[#allocation7 + $0xe0] sm:$0xff]
        %v330 = vld [vmem:[#allocation7 + $0xe8] sm:$0xff]
        %v331 = vld [vmem:[#allocation7 + $0xf0] sm:$0xff]
        %v332 = vld [vmem:[#allocation7 + $0xf8] sm:$0xff]
        %v333 = vld [vmem:[#allocation7 + $0x100] sm:$0xff]
        %v334 = vld [vmem:[#allocation7 + $0x108] sm:$0xff]
        %v335 = vld [vmem:[#allocation7 + $0x110] sm:$0xff]
        %v336 = vld [vmem:[#allocation7 + $0x118] sm:$0xff]
        %v337 = vld [vmem:[#allocation7 + $0x120] sm:$0xff]
        %v338 = vld [vmem:[#allocation7 + $0x128] sm:$0xff]
        %v339 = vld [vmem:[#allocation7 + $0x130] sm:$0xff]
        %v340 = vld [vmem:[#allocation7 + $0x138] sm:$0xff]
        %v341 = vld [vmem:[#allocation7 + $0x140] sm:$0xff]
        %v342 = vld [vmem:[#allocation7 + $0x148] sm:$0xff]
        %v343 = vld [vmem:[#allocation7 + $0x150] sm:$0xff]
        %v344 = vld [vmem:[#allocation7 + $0x158] sm:$0xff]
        %v345 = vld [vmem:[#allocation7 + $0x160] sm:$0xff]
        %v346 = vld [vmem:[#allocation7 + $0x168] sm:$0xff]
        %v347 = vld [vmem:[#allocation7 + $0x170] sm:$0xff]
        %v348 = vld [vmem:[#allocation7 + $0x178] sm:$0xff]
        %v349 = vld [vmem:[#allocation7 + $0x180] sm:$0xff]
        %v350 = vld [vmem:[#allocation7 + $0x188] sm:$0xff]
        %v351 = vld [vmem:[#allocation7 + $0x190] sm:$0xff]
        %v352 = vld [vmem:[#allocation7 + $0x198] sm:$0xff]
        %v353 = vld [vmem:[#allocation7 + $0x1a0] sm:$0xff]
        %v354 = vld [vmem:[#allocation7 + $0x1a8] sm:$0xff]
        %v355 = vld [vmem:[#allocation7 + $0x1b0] sm:$0xff]
        %v356 = vld [vmem:[#allocation7 + $0x1b8] sm:$0xff]
        %v357 = vld [vmem:[#allocation7 + $0x1c0] sm:$0xff]
        %v358 = vld [vmem:[#allocation7 + $0x1c8] sm:$0xff]
        %v359 = vld [vmem:[#allocation7 + $0x1d0] sm:$0xff]
        %v360 = vld [vmem:[#allocation7 + $0x1d8] sm:$0xff]
        %v361 = vld [vmem:[#allocation7 + $0x1e0] sm:$0xff]
        %v362 = vld [vmem:[#allocation7 + $0x1e8] sm:$0xff]
        %v363 = vld [vmem:[#allocation7 + $0x1f0] sm:$0xff]
        %v364 = vld [vmem:[#allocation7 + $0x1f8] sm:$0xff]
        %v365 = vld [vmem:[#allocation7 + $0x200] sm:$0xff]
        %v366 = vld [vmem:[#allocation7 + $0x208] sm:$0xff]
        %v367 = vld [vmem:[#allocation7 + $0x210] sm:$0xff]
        %v368 = vld [vmem:[#allocation7 + $0x218] sm:$0xff]
        %v369 = vld [vmem:[#allocation7 + $0x220] sm:$0xff]
        %v370 = vld [vmem:[#allocation7 + $0x228] sm:$0xff]
        %v371 = vld [vmem:[#allocation7 + $0x230] sm:$0xff]
        %v372 = vld [vmem:[#allocation7 + $0x238] sm:$0xff]
        %v373 = vld [vmem:[#allocation7 + $0x240] sm:$0xff]
        %v374 = vld [vmem:[#allocation7 + $0x248] sm:$0xff]
        %v375 = vld [vmem:[#allocation7 + $0x250] sm:$0xff]
        %v376 = vld [vmem:[#allocation7 + $0x258] sm:$0xff]
        %v377 = vld [vmem:[#allocation7 + $0x260] sm:$0xff]
        %v378 = vld [vmem:[#allocation7 + $0x268] sm:$0xff]
        %v379 = vld [vmem:[#allocation7 + $0x270] sm:$0xff]
        %v380 = vld [vmem:[#allocation7 + $0x278] sm:$0xff]
        %v381 = vld [vmem:[#allocation7 + $0x280] sm:$0xff]
        %v382 = vld [vmem:[#allocation7 + $0x288] sm:$0xff]
        %v383 = vld [vmem:[#allocation7 + $0x290] sm:$0xff]
        %v384 = vld [vmem:[#allocation7 + $0x298] sm:$0xff]
        %v385 = vld [vmem:[#allocation7 + $0x2a0] sm:$0xff]
        %v386 = vld [vmem:[#allocation7 + $0x2a8] sm:$0xff]
        %v387 = vld [vmem:[#allocation7 + $0x2b0] sm:$0xff]
        %v388 = vld [vmem:[#allocation7 + $0x2b8] sm:$0xff]
        %v389 = vld [vmem:[#allocation7 + $0x2c0] sm:$0xff]
        %v390 = vld [vmem:[#allocation7 + $0x2c8] sm:$0xff]
        %v391 = vld [vmem:[#allocation7 + $0x2d0] sm:$0xff]
        %v392 = vld [vmem:[#allocation7 + $0x2d8] sm:$0xff]
        %v393 = vld [vmem:[#allocation7 + $0x2e0] sm:$0xff]
        %v394 = vld [vmem:[#allocation7 + $0x2e8] sm:$0xff]
        %v395 = vld [vmem:[#allocation7 + $0x2f0] sm:$0xff]
        %v396 = vld [vmem:[#allocation7 + $0x2f8] sm:$0xff]
        %v397 = vld [vmem:[#allocation7 + $0x300] sm:$0xff]
        %v398 = vld [vmem:[#allocation7 + $0x308] sm:$0xff]
        %v399 = vld [vmem:[#allocation7 + $0x310] sm:$0xff]
        %v400 = vld [vmem:[#allocation7 + $0x318] sm:$0xff]
        %v401 = vld [vmem:[#allocation7 + $0x320] sm:$0xff]
        %v402 = vld [vmem:[#allocation7 + $0x328] sm:$0xff]
        %v403 = vld [vmem:[#allocation7 + $0x330] sm:$0xff]
        %v404 = vld [vmem:[#allocation7 + $0x338] sm:$0xff]
        %v405 = vld [vmem:[#allocation7 + $0x340] sm:$0xff]
        %v406 = vld [vmem:[#allocation7 + $0x348] sm:$0xff]
        %v407 = vld [vmem:[#allocation7 + $0x350] sm:$0xff]
        %v408 = vld [vmem:[#allocation7 + $0x358] sm:$0xff]
        %v409 = vld [vmem:[#allocation7 + $0x360] sm:$0xff]
        %v410 = vld [vmem:[#allocation7 + $0x368] sm:$0xff]
        %v411 = vld [vmem:[#allocation7 + $0x370] sm:$0xff]
        %v412 = vld [vmem:[#allocation7 + $0x378] sm:$0xff]
        %v413 = vld [vmem:[#allocation7 + $0x380] sm:$0xff]
        %v414 = vld [vmem:[#allocation7 + $0x388] sm:$0xff]
        %v415 = vld [vmem:[#allocation7 + $0x390] sm:$0xff]
        %v416 = vld [vmem:[#allocation7 + $0x398] sm:$0xff]
        %v417 = vld [vmem:[#allocation7 + $0x3a0] sm:$0xff]
        %v418 = vld [vmem:[#allocation7 + $0x3a8] sm:$0xff]
        %v419 = vld [vmem:[#allocation7 + $0x3b0] sm:$0xff]
        %v420 = vld [vmem:[#allocation7 + $0x3b8] sm:$0xff]
        %v421 = vld [vmem:[#allocation7 + $0x3c0] sm:$0xff]
        %v422 = vld [vmem:[#allocation7 + $0x3c8] sm:$0xff]
        %v423 = vld [vmem:[#allocation7 + $0x3d0] sm:$0xff]
        %v424 = vld [vmem:[#allocation7 + $0x3d8] sm:$0xff]
        %v425 = vld [vmem:[#allocation7 + $0x3e0] sm:$0xff]
        %v426 = vld [vmem:[#allocation7 + $0x3e8] sm:$0xff]
        %v427 = vld [vmem:[#allocation7 + $0x3f0] sm:$0xff]
        %v428 = vld [vmem:[#allocation7 + $0x3f8] sm:$0xff]
        %v429 = vld [vmem:[#allocation2 + $0x10] sm:$0x11]
        %s430 = scalar_lea.vmem [#allocation7], 1024
        %v431 = vld [vmem:[%s430] sm:$0xff]
        %v432 = vld [vmem:[%s430 + $0x8] sm:$0xff]
        %v433 = vld [vmem:[%s430 + $0x10] sm:$0xff]
        %v434 = vld [vmem:[%s430 + $0x18] sm:$0xff]
        %v435 = vld [vmem:[%s430 + $0x20] sm:$0xff]
        %v436 = vld [vmem:[%s430 + $0x28] sm:$0xff]
        %v437 = vld [vmem:[%s430 + $0x30] sm:$0xff]
        %v438 = vld [vmem:[%s430 + $0x38] sm:$0xff]
        %v439 = vld [vmem:[%s430 + $0x40] sm:$0xff]
        %v440 = vld [vmem:[%s430 + $0x48] sm:$0xff]
        %v441 = vld [vmem:[%s430 + $0x50] sm:$0xff]
        %v442 = vld [vmem:[%s430 + $0x58] sm:$0xff]
        %v443 = vld [vmem:[%s430 + $0x60] sm:$0xff]
        %v444 = vld [vmem:[%s430 + $0x68] sm:$0xff]
        %v445 = vld [vmem:[%s430 + $0x70] sm:$0xff]
        %v446 = vld [vmem:[%s430 + $0x78] sm:$0xff]
        %v447 = vld [vmem:[%s430 + $0x80] sm:$0xff]
        %v448 = vld [vmem:[%s430 + $0x88] sm:$0xff]
        %v449 = vld [vmem:[%s430 + $0x90] sm:$0xff]
        %v450 = vld [vmem:[%s430 + $0x98] sm:$0xff]
        %v451 = vld [vmem:[%s430 + $0xa0] sm:$0xff]
        %v452 = vld [vmem:[%s430 + $0xa8] sm:$0xff]
        %v453 = vld [vmem:[%s430 + $0xb0] sm:$0xff]
        %v454 = vld [vmem:[%s430 + $0xb8] sm:$0xff]
        %v455 = vld [vmem:[%s430 + $0xc0] sm:$0xff]
        %v456 = vld [vmem:[%s430 + $0xc8] sm:$0xff]
        %v457 = vld [vmem:[%s430 + $0xd0] sm:$0xff]
        %v458 = vld [vmem:[%s430 + $0xd8] sm:$0xff]
        %v459 = vld [vmem:[%s430 + $0xe0] sm:$0xff]
        %v460 = vld [vmem:[%s430 + $0xe8] sm:$0xff]
        %v461 = vld [vmem:[%s430 + $0xf0] sm:$0xff]
        %v462 = vld [vmem:[%s430 + $0xf8] sm:$0xff]
        %v463 = vld [vmem:[%s430 + $0x100] sm:$0xff]
        %v464 = vld [vmem:[%s430 + $0x108] sm:$0xff]
        %v465 = vld [vmem:[%s430 + $0x110] sm:$0xff]
        %v466 = vld [vmem:[%s430 + $0x118] sm:$0xff]
        %v467 = vld [vmem:[%s430 + $0x120] sm:$0xff]
        %v468 = vld [vmem:[%s430 + $0x128] sm:$0xff]
        %v469 = vld [vmem:[%s430 + $0x130] sm:$0xff]
        %v470 = vld [vmem:[%s430 + $0x138] sm:$0xff]
        %v471 = vld [vmem:[%s430 + $0x140] sm:$0xff]
        %v472 = vld [vmem:[%s430 + $0x148] sm:$0xff]
        %v473 = vld [vmem:[%s430 + $0x150] sm:$0xff]
        %v474 = vld [vmem:[%s430 + $0x158] sm:$0xff]
        %v475 = vld [vmem:[%s430 + $0x160] sm:$0xff]
        %v476 = vld [vmem:[%s430 + $0x168] sm:$0xff]
        %v477 = vld [vmem:[%s430 + $0x170] sm:$0xff]
        %v478 = vld [vmem:[%s430 + $0x178] sm:$0xff]
        %v479 = vld [vmem:[%s430 + $0x180] sm:$0xff]
        %v480 = vld [vmem:[%s430 + $0x188] sm:$0xff]
        %v481 = vld [vmem:[%s430 + $0x190] sm:$0xff]
        %v482 = vld [vmem:[%s430 + $0x198] sm:$0xff]
        %v483 = vld [vmem:[%s430 + $0x1a0] sm:$0xff]
        %v484 = vld [vmem:[%s430 + $0x1a8] sm:$0xff]
        %v485 = vld [vmem:[%s430 + $0x1b0] sm:$0xff]
        %v486 = vld [vmem:[%s430 + $0x1b8] sm:$0xff]
        %v487 = vld [vmem:[%s430 + $0x1c0] sm:$0xff]
        %v488 = vld [vmem:[%s430 + $0x1c8] sm:$0xff]
        %v489 = vld [vmem:[%s430 + $0x1d0] sm:$0xff]
        %v490 = vld [vmem:[%s430 + $0x1d8] sm:$0xff]
        %v491 = vld [vmem:[%s430 + $0x1e0] sm:$0xff]
        %v492 = vld [vmem:[%s430 + $0x1e8] sm:$0xff]
        %v493 = vld [vmem:[%s430 + $0x1f0] sm:$0xff]
        %v494 = vld [vmem:[%s430 + $0x1f8] sm:$0xff]
        %v495 = vld [vmem:[%s430 + $0x200] sm:$0xff]
        %v496 = vld [vmem:[%s430 + $0x208] sm:$0xff]
        %v497 = vld [vmem:[%s430 + $0x210] sm:$0xff]
        %v498 = vld [vmem:[%s430 + $0x218] sm:$0xff]
        %v499 = vld [vmem:[%s430 + $0x220] sm:$0xff]
        %v500 = vld [vmem:[%s430 + $0x228] sm:$0xff]
        %v501 = vld [vmem:[%s430 + $0x230] sm:$0xff]
        %v502 = vld [vmem:[%s430 + $0x238] sm:$0xff]
        %v503 = vld [vmem:[%s430 + $0x240] sm:$0xff]
        %v504 = vld [vmem:[%s430 + $0x248] sm:$0xff]
        %v505 = vld [vmem:[%s430 + $0x250] sm:$0xff]
        %v506 = vld [vmem:[%s430 + $0x258] sm:$0xff]
        %v507 = vld [vmem:[%s430 + $0x260] sm:$0xff]
        %v508 = vld [vmem:[%s430 + $0x268] sm:$0xff]
        %v509 = vld [vmem:[%s430 + $0x270] sm:$0xff]
        %v510 = vld [vmem:[%s430 + $0x278] sm:$0xff]
        %v511 = vld [vmem:[%s430 + $0x280] sm:$0xff]
        %v512 = vld [vmem:[%s430 + $0x288] sm:$0xff]
        %v513 = vld [vmem:[%s430 + $0x290] sm:$0xff]
        %v514 = vld [vmem:[%s430 + $0x298] sm:$0xff]
        %v515 = vld [vmem:[%s430 + $0x2a0] sm:$0xff]
        %v516 = vld [vmem:[%s430 + $0x2a8] sm:$0xff]
        %v517 = vld [vmem:[%s430 + $0x2b0] sm:$0xff]
        %v518 = vld [vmem:[%s430 + $0x2b8] sm:$0xff]
        %v519 = vld [vmem:[%s430 + $0x2c0] sm:$0xff]
        %v520 = vld [vmem:[%s430 + $0x2c8] sm:$0xff]
        %v521 = vld [vmem:[%s430 + $0x2d0] sm:$0xff]
        %v522 = vld [vmem:[%s430 + $0x2d8] sm:$0xff]
        %v523 = vld [vmem:[%s430 + $0x2e0] sm:$0xff]
        %v524 = vld [vmem:[%s430 + $0x2e8] sm:$0xff]
        %v525 = vld [vmem:[%s430 + $0x2f0] sm:$0xff]
        %v526 = vld [vmem:[%s430 + $0x2f8] sm:$0xff]
        %v527 = vld [vmem:[%s430 + $0x300] sm:$0xff]
        %v528 = vld [vmem:[%s430 + $0x308] sm:$0xff]
        %v529 = vld [vmem:[%s430 + $0x310] sm:$0xff]
        %v530 = vld [vmem:[%s430 + $0x318] sm:$0xff]
        %v531 = vld [vmem:[%s430 + $0x320] sm:$0xff]
        %v532 = vld [vmem:[%s430 + $0x328] sm:$0xff]
        %v533 = vld [vmem:[%s430 + $0x330] sm:$0xff]
        %v534 = vld [vmem:[%s430 + $0x338] sm:$0xff]
        %v535 = vld [vmem:[%s430 + $0x340] sm:$0xff]
        %v536 = vld [vmem:[%s430 + $0x348] sm:$0xff]
        %v537 = vld [vmem:[%s430 + $0x350] sm:$0xff]
        %v538 = vld [vmem:[%s430 + $0x358] sm:$0xff]
        %v539 = vld [vmem:[%s430 + $0x360] sm:$0xff]
        %v540 = vld [vmem:[%s430 + $0x368] sm:$0xff]
        %v541 = vld [vmem:[%s430 + $0x370] sm:$0xff]
        %v542 = vld [vmem:[%s430 + $0x378] sm:$0xff]
        %v543 = vld [vmem:[%s430 + $0x380] sm:$0xff]
        %v544 = vld [vmem:[%s430 + $0x388] sm:$0xff]
        %v545 = vld [vmem:[%s430 + $0x390] sm:$0xff]
        %v546 = vld [vmem:[%s430 + $0x398] sm:$0xff]
        %v547 = vld [vmem:[%s430 + $0x3a0] sm:$0xff]
        %v548 = vld [vmem:[%s430 + $0x3a8] sm:$0xff]
        %v549 = vld [vmem:[%s430 + $0x3b0] sm:$0xff]
        %v550 = vld [vmem:[%s430 + $0x3b8] sm:$0xff]
        %v551 = vld [vmem:[%s430 + $0x3c0] sm:$0xff]
        %v552 = vld [vmem:[%s430 + $0x3c8] sm:$0xff]
        %v553 = vld [vmem:[%s430 + $0x3d0] sm:$0xff]
        %v554 = vld [vmem:[%s430 + $0x3d8] sm:$0xff]
        %v555 = vld [vmem:[%s430 + $0x3e0] sm:$0xff]
        %v556 = vld [vmem:[%s430 + $0x3e8] sm:$0xff]
        %v557 = vld [vmem:[%s430 + $0x3f0] sm:$0xff]
        %v558 = vld [vmem:[%s430 + $0x3f8] sm:$0xff]
        %v562 = vunpack.c.l.b16 %v299
        %v563 = vunpack.c.h.b16 %v299
        %v564 = vunpack.c.l.b16 %v300
        %v565 = vunpack.c.h.b16 %v300
        %v566 = vunpack.c.l.b16 %v429
        %v567 = vunpack.c.h.b16 %v429
        %v568 = vpack.c.b16 %v564, %v562
        %v569 = vpack.c.b16 %v565, %v563
        %v570 = vpack.c.b16 %v566, %v566
        %v571 = vpack.c.b16 %v567, %v567
        %vm572 = vsmask.f32 7424
        %v574 = vshrl.u32 %v568, 16
        %v576 = vshll.u32 %v568, 16
        %v578 = vrot.slane %v576, 1
        %v579 = vor.u32 %v574, %v578
        %v581 = vshll.u32 %v570, 16
        %v583 = vrot.slane %v581, 1
        %v584 = vsel %vm572, %v579, %v583
        %v586 = vshrl.u32 %v569, 16
        %v588 = vshll.u32 %v569, 16
        %v590 = vrot.slane %v588, 1
        %v591 = vor.u32 %v586, %v590
        %v593 = vshll.u32 %v571, 16
        %v595 = vrot.slane %v593, 1
        %v596 = vsel %vm572, %v591, %v595
        %v727 = vunpack.c.l.b16 %v431
        %v728 = vunpack.c.h.b16 %v431
        %v729 = vunpack.c.l.b16 %v432
        %v730 = vunpack.c.h.b16 %v432
        %v731 = vunpack.c.l.b16 %v433
        %v732 = vunpack.c.h.b16 %v433
        %v733 = vunpack.c.l.b16 %v434
        %v734 = vunpack.c.h.b16 %v434
        %v735 = vunpack.c.l.b16 %v435
        %v736 = vunpack.c.h.b16 %v435
        %v737 = vunpack.c.l.b16 %v436
        %v738 = vunpack.c.h.b16 %v436
        %v739 = vunpack.c.l.b16 %v437
        %v740 = vunpack.c.h.b16 %v437
        %v741 = vunpack.c.l.b16 %v438
        %v742 = vunpack.c.h.b16 %v438
        %v743 = vunpack.c.l.b16 %v439
        %v744 = vunpack.c.h.b16 %v439
        %v745 = vunpack.c.l.b16 %v440
        %v746 = vunpack.c.h.b16 %v440
        %v747 = vunpack.c.l.b16 %v441
        %v748 = vunpack.c.h.b16 %v441
        %v749 = vunpack.c.l.b16 %v442
        %v750 = vunpack.c.h.b16 %v442
        %v751 = vunpack.c.l.b16 %v443
        %v752 = vunpack.c.h.b16 %v443
        %v753 = vunpack.c.l.b16 %v444
        %v754 = vunpack.c.h.b16 %v444
        %v755 = vunpack.c.l.b16 %v445
        %v756 = vunpack.c.h.b16 %v445
        %v757 = vunpack.c.l.b16 %v446
        %v758 = vunpack.c.h.b16 %v446
        %v759 = vunpack.c.l.b16 %v447
        %v760 = vunpack.c.h.b16 %v447
        %v761 = vunpack.c.l.b16 %v448
        %v762 = vunpack.c.h.b16 %v448
        %v763 = vunpack.c.l.b16 %v449
        %v764 = vunpack.c.h.b16 %v449
        %v765 = vunpack.c.l.b16 %v450
        %v766 = vunpack.c.h.b16 %v450
        %v767 = vunpack.c.l.b16 %v451
        %v768 = vunpack.c.h.b16 %v451
        %v769 = vunpack.c.l.b16 %v452
        %v770 = vunpack.c.h.b16 %v452
        %v771 = vunpack.c.l.b16 %v453
        %v772 = vunpack.c.h.b16 %v453
        %v773 = vunpack.c.l.b16 %v454
        %v774 = vunpack.c.h.b16 %v454
        %v775 = vunpack.c.l.b16 %v455
        %v776 = vunpack.c.h.b16 %v455
        %v777 = vunpack.c.l.b16 %v456
        %v778 = vunpack.c.h.b16 %v456
        %v779 = vunpack.c.l.b16 %v457
        %v780 = vunpack.c.h.b16 %v457
        %v781 = vunpack.c.l.b16 %v458
        %v782 = vunpack.c.h.b16 %v458
        %v783 = vunpack.c.l.b16 %v459
        %v784 = vunpack.c.h.b16 %v459
        %v785 = vunpack.c.l.b16 %v460
        %v786 = vunpack.c.h.b16 %v460
        %v787 = vunpack.c.l.b16 %v461
        %v788 = vunpack.c.h.b16 %v461
        %v789 = vunpack.c.l.b16 %v462
        %v790 = vunpack.c.h.b16 %v462
        %v791 = vunpack.c.l.b16 %v463
        %v792 = vunpack.c.h.b16 %v463
        %v793 = vunpack.c.l.b16 %v464
        %v794 = vunpack.c.h.b16 %v464
        %v795 = vunpack.c.l.b16 %v465
        %v796 = vunpack.c.h.b16 %v465
        %v797 = vunpack.c.l.b16 %v466
        %v798 = vunpack.c.h.b16 %v466
        %v799 = vunpack.c.l.b16 %v467
        %v800 = vunpack.c.h.b16 %v467
        %v801 = vunpack.c.l.b16 %v468
        %v802 = vunpack.c.h.b16 %v468
        %v803 = vunpack.c.l.b16 %v469
        %v804 = vunpack.c.h.b16 %v469
        %v805 = vunpack.c.l.b16 %v470
        %v806 = vunpack.c.h.b16 %v470
        %v807 = vunpack.c.l.b16 %v471
        %v808 = vunpack.c.h.b16 %v471
        %v809 = vunpack.c.l.b16 %v472
        %v810 = vunpack.c.h.b16 %v472
        %v811 = vunpack.c.l.b16 %v473
        %v812 = vunpack.c.h.b16 %v473
        %v813 = vunpack.c.l.b16 %v474
        %v814 = vunpack.c.h.b16 %v474
        %v815 = vunpack.c.l.b16 %v475
        %v816 = vunpack.c.h.b16 %v475
        %v817 = vunpack.c.l.b16 %v476
        %v818 = vunpack.c.h.b16 %v476
        %v819 = vunpack.c.l.b16 %v477
        %v820 = vunpack.c.h.b16 %v477
        %v821 = vunpack.c.l.b16 %v478
        %v822 = vunpack.c.h.b16 %v478
        %v823 = vunpack.c.l.b16 %v479
        %v824 = vunpack.c.h.b16 %v479
        %v825 = vunpack.c.l.b16 %v480
        %v826 = vunpack.c.h.b16 %v480
        %v827 = vunpack.c.l.b16 %v481
        %v828 = vunpack.c.h.b16 %v481
        %v829 = vunpack.c.l.b16 %v482
        %v830 = vunpack.c.h.b16 %v482
        %v831 = vunpack.c.l.b16 %v483
        %v832 = vunpack.c.h.b16 %v483
        %v833 = vunpack.c.l.b16 %v484
        %v834 = vunpack.c.h.b16 %v484
        %v835 = vunpack.c.l.b16 %v485
        %v836 = vunpack.c.h.b16 %v485
        %v837 = vunpack.c.l.b16 %v486
        %v838 = vunpack.c.h.b16 %v486
        %v839 = vunpack.c.l.b16 %v487
        %v840 = vunpack.c.h.b16 %v487
        %v841 = vunpack.c.l.b16 %v488
        %v842 = vunpack.c.h.b16 %v488
        %v843 = vunpack.c.l.b16 %v489
        %v844 = vunpack.c.h.b16 %v489
        %v845 = vunpack.c.l.b16 %v490
        %v846 = vunpack.c.h.b16 %v490
        %v847 = vunpack.c.l.b16 %v491
        %v848 = vunpack.c.h.b16 %v491
        %v849 = vunpack.c.l.b16 %v492
        %v850 = vunpack.c.h.b16 %v492
        %v851 = vunpack.c.l.b16 %v493
        %v852 = vunpack.c.h.b16 %v493
        %v853 = vunpack.c.l.b16 %v494
        %v854 = vunpack.c.h.b16 %v494
        %v855 = vunpack.c.l.b16 %v495
        %v856 = vunpack.c.h.b16 %v495
        %v857 = vunpack.c.l.b16 %v496
        %v858 = vunpack.c.h.b16 %v496
        %v859 = vunpack.c.l.b16 %v497
        %v860 = vunpack.c.h.b16 %v497
        %v861 = vunpack.c.l.b16 %v498
        %v862 = vunpack.c.h.b16 %v498
        %v863 = vunpack.c.l.b16 %v499
        %v864 = vunpack.c.h.b16 %v499
        %v865 = vunpack.c.l.b16 %v500
        %v866 = vunpack.c.h.b16 %v500
        %v867 = vunpack.c.l.b16 %v501
        %v868 = vunpack.c.h.b16 %v501
        %v869 = vunpack.c.l.b16 %v502
        %v870 = vunpack.c.h.b16 %v502
        %v871 = vunpack.c.l.b16 %v503
        %v872 = vunpack.c.h.b16 %v503
        %v873 = vunpack.c.l.b16 %v504
        %v874 = vunpack.c.h.b16 %v504
        %v875 = vunpack.c.l.b16 %v505
        %v876 = vunpack.c.h.b16 %v505
        %v877 = vunpack.c.l.b16 %v506
        %v878 = vunpack.c.h.b16 %v506
        %v879 = vunpack.c.l.b16 %v507
        %v880 = vunpack.c.h.b16 %v507
        %v881 = vunpack.c.l.b16 %v508
        %v882 = vunpack.c.h.b16 %v508
        %v883 = vunpack.c.l.b16 %v509
        %v884 = vunpack.c.h.b16 %v509
        %v885 = vunpack.c.l.b16 %v510
        %v886 = vunpack.c.h.b16 %v510
        %v887 = vunpack.c.l.b16 %v511
        %v888 = vunpack.c.h.b16 %v511
        %v889 = vunpack.c.l.b16 %v512
        %v890 = vunpack.c.h.b16 %v512
        %v891 = vunpack.c.l.b16 %v513
        %v892 = vunpack.c.h.b16 %v513
        %v893 = vunpack.c.l.b16 %v514
        %v894 = vunpack.c.h.b16 %v514
        %v895 = vunpack.c.l.b16 %v515
        %v896 = vunpack.c.h.b16 %v515
        %v897 = vunpack.c.l.b16 %v516
        %v898 = vunpack.c.h.b16 %v516
        %v899 = vunpack.c.l.b16 %v517
        %v900 = vunpack.c.h.b16 %v517
        %v901 = vunpack.c.l.b16 %v518
        %v902 = vunpack.c.h.b16 %v518
        %v903 = vunpack.c.l.b16 %v519
        %v904 = vunpack.c.h.b16 %v519
        %v905 = vunpack.c.l.b16 %v520
        %v906 = vunpack.c.h.b16 %v520
        %v907 = vunpack.c.l.b16 %v521
        %v908 = vunpack.c.h.b16 %v521
        %v909 = vunpack.c.l.b16 %v522
        %v910 = vunpack.c.h.b16 %v522
        %v911 = vunpack.c.l.b16 %v523
        %v912 = vunpack.c.h.b16 %v523
        %v913 = vunpack.c.l.b16 %v524
        %v914 = vunpack.c.h.b16 %v524
        %v915 = vunpack.c.l.b16 %v525
        %v916 = vunpack.c.h.b16 %v525
        %v917 = vunpack.c.l.b16 %v526
        %v918 = vunpack.c.h.b16 %v526
        %v919 = vunpack.c.l.b16 %v527
        %v920 = vunpack.c.h.b16 %v527
        %v921 = vunpack.c.l.b16 %v528
        %v922 = vunpack.c.h.b16 %v528
        %v923 = vunpack.c.l.b16 %v529
        %v924 = vunpack.c.h.b16 %v529
        %v925 = vunpack.c.l.b16 %v530
        %v926 = vunpack.c.h.b16 %v530
        %v927 = vunpack.c.l.b16 %v531
        %v928 = vunpack.c.h.b16 %v531
        %v929 = vunpack.c.l.b16 %v532
        %v930 = vunpack.c.h.b16 %v532
        %v931 = vunpack.c.l.b16 %v533
        %v932 = vunpack.c.h.b16 %v533
        %v933 = vunpack.c.l.b16 %v534
        %v934 = vunpack.c.h.b16 %v534
        %v935 = vunpack.c.l.b16 %v535
        %v936 = vunpack.c.h.b16 %v535
        %v937 = vunpack.c.l.b16 %v536
        %v938 = vunpack.c.h.b16 %v536
        %v939 = vunpack.c.l.b16 %v537
        %v940 = vunpack.c.h.b16 %v537
        %v941 = vunpack.c.l.b16 %v538
        %v942 = vunpack.c.h.b16 %v538
        %v943 = vunpack.c.l.b16 %v539
        %v944 = vunpack.c.h.b16 %v539
        %v945 = vunpack.c.l.b16 %v540
        %v946 = vunpack.c.h.b16 %v540
        %v947 = vunpack.c.l.b16 %v541
        %v948 = vunpack.c.h.b16 %v541
        %v949 = vunpack.c.l.b16 %v542
        %v950 = vunpack.c.h.b16 %v542
        %v951 = vunpack.c.l.b16 %v543
        %v952 = vunpack.c.h.b16 %v543
        %v953 = vunpack.c.l.b16 %v544
        %v954 = vunpack.c.h.b16 %v544
        %v955 = vunpack.c.l.b16 %v545
        %v956 = vunpack.c.h.b16 %v545
        %v957 = vunpack.c.l.b16 %v546
        %v958 = vunpack.c.h.b16 %v546
        %v959 = vunpack.c.l.b16 %v547
        %v960 = vunpack.c.h.b16 %v547
        %v961 = vunpack.c.l.b16 %v548
        %v962 = vunpack.c.h.b16 %v548
        %v963 = vunpack.c.l.b16 %v549
        %v964 = vunpack.c.h.b16 %v549
        %v965 = vunpack.c.l.b16 %v550
        %v966 = vunpack.c.h.b16 %v550
        %v967 = vunpack.c.l.b16 %v551
        %v968 = vunpack.c.h.b16 %v551
        %v969 = vunpack.c.l.b16 %v552
        %v970 = vunpack.c.h.b16 %v552
        %v971 = vunpack.c.l.b16 %v553
        %v972 = vunpack.c.h.b16 %v553
        %v973 = vunpack.c.l.b16 %v554
        %v974 = vunpack.c.h.b16 %v554
        %v975 = vunpack.c.l.b16 %v555
        %v976 = vunpack.c.h.b16 %v555
        %v977 = vunpack.c.l.b16 %v556
        %v978 = vunpack.c.h.b16 %v556
        %v979 = vunpack.c.l.b16 %v557
        %v980 = vunpack.c.h.b16 %v557
        %v981 = vunpack.c.l.b16 %v558
        %v982 = vunpack.c.h.b16 %v558
        %v983 = vpack.c.b16 %v735, %v727
        %v984 = vpack.c.b16 %v736, %v728
        %v985 = vpack.c.b16 %v737, %v729
        %v986 = vpack.c.b16 %v738, %v730
        %v987 = vpack.c.b16 %v739, %v731
        %v988 = vpack.c.b16 %v740, %v732
        %v989 = vpack.c.b16 %v741, %v733
        %v990 = vpack.c.b16 %v742, %v734
        %v991 = vpack.c.b16 %v751, %v743
        %v992 = vpack.c.b16 %v752, %v744
        %v993 = vpack.c.b16 %v753, %v745
        %v994 = vpack.c.b16 %v754, %v746
        %v995 = vpack.c.b16 %v755, %v747
        %v996 = vpack.c.b16 %v756, %v748
        %v997 = vpack.c.b16 %v757, %v749
        %v998 = vpack.c.b16 %v758, %v750
        %v999 = vpack.c.b16 %v767, %v759
        %v1000 = vpack.c.b16 %v768, %v760
        %v1001 = vpack.c.b16 %v769, %v761
        %v1002 = vpack.c.b16 %v770, %v762
        %v1003 = vpack.c.b16 %v771, %v763
        %v1004 = vpack.c.b16 %v772, %v764
        %v1005 = vpack.c.b16 %v773, %v765
        %v1006 = vpack.c.b16 %v774, %v766
        %v1007 = vpack.c.b16 %v783, %v775
        %v1008 = vpack.c.b16 %v784, %v776
        %v1009 = vpack.c.b16 %v785, %v777
        %v1010 = vpack.c.b16 %v786, %v778
        %v1011 = vpack.c.b16 %v787, %v779
        %v1012 = vpack.c.b16 %v788, %v780
        %v1013 = vpack.c.b16 %v789, %v781
        %v1014 = vpack.c.b16 %v790, %v782
        %v1015 = vpack.c.b16 %v799, %v791
        %v1016 = vpack.c.b16 %v800, %v792
        %v1017 = vpack.c.b16 %v801, %v793
        %v1018 = vpack.c.b16 %v802, %v794
        %v1019 = vpack.c.b16 %v803, %v795
        %v1020 = vpack.c.b16 %v804, %v796
        %v1021 = vpack.c.b16 %v805, %v797
        %v1022 = vpack.c.b16 %v806, %v798
        %v1023 = vpack.c.b16 %v815, %v807
        %v1024 = vpack.c.b16 %v816, %v808
        %v1025 = vpack.c.b16 %v817, %v809
        %v1026 = vpack.c.b16 %v818, %v810
        %v1027 = vpack.c.b16 %v819, %v811
        %v1028 = vpack.c.b16 %v820, %v812
        %v1029 = vpack.c.b16 %v821, %v813
        %v1030 = vpack.c.b16 %v822, %v814
        %v1031 = vpack.c.b16 %v831, %v823
        %v1032 = vpack.c.b16 %v832, %v824
        %v1033 = vpack.c.b16 %v833, %v825
        %v1034 = vpack.c.b16 %v834, %v826
        %v1035 = vpack.c.b16 %v835, %v827
        %v1036 = vpack.c.b16 %v836, %v828
        %v1037 = vpack.c.b16 %v837, %v829
        %v1038 = vpack.c.b16 %v838, %v830
        %v1039 = vpack.c.b16 %v847, %v839
        %v1040 = vpack.c.b16 %v848, %v840
        %v1041 = vpack.c.b16 %v849, %v841
        %v1042 = vpack.c.b16 %v850, %v842
        %v1043 = vpack.c.b16 %v851, %v843
        %v1044 = vpack.c.b16 %v852, %v844
        %v1045 = vpack.c.b16 %v853, %v845
        %v1046 = vpack.c.b16 %v854, %v846
        %v1047 = vpack.c.b16 %v863, %v855
        %v1048 = vpack.c.b16 %v864, %v856
        %v1049 = vpack.c.b16 %v865, %v857
        %v1050 = vpack.c.b16 %v866, %v858
        %v1051 = vpack.c.b16 %v867, %v859
        %v1052 = vpack.c.b16 %v868, %v860
        %v1053 = vpack.c.b16 %v869, %v861
        %v1054 = vpack.c.b16 %v870, %v862
        %v1055 = vpack.c.b16 %v879, %v871
        %v1056 = vpack.c.b16 %v880, %v872
        %v1057 = vpack.c.b16 %v881, %v873
        %v1058 = vpack.c.b16 %v882, %v874
        %v1059 = vpack.c.b16 %v883, %v875
        %v1060 = vpack.c.b16 %v884, %v876
        %v1061 = vpack.c.b16 %v885, %v877
        %v1062 = vpack.c.b16 %v886, %v878
        %v1063 = vpack.c.b16 %v895, %v887
        %v1064 = vpack.c.b16 %v896, %v888
        %v1065 = vpack.c.b16 %v897, %v889
        %v1066 = vpack.c.b16 %v898, %v890
        %v1067 = vpack.c.b16 %v899, %v891
        %v1068 = vpack.c.b16 %v900, %v892
        %v1069 = vpack.c.b16 %v901, %v893
        %v1070 = vpack.c.b16 %v902, %v894
        %v1071 = vpack.c.b16 %v911, %v903
        %v1072 = vpack.c.b16 %v912, %v904
        %v1073 = vpack.c.b16 %v913, %v905
        %v1074 = vpack.c.b16 %v914, %v906
        %v1075 = vpack.c.b16 %v915, %v907
        %v1076 = vpack.c.b16 %v916, %v908
        %v1077 = vpack.c.b16 %v917, %v909
        %v1078 = vpack.c.b16 %v918, %v910
        %v1079 = vpack.c.b16 %v927, %v919
        %v1080 = vpack.c.b16 %v928, %v920
        %v1081 = vpack.c.b16 %v929, %v921
        %v1082 = vpack.c.b16 %v930, %v922
        %v1083 = vpack.c.b16 %v931, %v923
        %v1084 = vpack.c.b16 %v932, %v924
        %v1085 = vpack.c.b16 %v933, %v925
        %v1086 = vpack.c.b16 %v934, %v926
        %v1087 = vpack.c.b16 %v943, %v935
        %v1088 = vpack.c.b16 %v944, %v936
        %v1089 = vpack.c.b16 %v945, %v937
        %v1090 = vpack.c.b16 %v946, %v938
        %v1091 = vpack.c.b16 %v947, %v939
        %v1092 = vpack.c.b16 %v948, %v940
        %v1093 = vpack.c.b16 %v949, %v941
        %v1094 = vpack.c.b16 %v950, %v942
        %v1095 = vpack.c.b16 %v959, %v951
        %v1096 = vpack.c.b16 %v960, %v952
        %v1097 = vpack.c.b16 %v961, %v953
        %v1098 = vpack.c.b16 %v962, %v954
        %v1099 = vpack.c.b16 %v963, %v955
        %v1100 = vpack.c.b16 %v964, %v956
        %v1101 = vpack.c.b16 %v965, %v957
        %v1102 = vpack.c.b16 %v966, %v958
        %v1103 = vpack.c.b16 %v975, %v967
        %v1104 = vpack.c.b16 %v976, %v968
        %v1105 = vpack.c.b16 %v977, %v969
        %v1106 = vpack.c.b16 %v978, %v970
        %v1107 = vpack.c.b16 %v979, %v971
        %v1108 = vpack.c.b16 %v980, %v972
        %v1109 = vpack.c.b16 %v981, %v973
        %v1110 = vpack.c.b16 %v982, %v974
        %1239 = vmatprep.subr.bf16.mxu0 %v984
        %1240 = vmatpush1.bf16.msra.mxu0 %v983
        %1241 = vmatprep.subr.bf16.mxu0 %v992
        %1242 = vmatpush1.bf16.msra.mxu0 %v991
        %1243 = vmatprep.subr.bf16.mxu0 %v1000
        %1244 = vmatpush1.bf16.msra.mxu0 %v999
        %1245 = vmatprep.subr.bf16.mxu0 %v1008
        %1246 = vmatpush1.bf16.msra.mxu0 %v1007
        %1247 = vmatprep.subr.bf16.mxu0 %v1016
        %1248 = vmatpush1.bf16.msra.mxu0 %v1015
        %1249 = vmatprep.subr.bf16.mxu0 %v1024
        %1250 = vmatpush1.bf16.msra.mxu0 %v1023
        %1251 = vmatprep.subr.bf16.mxu0 %v1032
        %1252 = vmatpush1.bf16.msra.mxu0 %v1031
        %1253 = vmatprep.subr.bf16.mxu0 %v1040
        %1254 = vmatpush1.bf16.msra.mxu0 %v1039
        %1255 = vmatprep.subr.bf16.mxu0 %v1048
        %1256 = vmatpush1.bf16.msra.mxu0 %v1047
        %1257 = vmatprep.subr.bf16.mxu0 %v1056
        %1258 = vmatpush1.bf16.msra.mxu0 %v1055
        %1259 = vmatprep.subr.bf16.mxu0 %v1064
        %1260 = vmatpush1.bf16.msra.mxu0 %v1063
        %1261 = vmatprep.subr.bf16.mxu0 %v1072
        %1262 = vmatpush1.bf16.msra.mxu0 %v1071
        %1263 = vmatprep.subr.bf16.mxu0 %v1080
        %1264 = vmatpush1.bf16.msra.mxu0 %v1079
        %1265 = vmatprep.subr.bf16.mxu0 %v1088
        %1266 = vmatpush1.bf16.msra.mxu0 %v1087
        %1267 = vmatprep.subr.bf16.mxu0 %v1096
        %1268 = vmatpush1.bf16.msra.mxu0 %v1095
        %1269 = vmatprep.subr.bf16.mxu0 %v1104
        %1270 = vmatpush1.bf16.msra.mxu0 %v1103
        %1271 = vmatprep.mubr.bf16.mxu0 %v596
        %1272 = vmatmul.mubr.bf16.gmra.mrb[0].mxu0 %v584
        %v1273 = vpop.f32.mrb[0].mxu0
        %v1274 = vadd.f32 0.0, %v1273
        %v1275 = vpop.f32.mrb[0].mxu0
        %v1276 = vadd.f32 0.0, %v1275
        %v1277 = vpop.f32.mrb[0].mxu0
        %v1278 = vadd.f32 0.0, %v1277
        %v1279 = vpop.f32.mrb[0].mxu0
        %v1280 = vadd.f32 0.0, %v1279
        %1281 = vdwg.mxu0
        %1282 = vmatprep.subr.bf16.mxu0 %v986
        %1283 = vmatpush1.bf16.msra.mxu0 %v985
        %1284 = vmatprep.subr.bf16.mxu0 %v994
        %1285 = vmatpush1.bf16.msra.mxu0 %v993
        %1286 = vmatprep.subr.bf16.mxu0 %v1002
        %1287 = vmatpush1.bf16.msra.mxu0 %v1001
        %1288 = vmatprep.subr.bf16.mxu0 %v1010
        %1289 = vmatpush1.bf16.msra.mxu0 %v1009
        %1290 = vmatprep.subr.bf16.mxu0 %v1018
        %1291 = vmatpush1.bf16.msra.mxu0 %v1017
        %1292 = vmatprep.subr.bf16.mxu0 %v1026
        %1293 = vmatpush1.bf16.msra.mxu0 %v1025
        %1294 = vmatprep.subr.bf16.mxu0 %v1034
        %1295 = vmatpush1.bf16.msra.mxu0 %v1033
        %1296 = vmatprep.subr.bf16.mxu0 %v1042
        %1297 = vmatpush1.bf16.msra.mxu0 %v1041
        %1298 = vmatprep.subr.bf16.mxu0 %v1050
        %1299 = vmatpush1.bf16.msra.mxu0 %v1049
        %1300 = vmatprep.subr.bf16.mxu0 %v1058
        %1301 = vmatpush1.bf16.msra.mxu0 %v1057
        %1302 = vmatprep.subr.bf16.mxu0 %v1066
        %1303 = vmatpush1.bf16.msra.mxu0 %v1065
        %1304 = vmatprep.subr.bf16.mxu0 %v1074
        %1305 = vmatpush1.bf16.msra.mxu0 %v1073
        %1306 = vmatprep.subr.bf16.mxu0 %v1082
        %1307 = vmatpush1.bf16.msra.mxu0 %v1081
        %1308 = vmatprep.subr.bf16.mxu0 %v1090
        %1309 = vmatpush1.bf16.msra.mxu0 %v1089
        %1310 = vmatprep.subr.bf16.mxu0 %v1098
        %1311 = vmatpush1.bf16.msra.mxu0 %v1097
        %1312 = vmatprep.subr.bf16.mxu0 %v1106
        %1313 = vmatpush1.bf16.msra.mxu0 %v1105
        %1314 = vmatprep.mubr.bf16.mxu0 %v596
        %1315 = vmatmul.mubr.bf16.gmra.mrb[0].mxu0 %v584
        %v1316 = vpop.f32.mrb[0].mxu0
        %v1317 = vadd.f32 0.0, %v1316
        %v1318 = vpop.f32.mrb[0].mxu0
        %v1319 = vadd.f32 0.0, %v1318
        %v1320 = vpop.f32.mrb[0].mxu0
        %v1321 = vadd.f32 0.0, %v1320
        %v1322 = vpop.f32.mrb[0].mxu0
        %v1323 = vadd.f32 0.0, %v1322
        %1324 = vdwg.mxu0
        %1325 = vmatprep.subr.bf16.mxu0 %v988
        %1326 = vmatpush1.bf16.msra.mxu0 %v987
        %1327 = vmatprep.subr.bf16.mxu0 %v996
        %1328 = vmatpush1.bf16.msra.mxu0 %v995
        %1329 = vmatprep.subr.bf16.mxu0 %v1004
        %1330 = vmatpush1.bf16.msra.mxu0 %v1003
        %1331 = vmatprep.subr.bf16.mxu0 %v1012
        %1332 = vmatpush1.bf16.msra.mxu0 %v1011
        %1333 = vmatprep.subr.bf16.mxu0 %v1020
        %1334 = vmatpush1.bf16.msra.mxu0 %v1019
        %1335 = vmatprep.subr.bf16.mxu0 %v1028
        %1336 = vmatpush1.bf16.msra.mxu0 %v1027
        %1337 = vmatprep.subr.bf16.mxu0 %v1036
        %1338 = vmatpush1.bf16.msra.mxu0 %v1035
        %1339 = vmatprep.subr.bf16.mxu0 %v1044
        %1340 = vmatpush1.bf16.msra.mxu0 %v1043
        %1341 = vmatprep.subr.bf16.mxu0 %v1052
        %1342 = vmatpush1.bf16.msra.mxu0 %v1051
        %1343 = vmatprep.subr.bf16.mxu0 %v1060
        %1344 = vmatpush1.bf16.msra.mxu0 %v1059
        %1345 = vmatprep.subr.bf16.mxu0 %v1068
        %1346 = vmatpush1.bf16.msra.mxu0 %v1067
        %1347 = vmatprep.subr.bf16.mxu0 %v1076
        %1348 = vmatpush1.bf16.msra.mxu0 %v1075
        %1349 = vmatprep.subr.bf16.mxu0 %v1084
        %1350 = vmatpush1.bf16.msra.mxu0 %v1083
        %1351 = vmatprep.subr.bf16.mxu0 %v1092
        %1352 = vmatpush1.bf16.msra.mxu0 %v1091
        %1353 = vmatprep.subr.bf16.mxu0 %v1100
        %1354 = vmatpush1.bf16.msra.mxu0 %v1099
        %1355 = vmatprep.subr.bf16.mxu0 %v1108
        %1356 = vmatpush1.bf16.msra.mxu0 %v1107
        %1357 = vmatprep.mubr.bf16.mxu0 %v596
        %1358 = vmatmul.mubr.bf16.gmra.mrb[0].mxu0 %v584
        %v1359 = vpop.f32.mrb[0].mxu0
        %v1360 = vadd.f32 0.0, %v1359
        %v1361 = vpop.f32.mrb[0].mxu0
        %v1362 = vadd.f32 0.0, %v1361
        %v1363 = vpop.f32.mrb[0].mxu0
        %v1364 = vadd.f32 0.0, %v1363
        %v1365 = vpop.f32.mrb[0].mxu0
        %v1366 = vadd.f32 0.0, %v1365
        %1367 = vdwg.mxu0
        %1368 = vmatprep.subr.bf16.mxu0 %v990
        %1369 = vmatpush1.bf16.msra.mxu0 %v989
        %1370 = vmatprep.subr.bf16.mxu0 %v998
        %1371 = vmatpush1.bf16.msra.mxu0 %v997
        %1372 = vmatprep.subr.bf16.mxu0 %v1006
        %1373 = vmatpush1.bf16.msra.mxu0 %v1005
        %1374 = vmatprep.subr.bf16.mxu0 %v1014
        %1375 = vmatpush1.bf16.msra.mxu0 %v1013
        %1376 = vmatprep.subr.bf16.mxu0 %v1022
        %1377 = vmatpush1.bf16.msra.mxu0 %v1021
        %1378 = vmatprep.subr.bf16.mxu0 %v1030
        %1379 = vmatpush1.bf16.msra.mxu0 %v1029
        %1380 = vmatprep.subr.bf16.mxu0 %v1038
        %1381 = vmatpush1.bf16.msra.mxu0 %v1037
        %1382 = vmatprep.subr.bf16.mxu0 %v1046
        %1383 = vmatpush1.bf16.msra.mxu0 %v1045
        %1384 = vmatprep.subr.bf16.mxu0 %v1054
        %1385 = vmatpush1.bf16.msra.mxu0 %v1053
        %1386 = vmatprep.subr.bf16.mxu0 %v1062
        %1387 = vmatpush1.bf16.msra.mxu0 %v1061
        %1388 = vmatprep.subr.bf16.mxu0 %v1070
        %1389 = vmatpush1.bf16.msra.mxu0 %v1069
        %1390 = vmatprep.subr.bf16.mxu0 %v1078
        %1391 = vmatpush1.bf16.msra.mxu0 %v1077
        %1392 = vmatprep.subr.bf16.mxu0 %v1086
        %1393 = vmatpush1.bf16.msra.mxu0 %v1085
        %1394 = vmatprep.subr.bf16.mxu0 %v1094
        %1395 = vmatpush1.bf16.msra.mxu0 %v1093
        %1396 = vmatprep.subr.bf16.mxu0 %v1102
        %1397 = vmatpush1.bf16.msra.mxu0 %v1101
        %1398 = vmatprep.subr.bf16.mxu0 %v1110
        %1399 = vmatpush1.bf16.msra.mxu0 %v1109
        %1400 = vmatprep.mubr.bf16.mxu0 %v596
        %1401 = vmatmul.mubr.bf16.gmra.mrb[0].mxu0 %v584
        %v1402 = vpop.f32.mrb[0].mxu0
        %v1403 = vadd.f32 0.0, %v1402
        %v1404 = vpop.f32.mrb[0].mxu0
        %v1405 = vadd.f32 0.0, %v1404
        %v1406 = vpop.f32.mrb[0].mxu0
        %v1407 = vadd.f32 0.0, %v1406
        %v1408 = vpop.f32.mrb[0].mxu0
        %v1409 = vadd.f32 0.0, %v1408
        %1410 = vdwg.mxu0
        %v1541 = vunpack.c.l.b16 %v301
        %v1542 = vunpack.c.h.b16 %v301
        %v1543 = vunpack.c.l.b16 %v302
        %v1544 = vunpack.c.h.b16 %v302
        %v1545 = vunpack.c.l.b16 %v303
        %v1546 = vunpack.c.h.b16 %v303
        %v1547 = vunpack.c.l.b16 %v304
        %v1548 = vunpack.c.h.b16 %v304
        %v1549 = vunpack.c.l.b16 %v305
        %v1550 = vunpack.c.h.b16 %v305
        %v1551 = vunpack.c.l.b16 %v306
        %v1552 = vunpack.c.h.b16 %v306
        %v1553 = vunpack.c.l.b16 %v307
        %v1554 = vunpack.c.h.b16 %v307
        %v1555 = vunpack.c.l.b16 %v308
        %v1556 = vunpack.c.h.b16 %v308
        %v1557 = vunpack.c.l.b16 %v309
        %v1558 = vunpack.c.h.b16 %v309
        %v1559 = vunpack.c.l.b16 %v310
        %v1560 = vunpack.c.h.b16 %v310
        %v1561 = vunpack.c.l.b16 %v311
        %v1562 = vunpack.c.h.b16 %v311
        %v1563 = vunpack.c.l.b16 %v312
        %v1564 = vunpack.c.h.b16 %v312
        %v1565 = vunpack.c.l.b16 %v313
        %v1566 = vunpack.c.h.b16 %v313
        %v1567 = vunpack.c.l.b16 %v314
        %v1568 = vunpack.c.h.b16 %v314
        %v1569 = vunpack.c.l.b16 %v315
        %v1570 = vunpack.c.h.b16 %v315
        %v1571 = vunpack.c.l.b16 %v316
        %v1572 = vunpack.c.h.b16 %v316
        %v1573 = vunpack.c.l.b16 %v317
        %v1574 = vunpack.c.h.b16 %v317
        %v1575 = vunpack.c.l.b16 %v318
        %v1576 = vunpack.c.h.b16 %v318
        %v1577 = vunpack.c.l.b16 %v319
        %v1578 = vunpack.c.h.b16 %v319
        %v1579 = vunpack.c.l.b16 %v320
        %v1580 = vunpack.c.h.b16 %v320
        %v1581 = vunpack.c.l.b16 %v321
        %v1582 = vunpack.c.h.b16 %v321
        %v1583 = vunpack.c.l.b16 %v322
        %v1584 = vunpack.c.h.b16 %v322
        %v1585 = vunpack.c.l.b16 %v323
        %v1586 = vunpack.c.h.b16 %v323
        %v1587 = vunpack.c.l.b16 %v324
        %v1588 = vunpack.c.h.b16 %v324
        %v1589 = vunpack.c.l.b16 %v325
        %v1590 = vunpack.c.h.b16 %v325
        %v1591 = vunpack.c.l.b16 %v326
        %v1592 = vunpack.c.h.b16 %v326
        %v1593 = vunpack.c.l.b16 %v327
        %v1594 = vunpack.c.h.b16 %v327
        %v1595 = vunpack.c.l.b16 %v328
        %v1596 = vunpack.c.h.b16 %v328
        %v1597 = vunpack.c.l.b16 %v329
        %v1598 = vunpack.c.h.b16 %v329
        %v1599 = vunpack.c.l.b16 %v330
        %v1600 = vunpack.c.h.b16 %v330
        %v1601 = vunpack.c.l.b16 %v331
        %v1602 = vunpack.c.h.b16 %v331
        %v1603 = vunpack.c.l.b16 %v332
        %v1604 = vunpack.c.h.b16 %v332
        %v1605 = vunpack.c.l.b16 %v333
        %v1606 = vunpack.c.h.b16 %v333
        %v1607 = vunpack.c.l.b16 %v334
        %v1608 = vunpack.c.h.b16 %v334
        %v1609 = vunpack.c.l.b16 %v335
        %v1610 = vunpack.c.h.b16 %v335
        %v1611 = vunpack.c.l.b16 %v336
        %v1612 = vunpack.c.h.b16 %v336
        %v1613 = vunpack.c.l.b16 %v337
        %v1614 = vunpack.c.h.b16 %v337
        %v1615 = vunpack.c.l.b16 %v338
        %v1616 = vunpack.c.h.b16 %v338
        %v1617 = vunpack.c.l.b16 %v339
        %v1618 = vunpack.c.h.b16 %v339
        %v1619 = vunpack.c.l.b16 %v340
        %v1620 = vunpack.c.h.b16 %v340
        %v1621 = vunpack.c.l.b16 %v341
        %v1622 = vunpack.c.h.b16 %v341
        %v1623 = vunpack.c.l.b16 %v342
        %v1624 = vunpack.c.h.b16 %v342
        %v1625 = vunpack.c.l.b16 %v343
        %v1626 = vunpack.c.h.b16 %v343
        %v1627 = vunpack.c.l.b16 %v344
        %v1628 = vunpack.c.h.b16 %v344
        %v1629 = vunpack.c.l.b16 %v345
        %v1630 = vunpack.c.h.b16 %v345
        %v1631 = vunpack.c.l.b16 %v346
        %v1632 = vunpack.c.h.b16 %v346
        %v1633 = vunpack.c.l.b16 %v347
        %v1634 = vunpack.c.h.b16 %v347
        %v1635 = vunpack.c.l.b16 %v348
        %v1636 = vunpack.c.h.b16 %v348
        %v1637 = vunpack.c.l.b16 %v349
        %v1638 = vunpack.c.h.b16 %v349
        %v1639 = vunpack.c.l.b16 %v350
        %v1640 = vunpack.c.h.b16 %v350
        %v1641 = vunpack.c.l.b16 %v351
        %v1642 = vunpack.c.h.b16 %v351
        %v1643 = vunpack.c.l.b16 %v352
        %v1644 = vunpack.c.h.b16 %v352
        %v1645 = vunpack.c.l.b16 %v353
        %v1646 = vunpack.c.h.b16 %v353
        %v1647 = vunpack.c.l.b16 %v354
        %v1648 = vunpack.c.h.b16 %v354
        %v1649 = vunpack.c.l.b16 %v355
        %v1650 = vunpack.c.h.b16 %v355
        %v1651 = vunpack.c.l.b16 %v356
        %v1652 = vunpack.c.h.b16 %v356
        %v1653 = vunpack.c.l.b16 %v357
        %v1654 = vunpack.c.h.b16 %v357
        %v1655 = vunpack.c.l.b16 %v358
        %v1656 = vunpack.c.h.b16 %v358
        %v1657 = vunpack.c.l.b16 %v359
        %v1658 = vunpack.c.h.b16 %v359
        %v1659 = vunpack.c.l.b16 %v360
        %v1660 = vunpack.c.h.b16 %v360
        %v1661 = vunpack.c.l.b16 %v361
        %v1662 = vunpack.c.h.b16 %v361
        %v1663 = vunpack.c.l.b16 %v362
        %v1664 = vunpack.c.h.b16 %v362
        %v1665 = vunpack.c.l.b16 %v363
        %v1666 = vunpack.c.h.b16 %v363
        %v1667 = vunpack.c.l.b16 %v364
        %v1668 = vunpack.c.h.b16 %v364
        %v1669 = vunpack.c.l.b16 %v365
        %v1670 = vunpack.c.h.b16 %v365
        %v1671 = vunpack.c.l.b16 %v366
        %v1672 = vunpack.c.h.b16 %v366
        %v1673 = vunpack.c.l.b16 %v367
        %v1674 = vunpack.c.h.b16 %v367
        %v1675 = vunpack.c.l.b16 %v368
        %v1676 = vunpack.c.h.b16 %v368
        %v1677 = vunpack.c.l.b16 %v369
        %v1678 = vunpack.c.h.b16 %v369
        %v1679 = vunpack.c.l.b16 %v370
        %v1680 = vunpack.c.h.b16 %v370
        %v1681 = vunpack.c.l.b16 %v371
        %v1682 = vunpack.c.h.b16 %v371
        %v1683 = vunpack.c.l.b16 %v372
        %v1684 = vunpack.c.h.b16 %v372
        %v1685 = vunpack.c.l.b16 %v373
        %v1686 = vunpack.c.h.b16 %v373
        %v1687 = vunpack.c.l.b16 %v374
        %v1688 = vunpack.c.h.b16 %v374
        %v1689 = vunpack.c.l.b16 %v375
        %v1690 = vunpack.c.h.b16 %v375
        %v1691 = vunpack.c.l.b16 %v376
        %v1692 = vunpack.c.h.b16 %v376
        %v1693 = vunpack.c.l.b16 %v377
        %v1694 = vunpack.c.h.b16 %v377
        %v1695 = vunpack.c.l.b16 %v378
        %v1696 = vunpack.c.h.b16 %v378
        %v1697 = vunpack.c.l.b16 %v379
        %v1698 = vunpack.c.h.b16 %v379
        %v1699 = vunpack.c.l.b16 %v380
        %v1700 = vunpack.c.h.b16 %v380
        %v1701 = vunpack.c.l.b16 %v381
        %v1702 = vunpack.c.h.b16 %v381
        %v1703 = vunpack.c.l.b16 %v382
        %v1704 = vunpack.c.h.b16 %v382
        %v1705 = vunpack.c.l.b16 %v383
        %v1706 = vunpack.c.h.b16 %v383
        %v1707 = vunpack.c.l.b16 %v384
        %v1708 = vunpack.c.h.b16 %v384
        %v1709 = vunpack.c.l.b16 %v385
        %v1710 = vunpack.c.h.b16 %v385
        %v1711 = vunpack.c.l.b16 %v386
        %v1712 = vunpack.c.h.b16 %v386
        %v1713 = vunpack.c.l.b16 %v387
        %v1714 = vunpack.c.h.b16 %v387
        %v1715 = vunpack.c.l.b16 %v388
        %v1716 = vunpack.c.h.b16 %v388
        %v1717 = vunpack.c.l.b16 %v389
        %v1718 = vunpack.c.h.b16 %v389
        %v1719 = vunpack.c.l.b16 %v390
        %v1720 = vunpack.c.h.b16 %v390
        %v1721 = vunpack.c.l.b16 %v391
        %v1722 = vunpack.c.h.b16 %v391
        %v1723 = vunpack.c.l.b16 %v392
        %v1724 = vunpack.c.h.b16 %v392
        %v1725 = vunpack.c.l.b16 %v393
        %v1726 = vunpack.c.h.b16 %v393
        %v1727 = vunpack.c.l.b16 %v394
        %v1728 = vunpack.c.h.b16 %v394
        %v1729 = vunpack.c.l.b16 %v395
        %v1730 = vunpack.c.h.b16 %v395
        %v1731 = vunpack.c.l.b16 %v396
        %v1732 = vunpack.c.h.b16 %v396
        %v1733 = vunpack.c.l.b16 %v397
        %v1734 = vunpack.c.h.b16 %v397
        %v1735 = vunpack.c.l.b16 %v398
        %v1736 = vunpack.c.h.b16 %v398
        %v1737 = vunpack.c.l.b16 %v399
        %v1738 = vunpack.c.h.b16 %v399
        %v1739 = vunpack.c.l.b16 %v400
        %v1740 = vunpack.c.h.b16 %v400
        %v1741 = vunpack.c.l.b16 %v401
        %v1742 = vunpack.c.h.b16 %v401
        %v1743 = vunpack.c.l.b16 %v402
        %v1744 = vunpack.c.h.b16 %v402
        %v1745 = vunpack.c.l.b16 %v403
        %v1746 = vunpack.c.h.b16 %v403
        %v1747 = vunpack.c.l.b16 %v404
        %v1748 = vunpack.c.h.b16 %v404
        %v1749 = vunpack.c.l.b16 %v405
        %v1750 = vunpack.c.h.b16 %v405
        %v1751 = vunpack.c.l.b16 %v406
        %v1752 = vunpack.c.h.b16 %v406
        %v1753 = vunpack.c.l.b16 %v407
        %v1754 = vunpack.c.h.b16 %v407
        %v1755 = vunpack.c.l.b16 %v408
        %v1756 = vunpack.c.h.b16 %v408
        %v1757 = vunpack.c.l.b16 %v409
        %v1758 = vunpack.c.h.b16 %v409
        %v1759 = vunpack.c.l.b16 %v410
        %v1760 = vunpack.c.h.b16 %v410
        %v1761 = vunpack.c.l.b16 %v411
        %v1762 = vunpack.c.h.b16 %v411
        %v1763 = vunpack.c.l.b16 %v412
        %v1764 = vunpack.c.h.b16 %v412
        %v1765 = vunpack.c.l.b16 %v413
        %v1766 = vunpack.c.h.b16 %v413
        %v1767 = vunpack.c.l.b16 %v414
        %v1768 = vunpack.c.h.b16 %v414
        %v1769 = vunpack.c.l.b16 %v415
        %v1770 = vunpack.c.h.b16 %v415
        %v1771 = vunpack.c.l.b16 %v416
        %v1772 = vunpack.c.h.b16 %v416
        %v1773 = vunpack.c.l.b16 %v417
        %v1774 = vunpack.c.h.b16 %v417
        %v1775 = vunpack.c.l.b16 %v418
        %v1776 = vunpack.c.h.b16 %v418
        %v1777 = vunpack.c.l.b16 %v419
        %v1778 = vunpack.c.h.b16 %v419
        %v1779 = vunpack.c.l.b16 %v420
        %v1780 = vunpack.c.h.b16 %v420
        %v1781 = vunpack.c.l.b16 %v421
        %v1782 = vunpack.c.h.b16 %v421
        %v1783 = vunpack.c.l.b16 %v422
        %v1784 = vunpack.c.h.b16 %v422
        %v1785 = vunpack.c.l.b16 %v423
        %v1786 = vunpack.c.h.b16 %v423
        %v1787 = vunpack.c.l.b16 %v424
        %v1788 = vunpack.c.h.b16 %v424
        %v1789 = vunpack.c.l.b16 %v425
        %v1790 = vunpack.c.h.b16 %v425
        %v1791 = vunpack.c.l.b16 %v426
        %v1792 = vunpack.c.h.b16 %v426
        %v1793 = vunpack.c.l.b16 %v427
        %v1794 = vunpack.c.h.b16 %v427
        %v1795 = vunpack.c.l.b16 %v428
        %v1796 = vunpack.c.h.b16 %v428
        %v1797 = vpack.c.b16 %v1549, %v1541
        %v1798 = vpack.c.b16 %v1550, %v1542
        %v1799 = vpack.c.b16 %v1551, %v1543
        %v1800 = vpack.c.b16 %v1552, %v1544
        %v1801 = vpack.c.b16 %v1553, %v1545
        %v1802 = vpack.c.b16 %v1554, %v1546
        %v1803 = vpack.c.b16 %v1555, %v1547
        %v1804 = vpack.c.b16 %v1556, %v1548
        %v1805 = vpack.c.b16 %v1565, %v1557
        %v1806 = vpack.c.b16 %v1566, %v1558
        %v1807 = vpack.c.b16 %v1567, %v1559
        %v1808 = vpack.c.b16 %v1568, %v1560
        %v1809 = vpack.c.b16 %v1569, %v1561
        %v1810 = vpack.c.b16 %v1570, %v1562
        %v1811 = vpack.c.b16 %v1571, %v1563
        %v1812 = vpack.c.b16 %v1572, %v1564
        %v1813 = vpack.c.b16 %v1581, %v1573
        %v1814 = vpack.c.b16 %v1582, %v1574
        %v1815 = vpack.c.b16 %v1583, %v1575
        %v1816 = vpack.c.b16 %v1584, %v1576
        %v1817 = vpack.c.b16 %v1585, %v1577
        %v1818 = vpack.c.b16 %v1586, %v1578
        %v1819 = vpack.c.b16 %v1587, %v1579
        %v1820 = vpack.c.b16 %v1588, %v1580
        %v1821 = vpack.c.b16 %v1597, %v1589
        %v1822 = vpack.c.b16 %v1598, %v1590
        %v1823 = vpack.c.b16 %v1599, %v1591
        %v1824 = vpack.c.b16 %v1600, %v1592
        %v1825 = vpack.c.b16 %v1601, %v1593
        %v1826 = vpack.c.b16 %v1602, %v1594
        %v1827 = vpack.c.b16 %v1603, %v1595
        %v1828 = vpack.c.b16 %v1604, %v1596
        %v1829 = vpack.c.b16 %v1613, %v1605
        %v1830 = vpack.c.b16 %v1614, %v1606
        %v1831 = vpack.c.b16 %v1615, %v1607
        %v1832 = vpack.c.b16 %v1616, %v1608
        %v1833 = vpack.c.b16 %v1617, %v1609
        %v1834 = vpack.c.b16 %v1618, %v1610
        %v1835 = vpack.c.b16 %v1619, %v1611
        %v1836 = vpack.c.b16 %v1620, %v1612
        %v1837 = vpack.c.b16 %v1629, %v1621
        %v1838 = vpack.c.b16 %v1630, %v1622
        %v1839 = vpack.c.b16 %v1631, %v1623
        %v1840 = vpack.c.b16 %v1632, %v1624
        %v1841 = vpack.c.b16 %v1633, %v1625
        %v1842 = vpack.c.b16 %v1634, %v1626
        %v1843 = vpack.c.b16 %v1635, %v1627
        %v1844 = vpack.c.b16 %v1636, %v1628
        %v1845 = vpack.c.b16 %v1645, %v1637
        %v1846 = vpack.c.b16 %v1646, %v1638
        %v1847 = vpack.c.b16 %v1647, %v1639
        %v1848 = vpack.c.b16 %v1648, %v1640
        %v1849 = vpack.c.b16 %v1649, %v1641
        %v1850 = vpack.c.b16 %v1650, %v1642
        %v1851 = vpack.c.b16 %v1651, %v1643
        %v1852 = vpack.c.b16 %v1652, %v1644
        %v1853 = vpack.c.b16 %v1661, %v1653
        %v1854 = vpack.c.b16 %v1662, %v1654
        %v1855 = vpack.c.b16 %v1663, %v1655
        %v1856 = vpack.c.b16 %v1664, %v1656
        %v1857 = vpack.c.b16 %v1665, %v1657
        %v1858 = vpack.c.b16 %v1666, %v1658
        %v1859 = vpack.c.b16 %v1667, %v1659
        %v1860 = vpack.c.b16 %v1668, %v1660
        %v1861 = vpack.c.b16 %v1677, %v1669
        %v1862 = vpack.c.b16 %v1678, %v1670
        %v1863 = vpack.c.b16 %v1679, %v1671
        %v1864 = vpack.c.b16 %v1680, %v1672
        %v1865 = vpack.c.b16 %v1681, %v1673
        %v1866 = vpack.c.b16 %v1682, %v1674
        %v1867 = vpack.c.b16 %v1683, %v1675
        %v1868 = vpack.c.b16 %v1684, %v1676
        %v1869 = vpack.c.b16 %v1693, %v1685
        %v1870 = vpack.c.b16 %v1694, %v1686
        %v1871 = vpack.c.b16 %v1695, %v1687
        %v1872 = vpack.c.b16 %v1696, %v1688
        %v1873 = vpack.c.b16 %v1697, %v1689
        %v1874 = vpack.c.b16 %v1698, %v1690
        %v1875 = vpack.c.b16 %v1699, %v1691
        %v1876 = vpack.c.b16 %v1700, %v1692
        %v1877 = vpack.c.b16 %v1709, %v1701
        %v1878 = vpack.c.b16 %v1710, %v1702
        %v1879 = vpack.c.b16 %v1711, %v1703
        %v1880 = vpack.c.b16 %v1712, %v1704
        %v1881 = vpack.c.b16 %v1713, %v1705
        %v1882 = vpack.c.b16 %v1714, %v1706
        %v1883 = vpack.c.b16 %v1715, %v1707
        %v1884 = vpack.c.b16 %v1716, %v1708
        %v1885 = vpack.c.b16 %v1725, %v1717
        %v1886 = vpack.c.b16 %v1726, %v1718
        %v1887 = vpack.c.b16 %v1727, %v1719
        %v1888 = vpack.c.b16 %v1728, %v1720
        %v1889 = vpack.c.b16 %v1729, %v1721
        %v1890 = vpack.c.b16 %v1730, %v1722
        %v1891 = vpack.c.b16 %v1731, %v1723
        %v1892 = vpack.c.b16 %v1732, %v1724
        %v1893 = vpack.c.b16 %v1741, %v1733
        %v1894 = vpack.c.b16 %v1742, %v1734
        %v1895 = vpack.c.b16 %v1743, %v1735
        %v1896 = vpack.c.b16 %v1744, %v1736
        %v1897 = vpack.c.b16 %v1745, %v1737
        %v1898 = vpack.c.b16 %v1746, %v1738
        %v1899 = vpack.c.b16 %v1747, %v1739
        %v1900 = vpack.c.b16 %v1748, %v1740
        %v1901 = vpack.c.b16 %v1757, %v1749
        %v1902 = vpack.c.b16 %v1758, %v1750
        %v1903 = vpack.c.b16 %v1759, %v1751
        %v1904 = vpack.c.b16 %v1760, %v1752
        %v1905 = vpack.c.b16 %v1761, %v1753
        %v1906 = vpack.c.b16 %v1762, %v1754
        %v1907 = vpack.c.b16 %v1763, %v1755
        %v1908 = vpack.c.b16 %v1764, %v1756
        %v1909 = vpack.c.b16 %v1773, %v1765
        %v1910 = vpack.c.b16 %v1774, %v1766
        %v1911 = vpack.c.b16 %v1775, %v1767
        %v1912 = vpack.c.b16 %v1776, %v1768
        %v1913 = vpack.c.b16 %v1777, %v1769
        %v1914 = vpack.c.b16 %v1778, %v1770
        %v1915 = vpack.c.b16 %v1779, %v1771
        %v1916 = vpack.c.b16 %v1780, %v1772
        %v1917 = vpack.c.b16 %v1789, %v1781
        %v1918 = vpack.c.b16 %v1790, %v1782
        %v1919 = vpack.c.b16 %v1791, %v1783
        %v1920 = vpack.c.b16 %v1792, %v1784
        %v1921 = vpack.c.b16 %v1793, %v1785
        %v1922 = vpack.c.b16 %v1794, %v1786
        %v1923 = vpack.c.b16 %v1795, %v1787
        %v1924 = vpack.c.b16 %v1796, %v1788
        %2053 = vmatprep.subr.bf16.mxu0 %v1798
        %2054 = vmatpush1.bf16.msra.mxu0 %v1797
        %2055 = vmatprep.subr.bf16.mxu0 %v1806
        %2056 = vmatpush1.bf16.msra.mxu0 %v1805
        %2057 = vmatprep.subr.bf16.mxu0 %v1814
        %2058 = vmatpush1.bf16.msra.mxu0 %v1813
        %2059 = vmatprep.subr.bf16.mxu0 %v1822
        %2060 = vmatpush1.bf16.msra.mxu0 %v1821
        %2061 = vmatprep.subr.bf16.mxu0 %v1830
        %2062 = vmatpush1.bf16.msra.mxu0 %v1829
        %2063 = vmatprep.subr.bf16.mxu0 %v1838
        %2064 = vmatpush1.bf16.msra.mxu0 %v1837
        %2065 = vmatprep.subr.bf16.mxu0 %v1846
        %2066 = vmatpush1.bf16.msra.mxu0 %v1845
        %2067 = vmatprep.subr.bf16.mxu0 %v1854
        %2068 = vmatpush1.bf16.msra.mxu0 %v1853
        %2069 = vmatprep.subr.bf16.mxu0 %v1862
        %2070 = vmatpush1.bf16.msra.mxu0 %v1861
        %2071 = vmatprep.subr.bf16.mxu0 %v1870
        %2072 = vmatpush1.bf16.msra.mxu0 %v1869
        %2073 = vmatprep.subr.bf16.mxu0 %v1878
        %2074 = vmatpush1.bf16.msra.mxu0 %v1877
        %2075 = vmatprep.subr.bf16.mxu0 %v1886
        %2076 = vmatpush1.bf16.msra.mxu0 %v1885
        %2077 = vmatprep.subr.bf16.mxu0 %v1894
        %2078 = vmatpush1.bf16.msra.mxu0 %v1893
        %2079 = vmatprep.subr.bf16.mxu0 %v1902
        %2080 = vmatpush1.bf16.msra.mxu0 %v1901
        %2081 = vmatprep.subr.bf16.mxu0 %v1910
        %2082 = vmatpush1.bf16.msra.mxu0 %v1909
        %2083 = vmatprep.subr.bf16.mxu0 %v1918
        %2084 = vmatpush1.bf16.msra.mxu0 %v1917
        %2085 = vmatprep.mubr.bf16.mxu0 %v569
        %2086 = vmatmul.mubr.bf16.gmra.mrb[0].mxu0 %v568
        %v2087 = vpop.f32.mrb[0].mxu0
        %v2088 = vadd.f32 %v1274, %v2087
        %v2089 = vpop.f32.mrb[0].mxu0
        %v2090 = vadd.f32 %v1276, %v2089
        %v2091 = vpop.f32.mrb[0].mxu0
        %v2092 = vadd.f32 %v1278, %v2091
        %v2093 = vpop.f32.mrb[0].mxu0
        %v2094 = vadd.f32 %v1280, %v2093
        %2095 = vdwg.mxu0
        %2096 = vmatprep.subr.bf16.mxu0 %v1800
        %2097 = vmatpush1.bf16.msra.mxu0 %v1799
        %2098 = vmatprep.subr.bf16.mxu0 %v1808
        %2099 = vmatpush1.bf16.msra.mxu0 %v1807
        %2100 = vmatprep.subr.bf16.mxu0 %v1816
        %2101 = vmatpush1.bf16.msra.mxu0 %v1815
        %2102 = vmatprep.subr.bf16.mxu0 %v1824
        %2103 = vmatpush1.bf16.msra.mxu0 %v1823
        %2104 = vmatprep.subr.bf16.mxu0 %v1832
        %2105 = vmatpush1.bf16.msra.mxu0 %v1831
        %2106 = vmatprep.subr.bf16.mxu0 %v1840
        %2107 = vmatpush1.bf16.msra.mxu0 %v1839
        %2108 = vmatprep.subr.bf16.mxu0 %v1848
        %2109 = vmatpush1.bf16.msra.mxu0 %v1847
        %2110 = vmatprep.subr.bf16.mxu0 %v1856
        %2111 = vmatpush1.bf16.msra.mxu0 %v1855
        %2112 = vmatprep.subr.bf16.mxu0 %v1864
        %2113 = vmatpush1.bf16.msra.mxu0 %v1863
        %2114 = vmatprep.subr.bf16.mxu0 %v1872
        %2115 = vmatpush1.bf16.msra.mxu0 %v1871
        %2116 = vmatprep.subr.bf16.mxu0 %v1880
        %2117 = vmatpush1.bf16.msra.mxu0 %v1879
        %2118 = vmatprep.subr.bf16.mxu0 %v1888
        %2119 = vmatpush1.bf16.msra.mxu0 %v1887
        %2120 = vmatprep.subr.bf16.mxu0 %v1896
        %2121 = vmatpush1.bf16.msra.mxu0 %v1895
        %2122 = vmatprep.subr.bf16.mxu0 %v1904
        %2123 = vmatpush1.bf16.msra.mxu0 %v1903
        %2124 = vmatprep.subr.bf16.mxu0 %v1912
        %2125 = vmatpush1.bf16.msra.mxu0 %v1911
        %2126 = vmatprep.subr.bf16.mxu0 %v1920
        %2127 = vmatpush1.bf16.msra.mxu0 %v1919
        %2128 = vmatprep.mubr.bf16.mxu0 %v569
        %2129 = vmatmul.mubr.bf16.gmra.mrb[0].mxu0 %v568
        %v2130 = vpop.f32.mrb[0].mxu0
        %v2131 = vadd.f32 %v1317, %v2130
        %v2132 = vpop.f32.mrb[0].mxu0
        %v2133 = vadd.f32 %v1319, %v2132
        %v2134 = vpop.f32.mrb[0].mxu0
        %v2135 = vadd.f32 %v1321, %v2134
        %v2136 = vpop.f32.mrb[0].mxu0
        %v2137 = vadd.f32 %v1323, %v2136
        %2138 = vdwg.mxu0
        %2139 = vmatprep.subr.bf16.mxu0 %v1802
        %2140 = vmatpush1.bf16.msra.mxu0 %v1801
        %2141 = vmatprep.subr.bf16.mxu0 %v1810
        %2142 = vmatpush1.bf16.msra.mxu0 %v1809
        %2143 = vmatprep.subr.bf16.mxu0 %v1818
        %2144 = vmatpush1.bf16.msra.mxu0 %v1817
        %2145 = vmatprep.subr.bf16.mxu0 %v1826
        %2146 = vmatpush1.bf16.msra.mxu0 %v1825
        %2147 = vmatprep.subr.bf16.mxu0 %v1834
        %2148 = vmatpush1.bf16.msra.mxu0 %v1833
        %2149 = vmatprep.subr.bf16.mxu0 %v1842
        %2150 = vmatpush1.bf16.msra.mxu0 %v1841
        %2151 = vmatprep.subr.bf16.mxu0 %v1850
        %2152 = vmatpush1.bf16.msra.mxu0 %v1849
        %2153 = vmatprep.subr.bf16.mxu0 %v1858
        %2154 = vmatpush1.bf16.msra.mxu0 %v1857
        %2155 = vmatprep.subr.bf16.mxu0 %v1866
        %2156 = vmatpush1.bf16.msra.mxu0 %v1865
        %2157 = vmatprep.subr.bf16.mxu0 %v1874
        %2158 = vmatpush1.bf16.msra.mxu0 %v1873
        %2159 = vmatprep.subr.bf16.mxu0 %v1882
        %2160 = vmatpush1.bf16.msra.mxu0 %v1881
        %2161 = vmatprep.subr.bf16.mxu0 %v1890
        %2162 = vmatpush1.bf16.msra.mxu0 %v1889
        %2163 = vmatprep.subr.bf16.mxu0 %v1898
        %2164 = vmatpush1.bf16.msra.mxu0 %v1897
        %2165 = vmatprep.subr.bf16.mxu0 %v1906
        %2166 = vmatpush1.bf16.msra.mxu0 %v1905
        %2167 = vmatprep.subr.bf16.mxu0 %v1914
        %2168 = vmatpush1.bf16.msra.mxu0 %v1913
        %2169 = vmatprep.subr.bf16.mxu0 %v1922
        %2170 = vmatpush1.bf16.msra.mxu0 %v1921
        %2171 = vmatprep.mubr.bf16.mxu0 %v569
        %2172 = vmatmul.mubr.bf16.gmra.mrb[0].mxu0 %v568
        %v2173 = vpop.f32.mrb[0].mxu0
        %v2174 = vadd.f32 %v1360, %v2173
        %v2175 = vpop.f32.mrb[0].mxu0
        %v2176 = vadd.f32 %v1362, %v2175
        %v2177 = vpop.f32.mrb[0].mxu0
        %v2178 = vadd.f32 %v1364, %v2177
        %v2179 = vpop.f32.mrb[0].mxu0
        %v2180 = vadd.f32 %v1366, %v2179
        %2181 = vdwg.mxu0
        %2182 = vmatprep.subr.bf16.mxu0 %v1804
        %2183 = vmatpush1.bf16.msra.mxu0 %v1803
        %2184 = vmatprep.subr.bf16.mxu0 %v1812
        %2185 = vmatpush1.bf16.msra.mxu0 %v1811
        %2186 = vmatprep.subr.bf16.mxu0 %v1820
        %2187 = vmatpush1.bf16.msra.mxu0 %v1819
        %2188 = vmatprep.subr.bf16.mxu0 %v1828
        %2189 = vmatpush1.bf16.msra.mxu0 %v1827
        %2190 = vmatprep.subr.bf16.mxu0 %v1836
        %2191 = vmatpush1.bf16.msra.mxu0 %v1835
        %2192 = vmatprep.subr.bf16.mxu0 %v1844
        %2193 = vmatpush1.bf16.msra.mxu0 %v1843
        %2194 = vmatprep.subr.bf16.mxu0 %v1852
        %2195 = vmatpush1.bf16.msra.mxu0 %v1851
        %2196 = vmatprep.subr.bf16.mxu0 %v1860
        %2197 = vmatpush1.bf16.msra.mxu0 %v1859
        %2198 = vmatprep.subr.bf16.mxu0 %v1868
        %2199 = vmatpush1.bf16.msra.mxu0 %v1867
        %2200 = vmatprep.subr.bf16.mxu0 %v1876
        %2201 = vmatpush1.bf16.msra.mxu0 %v1875
        %2202 = vmatprep.subr.bf16.mxu0 %v1884
        %2203 = vmatpush1.bf16.msra.mxu0 %v1883
        %2204 = vmatprep.subr.bf16.mxu0 %v1892
        %2205 = vmatpush1.bf16.msra.mxu0 %v1891
        %2206 = vmatprep.subr.bf16.mxu0 %v1900
        %2207 = vmatpush1.bf16.msra.mxu0 %v1899
        %2208 = vmatprep.subr.bf16.mxu0 %v1908
        %2209 = vmatpush1.bf16.msra.mxu0 %v1907
        %2210 = vmatprep.subr.bf16.mxu0 %v1916
        %2211 = vmatpush1.bf16.msra.mxu0 %v1915
        %2212 = vmatprep.subr.bf16.mxu0 %v1924
        %2213 = vmatpush1.bf16.msra.mxu0 %v1923
        %2214 = vmatprep.mubr.bf16.mxu0 %v569
        %2215 = vmatmul.mubr.bf16.gmra.mrb[0].mxu0 %v568
        %v2216 = vpop.f32.mrb[0].mxu0
        %v2217 = vadd.f32 %v1403, %v2216
        %v2218 = vpop.f32.mrb[0].mxu0
        %v2219 = vadd.f32 %v1405, %v2218
        %v2220 = vpop.f32.mrb[0].mxu0
        %v2221 = vadd.f32 %v1407, %v2220
        %v2222 = vpop.f32.mrb[0].mxu0
        %v2223 = vadd.f32 %v1409, %v2222
        %2224 = vdwg.mxu0
        %v2225 = vld [vmem:[#allocation2] sm:$0xee]
        %s2226 = scalar_lea.vmem [#allocation7], 2048
        %v2227 = vld [vmem:[%s2226] sm:$0xff]
        %v2228 = vld [vmem:[%s2226 + $0x8] sm:$0xff]
        %v2229 = vld [vmem:[%s2226 + $0x10] sm:$0xff]
        %v2230 = vld [vmem:[%s2226 + $0x18] sm:$0xff]
        %v2231 = vld [vmem:[%s2226 + $0x20] sm:$0xff]
        %v2232 = vld [vmem:[%s2226 + $0x28] sm:$0xff]
        %v2233 = vld [vmem:[%s2226 + $0x30] sm:$0xff]
        %v2234 = vld [vmem:[%s2226 + $0x38] sm:$0xff]
        %v2235 = vld [vmem:[%s2226 + $0x40] sm:$0xff]
        %v2236 = vld [vmem:[%s2226 + $0x48] sm:$0xff]
        %v2237 = vld [vmem:[%s2226 + $0x50] sm:$0xff]
        %v2238 = vld [vmem:[%s2226 + $0x58] sm:$0xff]
        %v2239 = vld [vmem:[%s2226 + $0x60] sm:$0xff]
        %v2240 = vld [vmem:[%s2226 + $0x68] sm:$0xff]
        %v2241 = vld [vmem:[%s2226 + $0x70] sm:$0xff]
        %v2242 = vld [vmem:[%s2226 + $0x78] sm:$0xff]
        %v2243 = vld [vmem:[%s2226 + $0x80] sm:$0xff]
        %v2244 = vld [vmem:[%s2226 + $0x88] sm:$0xff]
        %v2245 = vld [vmem:[%s2226 + $0x90] sm:$0xff]
        %v2246 = vld [vmem:[%s2226 + $0x98] sm:$0xff]
        %v2247 = vld [vmem:[%s2226 + $0xa0] sm:$0xff]
        %v2248 = vld [vmem:[%s2226 + $0xa8] sm:$0xff]
        %v2249 = vld [vmem:[%s2226 + $0xb0] sm:$0xff]
        %v2250 = vld [vmem:[%s2226 + $0xb8] sm:$0xff]
        %v2251 = vld [vmem:[%s2226 + $0xc0] sm:$0xff]
        %v2252 = vld [vmem:[%s2226 + $0xc8] sm:$0xff]
        %v2253 = vld [vmem:[%s2226 + $0xd0] sm:$0xff]
        %v2254 = vld [vmem:[%s2226 + $0xd8] sm:$0xff]
        %v2255 = vld [vmem:[%s2226 + $0xe0] sm:$0xff]
        %v2256 = vld [vmem:[%s2226 + $0xe8] sm:$0xff]
        %v2257 = vld [vmem:[%s2226 + $0xf0] sm:$0xff]
        %v2258 = vld [vmem:[%s2226 + $0xf8] sm:$0xff]
        %v2259 = vld [vmem:[%s2226 + $0x100] sm:$0xff]
        %v2260 = vld [vmem:[%s2226 + $0x108] sm:$0xff]
        %v2261 = vld [vmem:[%s2226 + $0x110] sm:$0xff]
        %v2262 = vld [vmem:[%s2226 + $0x118] sm:$0xff]
        %v2263 = vld [vmem:[%s2226 + $0x120] sm:$0xff]
        %v2264 = vld [vmem:[%s2226 + $0x128] sm:$0xff]
        %v2265 = vld [vmem:[%s2226 + $0x130] sm:$0xff]
        %v2266 = vld [vmem:[%s2226 + $0x138] sm:$0xff]
        %v2267 = vld [vmem:[%s2226 + $0x140] sm:$0xff]
        %v2268 = vld [vmem:[%s2226 + $0x148] sm:$0xff]
        %v2269 = vld [vmem:[%s2226 + $0x150] sm:$0xff]
        %v2270 = vld [vmem:[%s2226 + $0x158] sm:$0xff]
        %v2271 = vld [vmem:[%s2226 + $0x160] sm:$0xff]
        %v2272 = vld [vmem:[%s2226 + $0x168] sm:$0xff]
        %v2273 = vld [vmem:[%s2226 + $0x170] sm:$0xff]
        %v2274 = vld [vmem:[%s2226 + $0x178] sm:$0xff]
        %v2275 = vld [vmem:[%s2226 + $0x180] sm:$0xff]
        %v2276 = vld [vmem:[%s2226 + $0x188] sm:$0xff]
        %v2277 = vld [vmem:[%s2226 + $0x190] sm:$0xff]
        %v2278 = vld [vmem:[%s2226 + $0x198] sm:$0xff]
        %v2279 = vld [vmem:[%s2226 + $0x1a0] sm:$0xff]
        %v2280 = vld [vmem:[%s2226 + $0x1a8] sm:$0xff]
        %v2281 = vld [vmem:[%s2226 + $0x1b0] sm:$0xff]
        %v2282 = vld [vmem:[%s2226 + $0x1b8] sm:$0xff]
        %v2283 = vld [vmem:[%s2226 + $0x1c0] sm:$0xff]
        %v2284 = vld [vmem:[%s2226 + $0x1c8] sm:$0xff]
        %v2285 = vld [vmem:[%s2226 + $0x1d0] sm:$0xff]
        %v2286 = vld [vmem:[%s2226 + $0x1d8] sm:$0xff]
        %v2287 = vld [vmem:[%s2226 + $0x1e0] sm:$0xff]
        %v2288 = vld [vmem:[%s2226 + $0x1e8] sm:$0xff]
        %v2289 = vld [vmem:[%s2226 + $0x1f0] sm:$0xff]
        %v2290 = vld [vmem:[%s2226 + $0x1f8] sm:$0xff]
        %v2291 = vld [vmem:[%s2226 + $0x200] sm:$0xff]
        %v2292 = vld [vmem:[%s2226 + $0x208] sm:$0xff]
        %v2293 = vld [vmem:[%s2226 + $0x210] sm:$0xff]
        %v2294 = vld [vmem:[%s2226 + $0x218] sm:$0xff]
        %v2295 = vld [vmem:[%s2226 + $0x220] sm:$0xff]
        %v2296 = vld [vmem:[%s2226 + $0x228] sm:$0xff]
        %v2297 = vld [vmem:[%s2226 + $0x230] sm:$0xff]
        %v2298 = vld [vmem:[%s2226 + $0x238] sm:$0xff]
        %v2299 = vld [vmem:[%s2226 + $0x240] sm:$0xff]
        %v2300 = vld [vmem:[%s2226 + $0x248] sm:$0xff]
        %v2301 = vld [vmem:[%s2226 + $0x250] sm:$0xff]
        %v2302 = vld [vmem:[%s2226 + $0x258] sm:$0xff]
        %v2303 = vld [vmem:[%s2226 + $0x260] sm:$0xff]
        %v2304 = vld [vmem:[%s2226 + $0x268] sm:$0xff]
        %v2305 = vld [vmem:[%s2226 + $0x270] sm:$0xff]
        %v2306 = vld [vmem:[%s2226 + $0x278] sm:$0xff]
        %v2307 = vld [vmem:[%s2226 + $0x280] sm:$0xff]
        %v2308 = vld [vmem:[%s2226 + $0x288] sm:$0xff]
        %v2309 = vld [vmem:[%s2226 + $0x290] sm:$0xff]
        %v2310 = vld [vmem:[%s2226 + $0x298] sm:$0xff]
        %v2311 = vld [vmem:[%s2226 + $0x2a0] sm:$0xff]
        %v2312 = vld [vmem:[%s2226 + $0x2a8] sm:$0xff]
        %v2313 = vld [vmem:[%s2226 + $0x2b0] sm:$0xff]
        %v2314 = vld [vmem:[%s2226 + $0x2b8] sm:$0xff]
        %v2315 = vld [vmem:[%s2226 + $0x2c0] sm:$0xff]
        %v2316 = vld [vmem:[%s2226 + $0x2c8] sm:$0xff]
        %v2317 = vld [vmem:[%s2226 + $0x2d0] sm:$0xff]
        %v2318 = vld [vmem:[%s2226 + $0x2d8] sm:$0xff]
        %v2319 = vld [vmem:[%s2226 + $0x2e0] sm:$0xff]
        %v2320 = vld [vmem:[%s2226 + $0x2e8] sm:$0xff]
        %v2321 = vld [vmem:[%s2226 + $0x2f0] sm:$0xff]
        %v2322 = vld [vmem:[%s2226 + $0x2f8] sm:$0xff]
        %v2323 = vld [vmem:[%s2226 + $0x300] sm:$0xff]
        %v2324 = vld [vmem:[%s2226 + $0x308] sm:$0xff]
        %v2325 = vld [vmem:[%s2226 + $0x310] sm:$0xff]
        %v2326 = vld [vmem:[%s2226 + $0x318] sm:$0xff]
        %v2327 = vld [vmem:[%s2226 + $0x320] sm:$0xff]
        %v2328 = vld [vmem:[%s2226 + $0x328] sm:$0xff]
        %v2329 = vld [vmem:[%s2226 + $0x330] sm:$0xff]
        %v2330 = vld [vmem:[%s2226 + $0x338] sm:$0xff]
        %v2331 = vld [vmem:[%s2226 + $0x340] sm:$0xff]
        %v2332 = vld [vmem:[%s2226 + $0x348] sm:$0xff]
        %v2333 = vld [vmem:[%s2226 + $0x350] sm:$0xff]
        %v2334 = vld [vmem:[%s2226 + $0x358] sm:$0xff]
        %v2335 = vld [vmem:[%s2226 + $0x360] sm:$0xff]
        %v2336 = vld [vmem:[%s2226 + $0x368] sm:$0xff]
        %v2337 = vld [vmem:[%s2226 + $0x370] sm:$0xff]
        %v2338 = vld [vmem:[%s2226 + $0x378] sm:$0xff]
        %v2339 = vld [vmem:[%s2226 + $0x380] sm:$0xff]
        %v2340 = vld [vmem:[%s2226 + $0x388] sm:$0xff]
        %v2341 = vld [vmem:[%s2226 + $0x390] sm:$0xff]
        %v2342 = vld [vmem:[%s2226 + $0x398] sm:$0xff]
        %v2343 = vld [vmem:[%s2226 + $0x3a0] sm:$0xff]
        %v2344 = vld [vmem:[%s2226 + $0x3a8] sm:$0xff]
        %v2345 = vld [vmem:[%s2226 + $0x3b0] sm:$0xff]
        %v2346 = vld [vmem:[%s2226 + $0x3b8] sm:$0xff]
        %v2347 = vld [vmem:[%s2226 + $0x3c0] sm:$0xff]
        %v2348 = vld [vmem:[%s2226 + $0x3c8] sm:$0xff]
        %v2349 = vld [vmem:[%s2226 + $0x3d0] sm:$0xff]
        %v2350 = vld [vmem:[%s2226 + $0x3d8] sm:$0xff]
        %v2351 = vld [vmem:[%s2226 + $0x3e0] sm:$0xff]
        %v2352 = vld [vmem:[%s2226 + $0x3e8] sm:$0xff]
        %v2353 = vld [vmem:[%s2226 + $0x3f0] sm:$0xff]
        %v2354 = vld [vmem:[%s2226 + $0x3f8] sm:$0xff]
        %v2356 = vunpack.c.l.b16 %v2225
        %v2357 = vunpack.c.h.b16 %v2225
        %v2358 = vpack.c.b16 %v564, %v2356
        %v2359 = vpack.c.b16 %v565, %v2357
        %vm2360 = vcmask 1046528
        %v2361 = vrot.slane %v2358, 1
        %v2362 = vrot.slane %v570, 1
        %v2363 = vsel %vm2360, %v2361, %v2362
        %v2364 = vrot.slane %v2359, 1
        %v2365 = vrot.slane %v571, 1
        %v2366 = vsel %vm2360, %v2364, %v2365
        %v2497 = vunpack.c.l.b16 %v2227
        %v2498 = vunpack.c.h.b16 %v2227
        %v2499 = vunpack.c.l.b16 %v2228
        %v2500 = vunpack.c.h.b16 %v2228
        %v2501 = vunpack.c.l.b16 %v2229
        %v2502 = vunpack.c.h.b16 %v2229
        %v2503 = vunpack.c.l.b16 %v2230
        %v2504 = vunpack.c.h.b16 %v2230
        %v2505 = vunpack.c.l.b16 %v2231
        %v2506 = vunpack.c.h.b16 %v2231
        %v2507 = vunpack.c.l.b16 %v2232
        %v2508 = vunpack.c.h.b16 %v2232
        %v2509 = vunpack.c.l.b16 %v2233
        %v2510 = vunpack.c.h.b16 %v2233
        %v2511 = vunpack.c.l.b16 %v2234
        %v2512 = vunpack.c.h.b16 %v2234
        %v2513 = vunpack.c.l.b16 %v2235
        %v2514 = vunpack.c.h.b16 %v2235
        %v2515 = vunpack.c.l.b16 %v2236
        %v2516 = vunpack.c.h.b16 %v2236
        %v2517 = vunpack.c.l.b16 %v2237
        %v2518 = vunpack.c.h.b16 %v2237
        %v2519 = vunpack.c.l.b16 %v2238
        %v2520 = vunpack.c.h.b16 %v2238
        %v2521 = vunpack.c.l.b16 %v2239
        %v2522 = vunpack.c.h.b16 %v2239
        %v2523 = vunpack.c.l.b16 %v2240
        %v2524 = vunpack.c.h.b16 %v2240
        %v2525 = vunpack.c.l.b16 %v2241
        %v2526 = vunpack.c.h.b16 %v2241
        %v2527 = vunpack.c.l.b16 %v2242
        %v2528 = vunpack.c.h.b16 %v2242
        %v2529 = vunpack.c.l.b16 %v2243
        %v2530 = vunpack.c.h.b16 %v2243
        %v2531 = vunpack.c.l.b16 %v2244
        %v2532 = vunpack.c.h.b16 %v2244
        %v2533 = vunpack.c.l.b16 %v2245
        %v2534 = vunpack.c.h.b16 %v2245
        %v2535 = vunpack.c.l.b16 %v2246
        %v2536 = vunpack.c.h.b16 %v2246
        %v2537 = vunpack.c.l.b16 %v2247
        %v2538 = vunpack.c.h.b16 %v2247
        %v2539 = vunpack.c.l.b16 %v2248
        %v2540 = vunpack.c.h.b16 %v2248
        %v2541 = vunpack.c.l.b16 %v2249
        %v2542 = vunpack.c.h.b16 %v2249
        %v2543 = vunpack.c.l.b16 %v2250
        %v2544 = vunpack.c.h.b16 %v2250
        %v2545 = vunpack.c.l.b16 %v2251
        %v2546 = vunpack.c.h.b16 %v2251
        %v2547 = vunpack.c.l.b16 %v2252
        %v2548 = vunpack.c.h.b16 %v2252
        %v2549 = vunpack.c.l.b16 %v2253
        %v2550 = vunpack.c.h.b16 %v2253
        %v2551 = vunpack.c.l.b16 %v2254
        %v2552 = vunpack.c.h.b16 %v2254
        %v2553 = vunpack.c.l.b16 %v2255
        %v2554 = vunpack.c.h.b16 %v2255
        %v2555 = vunpack.c.l.b16 %v2256
        %v2556 = vunpack.c.h.b16 %v2256
        %v2557 = vunpack.c.l.b16 %v2257
        %v2558 = vunpack.c.h.b16 %v2257
        %v2559 = vunpack.c.l.b16 %v2258
        %v2560 = vunpack.c.h.b16 %v2258
        %v2561 = vunpack.c.l.b16 %v2259
        %v2562 = vunpack.c.h.b16 %v2259
        %v2563 = vunpack.c.l.b16 %v2260
        %v2564 = vunpack.c.h.b16 %v2260
        %v2565 = vunpack.c.l.b16 %v2261
        %v2566 = vunpack.c.h.b16 %v2261
        %v2567 = vunpack.c.l.b16 %v2262
        %v2568 = vunpack.c.h.b16 %v2262
        %v2569 = vunpack.c.l.b16 %v2263
        %v2570 = vunpack.c.h.b16 %v2263
        %v2571 = vunpack.c.l.b16 %v2264
        %v2572 = vunpack.c.h.b16 %v2264
        %v2573 = vunpack.c.l.b16 %v2265
        %v2574 = vunpack.c.h.b16 %v2265
        %v2575 = vunpack.c.l.b16 %v2266
        %v2576 = vunpack.c.h.b16 %v2266
        %v2577 = vunpack.c.l.b16 %v2267
        %v2578 = vunpack.c.h.b16 %v2267
        %v2579 = vunpack.c.l.b16 %v2268
        %v2580 = vunpack.c.h.b16 %v2268
        %v2581 = vunpack.c.l.b16 %v2269
        %v2582 = vunpack.c.h.b16 %v2269
        %v2583 = vunpack.c.l.b16 %v2270
        %v2584 = vunpack.c.h.b16 %v2270
        %v2585 = vunpack.c.l.b16 %v2271
        %v2586 = vunpack.c.h.b16 %v2271
        %v2587 = vunpack.c.l.b16 %v2272
        %v2588 = vunpack.c.h.b16 %v2272
        %v2589 = vunpack.c.l.b16 %v2273
        %v2590 = vunpack.c.h.b16 %v2273
        %v2591 = vunpack.c.l.b16 %v2274
        %v2592 = vunpack.c.h.b16 %v2274
        %v2593 = vunpack.c.l.b16 %v2275
        %v2594 = vunpack.c.h.b16 %v2275
        %v2595 = vunpack.c.l.b16 %v2276
        %v2596 = vunpack.c.h.b16 %v2276
        %v2597 = vunpack.c.l.b16 %v2277
        %v2598 = vunpack.c.h.b16 %v2277
        %v2599 = vunpack.c.l.b16 %v2278
        %v2600 = vunpack.c.h.b16 %v2278
        %v2601 = vunpack.c.l.b16 %v2279
        %v2602 = vunpack.c.h.b16 %v2279
        %v2603 = vunpack.c.l.b16 %v2280
        %v2604 = vunpack.c.h.b16 %v2280
        %v2605 = vunpack.c.l.b16 %v2281
        %v2606 = vunpack.c.h.b16 %v2281
        %v2607 = vunpack.c.l.b16 %v2282
        %v2608 = vunpack.c.h.b16 %v2282
        %v2609 = vunpack.c.l.b16 %v2283
        %v2610 = vunpack.c.h.b16 %v2283
        %v2611 = vunpack.c.l.b16 %v2284
        %v2612 = vunpack.c.h.b16 %v2284
        %v2613 = vunpack.c.l.b16 %v2285
        %v2614 = vunpack.c.h.b16 %v2285
        %v2615 = vunpack.c.l.b16 %v2286
        %v2616 = vunpack.c.h.b16 %v2286
        %v2617 = vunpack.c.l.b16 %v2287
        %v2618 = vunpack.c.h.b16 %v2287
        %v2619 = vunpack.c.l.b16 %v2288
        %v2620 = vunpack.c.h.b16 %v2288
        %v2621 = vunpack.c.l.b16 %v2289
        %v2622 = vunpack.c.h.b16 %v2289
        %v2623 = vunpack.c.l.b16 %v2290
        %v2624 = vunpack.c.h.b16 %v2290
        %v2625 = vunpack.c.l.b16 %v2291
        %v2626 = vunpack.c.h.b16 %v2291
        %v2627 = vunpack.c.l.b16 %v2292
        %v2628 = vunpack.c.h.b16 %v2292
        %v2629 = vunpack.c.l.b16 %v2293
        %v2630 = vunpack.c.h.b16 %v2293
        %v2631 = vunpack.c.l.b16 %v2294
        %v2632 = vunpack.c.h.b16 %v2294
        %v2633 = vunpack.c.l.b16 %v2295
        %v2634 = vunpack.c.h.b16 %v2295
        %v2635 = vunpack.c.l.b16 %v2296
        %v2636 = vunpack.c.h.b16 %v2296
        %v2637 = vunpack.c.l.b16 %v2297
        %v2638 = vunpack.c.h.b16 %v2297
        %v2639 = vunpack.c.l.b16 %v2298
        %v2640 = vunpack.c.h.b16 %v2298
        %v2641 = vunpack.c.l.b16 %v2299
        %v2642 = vunpack.c.h.b16 %v2299
        %v2643 = vunpack.c.l.b16 %v2300
        %v2644 = vunpack.c.h.b16 %v2300
        %v2645 = vunpack.c.l.b16 %v2301
        %v2646 = vunpack.c.h.b16 %v2301
        %v2647 = vunpack.c.l.b16 %v2302
        %v2648 = vunpack.c.h.b16 %v2302
        %v2649 = vunpack.c.l.b16 %v2303
        %v2650 = vunpack.c.h.b16 %v2303
        %v2651 = vunpack.c.l.b16 %v2304
        %v2652 = vunpack.c.h.b16 %v2304
        %v2653 = vunpack.c.l.b16 %v2305
        %v2654 = vunpack.c.h.b16 %v2305
        %v2655 = vunpack.c.l.b16 %v2306
        %v2656 = vunpack.c.h.b16 %v2306
        %v2657 = vunpack.c.l.b16 %v2307
        %v2658 = vunpack.c.h.b16 %v2307
        %v2659 = vunpack.c.l.b16 %v2308
        %v2660 = vunpack.c.h.b16 %v2308
        %v2661 = vunpack.c.l.b16 %v2309
        %v2662 = vunpack.c.h.b16 %v2309
        %v2663 = vunpack.c.l.b16 %v2310
        %v2664 = vunpack.c.h.b16 %v2310
        %v2665 = vunpack.c.l.b16 %v2311
        %v2666 = vunpack.c.h.b16 %v2311
        %v2667 = vunpack.c.l.b16 %v2312
        %v2668 = vunpack.c.h.b16 %v2312
        %v2669 = vunpack.c.l.b16 %v2313
        %v2670 = vunpack.c.h.b16 %v2313
        %v2671 = vunpack.c.l.b16 %v2314
        %v2672 = vunpack.c.h.b16 %v2314
        %v2673 = vunpack.c.l.b16 %v2315
        %v2674 = vunpack.c.h.b16 %v2315
        %v2675 = vunpack.c.l.b16 %v2316
        %v2676 = vunpack.c.h.b16 %v2316
        %v2677 = vunpack.c.l.b16 %v2317
        %v2678 = vunpack.c.h.b16 %v2317
        %v2679 = vunpack.c.l.b16 %v2318
        %v2680 = vunpack.c.h.b16 %v2318
        %v2681 = vunpack.c.l.b16 %v2319
        %v2682 = vunpack.c.h.b16 %v2319
        %v2683 = vunpack.c.l.b16 %v2320
        %v2684 = vunpack.c.h.b16 %v2320
        %v2685 = vunpack.c.l.b16 %v2321
        %v2686 = vunpack.c.h.b16 %v2321
        %v2687 = vunpack.c.l.b16 %v2322
        %v2688 = vunpack.c.h.b16 %v2322
        %v2689 = vunpack.c.l.b16 %v2323
        %v2690 = vunpack.c.h.b16 %v2323
        %v2691 = vunpack.c.l.b16 %v2324
        %v2692 = vunpack.c.h.b16 %v2324
        %v2693 = vunpack.c.l.b16 %v2325
        %v2694 = vunpack.c.h.b16 %v2325
        %v2695 = vunpack.c.l.b16 %v2326
        %v2696 = vunpack.c.h.b16 %v2326
        %v2697 = vunpack.c.l.b16 %v2327
        %v2698 = vunpack.c.h.b16 %v2327
        %v2699 = vunpack.c.l.b16 %v2328
        %v2700 = vunpack.c.h.b16 %v2328
        %v2701 = vunpack.c.l.b16 %v2329
        %v2702 = vunpack.c.h.b16 %v2329
        %v2703 = vunpack.c.l.b16 %v2330
        %v2704 = vunpack.c.h.b16 %v2330
        %v2705 = vunpack.c.l.b16 %v2331
        %v2706 = vunpack.c.h.b16 %v2331
        %v2707 = vunpack.c.l.b16 %v2332
        %v2708 = vunpack.c.h.b16 %v2332
        %v2709 = vunpack.c.l.b16 %v2333
        %v2710 = vunpack.c.h.b16 %v2333
        %v2711 = vunpack.c.l.b16 %v2334
        %v2712 = vunpack.c.h.b16 %v2334
        %v2713 = vunpack.c.l.b16 %v2335
        %v2714 = vunpack.c.h.b16 %v2335
        %v2715 = vunpack.c.l.b16 %v2336
        %v2716 = vunpack.c.h.b16 %v2336
        %v2717 = vunpack.c.l.b16 %v2337
        %v2718 = vunpack.c.h.b16 %v2337
        %v2719 = vunpack.c.l.b16 %v2338
        %v2720 = vunpack.c.h.b16 %v2338
        %v2721 = vunpack.c.l.b16 %v2339
        %v2722 = vunpack.c.h.b16 %v2339
        %v2723 = vunpack.c.l.b16 %v2340
        %v2724 = vunpack.c.h.b16 %v2340
        %v2725 = vunpack.c.l.b16 %v2341
        %v2726 = vunpack.c.h.b16 %v2341
        %v2727 = vunpack.c.l.b16 %v2342
        %v2728 = vunpack.c.h.b16 %v2342
        %v2729 = vunpack.c.l.b16 %v2343
        %v2730 = vunpack.c.h.b16 %v2343
        %v2731 = vunpack.c.l.b16 %v2344
        %v2732 = vunpack.c.h.b16 %v2344
        %v2733 = vunpack.c.l.b16 %v2345
        %v2734 = vunpack.c.h.b16 %v2345
        %v2735 = vunpack.c.l.b16 %v2346
        %v2736 = vunpack.c.h.b16 %v2346
        %v2737 = vunpack.c.l.b16 %v2347
        %v2738 = vunpack.c.h.b16 %v2347
        %v2739 = vunpack.c.l.b16 %v2348
        %v2740 = vunpack.c.h.b16 %v2348
        %v2741 = vunpack.c.l.b16 %v2349
        %v2742 = vunpack.c.h.b16 %v2349
        %v2743 = vunpack.c.l.b16 %v2350
        %v2744 = vunpack.c.h.b16 %v2350
        %v2745 = vunpack.c.l.b16 %v2351
        %v2746 = vunpack.c.h.b16 %v2351
        %v2747 = vunpack.c.l.b16 %v2352
        %v2748 = vunpack.c.h.b16 %v2352
        %v2749 = vunpack.c.l.b16 %v2353
        %v2750 = vunpack.c.h.b16 %v2353
        %v2751 = vunpack.c.l.b16 %v2354
        %v2752 = vunpack.c.h.b16 %v2354
        %v2753 = vpack.c.b16 %v2505, %v2497
        %v2754 = vpack.c.b16 %v2506, %v2498
        %v2755 = vpack.c.b16 %v2507, %v2499
        %v2756 = vpack.c.b16 %v2508, %v2500
        %v2757 = vpack.c.b16 %v2509, %v2501
        %v2758 = vpack.c.b16 %v2510, %v2502
        %v2759 = vpack.c.b16 %v2511, %v2503
        %v2760 = vpack.c.b16 %v2512, %v2504
        %v2761 = vpack.c.b16 %v2521, %v2513
        %v2762 = vpack.c.b16 %v2522, %v2514
        %v2763 = vpack.c.b16 %v2523, %v2515
        %v2764 = vpack.c.b16 %v2524, %v2516
        %v2765 = vpack.c.b16 %v2525, %v2517
        %v2766 = vpack.c.b16 %v2526, %v2518
        %v2767 = vpack.c.b16 %v2527, %v2519
        %v2768 = vpack.c.b16 %v2528, %v2520
        %v2769 = vpack.c.b16 %v2537, %v2529
        %v2770 = vpack.c.b16 %v2538, %v2530
        %v2771 = vpack.c.b16 %v2539, %v2531
        %v2772 = vpack.c.b16 %v2540, %v2532
        %v2773 = vpack.c.b16 %v2541, %v2533
        %v2774 = vpack.c.b16 %v2542, %v2534
        %v2775 = vpack.c.b16 %v2543, %v2535
        %v2776 = vpack.c.b16 %v2544, %v2536
        %v2777 = vpack.c.b16 %v2553, %v2545
        %v2778 = vpack.c.b16 %v2554, %v2546
        %v2779 = vpack.c.b16 %v2555, %v2547
        %v2780 = vpack.c.b16 %v2556, %v2548
        %v2781 = vpack.c.b16 %v2557, %v2549
        %v2782 = vpack.c.b16 %v2558, %v2550
        %v2783 = vpack.c.b16 %v2559, %v2551
        %v2784 = vpack.c.b16 %v2560, %v2552
        %v2785 = vpack.c.b16 %v2569, %v2561
        %v2786 = vpack.c.b16 %v2570, %v2562
        %v2787 = vpack.c.b16 %v2571, %v2563
        %v2788 = vpack.c.b16 %v2572, %v2564
        %v2789 = vpack.c.b16 %v2573, %v2565
        %v2790 = vpack.c.b16 %v2574, %v2566
        %v2791 = vpack.c.b16 %v2575, %v2567
        %v2792 = vpack.c.b16 %v2576, %v2568
        %v2793 = vpack.c.b16 %v2585, %v2577
        %v2794 = vpack.c.b16 %v2586, %v2578
        %v2795 = vpack.c.b16 %v2587, %v2579
        %v2796 = vpack.c.b16 %v2588, %v2580
        %v2797 = vpack.c.b16 %v2589, %v2581
        %v2798 = vpack.c.b16 %v2590, %v2582
        %v2799 = vpack.c.b16 %v2591, %v2583
        %v2800 = vpack.c.b16 %v2592, %v2584
        %v2801 = vpack.c.b16 %v2601, %v2593
        %v2802 = vpack.c.b16 %v2602, %v2594
        %v2803 = vpack.c.b16 %v2603, %v2595
        %v2804 = vpack.c.b16 %v2604, %v2596
        %v2805 = vpack.c.b16 %v2605, %v2597
        %v2806 = vpack.c.b16 %v2606, %v2598
        %v2807 = vpack.c.b16 %v2607, %v2599
        %v2808 = vpack.c.b16 %v2608, %v2600
        %v2809 = vpack.c.b16 %v2617, %v2609
        %v2810 = vpack.c.b16 %v2618, %v2610
        %v2811 = vpack.c.b16 %v2619, %v2611
        %v2812 = vpack.c.b16 %v2620, %v2612
        %v2813 = vpack.c.b16 %v2621, %v2613
        %v2814 = vpack.c.b16 %v2622, %v2614
        %v2815 = vpack.c.b16 %v2623, %v2615
        %v2816 = vpack.c.b16 %v2624, %v2616
        %v2817 = vpack.c.b16 %v2633, %v2625
        %v2818 = vpack.c.b16 %v2634, %v2626
        %v2819 = vpack.c.b16 %v2635, %v2627
        %v2820 = vpack.c.b16 %v2636, %v2628
        %v2821 = vpack.c.b16 %v2637, %v2629
        %v2822 = vpack.c.b16 %v2638, %v2630
        %v2823 = vpack.c.b16 %v2639, %v2631
        %v2824 = vpack.c.b16 %v2640, %v2632
        %v2825 = vpack.c.b16 %v2649, %v2641
        %v2826 = vpack.c.b16 %v2650, %v2642
        %v2827 = vpack.c.b16 %v2651, %v2643
        %v2828 = vpack.c.b16 %v2652, %v2644
        %v2829 = vpack.c.b16 %v2653, %v2645
        %v2830 = vpack.c.b16 %v2654, %v2646
        %v2831 = vpack.c.b16 %v2655, %v2647
        %v2832 = vpack.c.b16 %v2656, %v2648
        %v2833 = vpack.c.b16 %v2665, %v2657
        %v2834 = vpack.c.b16 %v2666, %v2658
        %v2835 = vpack.c.b16 %v2667, %v2659
        %v2836 = vpack.c.b16 %v2668, %v2660
        %v2837 = vpack.c.b16 %v2669, %v2661
        %v2838 = vpack.c.b16 %v2670, %v2662
        %v2839 = vpack.c.b16 %v2671, %v2663
        %v2840 = vpack.c.b16 %v2672, %v2664
        %v2841 = vpack.c.b16 %v2681, %v2673
        %v2842 = vpack.c.b16 %v2682, %v2674
        %v2843 = vpack.c.b16 %v2683, %v2675
        %v2844 = vpack.c.b16 %v2684, %v2676
        %v2845 = vpack.c.b16 %v2685, %v2677
        %v2846 = vpack.c.b16 %v2686, %v2678
        %v2847 = vpack.c.b16 %v2687, %v2679
        %v2848 = vpack.c.b16 %v2688, %v2680
        %v2849 = vpack.c.b16 %v2697, %v2689
        %v2850 = vpack.c.b16 %v2698, %v2690
        %v2851 = vpack.c.b16 %v2699, %v2691
        %v2852 = vpack.c.b16 %v2700, %v2692
        %v2853 = vpack.c.b16 %v2701, %v2693
        %v2854 = vpack.c.b16 %v2702, %v2694
        %v2855 = vpack.c.b16 %v2703, %v2695
        %v2856 = vpack.c.b16 %v2704, %v2696
        %v2857 = vpack.c.b16 %v2713, %v2705
        %v2858 = vpack.c.b16 %v2714, %v2706
        %v2859 = vpack.c.b16 %v2715, %v2707
        %v2860 = vpack.c.b16 %v2716, %v2708
        %v2861 = vpack.c.b16 %v2717, %v2709
        %v2862 = vpack.c.b16 %v2718, %v2710
        %v2863 = vpack.c.b16 %v2719, %v2711
        %v2864 = vpack.c.b16 %v2720, %v2712
        %v2865 = vpack.c.b16 %v2729, %v2721
        %v2866 = vpack.c.b16 %v2730, %v2722
        %v2867 = vpack.c.b16 %v2731, %v2723
        %v2868 = vpack.c.b16 %v2732, %v2724
        %v2869 = vpack.c.b16 %v2733, %v2725
        %v2870 = vpack.c.b16 %v2734, %v2726
        %v2871 = vpack.c.b16 %v2735, %v2727
        %v2872 = vpack.c.b16 %v2736, %v2728
        %v2873 = vpack.c.b16 %v2745, %v2737
        %v2874 = vpack.c.b16 %v2746, %v2738
        %v2875 = vpack.c.b16 %v2747, %v2739
        %v2876 = vpack.c.b16 %v2748, %v2740
        %v2877 = vpack.c.b16 %v2749, %v2741
        %v2878 = vpack.c.b16 %v2750, %v2742
        %v2879 = vpack.c.b16 %v2751, %v2743
        %v2880 = vpack.c.b16 %v2752, %v2744
        %3009 = vmatprep.subr.bf16.mxu0 %v2754
        %3010 = vmatpush1.bf16.msra.mxu0 %v2753
        %3011 = vmatprep.subr.bf16.mxu0 %v2762
        %3012 = vmatpush1.bf16.msra.mxu0 %v2761
        %3013 = vmatprep.subr.bf16.mxu0 %v2770
        %3014 = vmatpush1.bf16.msra.mxu0 %v2769
        %3015 = vmatprep.subr.bf16.mxu0 %v2778
        %3016 = vmatpush1.bf16.msra.mxu0 %v2777
        %3017 = vmatprep.subr.bf16.mxu0 %v2786
        %3018 = vmatpush1.bf16.msra.mxu0 %v2785
        %3019 = vmatprep.subr.bf16.mxu0 %v2794
        %3020 = vmatpush1.bf16.msra.mxu0 %v2793
        %3021 = vmatprep.subr.bf16.mxu0 %v2802
        %3022 = vmatpush1.bf16.msra.mxu0 %v2801
        %3023 = vmatprep.subr.bf16.mxu0 %v2810
        %3024 = vmatpush1.bf16.msra.mxu0 %v2809
        %3025 = vmatprep.subr.bf16.mxu0 %v2818
        %3026 = vmatpush1.bf16.msra.mxu0 %v2817
        %3027 = vmatprep.subr.bf16.mxu0 %v2826
        %3028 = vmatpush1.bf16.msra.mxu0 %v2825
        %3029 = vmatprep.subr.bf16.mxu0 %v2834
        %3030 = vmatpush1.bf16.msra.mxu0 %v2833
        %3031 = vmatprep.subr.bf16.mxu0 %v2842
        %3032 = vmatpush1.bf16.msra.mxu0 %v2841
        %3033 = vmatprep.subr.bf16.mxu0 %v2850
        %3034 = vmatpush1.bf16.msra.mxu0 %v2849
        %3035 = vmatprep.subr.bf16.mxu0 %v2858
        %3036 = vmatpush1.bf16.msra.mxu0 %v2857
        %3037 = vmatprep.subr.bf16.mxu0 %v2866
        %3038 = vmatpush1.bf16.msra.mxu0 %v2865
        %3039 = vmatprep.subr.bf16.mxu0 %v2874
        %3040 = vmatpush1.bf16.msra.mxu0 %v2873
        %3041 = vmatprep.mubr.bf16.mxu0 %v2366
        %3042 = vmatmul.mubr.bf16.gmra.mrb[0].mxu0 %v2363
        %v3043 = vpop.f32.mrb[0].mxu0
        %v3044 = vadd.f32 0.0, %v3043
        %v3045 = vpop.f32.mrb[0].mxu0
        %v3046 = vadd.f32 0.0, %v3045
        %v3047 = vpop.f32.mrb[0].mxu0
        %v3048 = vadd.f32 0.0, %v3047
        %v3049 = vpop.f32.mrb[0].mxu0
        %v3050 = vadd.f32 0.0, %v3049
        %3051 = vdwg.mxu0
        %3052 = vmatprep.subr.bf16.mxu0 %v2756
        %3053 = vmatpush1.bf16.msra.mxu0 %v2755
        %3054 = vmatprep.subr.bf16.mxu0 %v2764
        %3055 = vmatpush1.bf16.msra.mxu0 %v2763
        %3056 = vmatprep.subr.bf16.mxu0 %v2772
        %3057 = vmatpush1.bf16.msra.mxu0 %v2771
        %3058 = vmatprep.subr.bf16.mxu0 %v2780
        %3059 = vmatpush1.bf16.msra.mxu0 %v2779
        %3060 = vmatprep.subr.bf16.mxu0 %v2788
        %3061 = vmatpush1.bf16.msra.mxu0 %v2787
        %3062 = vmatprep.subr.bf16.mxu0 %v2796
        %3063 = vmatpush1.bf16.msra.mxu0 %v2795
        %3064 = vmatprep.subr.bf16.mxu0 %v2804
        %3065 = vmatpush1.bf16.msra.mxu0 %v2803
        %3066 = vmatprep.subr.bf16.mxu0 %v2812
        %3067 = vmatpush1.bf16.msra.mxu0 %v2811
        %3068 = vmatprep.subr.bf16.mxu0 %v2820
        %3069 = vmatpush1.bf16.msra.mxu0 %v2819
        %3070 = vmatprep.subr.bf16.mxu0 %v2828
        %3071 = vmatpush1.bf16.msra.mxu0 %v2827
        %3072 = vmatprep.subr.bf16.mxu0 %v2836
        %3073 = vmatpush1.bf16.msra.mxu0 %v2835
        %3074 = vmatprep.subr.bf16.mxu0 %v2844
        %3075 = vmatpush1.bf16.msra.mxu0 %v2843
        %3076 = vmatprep.subr.bf16.mxu0 %v2852
        %3077 = vmatpush1.bf16.msra.mxu0 %v2851
        %3078 = vmatprep.subr.bf16.mxu0 %v2860
        %3079 = vmatpush1.bf16.msra.mxu0 %v2859
        %3080 = vmatprep.subr.bf16.mxu0 %v2868
        %3081 = vmatpush1.bf16.msra.mxu0 %v2867
        %3082 = vmatprep.subr.bf16.mxu0 %v2876
        %3083 = vmatpush1.bf16.msra.mxu0 %v2875
        %3084 = vmatprep.mubr.bf16.mxu0 %v2366
        %3085 = vmatmul.mubr.bf16.gmra.mrb[0].mxu0 %v2363
        %v3086 = vpop.f32.mrb[0].mxu0
        %v3087 = vadd.f32 0.0, %v3086
        %v3088 = vpop.f32.mrb[0].mxu0
        %v3089 = vadd.f32 0.0, %v3088
        %v3090 = vpop.f32.mrb[0].mxu0
        %v3091 = vadd.f32 0.0, %v3090
        %v3092 = vpop.f32.mrb[0].mxu0
        %v3093 = vadd.f32 0.0, %v3092
        %3094 = vdwg.mxu0
        %3095 = vmatprep.subr.bf16.mxu0 %v2758
        %3096 = vmatpush1.bf16.msra.mxu0 %v2757
        %3097 = vmatprep.subr.bf16.mxu0 %v2766
        %3098 = vmatpush1.bf16.msra.mxu0 %v2765
        %3099 = vmatprep.subr.bf16.mxu0 %v2774
        %3100 = vmatpush1.bf16.msra.mxu0 %v2773
        %3101 = vmatprep.subr.bf16.mxu0 %v2782
        %3102 = vmatpush1.bf16.msra.mxu0 %v2781
        %3103 = vmatprep.subr.bf16.mxu0 %v2790
        %3104 = vmatpush1.bf16.msra.mxu0 %v2789
        %3105 = vmatprep.subr.bf16.mxu0 %v2798
        %3106 = vmatpush1.bf16.msra.mxu0 %v2797
        %3107 = vmatprep.subr.bf16.mxu0 %v2806
        %3108 = vmatpush1.bf16.msra.mxu0 %v2805
        %3109 = vmatprep.subr.bf16.mxu0 %v2814
        %3110 = vmatpush1.bf16.msra.mxu0 %v2813
        %3111 = vmatprep.subr.bf16.mxu0 %v2822
        %3112 = vmatpush1.bf16.msra.mxu0 %v2821
        %3113 = vmatprep.subr.bf16.mxu0 %v2830
        %3114 = vmatpush1.bf16.msra.mxu0 %v2829
        %3115 = vmatprep.subr.bf16.mxu0 %v2838
        %3116 = vmatpush1.bf16.msra.mxu0 %v2837
        %3117 = vmatprep.subr.bf16.mxu0 %v2846
        %3118 = vmatpush1.bf16.msra.mxu0 %v2845
        %3119 = vmatprep.subr.bf16.mxu0 %v2854
        %3120 = vmatpush1.bf16.msra.mxu0 %v2853
        %3121 = vmatprep.subr.bf16.mxu0 %v2862
        %3122 = vmatpush1.bf16.msra.mxu0 %v2861
        %3123 = vmatprep.subr.bf16.mxu0 %v2870
        %3124 = vmatpush1.bf16.msra.mxu0 %v2869
        %3125 = vmatprep.subr.bf16.mxu0 %v2878
        %3126 = vmatpush1.bf16.msra.mxu0 %v2877
        %3127 = vmatprep.mubr.bf16.mxu0 %v2366
        %3128 = vmatmul.mubr.bf16.gmra.mrb[0].mxu0 %v2363
        %v3129 = vpop.f32.mrb[0].mxu0
        %v3130 = vadd.f32 0.0, %v3129
        %v3131 = vpop.f32.mrb[0].mxu0
        %v3132 = vadd.f32 0.0, %v3131
        %v3133 = vpop.f32.mrb[0].mxu0
        %v3134 = vadd.f32 0.0, %v3133
        %v3135 = vpop.f32.mrb[0].mxu0
        %v3136 = vadd.f32 0.0, %v3135
        %3137 = vdwg.mxu0
        %3138 = vmatprep.subr.bf16.mxu0 %v2760
        %3139 = vmatpush1.bf16.msra.mxu0 %v2759
        %3140 = vmatprep.subr.bf16.mxu0 %v2768
        %3141 = vmatpush1.bf16.msra.mxu0 %v2767
        %3142 = vmatprep.subr.bf16.mxu0 %v2776
        %3143 = vmatpush1.bf16.msra.mxu0 %v2775
        %3144 = vmatprep.subr.bf16.mxu0 %v2784
        %3145 = vmatpush1.bf16.msra.mxu0 %v2783
        %3146 = vmatprep.subr.bf16.mxu0 %v2792
        %3147 = vmatpush1.bf16.msra.mxu0 %v2791
        %3148 = vmatprep.subr.bf16.mxu0 %v2800
        %3149 = vmatpush1.bf16.msra.mxu0 %v2799
        %3150 = vmatprep.subr.bf16.mxu0 %v2808
        %3151 = vmatpush1.bf16.msra.mxu0 %v2807
        %3152 = vmatprep.subr.bf16.mxu0 %v2816
        %3153 = vmatpush1.bf16.msra.mxu0 %v2815
        %3154 = vmatprep.subr.bf16.mxu0 %v2824
        %3155 = vmatpush1.bf16.msra.mxu0 %v2823
        %3156 = vmatprep.subr.bf16.mxu0 %v2832
        %3157 = vmatpush1.bf16.msra.mxu0 %v2831
        %3158 = vmatprep.subr.bf16.mxu0 %v2840
        %3159 = vmatpush1.bf16.msra.mxu0 %v2839
        %3160 = vmatprep.subr.bf16.mxu0 %v2848
        %3161 = vmatpush1.bf16.msra.mxu0 %v2847
        %3162 = vmatprep.subr.bf16.mxu0 %v2856
        %3163 = vmatpush1.bf16.msra.mxu0 %v2855
        %3164 = vmatprep.subr.bf16.mxu0 %v2864
        %3165 = vmatpush1.bf16.msra.mxu0 %v2863
        %3166 = vmatprep.subr.bf16.mxu0 %v2872
        %3167 = vmatpush1.bf16.msra.mxu0 %v2871
        %3168 = vmatprep.subr.bf16.mxu0 %v2880
        %3169 = vmatpush1.bf16.msra.mxu0 %v2879
        %3170 = vmatprep.mubr.bf16.mxu0 %v2366
        %3171 = vmatmul.mubr.bf16.gmra.mrb[0].mxu0 %v2363
        %v3172 = vpop.f32.mrb[0].mxu0
        %v3173 = vadd.f32 0.0, %v3172
        %v3174 = vpop.f32.mrb[0].mxu0
        %v3175 = vadd.f32 0.0, %v3174
        %v3176 = vpop.f32.mrb[0].mxu0
        %v3177 = vadd.f32 0.0, %v3176
        %v3178 = vpop.f32.mrb[0].mxu0
        %v3179 = vadd.f32 0.0, %v3178
        %3180 = vdwg.mxu0
        %v3181 = vadd.f32 %v2088, %v3044
        %v3182 = vadd.f32 %v2090, %v3046
        %v3183 = vadd.f32 %v2131, %v3087
        %v3184 = vadd.f32 %v2133, %v3089
        %v3185 = vadd.f32 %v2174, %v3130
        %v3186 = vadd.f32 %v2176, %v3132
        %v3187 = vadd.f32 %v2217, %v3173
        %v3188 = vadd.f32 %v2219, %v3175
        %v3189 = vadd.f32 %v2092, %v3048
        %v3190 = vadd.f32 %v2094, %v3050
        %v3191 = vadd.f32 %v2135, %v3091
        %v3192 = vadd.f32 %v2137, %v3093
        %v3193 = vadd.f32 %v2178, %v3134
        %v3194 = vadd.f32 %v2180, %v3136
        %v3195 = vadd.f32 %v2221, %v3177
        %v3196 = vadd.f32 %v2223, %v3179
        %v3197 = vld [vmem:[#allocation9] sm:$0xff]
        %v3199 = vlaneseq
        %v3200 = vshrl.u32 %v3199, 7
        %v3201 = vsub.s32 0, %v3200
        %v3202 = vrot.slane %v3197, %v3201
        %v3203 = vlaneseq
        %v3204 = vshrl.u32 %v3203, 7
        %v3205 = vsub.s32 1, %v3204
        %v3206 = vrot.slane %v3197, %v3205
        %v3207 = vlaneseq
        %v3208 = vshrl.u32 %v3207, 7
        %v3209 = vsub.s32 2, %v3208
        %v3210 = vrot.slane %v3197, %v3209
        %v3211 = vlaneseq
        %v3212 = vshrl.u32 %v3211, 7
        %v3213 = vsub.s32 3, %v3212
        %v3214 = vrot.slane %v3197, %v3213
        %v3215 = vlaneseq
        %v3216 = vshrl.u32 %v3215, 7
        %v3217 = vsub.s32 4, %v3216
        %v3218 = vrot.slane %v3197, %v3217
        %v3219 = vlaneseq
        %v3220 = vshrl.u32 %v3219, 7
        %v3221 = vsub.s32 5, %v3220
        %v3222 = vrot.slane %v3197, %v3221
        %v3223 = vlaneseq
        %v3224 = vshrl.u32 %v3223, 7
        %v3225 = vsub.s32 6, %v3224
        %v3226 = vrot.slane %v3197, %v3225
        %v3227 = vlaneseq
        %v3228 = vshrl.u32 %v3227, 7
        %v3229 = vsub.s32 7, %v3228
        %v3230 = vrot.slane %v3197, %v3229
        %v3239 = vadd.f32 %v3181, %v3202
        %v3240 = vadd.f32 %v3182, %v3206
        %v3241 = vadd.f32 %v3183, %v3210
        %v3242 = vadd.f32 %v3184, %v3214
        %v3243 = vadd.f32 %v3185, %v3218
        %v3244 = vadd.f32 %v3186, %v3222
        %v3245 = vadd.f32 %v3187, %v3226
        %v3246 = vadd.f32 %v3188, %v3230
        %v3247 = vadd.f32 %v3189, %v3202
        %v3248 = vadd.f32 %v3190, %v3206
        %v3249 = vadd.f32 %v3191, %v3210
        %v3250 = vadd.f32 %v3192, %v3214
        %v3251 = vadd.f32 %v3193, %v3218
        %v3252 = vadd.f32 %v3194, %v3222
        %v3253 = vadd.f32 %v3195, %v3226
        %v3254 = vadd.f32 %v3196, %v3230
        %s3255 = sld [smem:[#allocation3]]
        %vm3256 = vcmp.ge.f32.partialorder %v3239, 0.0
        %vm3257 = vcmp.ge.f32.partialorder %v3240, 0.0
        %vm3258 = vcmp.ge.f32.partialorder %v3241, 0.0
        %vm3259 = vcmp.ge.f32.partialorder %v3242, 0.0
        %vm3260 = vcmp.ge.f32.partialorder %v3243, 0.0
        %vm3261 = vcmp.ge.f32.partialorder %v3244, 0.0
        %vm3262 = vcmp.ge.f32.partialorder %v3245, 0.0
        %vm3263 = vcmp.ge.f32.partialorder %v3246, 0.0
        %vm3264 = vcmp.ge.f32.partialorder %v3247, 0.0
        %vm3265 = vcmp.ge.f32.partialorder %v3248, 0.0
        %vm3266 = vcmp.ge.f32.partialorder %v3249, 0.0
        %vm3267 = vcmp.ge.f32.partialorder %v3250, 0.0
        %vm3268 = vcmp.ge.f32.partialorder %v3251, 0.0
        %vm3269 = vcmp.ge.f32.partialorder %v3252, 0.0
        %vm3270 = vcmp.ge.f32.partialorder %v3253, 0.0
        %vm3271 = vcmp.ge.f32.partialorder %v3254, 0.0
        %v3272 = vstv %s3255
        %v3273 = vmul.f32 %v3272, %v3239
        %v3274 = vmul.f32 %v3272, %v3240
        %v3275 = vmul.f32 %v3272, %v3241
        %v3276 = vmul.f32 %v3272, %v3242
        %v3277 = vmul.f32 %v3272, %v3243
        %v3278 = vmul.f32 %v3272, %v3244
        %v3279 = vmul.f32 %v3272, %v3245
        %v3280 = vmul.f32 %v3272, %v3246
        %v3281 = vmul.f32 %v3272, %v3247
        %v3282 = vmul.f32 %v3272, %v3248
        %v3283 = vmul.f32 %v3272, %v3249
        %v3284 = vmul.f32 %v3272, %v3250
        %v3285 = vmul.f32 %v3272, %v3251
        %v3286 = vmul.f32 %v3272, %v3252
        %v3287 = vmul.f32 %v3272, %v3253
        %v3288 = vmul.f32 %v3272, %v3254
        %v3289 = vsel %vm3256, %v3239, %v3273
        %v3290 = vsel %vm3257, %v3240, %v3274
        %v3291 = vsel %vm3258, %v3241, %v3275
        %v3292 = vsel %vm3259, %v3242, %v3276
        %v3293 = vsel %vm3260, %v3243, %v3277
        %v3294 = vsel %vm3261, %v3244, %v3278
        %v3295 = vsel %vm3262, %v3245, %v3279
        %v3296 = vsel %vm3263, %v3246, %v3280
        %v3297 = vsel %vm3264, %v3247, %v3281
        %v3298 = vsel %vm3265, %v3248, %v3282
        %v3299 = vsel %vm3266, %v3249, %v3283
        %v3300 = vsel %vm3267, %v3250, %v3284
        %v3301 = vsel %vm3268, %v3251, %v3285
        %v3302 = vsel %vm3269, %v3252, %v3286
        %v3303 = vsel %vm3270, %v3253, %v3287
        %v3304 = vsel %vm3271, %v3254, %v3288
        %v3305 = vpack.c.bf16 %v3297, %v3289
        %v3306 = vpack.c.bf16 %v3298, %v3290
        %v3307 = vpack.c.bf16 %v3299, %v3291
        %v3308 = vpack.c.bf16 %v3300, %v3292
        %v3309 = vpack.c.bf16 %v3301, %v3293
        %v3310 = vpack.c.bf16 %v3302, %v3294
        %v3311 = vpack.c.bf16 %v3303, %v3295
        %v3312 = vpack.c.bf16 %v3304, %v3296
        %v3321 = vunpack.c.l.b16 %v3305
        %v3322 = vunpack.c.l.b16 %v3306
        %v3323 = vunpack.c.l.b16 %v3307
        %v3324 = vunpack.c.l.b16 %v3308
        %v3325 = vunpack.c.l.b16 %v3309
        %v3326 = vunpack.c.l.b16 %v3310
        %v3327 = vunpack.c.l.b16 %v3311
        %v3328 = vunpack.c.l.b16 %v3312
        %v3329 = vunpack.c.h.b16 %v3305
        %v3330 = vunpack.c.h.b16 %v3306
        %v3331 = vunpack.c.h.b16 %v3307
        %v3332 = vunpack.c.h.b16 %v3308
        %v3333 = vunpack.c.h.b16 %v3309
        %v3334 = vunpack.c.h.b16 %v3310
        %v3335 = vunpack.c.h.b16 %v3311
        %v3336 = vunpack.c.h.b16 %v3312
        %v3337 = vpack.c.b16 %v3322, %v3321
        %v3338 = vpack.c.b16 %v3324, %v3323
        %v3339 = vpack.c.b16 %v3326, %v3325
        %v3340 = vpack.c.b16 %v3328, %v3327
        %v3341 = vpack.c.b16 %v3330, %v3329
        %v3342 = vpack.c.b16 %v3332, %v3331
        %v3343 = vpack.c.b16 %v3334, %v3333
        %v3344 = vpack.c.b16 %v3336, %v3335
        %3353 = vst [vmem:[%s243] sm:$0xff] %v3337
        %3354 = vst [vmem:[%s243 + $0x8] sm:$0xff] %v3338
        %3355 = vst [vmem:[%s243 + $0x10] sm:$0xff] %v3339
        %3356 = vst [vmem:[%s243 + $0x18] sm:$0xff] %v3340
        %3357 = vst [vmem:[%s243 + $0x20] sm:$0xff] %v3341
        %3358 = vst [vmem:[%s243 + $0x28] sm:$0xff] %v3342
        %3359 = vst [vmem:[%s243 + $0x30] sm:$0xff] %v3343
        %3360 = vst [vmem:[%s243 + $0x38] sm:$0xff] %v3344
        %s3361 = sand.u32 %s120, 1
        %s3362 = scalar_lea.sflag [#allocation6], %s3361
        %s3363 = sand.u32 %s120, 1
        %s3364 = smul.addr %s3363, 64
        %s3365 = scalar_lea.vmem [#allocation10], %s3364
        // Predicated region
        $region49: #{_lambda_.4} parent=35 // pred_check
          %p3366 = pneg %p130
        $region50: #{_lambda_.4} parent=35 // pred_check_branch
          %3368 = sbr.rel (%p3366) target = $region52
        $region51: #{_lambda_.4} parent=35 // pred_region
          %s3370 = ssub.s32 1024, 1024
          %3371 = vsyncadd %s3362, %s3370
          %s3372 = smul.addr %s23, 16
          %s3373 = smul.addr %s3372, 64
          %s3374 = scalar_lea.hbm %s4, %s3373
          %s3375 = sshll.u32 %s3365, 4
          %s3376 = int_to_ptr.vmem [resolvable:$true] %s3375
          %3381 = dma.vmem_to_hbm [thread:$0]  %s3376, 1024, %s3374, %s3362, 512, 512, 32
        $region52: #{_lambda_.4} parent=35 // pred_fallthru
          _
      $region36: #{_lambda_.4} parent=5 // pred_fallthru
        _
      %p3382 = scmp.le.s32.totalorder 2, %s18
      // Predicated region
      $region53: #{_lambda_.4} parent=5 // pred_check
        %p3383 = pneg %p3382
      $region54: #{_lambda_.4} parent=5 // pred_check_branch
        %3385 = sbr.rel (%p3383) target = $region56
      $region55: #{_lambda_.4} parent=5 // pred_region
        %s3386 = ssub.s32 %s18, 2
        // Predicated region
        $region57: #{_lambda_.4} parent=55 // pred_check
          %p3387 = pneg %p136
        $region58: #{_lambda_.4} parent=55 // pred_check_branch
          %3389 = sbr.rel (%p3387) target = $region60
        $region59: #{_lambda_.4} parent=55 // pred_region
          %s3390 = sand.u32 %s121, 1
          %s3391 = scalar_lea.sflag [#allocation6], %s3390
          %s3392 = sand.u32 %s121, 1
          %s3393 = smul.addr %s3392, 64
          %s3394 = scalar_lea.vmem [#allocation10], %s3393
          %3395 = dma.done %s3391, 1024
        $region60: #{_lambda_.4} parent=55 // pred_fallthru
          _
      $region56: #{_lambda_.4} parent=5 // pred_fallthru
        _
    $region6: #{_lambda_.4} parent=1 // loop_footer
      %s22 = sadd.s32 1, %s18
    $region7: #{_lambda_.4} parent=1 // loop_footer_branch
      %17 = sbr.rel target = $region3
    $region8: #{_lambda_.4} parent=1 // loop_exit
      _
    %3396 = vsyncpa [#allocation5], 1
    %s3397 = scalar_lea.sflag [#allocation5], 1
    %3398 = vsyncpa %s3397, 1
    %3399 = vsyncpa [#allocation8], 1
    %3400 = vsyncpa [#allocation6], 1
    %s3401 = scalar_lea.sflag [#allocation6], 1
    %3402 = vsyncpa %s3401, 1

// kernel: _lambda_.5
$region0: #{_lambda_.5}
  #allocation0 [shape = 'u32[]', space=smem, size = 0x4, offset = 0x4, fixed_abs, tag = 'smem constant byte address 0x4 - core index']
  #allocation1 [shape = 'u32[144,128]{1,0:T(1,128)}', space=vmem, size = 0x12000, scoped, tag = 'internal scratch']
  #allocation2 [shape = 'bf16[36,512]{1,0:T(8,128)(2,1)}', space=vmem, size = 0xa000, scoped, tag = 'scratch operand']
  #allocation3 [shape = 'bf16[36,64]{1,0:T(8,128)(2,1)}', space=vmem, size = 0x2800, scoped, tag = 'scratch operand']
  #allocation4 [shape = 'bf16[34,256]{1,0:T(8,128)(2,1)}', space=vmem, size = 0x5000, scoped, tag = 'scratch operand']
  %s0 = inlined_call_operand.hbm [shape: bf16[2,32,512], index: 0, kind: input, shape index: {}]
  %s1 = inlined_call_operand.hbm [shape: bf16[2,32,64], index: 1, kind: input, shape index: {}]
  %s2 = inlined_call_operand.hbm [shape: bf16[5,512,256], index: 2, kind: input, shape index: {}]
  %s3 = inlined_call_operand.hbm [shape: bf16[320,256], index: 3, kind: input, shape index: {}]
  %s4 = inlined_call_operand.hbm [shape: f32[1,256], index: 4, kind: input, shape index: {}]
  %s5 = inlined_call_operand.hbm [shape: bf16[3,256,64], index: 5, kind: input, shape index: {}]
  %s6 = inlined_call_operand.hbm [shape: f32[1,64], index: 6, kind: input, shape index: {}]
  %s7 = inlined_call_operand.hbm [shape: f32[2], index: 7, kind: input, shape index: {}]
  %s8 = inlined_call_operand.hbm [shape: f32[2,32,64], index: 8, kind: output, shape index: {}]
  %s9 = sld [smem:[#allocation0]]
  $region97: #{_lambda_.5} parent=0
    _
  %s11 = ssub.s32 1, %s9
  %s12 = scalar_select 0, %s11, %s9
  $region1: #{_lambda_.5} parent=0
    #allocation5 [shape = 'u8[65536]{0}', space=vmem, size = 0x10000, scoped, tag = 'input window, operand 0']
    #allocation6 [shape = 's32[2]{0}', space=sflag, size = 0x8, scoped, tag = 'scoped memory for _lambda_.5']
    #allocation7 [shape = 's32[2]{0}', space=sflag, size = 0x8, scoped, tag = 'scoped memory for _lambda_.5']
    #allocation8 [shape = 's32[2]{0}', space=sflag, size = 0x8, scoped, tag = 'scoped memory for _lambda_.5']
    #allocation9 [shape = 'u8[16384]{0}', space=vmem, size = 0x4000, scoped, tag = 'input window, operand 1']
    #allocation10 [shape = 's32[2]{0}', space=sflag, size = 0x8, scoped, tag = 'scoped memory for _lambda_.5']
    #allocation11 [shape = 'u8[1310720]{0}', space=vmem, size = 0x140000, scoped, tag = 'input window, operand 2, single buffered']
    #allocation12 [shape = 'u8[163840]{0}', space=vmem, size = 0x28000, scoped, tag = 'input window, operand 3, single buffered']
    #allocation13 [shape = 's32[1]{0}', space=sflag, size = 0x4, scoped, tag = 'scoped memory for _lambda_.5']
    #allocation14 [shape = 'u8[1024]{0}', space=vmem, size = 0x400, scoped, tag = 'input window, operand 4, single buffered']
    #allocation15 [shape = 'u8[196608]{0}', space=vmem, size = 0x30000, scoped, tag = 'input window, operand 5, single buffered']
    #allocation16 [shape = 's32[1]{0}', space=sflag, size = 0x4, scoped, tag = 'scoped memory for _lambda_.5']
    #allocation17 [shape = 'u8[512]{0}', space=vmem, size = 0x400, scoped, tag = 'input window, operand 6, single buffered']
    #allocation18 [shape = 'u8[512]{0}', space=smem, size = 0x200, scoped, tag = 'input window, operand 7, single buffered']
    #allocation19 [shape = 'u8[32768]{0}', space=vmem, size = 0x8000, scoped, tag = 'output window, operand 0']
    %13 = vsyncpa [#allocation6], 0
    %s14 = scalar_lea.sflag [#allocation6], 1
    %15 = vsyncpa %s14, 0
    %16 = vsyncpa [#allocation10], 0
    %s17 = scalar_lea.sflag [#allocation10], 1
    %18 = vsyncpa %s17, 0
    %19 = vsyncpa [#allocation13], 0
    %20 = vsyncpa [#allocation16], 0
    %21 = vsyncpa [#allocation8], 0
    %22 = vsyncpa [#allocation7], 0
    %s23 = scalar_lea.sflag [#allocation7], 1
    %24 = vsyncpa %s23, 0
    loop: start=0, step=1, limit=4
    $region2: #{_lambda_.5} parent=1 // loop_pre_header
      _
    $region3: #{_lambda_.5} parent=1 // loop_header
      %s26 = sphi 0, %s30
      %p27 = scmp.ge.s32.totalorder %s26, 4
      %s36 = sphi 0, %s38
      %s39 = sphi 0, %s36
      %s40 = sphi 0, %s39
      %s56 = sphi 0, %s40
      %s62 = sphi 0, %s64
      %s65 = sphi 0, %s62
      %s66 = sphi 0, %s65
      %s82 = sphi 0, %s66
      %s86 = sphi 0, %s86
      %s88 = sphi 0, %s86
      %s89 = sphi 0, %s88
      %s103 = sphi 0, %s89
      %s107 = sphi 0, %s107
      %s109 = sphi 0, %s107
      %s110 = sphi 0, %s109
      %s124 = sphi 0, %s110
      %s128 = sphi 0, %s128
      %s130 = sphi 0, %s128
      %s131 = sphi 0, %s130
      %s145 = sphi 0, %s131
      %s149 = sphi 0, %s149
      %s151 = sphi 0, %s149
      %s152 = sphi 0, %s151
      %s166 = sphi 0, %s152
      %s170 = sphi 0, %s170
      %s172 = sphi 0, %s170
      %s173 = sphi 0, %s172
      %s187 = sphi 0, %s173
      %s191 = sphi 0, %s191
      %s193 = sphi 0, %s191
      %s194 = sphi 0, %s193
      %s208 = sphi 0, %s194
      %s214 = sphi 0, %s216
      %s217 = sphi 0, %s214
      %s218 = sphi 0, %s217
      %s234 = sphi 0, %s218
    $region4: #{_lambda_.5} parent=1 // loop_header_branch
      %29 = sbr.rel (%p27) target = $region8
    $region5: #{_lambda_.5} parent=1 // loop_body
      %s31 = ssub.s32 %s26, 1
      %s32 = ssub.s32 %s26, 2
      %s33 = sadd.s32 %s26, 1
      %s34 = ssub.s32 %s26, %s33
      %p35 = scmp.eq.s32.totalorder %s34, 0
      %s37 = sadd.s32 %s36, 1
      %s38 = scalar_select %p35, %s36, %s37
      %p41 = pneg %p35
      %p42 = scmp.eq.s32.totalorder %s26, 1
      %p43 = por %p41, %p42
      %p44 = scmp.ne.s32.totalorder %s36, %s39
      %p45 = scmp.eq.s32.totalorder %s26, 0
      %p46 = por %p44, %p45
      %p47 = scmp.ne.s32.totalorder %s36, %s39
      %p48 = scmp.eq.s32.totalorder %s31, 1
      %p49 = por %p47, %p48
      %p50 = scmp.ne.s32.totalorder %s39, %s40
      %p51 = scmp.eq.s32.totalorder %s31, 0
      %p52 = por %p50, %p51
      %p53 = scmp.ne.s32.totalorder %s39, %s40
      %p54 = scmp.eq.s32.totalorder %s32, 1
      %p55 = por %p53, %p54
      %p57 = scmp.ne.s32.totalorder %s40, %s56
      %p58 = scmp.eq.s32.totalorder %s32, 0
      %p59 = por %p57, %p58
      %s60 = ssub.s32 %s26, %s33
      %p61 = scmp.eq.s32.totalorder %s60, 0
      %s63 = sadd.s32 %s62, 1
      %s64 = scalar_select %p61, %s62, %s63
      %p67 = pneg %p61
      %p68 = scmp.eq.s32.totalorder %s26, 1
      %p69 = por %p67, %p68
      %p70 = scmp.ne.s32.totalorder %s62, %s65
      %p71 = scmp.eq.s32.totalorder %s26, 0
      %p72 = por %p70, %p71
      %p73 = scmp.ne.s32.totalorder %s62, %s65
      %p74 = scmp.eq.s32.totalorder %s31, 1
      %p75 = por %p73, %p74
      %p76 = scmp.ne.s32.totalorder %s65, %s66
      %p77 = scmp.eq.s32.totalorder %s31, 0
      %p78 = por %p76, %p77
      %p79 = scmp.ne.s32.totalorder %s65, %s66
      %p80 = scmp.eq.s32.totalorder %s32, 1
      %p81 = por %p79, %p80
      %p83 = scmp.ne.s32.totalorder %s66, %s82
      %p84 = scmp.eq.s32.totalorder %s32, 0
      %p85 = por %p83, %p84
      %s87 = sadd.s32 %s86, 1
      %p90 = scmp.eq.s32.totalorder %s26, 1
      %p91 = scmp.ne.s32.totalorder %s86, %s88
      %p92 = scmp.eq.s32.totalorder %s26, 0
      %p93 = por %p91, %p92
      %p94 = scmp.ne.s32.totalorder %s86, %s88
      %p95 = scmp.eq.s32.totalorder %s31, 1
      %p96 = por %p94, %p95
      %p97 = scmp.ne.s32.totalorder %s88, %s89
      %p98 = scmp.eq.s32.totalorder %s31, 0
      %p99 = por %p97, %p98
      %p100 = scmp.ne.s32.totalorder %s88, %s89
      %p101 = scmp.eq.s32.totalorder %s32, 1
      %p102 = por %p100, %p101
      %p104 = scmp.ne.s32.totalorder %s89, %s103
      %p105 = scmp.eq.s32.totalorder %s32, 0
      %p106 = por %p104, %p105
      %s108 = sadd.s32 %s107, 1
      %p111 = scmp.eq.s32.totalorder %s26, 1
      %p112 = scmp.ne.s32.totalorder %s107, %s109
      %p113 = scmp.eq.s32.totalorder %s26, 0
      %p114 = por %p112, %p113
      %p115 = scmp.ne.s32.totalorder %s107, %s109
      %p116 = scmp.eq.s32.totalorder %s31, 1
      %p117 = por %p115, %p116
      %p118 = scmp.ne.s32.totalorder %s109, %s110
      %p119 = scmp.eq.s32.totalorder %s31, 0
      %p120 = por %p118, %p119
      %p121 = scmp.ne.s32.totalorder %s109, %s110
      %p122 = scmp.eq.s32.totalorder %s32, 1
      %p123 = por %p121, %p122
      %p125 = scmp.ne.s32.totalorder %s110, %s124
      %p126 = scmp.eq.s32.totalorder %s32, 0
      %p127 = por %p125, %p126
      %s129 = sadd.s32 %s128, 1
      %p132 = scmp.eq.s32.totalorder %s26, 1
      %p133 = scmp.ne.s32.totalorder %s128, %s130
      %p134 = scmp.eq.s32.totalorder %s26, 0
      %p135 = por %p133, %p134
      %p136 = scmp.ne.s32.totalorder %s128, %s130
      %p137 = scmp.eq.s32.totalorder %s31, 1
      %p138 = por %p136, %p137
      %p139 = scmp.ne.s32.totalorder %s130, %s131
      %p140 = scmp.eq.s32.totalorder %s31, 0
      %p141 = por %p139, %p140
      %p142 = scmp.ne.s32.totalorder %s130, %s131
      %p143 = scmp.eq.s32.totalorder %s32, 1
      %p144 = por %p142, %p143
      %p146 = scmp.ne.s32.totalorder %s131, %s145
      %p147 = scmp.eq.s32.totalorder %s32, 0
      %p148 = por %p146, %p147
      %s150 = sadd.s32 %s149, 1
      %p153 = scmp.eq.s32.totalorder %s26, 1
      %p154 = scmp.ne.s32.totalorder %s149, %s151
      %p155 = scmp.eq.s32.totalorder %s26, 0
      %p156 = por %p154, %p155
      %p157 = scmp.ne.s32.totalorder %s149, %s151
      %p158 = scmp.eq.s32.totalorder %s31, 1
      %p159 = por %p157, %p158
      %p160 = scmp.ne.s32.totalorder %s151, %s152
      %p161 = scmp.eq.s32.totalorder %s31, 0
      %p162 = por %p160, %p161
      %p163 = scmp.ne.s32.totalorder %s151, %s152
      %p164 = scmp.eq.s32.totalorder %s32, 1
      %p165 = por %p163, %p164
      %p167 = scmp.ne.s32.totalorder %s152, %s166
      %p168 = scmp.eq.s32.totalorder %s32, 0
      %p169 = por %p167, %p168
      %s171 = sadd.s32 %s170, 1
      %p174 = scmp.eq.s32.totalorder %s26, 1
      %p175 = scmp.ne.s32.totalorder %s170, %s172
      %p176 = scmp.eq.s32.totalorder %s26, 0
      %p177 = por %p175, %p176
      %p178 = scmp.ne.s32.totalorder %s170, %s172
      %p179 = scmp.eq.s32.totalorder %s31, 1
      %p180 = por %p178, %p179
      %p181 = scmp.ne.s32.totalorder %s172, %s173
      %p182 = scmp.eq.s32.totalorder %s31, 0
      %p183 = por %p181, %p182
      %p184 = scmp.ne.s32.totalorder %s172, %s173
      %p185 = scmp.eq.s32.totalorder %s32, 1
      %p186 = por %p184, %p185
      %p188 = scmp.ne.s32.totalorder %s173, %s187
      %p189 = scmp.eq.s32.totalorder %s32, 0
      %p190 = por %p188, %p189
      %s192 = sadd.s32 %s191, 1
      %p195 = scmp.eq.s32.totalorder %s26, 1
      %p196 = scmp.ne.s32.totalorder %s191, %s193
      %p197 = scmp.eq.s32.totalorder %s26, 0
      %p198 = por %p196, %p197
      %p199 = scmp.ne.s32.totalorder %s191, %s193
      %p200 = scmp.eq.s32.totalorder %s31, 1
      %p201 = por %p199, %p200
      %p202 = scmp.ne.s32.totalorder %s193, %s194
      %p203 = scmp.eq.s32.totalorder %s31, 0
      %p204 = por %p202, %p203
      %p205 = scmp.ne.s32.totalorder %s193, %s194
      %p206 = scmp.eq.s32.totalorder %s32, 1
      %p207 = por %p205, %p206
      %p209 = scmp.ne.s32.totalorder %s194, %s208
      %p210 = scmp.eq.s32.totalorder %s32, 0
      %p211 = por %p209, %p210
      %s212 = ssub.s32 %s26, %s33
      %p213 = scmp.eq.s32.totalorder %s212, 0
      %s215 = sadd.s32 %s214, 1
      %s216 = scalar_select %p213, %s214, %s215
      %p219 = pneg %p213
      %p220 = scmp.eq.s32.totalorder %s26, 1
      %p221 = por %p219, %p220
      %p222 = scmp.ne.s32.totalorder %s214, %s217
      %p223 = scmp.eq.s32.totalorder %s26, 0
      %p224 = por %p222, %p223
      %p225 = scmp.ne.s32.totalorder %s214, %s217
      %p226 = scmp.eq.s32.totalorder %s31, 1
      %p227 = por %p225, %p226
      %p228 = scmp.ne.s32.totalorder %s217, %s218
      %p229 = scmp.eq.s32.totalorder %s31, 0
      %p230 = por %p228, %p229
      %p231 = scmp.ne.s32.totalorder %s217, %s218
      %p232 = scmp.eq.s32.totalorder %s32, 1
      %p233 = por %p231, %p232
      %p235 = scmp.ne.s32.totalorder %s218, %s234
      %p236 = scmp.eq.s32.totalorder %s32, 0
      %p237 = por %p235, %p236
      %p238 = scmp.le.s32.totalorder 1, %s26
      %p239 = scmp.lt.s32.totalorder %s26, 3
      %p240 = pnand %p238, %p239
      %p241 = pneg %p240
      // Predicated region
      $region9: #{_lambda_.5} parent=5 // pred_check
        _
      $region10: #{_lambda_.5} parent=5 // pred_check_branch
        %243 = sbr.rel (%p240) target = $region12
      $region11: #{_lambda_.5} parent=5 // pred_region
        %s244 = ssub.s32 %s26, 1
        // Predicated region
        $region13: #{_lambda_.5} parent=11 // pred_check
          %p245 = pneg %p99
        $region14: #{_lambda_.5} parent=11 // pred_check_branch
          %247 = sbr.rel (%p245) target = $region16
        $region15: #{_lambda_.5} parent=11 // pred_region
          %s249 = ssub.s32 40960, 40960
          %250 = vsyncadd [#allocation10], %s249
          %s251 = sshll.u32 [#allocation11], 4
          %s252 = int_to_ptr.vmem [resolvable:$true] %s251
          %257 = dma.hbm_to_vmem [thread:$0]  %s2, 40960, %s252, [#allocation10], 128, 128, 8
        $region16: #{_lambda_.5} parent=11 // pred_fallthru
          _
        // Predicated region
        $region17: #{_lambda_.5} parent=11 // pred_check
          %p258 = pneg %p120
        $region18: #{_lambda_.5} parent=11 // pred_check_branch
          %260 = sbr.rel (%p258) target = $region20
        $region19: #{_lambda_.5} parent=11 // pred_region
          %s262 = ssub.s32 5120, 5120
          %263 = vsyncadd [#allocation13], %s262
          %s264 = sshll.u32 [#allocation12], 4
          %s265 = int_to_ptr.vmem [resolvable:$true] %s264
          %270 = dma.hbm_to_vmem [thread:$0]  %s3, 5120, %s265, [#allocation13], 128, 128, 8
        $region20: #{_lambda_.5} parent=11 // pred_fallthru
          _
        // Predicated region
        $region21: #{_lambda_.5} parent=11 // pred_check
          %p271 = pneg %p141
        $region22: #{_lambda_.5} parent=11 // pred_check_branch
          %273 = sbr.rel (%p271) target = $region24
        $region23: #{_lambda_.5} parent=11 // pred_region
          %s275 = ssub.s32 32, 32
          %276 = vsyncadd [#allocation13], %s275
          %s278 = sshll.u32 [#allocation14], 4
          %s279 = int_to_ptr.vmem [resolvable:$true] %s278
          %281 = dma.hbm_to_vmem [thread:$0]  %s4, 32, %s279, [#allocation13]
        $region24: #{_lambda_.5} parent=11 // pred_fallthru
          _
        // Predicated region
        $region25: #{_lambda_.5} parent=11 // pred_check
          %p282 = pneg %p162
        $region26: #{_lambda_.5} parent=11 // pred_check_branch
          %284 = sbr.rel (%p282) target = $region28
        $region27: #{_lambda_.5} parent=11 // pred_region
          %s286 = ssub.s32 6144, 6144
          %287 = vsyncadd [#allocation16], %s286
          %s288 = sshll.u32 [#allocation15], 4
          %s289 = int_to_ptr.vmem [resolvable:$true] %s288
          %294 = dma.hbm_to_vmem [thread:$0]  %s5, 6144, %s289, [#allocation16], 64, 64, 4
        $region28: #{_lambda_.5} parent=11 // pred_fallthru
          _
        // Predicated region
        $region29: #{_lambda_.5} parent=11 // pred_check
          %p295 = pneg %p183
        $region30: #{_lambda_.5} parent=11 // pred_check_branch
          %297 = sbr.rel (%p295) target = $region32
        $region31: #{_lambda_.5} parent=11 // pred_region
          %s299 = ssub.s32 16, 16
          %300 = vsyncadd [#allocation16], %s299
          %s302 = sshll.u32 [#allocation17], 4
          %s303 = int_to_ptr.vmem [resolvable:$true] %s302
          %305 = dma.hbm_to_vmem [thread:$0]  %s6, 16, %s303, [#allocation16]
        $region32: #{_lambda_.5} parent=11 // pred_fallthru
          _
        // Predicated region
        $region33: #{_lambda_.5} parent=11 // pred_check
          %p306 = pneg %p204
        $region34: #{_lambda_.5} parent=11 // pred_check_branch
          %308 = sbr.rel (%p306) target = $region36
        $region35: #{_lambda_.5} parent=11 // pred_region
          %s310 = ssub.s32 16, 16
          %311 = vsyncadd [#allocation8], %s310
          %314 = dma.hbm_to_smem %s7, 16, [#allocation18], [#allocation8]
        $region36: #{_lambda_.5} parent=11 // pred_fallthru
          _
      $region12: #{_lambda_.5} parent=5 // pred_fallthru
        _
      %p315 = scmp.lt.s32.totalorder %s26, 2
      // Predicated region
      $region37: #{_lambda_.5} parent=5 // pred_check
        %p316 = pneg %p315
      $region38: #{_lambda_.5} parent=5 // pred_check_branch
        %318 = sbr.rel (%p316) target = $region40
      $region39: #{_lambda_.5} parent=5 // pred_region
        // Predicated region
        $region41: #{_lambda_.5} parent=39 // pred_check
          %p319 = pneg %p46
        $region42: #{_lambda_.5} parent=39 // pred_check_branch
          %321 = sbr.rel (%p319) target = $region44
        $region43: #{_lambda_.5} parent=39 // pred_region
          %s322 = sand.u32 %s36, 1
          %s323 = scalar_lea.sflag [#allocation6], %s322
          %s324 = sand.u32 %s36, 1
          %s325 = smul.addr %s324, 64
          %s326 = scalar_lea.vmem [#allocation5], %s325
          %s328 = ssub.s32 1024, 1024
          %329 = vsyncadd %s323, %s328
          %s330 = smul.addr %s26, 16
          %s331 = smul.addr %s330, 64
          %s332 = scalar_lea.hbm %s0, %s331
          %s333 = sshll.u32 %s326, 4
          %s334 = int_to_ptr.vmem [resolvable:$true] %s333
          %339 = dma.hbm_to_vmem [thread:$0]  %s332, 1024, %s334, %s323, 256, 256, 16
        $region44: #{_lambda_.5} parent=39 // pred_fallthru
          _
        // Predicated region
        $region45: #{_lambda_.5} parent=39 // pred_check
          %p340 = pneg %p72
        $region46: #{_lambda_.5} parent=39 // pred_check_branch
          %342 = sbr.rel (%p340) target = $region48
        $region47: #{_lambda_.5} parent=39 // pred_region
          %s343 = sand.u32 %s26, 1
          %s344 = scalar_lea.sflag [#allocation10], %s343
          %s345 = sand.u32 %s62, 1
          %s346 = smul.addr %s345, 16
          %s347 = scalar_lea.vmem [#allocation9], %s346
          %s349 = ssub.s32 256, 256
          %350 = vsyncadd %s344, %s349
          %s351 = smul.addr %s26, 4
          %s352 = smul.addr %s351, 64
          %s353 = scalar_lea.hbm %s1, %s352
          %s354 = sshll.u32 %s347, 4
          %s355 = int_to_ptr.vmem [resolvable:$true] %s354
          %360 = dma.hbm_to_vmem [thread:$0]  %s353, 256, %s355, %s344, 64, 64, 4
        $region48: #{_lambda_.5} parent=39 // pred_fallthru
          _
      $region40: #{_lambda_.5} parent=5 // pred_fallthru
        _
      %p361 = scmp.le.s32.totalorder 1, %s26
      %p362 = scmp.lt.s32.totalorder %s26, 3
      %p363 = pnand %p361, %p362
      %p364 = pneg %p363
      // Predicated region
      $region49: #{_lambda_.5} parent=5 // pred_check
        _
      $region50: #{_lambda_.5} parent=5 // pred_check_branch
        %366 = sbr.rel (%p363) target = $region52
      $region51: #{_lambda_.5} parent=5 // pred_region
        %s367 = ssub.s32 %s26, 1
        %s368 = sand.u32 %s39, 1
        %s369 = scalar_lea.sflag [#allocation6], %s368
        %s370 = sand.u32 %s39, 1
        %s371 = smul.addr %s370, 64
        %s372 = scalar_lea.vmem [#allocation5], %s371
        // Predicated region
        $region53: #{_lambda_.5} parent=51 // pred_check
          %p373 = pneg %p52
        $region54: #{_lambda_.5} parent=51 // pred_check_branch
          %375 = sbr.rel (%p373) target = $region56
        $region55: #{_lambda_.5} parent=51 // pred_region
          %376 = dma.done %s369, 1024
        $region56: #{_lambda_.5} parent=51 // pred_fallthru
          _
        %s377 = sand.u32 %s31, 1
        %s378 = scalar_lea.sflag [#allocation10], %s377
        %s379 = sand.u32 %s65, 1
        %s380 = smul.addr %s379, 16
        %s381 = scalar_lea.vmem [#allocation9], %s380
        // Predicated region
        $region57: #{_lambda_.5} parent=51 // pred_check
          %p382 = pneg %p78
        $region58: #{_lambda_.5} parent=51 // pred_check_branch
          %384 = sbr.rel (%p382) target = $region60
        $region59: #{_lambda_.5} parent=51 // pred_region
          %385 = dma.done %s378, 256
        $region60: #{_lambda_.5} parent=51 // pred_fallthru
          _
        // Predicated region
        $region61: #{_lambda_.5} parent=51 // pred_check
          %p386 = pneg %p99
        $region62: #{_lambda_.5} parent=51 // pred_check_branch
          %388 = sbr.rel (%p386) target = $region64
        $region63: #{_lambda_.5} parent=51 // pred_region
          %389 = dma.done [#allocation10], 40960
        $region64: #{_lambda_.5} parent=51 // pred_fallthru
          _
        // Predicated region
        $region65: #{_lambda_.5} parent=51 // pred_check
          %p390 = pneg %p120
        $region66: #{_lambda_.5} parent=51 // pred_check_branch
          %392 = sbr.rel (%p390) target = $region68
        $region67: #{_lambda_.5} parent=51 // pred_region
          %393 = dma.done [#allocation13], 5120
        $region68: #{_lambda_.5} parent=51 // pred_fallthru
          _
        // Predicated region
        $region69: #{_lambda_.5} parent=51 // pred_check
          %p394 = pneg %p141
        $region70: #{_lambda_.5} parent=51 // pred_check_branch
          %396 = sbr.rel (%p394) target = $region72
        $region71: #{_lambda_.5} parent=51 // pred_region
          %397 = dma.done [#allocation13], 32
        $region72: #{_lambda_.5} parent=51 // pred_fallthru
          _
        // Predicated region
        $region73: #{_lambda_.5} parent=51 // pred_check
          %p398 = pneg %p162
        $region74: #{_lambda_.5} parent=51 // pred_check_branch
          %400 = sbr.rel (%p398) target = $region76
        $region75: #{_lambda_.5} parent=51 // pred_region
          %401 = dma.done [#allocation16], 6144
        $region76: #{_lambda_.5} parent=51 // pred_fallthru
          _
        // Predicated region
        $region77: #{_lambda_.5} parent=51 // pred_check
          %p402 = pneg %p183
        $region78: #{_lambda_.5} parent=51 // pred_check_branch
          %404 = sbr.rel (%p402) target = $region80
        $region79: #{_lambda_.5} parent=51 // pred_region
          %405 = dma.done [#allocation16], 16
        $region80: #{_lambda_.5} parent=51 // pred_fallthru
          _
        // Predicated region
        $region81: #{_lambda_.5} parent=51 // pred_check
          %p406 = pneg %p204
        $region82: #{_lambda_.5} parent=51 // pred_check_branch
          %408 = sbr.rel (%p406) target = $region84
        $region83: #{_lambda_.5} parent=51 // pred_region
          %409 = dma.done [#allocation8], 16
        $region84: #{_lambda_.5} parent=51 // pred_fallthru
          _
        %410 = sfence
        %s411 = sand.u32 %s39, 1
        %s412 = scalar_lea.sflag [#allocation6], %s411
        %s413 = sand.u32 %s39, 1
        %s414 = smul.addr %s413, 64
        %s415 = scalar_lea.vmem [#allocation5], %s414
        %p416 = pneg %p52
        %p417 = pneg %p49
        %s418 = sand.u32 %s31, 1
        %s419 = scalar_lea.sflag [#allocation10], %s418
        %s420 = sand.u32 %s65, 1
        %s421 = smul.addr %s420, 16
        %s422 = scalar_lea.vmem [#allocation9], %s421
        %p423 = pneg %p78
        %p424 = pneg %p75
        %p425 = pneg %p99
        %p426 = pneg %p96
        %p427 = pneg %p120
        %p428 = pneg %p117
        %p429 = pneg %p141
        %p430 = pneg %p138
        %p431 = pneg %p162
        %p432 = pneg %p159
        %p433 = pneg %p183
        %p434 = pneg %p180
        %p435 = pneg %p204
        %p436 = pneg %p201
        %p437 = pneg %p230
        %p438 = pneg %p227
        %s439 = sand.u32 %s217, 1
        %s440 = scalar_lea.sflag [#allocation7], %s439
        %s441 = sand.u32 %s217, 1
        %s442 = smul.addr %s441, 32
        %s443 = scalar_lea.vmem [#allocation19], %s442
        %445 = vst [vmem:[#allocation2] sm:$0x11] 0
        %446 = vst [vmem:[#allocation2 + $0x8] sm:$0x11] 0
        %447 = vst [vmem:[#allocation2 + $0x40] sm:$0x22] 0
        %448 = vst [vmem:[#allocation2 + $0x48] sm:$0x22] 0
        %vm449 = vcmask 516096
        %450 = vst.msk [vmem:[#allocation3] sm:$0x1] %vm449, 0
        %vm451 = vcmask 517121
        %452 = vst.msk [vmem:[#allocation3 + $0x10] sm:$0x2] %vm451, 0
        %vm453 = vcmask 1040384
        %vm454 = vsmask.f32 256
        %vm455 = vmand %vm453, %vm454
        %vm456 = vcmask 1044484
        %vm457 = vsmask.f32 4352
        %vm458 = vmand %vm456, %vm457
        %vm459 = vmor %vm458, %vm455
        %v460 = vld [vmem:[#allocation4] sm:$0x11]
        %v461 = vsel %vm459, 0, %v460
        %462 = vst [vmem:[#allocation4] sm:$0x11] %v461
        %vm463 = vsmask.f32 7938
        %vm464 = vmand %vm453, %vm463
        %vm465 = vsmask.f32 7954
        %vm466 = vmand %vm456, %vm465
        %vm467 = vmor %vm466, %vm464
        %v468 = vld [vmem:[#allocation4 + $0x20] sm:$0x11]
        %v469 = vsel %vm467, 0, %v468
        %470 = vst [vmem:[#allocation4 + $0x20] sm:$0x11] %v469
        %v471 = vld [vmem:[%s372] sm:$0xff]
        %v472 = vld [vmem:[%s372 + $0x8] sm:$0xff]
        %v473 = vld [vmem:[%s372 + $0x10] sm:$0xff]
        %v474 = vld [vmem:[%s372 + $0x18] sm:$0xff]
        %v475 = vld [vmem:[%s372 + $0x20] sm:$0xff]
        %v476 = vld [vmem:[%s372 + $0x28] sm:$0xff]
        %v477 = vld [vmem:[%s372 + $0x30] sm:$0xff]
        %v478 = vld [vmem:[%s372 + $0x38] sm:$0xff]
        %vm487 = vmor %vm453, %vm456
        %v488 = vrot.slane %v471, 7
        %v489 = vrot.slane %v472, 7
        %v490 = vrot.slane %v488, 4
        %v491 = vrot.slane %v473, 7
        %v492 = vsel %vm487, %v490, %v491
        %v493 = vrot.slane %v489, 4
        %v494 = vrot.slane %v474, 7
        %v495 = vsel %vm487, %v493, %v494
        %v496 = vrot.slane %v491, 4
        %v497 = vrot.slane %v475, 7
        %v498 = vsel %vm487, %v496, %v497
        %v499 = vrot.slane %v494, 4
        %v500 = vrot.slane %v476, 7
        %v501 = vsel %vm487, %v499, %v500
        %v502 = vrot.slane %v497, 4
        %v503 = vrot.slane %v477, 7
        %v504 = vsel %vm487, %v502, %v503
        %v505 = vrot.slane %v500, 4
        %v506 = vrot.slane %v478, 7
        %v507 = vsel %vm487, %v505, %v506
        %v508 = vrot.slane %v503, 4
        %v509 = vrot.slane %v506, 4
        %520 = vst [vmem:[#allocation2] sm:$0xee] %v488
        %521 = vst [vmem:[#allocation2 + $0x8] sm:$0xee] %v489
        %522 = vst [vmem:[#allocation2 + $0x10] sm:$0xff] %v492
        %523 = vst [vmem:[#allocation2 + $0x18] sm:$0xff] %v495
        %524 = vst [vmem:[#allocation2 + $0x20] sm:$0xff] %v498
        %525 = vst [vmem:[#allocation2 + $0x28] sm:$0xff] %v501
        %526 = vst [vmem:[#allocation2 + $0x30] sm:$0xff] %v504
        %527 = vst [vmem:[#allocation2 + $0x38] sm:$0xff] %v507
        %528 = vst [vmem:[#allocation2 + $0x40] sm:$0x11] %v508
        %529 = vst [vmem:[#allocation2 + $0x48] sm:$0x11] %v509
        %v530 = vld [vmem:[%s381] sm:$0xf]
        %v531 = vld [vmem:[%s381 + $0x4] sm:$0xf]
        %v532 = vld [vmem:[%s381 + $0x8] sm:$0xf]
        %v533 = vld [vmem:[%s381 + $0xc] sm:$0xf]
        %v538 = vrot.slane %v530, 7
        %v539 = vrot.slane %v538, 4
        %v540 = vrot.slane %v531, 7
        %v541 = vsel %vm487, %v539, %v540
        %v542 = vrot.slane %v540, 4
        %v543 = vrot.slane %v532, 7
        %v544 = vsel %vm487, %v542, %v543
        %v545 = vrot.slane %v543, 4
        %v546 = vrot.slane %v533, 7
        %v547 = vsel %vm487, %v545, %v546
        %v548 = vrot.slane %v546, 4
        %vm554 = vcmask 519169
        %555 = vst.msk [vmem:[#allocation3] sm:$0xe] %vm554, %v538
        %vm556 = vcmask 519168
        %557 = vst.msk [vmem:[#allocation3 + $0x4] sm:$0xf] %vm556, %v541
        %558 = vst.msk [vmem:[#allocation3 + $0x8] sm:$0xf] %vm556, %v544
        %559 = vst.msk [vmem:[#allocation3 + $0xc] sm:$0xf] %vm556, %v547
        %560 = vst.msk [vmem:[#allocation3 + $0x10] sm:$0x1] %vm449, %v548
        %v561 = vld [vmem:[#allocation2] sm:$0xff]
        %v562 = vld [vmem:[#allocation2 + $0x8] sm:$0xff]
        %v563 = vld [vmem:[#allocation2 + $0x10] sm:$0xff]
        %v564 = vld [vmem:[#allocation2 + $0x18] sm:$0xff]
        %v565 = vld [vmem:[#allocation2 + $0x20] sm:$0xff]
        %v566 = vld [vmem:[#allocation2 + $0x28] sm:$0xff]
        %v567 = vld [vmem:[#allocation2 + $0x30] sm:$0xff]
        %v568 = vld [vmem:[#allocation2 + $0x38] sm:$0xff]
        %v569 = vld [vmem:[#allocation11] sm:$0xff]
        %v570 = vld [vmem:[#allocation11 + $0x8] sm:$0xff]
        %v571 = vld [vmem:[#allocation11 + $0x10] sm:$0xff]
        %v572 = vld [vmem:[#allocation11 + $0x18] sm:$0xff]
        %v573 = vld [vmem:[#allocation11 + $0x20] sm:$0xff]
        %v574 = vld [vmem:[#allocation11 + $0x28] sm:$0xff]
        %v575 = vld [vmem:[#allocation11 + $0x30] sm:$0xff]
        %v576 = vld [vmem:[#allocation11 + $0x38] sm:$0xff]
        %v577 = vld [vmem:[#allocation11 + $0x40] sm:$0xff]
        %v578 = vld [vmem:[#allocation11 + $0x48] sm:$0xff]
        %v579 = vld [vmem:[#allocation11 + $0x50] sm:$0xff]
        %v580 = vld [vmem:[#allocation11 + $0x58] sm:$0xff]
        %v581 = vld [vmem:[#allocation11 + $0x60] sm:$0xff]
        %v582 = vld [vmem:[#allocation11 + $0x68] sm:$0xff]
        %v583 = vld [vmem:[#allocation11 + $0x70] sm:$0xff]
        %v584 = vld [vmem:[#allocation11 + $0x78] sm:$0xff]
        %v585 = vld [vmem:[#allocation11 + $0x80] sm:$0xff]
        %v586 = vld [vmem:[#allocation11 + $0x88] sm:$0xff]
        %v587 = vld [vmem:[#allocation11 + $0x90] sm:$0xff]
        %v588 = vld [vmem:[#allocation11 + $0x98] sm:$0xff]
        %v589 = vld [vmem:[#allocation11 + $0xa0] sm:$0xff]
        %v590 = vld [vmem:[#allocation11 + $0xa8] sm:$0xff]
        %v591 = vld [vmem:[#allocation11 + $0xb0] sm:$0xff]
        %v592 = vld [vmem:[#allocation11 + $0xb8] sm:$0xff]
        %v593 = vld [vmem:[#allocation11 + $0xc0] sm:$0xff]
        %v594 = vld [vmem:[#allocation11 + $0xc8] sm:$0xff]
        %v595 = vld [vmem:[#allocation11 + $0xd0] sm:$0xff]
        %v596 = vld [vmem:[#allocation11 + $0xd8] sm:$0xff]
        %v597 = vld [vmem:[#allocation11 + $0xe0] sm:$0xff]
        %v598 = vld [vmem:[#allocation11 + $0xe8] sm:$0xff]
        %v599 = vld [vmem:[#allocation11 + $0xf0] sm:$0xff]
        %v600 = vld [vmem:[#allocation11 + $0xf8] sm:$0xff]
        %v601 = vld [vmem:[#allocation11 + $0x100] sm:$0xff]
        %v602 = vld [vmem:[#allocation11 + $0x108] sm:$0xff]
        %v603 = vld [vmem:[#allocation11 + $0x110] sm:$0xff]
        %v604 = vld [vmem:[#allocation11 + $0x118] sm:$0xff]
        %v605 = vld [vmem:[#allocation11 + $0x120] sm:$0xff]
        %v606 = vld [vmem:[#allocation11 + $0x128] sm:$0xff]
        %v607 = vld [vmem:[#allocation11 + $0x130] sm:$0xff]
        %v608 = vld [vmem:[#allocation11 + $0x138] sm:$0xff]
        %v609 = vld [vmem:[#allocation11 + $0x140] sm:$0xff]
        %v610 = vld [vmem:[#allocation11 + $0x148] sm:$0xff]
        %v611 = vld [vmem:[#allocation11 + $0x150] sm:$0xff]
        %v612 = vld [vmem:[#allocation11 + $0x158] sm:$0xff]
        %v613 = vld [vmem:[#allocation11 + $0x160] sm:$0xff]
        %v614 = vld [vmem:[#allocation11 + $0x168] sm:$0xff]
        %v615 = vld [vmem:[#allocation11 + $0x170] sm:$0xff]
        %v616 = vld [vmem:[#allocation11 + $0x178] sm:$0xff]
        %v617 = vld [vmem:[#allocation11 + $0x180] sm:$0xff]
        %v618 = vld [vmem:[#allocation11 + $0x188] sm:$0xff]
        %v619 = vld [vmem:[#allocation11 + $0x190] sm:$0xff]
        %v620 = vld [vmem:[#allocation11 + $0x198] sm:$0xff]
        %v621 = vld [vmem:[#allocation11 + $0x1a0] sm:$0xff]
        %v622 = vld [vmem:[#allocation11 + $0x1a8] sm:$0xff]
        %v623 = vld [vmem:[#allocation11 + $0x1b0] sm:$0xff]
        %v624 = vld [vmem:[#allocation11 + $0x1b8] sm:$0xff]
        %v625 = vld [vmem:[#allocation11 + $0x1c0] sm:$0xff]
        %v626 = vld [vmem:[#allocation11 + $0x1c8] sm:$0xff]
        %v627 = vld [vmem:[#allocation11 + $0x1d0] sm:$0xff]
        %v628 = vld [vmem:[#allocation11 + $0x1d8] sm:$0xff]
        %v629 = vld [vmem:[#allocation11 + $0x1e0] sm:$0xff]
        %v630 = vld [vmem:[#allocation11 + $0x1e8] sm:$0xff]
        %v631 = vld [vmem:[#allocation11 + $0x1f0] sm:$0xff]
        %v632 = vld [vmem:[#allocation11 + $0x1f8] sm:$0xff]
        %v633 = vld [vmem:[#allocation2 + $0x40] sm:$0x11]
        %v634 = vld [vmem:[#allocation2 + $0x48] sm:$0x11]
        %s635 = scalar_lea.vmem [#allocation11], 512
        %v636 = vld [vmem:[%s635] sm:$0xff]
        %v637 = vld [vmem:[%s635 + $0x8] sm:$0xff]
        %v638 = vld [vmem:[%s635 + $0x10] sm:$0xff]
        %v639 = vld [vmem:[%s635 + $0x18] sm:$0xff]
        %v640 = vld [vmem:[%s635 + $0x20] sm:$0xff]
        %v641 = vld [vmem:[%s635 + $0x28] sm:$0xff]
        %v642 = vld [vmem:[%s635 + $0x30] sm:$0xff]
        %v643 = vld [vmem:[%s635 + $0x38] sm:$0xff]
        %v644 = vld [vmem:[%s635 + $0x40] sm:$0xff]
        %v645 = vld [vmem:[%s635 + $0x48] sm:$0xff]
        %v646 = vld [vmem:[%s635 + $0x50] sm:$0xff]
        %v647 = vld [vmem:[%s635 + $0x58] sm:$0xff]
        %v648 = vld [vmem:[%s635 + $0x60] sm:$0xff]
        %v649 = vld [vmem:[%s635 + $0x68] sm:$0xff]
        %v650 = vld [vmem:[%s635 + $0x70] sm:$0xff]
        %v651 = vld [vmem:[%s635 + $0x78] sm:$0xff]
        %v652 = vld [vmem:[%s635 + $0x80] sm:$0xff]
        %v653 = vld [vmem:[%s635 + $0x88] sm:$0xff]
        %v654 = vld [vmem:[%s635 + $0x90] sm:$0xff]
        %v655 = vld [vmem:[%s635 + $0x98] sm:$0xff]
        %v656 = vld [vmem:[%s635 + $0xa0] sm:$0xff]
        %v657 = vld [vmem:[%s635 + $0xa8] sm:$0xff]
        %v658 = vld [vmem:[%s635 + $0xb0] sm:$0xff]
        %v659 = vld [vmem:[%s635 + $0xb8] sm:$0xff]
        %v660 = vld [vmem:[%s635 + $0xc0] sm:$0xff]
        %v661 = vld [vmem:[%s635 + $0xc8] sm:$0xff]
        %v662 = vld [vmem:[%s635 + $0xd0] sm:$0xff]
        %v663 = vld [vmem:[%s635 + $0xd8] sm:$0xff]
        %v664 = vld [vmem:[%s635 + $0xe0] sm:$0xff]
        %v665 = vld [vmem:[%s635 + $0xe8] sm:$0xff]
        %v666 = vld [vmem:[%s635 + $0xf0] sm:$0xff]
        %v667 = vld [vmem:[%s635 + $0xf8] sm:$0xff]
        %v668 = vld [vmem:[%s635 + $0x100] sm:$0xff]
        %v669 = vld [vmem:[%s635 + $0x108] sm:$0xff]
        %v670 = vld [vmem:[%s635 + $0x110] sm:$0xff]
        %v671 = vld [vmem:[%s635 + $0x118] sm:$0xff]
        %v672 = vld [vmem:[%s635 + $0x120] sm:$0xff]
        %v673 = vld [vmem:[%s635 + $0x128] sm:$0xff]
        %v674 = vld [vmem:[%s635 + $0x130] sm:$0xff]
        %v675 = vld [vmem:[%s635 + $0x138] sm:$0xff]
        %v676 = vld [vmem:[%s635 + $0x140] sm:$0xff]
        %v677 = vld [vmem:[%s635 + $0x148] sm:$0xff]
        %v678 = vld [vmem:[%s635 + $0x150] sm:$0xff]
        %v679 = vld [vmem:[%s635 + $0x158] sm:$0xff]
        %v680 = vld [vmem:[%s635 + $0x160] sm:$0xff]
        %v681 = vld [vmem:[%s635 + $0x168] sm:$0xff]
        %v682 = vld [vmem:[%s635 + $0x170] sm:$0xff]
        %v683 = vld [vmem:[%s635 + $0x178] sm:$0xff]
        %v684 = vld [vmem:[%s635 + $0x180] sm:$0xff]
        %v685 = vld [vmem:[%s635 + $0x188] sm:$0xff]
        %v686 = vld [vmem:[%s635 + $0x190] sm:$0xff]
        %v687 = vld [vmem:[%s635 + $0x198] sm:$0xff]
        %v688 = vld [vmem:[%s635 + $0x1a0] sm:$0xff]
        %v689 = vld [vmem:[%s635 + $0x1a8] sm:$0xff]
        %v690 = vld [vmem:[%s635 + $0x1b0] sm:$0xff]
        %v691 = vld [vmem:[%s635 + $0x1b8] sm:$0xff]
        %v692 = vld [vmem:[%s635 + $0x1c0] sm:$0xff]
        %v693 = vld [vmem:[%s635 + $0x1c8] sm:$0xff]
        %v694 = vld [vmem:[%s635 + $0x1d0] sm:$0xff]
        %v695 = vld [vmem:[%s635 + $0x1d8] sm:$0xff]
        %v696 = vld [vmem:[%s635 + $0x1e0] sm:$0xff]
        %v697 = vld [vmem:[%s635 + $0x1e8] sm:$0xff]
        %v698 = vld [vmem:[%s635 + $0x1f0] sm:$0xff]
        %v699 = vld [vmem:[%s635 + $0x1f8] sm:$0xff]
        %v710 = vunpack.c.l.b16 %v561
        %v711 = vunpack.c.h.b16 %v561
        %v712 = vunpack.c.l.b16 %v562
        %v713 = vunpack.c.h.b16 %v562
        %v714 = vunpack.c.l.b16 %v563
        %v715 = vunpack.c.h.b16 %v563
        %v716 = vunpack.c.l.b16 %v564
        %v717 = vunpack.c.h.b16 %v564
        %v718 = vunpack.c.l.b16 %v565
        %v719 = vunpack.c.h.b16 %v565
        %v720 = vunpack.c.l.b16 %v566
        %v721 = vunpack.c.h.b16 %v566
        %v722 = vunpack.c.l.b16 %v567
        %v723 = vunpack.c.h.b16 %v567
        %v724 = vunpack.c.l.b16 %v568
        %v725 = vunpack.c.h.b16 %v568
        %v726 = vunpack.c.l.b16 %v633
        %v727 = vunpack.c.h.b16 %v633
        %v728 = vunpack.c.l.b16 %v634
        %v729 = vunpack.c.h.b16 %v634
        %v730 = vpack.c.b16 %v714, %v710
        %v731 = vpack.c.b16 %v715, %v711
        %v732 = vpack.c.b16 %v716, %v712
        %v733 = vpack.c.b16 %v717, %v713
        %v734 = vpack.c.b16 %v722, %v718
        %v735 = vpack.c.b16 %v723, %v719
        %v736 = vpack.c.b16 %v724, %v720
        %v737 = vpack.c.b16 %v725, %v721
        %v738 = vpack.c.b16 %v726, %v726
        %v739 = vpack.c.b16 %v727, %v727
        %v740 = vpack.c.b16 %v728, %v728
        %v741 = vpack.c.b16 %v729, %v729
        %vm742 = vsmask.f32 7424
        %v744 = vshrl.u32 %v730, 16
        %v746 = vshll.u32 %v730, 16
        %v748 = vrot.slane %v746, 1
        %v749 = vor.u32 %v744, %v748
        %v751 = vshll.u32 %v734, 16
        %v753 = vrot.slane %v751, 1
        %v754 = vsel %vm742, %v749, %v753
        %v756 = vshrl.u32 %v731, 16
        %v758 = vshll.u32 %v731, 16
        %v760 = vrot.slane %v758, 1
        %v761 = vor.u32 %v756, %v760
        %v763 = vshll.u32 %v735, 16
        %v765 = vrot.slane %v763, 1
        %v766 = vsel %vm742, %v761, %v765
        %v768 = vshrl.u32 %v732, 16
        %v770 = vshll.u32 %v732, 16
        %v772 = vrot.slane %v770, 1
        %v773 = vor.u32 %v768, %v772
        %v775 = vshll.u32 %v736, 16
        %v777 = vrot.slane %v775, 1
        %v778 = vsel %vm742, %v773, %v777
        %v780 = vshrl.u32 %v733, 16
        %v782 = vshll.u32 %v733, 16
        %v784 = vrot.slane %v782, 1
        %v785 = vor.u32 %v780, %v784
        %v787 = vshll.u32 %v737, 16
        %v789 = vrot.slane %v787, 1
        %v790 = vsel %vm742, %v785, %v789
        %v791 = vshrl.u32 %v734, 16
        %v793 = vor.u32 %v791, %v753
        %v795 = vshll.u32 %v738, 16
        %v797 = vrot.slane %v795, 1
        %v798 = vsel %vm742, %v793, %v797
        %v799 = vshrl.u32 %v735, 16
        %v801 = vor.u32 %v799, %v765
        %v803 = vshll.u32 %v739, 16
        %v805 = vrot.slane %v803, 1
        %v806 = vsel %vm742, %v801, %v805
        %v807 = vshrl.u32 %v736, 16
        %v809 = vor.u32 %v807, %v777
        %v811 = vshll.u32 %v740, 16
        %v813 = vrot.slane %v811, 1
        %v814 = vsel %vm742, %v809, %v813
        %v815 = vshrl.u32 %v737, 16
        %v817 = vor.u32 %v815, %v789
        %v819 = vshll.u32 %v741, 16
        %v821 = vrot.slane %v819, 1
        %v822 = vsel %vm742, %v817, %v821
        %v895 = vunpack.c.l.b16 %v636
        %v896 = vunpack.c.h.b16 %v636
        %v897 = vunpack.c.l.b16 %v637
        %v898 = vunpack.c.h.b16 %v637
        %v899 = vunpack.c.l.b16 %v638
        %v900 = vunpack.c.h.b16 %v638
        %v901 = vunpack.c.l.b16 %v639
        %v902 = vunpack.c.h.b16 %v639
        %v903 = vunpack.c.l.b16 %v640
        %v904 = vunpack.c.h.b16 %v640
        %v905 = vunpack.c.l.b16 %v641
        %v906 = vunpack.c.h.b16 %v641
        %v907 = vunpack.c.l.b16 %v642
        %v908 = vunpack.c.h.b16 %v642
        %v909 = vunpack.c.l.b16 %v643
        %v910 = vunpack.c.h.b16 %v643
        %v911 = vunpack.c.l.b16 %v644
        %v912 = vunpack.c.h.b16 %v644
        %v913 = vunpack.c.l.b16 %v645
        %v914 = vunpack.c.h.b16 %v645
        %v915 = vunpack.c.l.b16 %v646
        %v916 = vunpack.c.h.b16 %v646
        %v917 = vunpack.c.l.b16 %v647
        %v918 = vunpack.c.h.b16 %v647
        %v919 = vunpack.c.l.b16 %v648
        %v920 = vunpack.c.h.b16 %v648
        %v921 = vunpack.c.l.b16 %v649
        %v922 = vunpack.c.h.b16 %v649
        %v923 = vunpack.c.l.b16 %v650
        %v924 = vunpack.c.h.b16 %v650
        %v925 = vunpack.c.l.b16 %v651
        %v926 = vunpack.c.h.b16 %v651
        %v927 = vunpack.c.l.b16 %v652
        %v928 = vunpack.c.h.b16 %v652
        %v929 = vunpack.c.l.b16 %v653
        %v930 = vunpack.c.h.b16 %v653
        %v931 = vunpack.c.l.b16 %v654
        %v932 = vunpack.c.h.b16 %v654
        %v933 = vunpack.c.l.b16 %v655
        %v934 = vunpack.c.h.b16 %v655
        %v935 = vunpack.c.l.b16 %v656
        %v936 = vunpack.c.h.b16 %v656
        %v937 = vunpack.c.l.b16 %v657
        %v938 = vunpack.c.h.b16 %v657
        %v939 = vunpack.c.l.b16 %v658
        %v940 = vunpack.c.h.b16 %v658
        %v941 = vunpack.c.l.b16 %v659
        %v942 = vunpack.c.h.b16 %v659
        %v943 = vunpack.c.l.b16 %v660
        %v944 = vunpack.c.h.b16 %v660
        %v945 = vunpack.c.l.b16 %v661
        %v946 = vunpack.c.h.b16 %v661
        %v947 = vunpack.c.l.b16 %v662
        %v948 = vunpack.c.h.b16 %v662
        %v949 = vunpack.c.l.b16 %v663
        %v950 = vunpack.c.h.b16 %v663
        %v951 = vunpack.c.l.b16 %v664
        %v952 = vunpack.c.h.b16 %v664
        %v953 = vunpack.c.l.b16 %v665
        %v954 = vunpack.c.h.b16 %v665
        %v955 = vunpack.c.l.b16 %v666
        %v956 = vunpack.c.h.b16 %v666
        %v957 = vunpack.c.l.b16 %v667
        %v958 = vunpack.c.h.b16 %v667
        %v959 = vunpack.c.l.b16 %v668
        %v960 = vunpack.c.h.b16 %v668
        %v961 = vunpack.c.l.b16 %v669
        %v962 = vunpack.c.h.b16 %v669
        %v963 = vunpack.c.l.b16 %v670
        %v964 = vunpack.c.h.b16 %v670
        %v965 = vunpack.c.l.b16 %v671
        %v966 = vunpack.c.h.b16 %v671
        %v967 = vunpack.c.l.b16 %v672
        %v968 = vunpack.c.h.b16 %v672
        %v969 = vunpack.c.l.b16 %v673
        %v970 = vunpack.c.h.b16 %v673
        %v971 = vunpack.c.l.b16 %v674
        %v972 = vunpack.c.h.b16 %v674
        %v973 = vunpack.c.l.b16 %v675
        %v974 = vunpack.c.h.b16 %v675
        %v975 = vunpack.c.l.b16 %v676
        %v976 = vunpack.c.h.b16 %v676
        %v977 = vunpack.c.l.b16 %v677
        %v978 = vunpack.c.h.b16 %v677
        %v979 = vunpack.c.l.b16 %v678
        %v980 = vunpack.c.h.b16 %v678
        %v981 = vunpack.c.l.b16 %v679
        %v982 = vunpack.c.h.b16 %v679
        %v983 = vunpack.c.l.b16 %v680
        %v984 = vunpack.c.h.b16 %v680
        %v985 = vunpack.c.l.b16 %v681
        %v986 = vunpack.c.h.b16 %v681
        %v987 = vunpack.c.l.b16 %v682
        %v988 = vunpack.c.h.b16 %v682
        %v989 = vunpack.c.l.b16 %v683
        %v990 = vunpack.c.h.b16 %v683
        %v991 = vunpack.c.l.b16 %v684
        %v992 = vunpack.c.h.b16 %v684
        %v993 = vunpack.c.l.b16 %v685
        %v994 = vunpack.c.h.b16 %v685
        %v995 = vunpack.c.l.b16 %v686
        %v996 = vunpack.c.h.b16 %v686
        %v997 = vunpack.c.l.b16 %v687
        %v998 = vunpack.c.h.b16 %v687
        %v999 = vunpack.c.l.b16 %v688
        %v1000 = vunpack.c.h.b16 %v688
        %v1001 = vunpack.c.l.b16 %v689
        %v1002 = vunpack.c.h.b16 %v689
        %v1003 = vunpack.c.l.b16 %v690
        %v1004 = vunpack.c.h.b16 %v690
        %v1005 = vunpack.c.l.b16 %v691
        %v1006 = vunpack.c.h.b16 %v691
        %v1007 = vunpack.c.l.b16 %v692
        %v1008 = vunpack.c.h.b16 %v692
        %v1009 = vunpack.c.l.b16 %v693
        %v1010 = vunpack.c.h.b16 %v693
        %v1011 = vunpack.c.l.b16 %v694
        %v1012 = vunpack.c.h.b16 %v694
        %v1013 = vunpack.c.l.b16 %v695
        %v1014 = vunpack.c.h.b16 %v695
        %v1015 = vunpack.c.l.b16 %v696
        %v1016 = vunpack.c.h.b16 %v696
        %v1017 = vunpack.c.l.b16 %v697
        %v1018 = vunpack.c.h.b16 %v697
        %v1019 = vunpack.c.l.b16 %v698
        %v1020 = vunpack.c.h.b16 %v698
        %v1021 = vunpack.c.l.b16 %v699
        %v1022 = vunpack.c.h.b16 %v699
        %v1023 = vpack.c.b16 %v897, %v895
        %v1024 = vpack.c.b16 %v898, %v896
        %v1025 = vpack.c.b16 %v901, %v899
        %v1026 = vpack.c.b16 %v902, %v900
        %v1027 = vpack.c.b16 %v905, %v903
        %v1028 = vpack.c.b16 %v906, %v904
        %v1029 = vpack.c.b16 %v909, %v907
        %v1030 = vpack.c.b16 %v910, %v908
        %v1031 = vpack.c.b16 %v913, %v911
        %v1032 = vpack.c.b16 %v914, %v912
        %v1033 = vpack.c.b16 %v917, %v915
        %v1034 = vpack.c.b16 %v918, %v916
        %v1035 = vpack.c.b16 %v921, %v919
        %v1036 = vpack.c.b16 %v922, %v920
        %v1037 = vpack.c.b16 %v925, %v923
        %v1038 = vpack.c.b16 %v926, %v924
        %v1039 = vpack.c.b16 %v929, %v927
        %v1040 = vpack.c.b16 %v930, %v928
        %v1041 = vpack.c.b16 %v933, %v931
        %v1042 = vpack.c.b16 %v934, %v932
        %v1043 = vpack.c.b16 %v937, %v935
        %v1044 = vpack.c.b16 %v938, %v936
        %v1045 = vpack.c.b16 %v941, %v939
        %v1046 = vpack.c.b16 %v942, %v940
        %v1047 = vpack.c.b16 %v945, %v943
        %v1048 = vpack.c.b16 %v946, %v944
        %v1049 = vpack.c.b16 %v949, %v947
        %v1050 = vpack.c.b16 %v950, %v948
        %v1051 = vpack.c.b16 %v953, %v951
        %v1052 = vpack.c.b16 %v954, %v952
        %v1053 = vpack.c.b16 %v957, %v955
        %v1054 = vpack.c.b16 %v958, %v956
        %v1055 = vpack.c.b16 %v961, %v959
        %v1056 = vpack.c.b16 %v962, %v960
        %v1057 = vpack.c.b16 %v965, %v963
        %v1058 = vpack.c.b16 %v966, %v964
        %v1059 = vpack.c.b16 %v969, %v967
        %v1060 = vpack.c.b16 %v970, %v968
        %v1061 = vpack.c.b16 %v973, %v971
        %v1062 = vpack.c.b16 %v974, %v972
        %v1063 = vpack.c.b16 %v977, %v975
        %v1064 = vpack.c.b16 %v978, %v976
        %v1065 = vpack.c.b16 %v981, %v979
        %v1066 = vpack.c.b16 %v982, %v980
        %v1067 = vpack.c.b16 %v985, %v983
        %v1068 = vpack.c.b16 %v986, %v984
        %v1069 = vpack.c.b16 %v989, %v987
        %v1070 = vpack.c.b16 %v990, %v988
        %v1071 = vpack.c.b16 %v993, %v991
        %v1072 = vpack.c.b16 %v994, %v992
        %v1073 = vpack.c.b16 %v997, %v995
        %v1074 = vpack.c.b16 %v998, %v996
        %v1075 = vpack.c.b16 %v1001, %v999
        %v1076 = vpack.c.b16 %v1002, %v1000
        %v1077 = vpack.c.b16 %v1005, %v1003
        %v1078 = vpack.c.b16 %v1006, %v1004
        %v1079 = vpack.c.b16 %v1009, %v1007
        %v1080 = vpack.c.b16 %v1010, %v1008
        %v1081 = vpack.c.b16 %v1013, %v1011
        %v1082 = vpack.c.b16 %v1014, %v1012
        %v1083 = vpack.c.b16 %v1017, %v1015
        %v1084 = vpack.c.b16 %v1018, %v1016
        %v1085 = vpack.c.b16 %v1021, %v1019
        %v1086 = vpack.c.b16 %v1022, %v1020
        %1151 = vmatprep.subr.bf16.mxu0 %v1024
        %1152 = vmatpush1.bf16.msra.mxu0 %v1023
        %1153 = vmatprep.subr.bf16.mxu0 %v1026
        %1154 = vmatpush1.bf16.msra.mxu0 %v1025
        %1155 = vmatprep.subr.bf16.mxu0 %v1028
        %1156 = vmatpush1.bf16.msra.mxu0 %v1027
        %1157 = vmatprep.subr.bf16.mxu0 %v1030
        %1158 = vmatpush1.bf16.msra.mxu0 %v1029
        %1159 = vmatprep.subr.bf16.mxu0 %v1032
        %1160 = vmatpush1.bf16.msra.mxu0 %v1031
        %1161 = vmatprep.subr.bf16.mxu0 %v1034
        %1162 = vmatpush1.bf16.msra.mxu0 %v1033
        %1163 = vmatprep.subr.bf16.mxu0 %v1036
        %1164 = vmatpush1.bf16.msra.mxu0 %v1035
        %1165 = vmatprep.subr.bf16.mxu0 %v1038
        %1166 = vmatpush1.bf16.msra.mxu0 %v1037
        %1167 = vmatprep.subr.bf16.mxu0 %v1040
        %1168 = vmatpush1.bf16.msra.mxu0 %v1039
        %1169 = vmatprep.subr.bf16.mxu0 %v1042
        %1170 = vmatpush1.bf16.msra.mxu0 %v1041
        %1171 = vmatprep.subr.bf16.mxu0 %v1044
        %1172 = vmatpush1.bf16.msra.mxu0 %v1043
        %1173 = vmatprep.subr.bf16.mxu0 %v1046
        %1174 = vmatpush1.bf16.msra.mxu0 %v1045
        %1175 = vmatprep.subr.bf16.mxu0 %v1048
        %1176 = vmatpush1.bf16.msra.mxu0 %v1047
        %1177 = vmatprep.subr.bf16.mxu0 %v1050
        %1178 = vmatpush1.bf16.msra.mxu0 %v1049
        %1179 = vmatprep.subr.bf16.mxu0 %v1052
        %1180 = vmatpush1.bf16.msra.mxu0 %v1051
        %1181 = vmatprep.subr.bf16.mxu0 %v1054
        %1182 = vmatpush1.bf16.msra.mxu0 %v1053
        %1183 = vmatprep.mubr.bf16.mxu0 %v766
        %1184 = vmatmul.mubr.bf16.gmra.mrb[0].mxu0 %v754
        %v1185 = vpop.f32.mrb[0].mxu0
        %v1186 = vadd.f32 0.0, %v1185
        %v1187 = vpop.f32.mrb[0].mxu0
        %v1188 = vadd.f32 0.0, %v1187
        %v1189 = vpop.f32.mrb[0].mxu0
        %v1190 = vadd.f32 0.0, %v1189
        %v1191 = vpop.f32.mrb[0].mxu0
        %v1192 = vadd.f32 0.0, %v1191
        %1193 = vmatprep.mubr.bf16.mxu0 %v806
        %1194 = vmatmul.mubr.bf16.gmra.mrb[0].mxu0 %v798
        %v1195 = vpop.f32.mrb[0].mxu0
        %v1196 = vadd.f32 0.0, %v1195
        %v1197 = vpop.f32.mrb[0].mxu0
        %v1198 = vadd.f32 0.0, %v1197
        %v1199 = vpop.f32.mrb[0].mxu0
        %v1200 = vadd.f32 0.0, %v1199
        %v1201 = vpop.f32.mrb[0].mxu0
        %v1202 = vadd.f32 0.0, %v1201
        %1203 = vdwg.mxu0
        %1204 = vmatprep.subr.bf16.mxu0 %v1056
        %1205 = vmatpush1.bf16.msra.mxu0 %v1055
        %1206 = vmatprep.subr.bf16.mxu0 %v1058
        %1207 = vmatpush1.bf16.msra.mxu0 %v1057
        %1208 = vmatprep.subr.bf16.mxu0 %v1060
        %1209 = vmatpush1.bf16.msra.mxu0 %v1059
        %1210 = vmatprep.subr.bf16.mxu0 %v1062
        %1211 = vmatpush1.bf16.msra.mxu0 %v1061
        %1212 = vmatprep.subr.bf16.mxu0 %v1064
        %1213 = vmatpush1.bf16.msra.mxu0 %v1063
        %1214 = vmatprep.subr.bf16.mxu0 %v1066
        %1215 = vmatpush1.bf16.msra.mxu0 %v1065
        %1216 = vmatprep.subr.bf16.mxu0 %v1068
        %1217 = vmatpush1.bf16.msra.mxu0 %v1067
        %1218 = vmatprep.subr.bf16.mxu0 %v1070
        %1219 = vmatpush1.bf16.msra.mxu0 %v1069
        %1220 = vmatprep.subr.bf16.mxu0 %v1072
        %1221 = vmatpush1.bf16.msra.mxu0 %v1071
        %1222 = vmatprep.subr.bf16.mxu0 %v1074
        %1223 = vmatpush1.bf16.msra.mxu0 %v1073
        %1224 = vmatprep.subr.bf16.mxu0 %v1076
        %1225 = vmatpush1.bf16.msra.mxu0 %v1075
        %1226 = vmatprep.subr.bf16.mxu0 %v1078
        %1227 = vmatpush1.bf16.msra.mxu0 %v1077
        %1228 = vmatprep.subr.bf16.mxu0 %v1080
        %1229 = vmatpush1.bf16.msra.mxu0 %v1079
        %1230 = vmatprep.subr.bf16.mxu0 %v1082
        %1231 = vmatpush1.bf16.msra.mxu0 %v1081
        %1232 = vmatprep.subr.bf16.mxu0 %v1084
        %1233 = vmatpush1.bf16.msra.mxu0 %v1083
        %1234 = vmatprep.subr.bf16.mxu0 %v1086
        %1235 = vmatpush1.bf16.msra.mxu0 %v1085
        %1236 = vmatprep.mubr.bf16.mxu0 %v790
        %1237 = vmatmul.mubr.bf16.gmra.mrb[0].mxu0 %v778
        %v1238 = vpop.f32.mrb[0].mxu0
        %v1239 = vadd.f32 %v1186, %v1238
        %v1240 = vpop.f32.mrb[0].mxu0
        %v1241 = vadd.f32 %v1188, %v1240
        %v1242 = vpop.f32.mrb[0].mxu0
        %v1243 = vadd.f32 %v1190, %v1242
        %v1244 = vpop.f32.mrb[0].mxu0
        %v1245 = vadd.f32 %v1192, %v1244
        %1246 = vmatprep.mubr.bf16.mxu0 %v822
        %1247 = vmatmul.mubr.bf16.gmra.mrb[0].mxu0 %v814
        %v1248 = vpop.f32.mrb[0].mxu0
        %v1249 = vadd.f32 %v1196, %v1248
        %v1250 = vpop.f32.mrb[0].mxu0
        %v1251 = vadd.f32 %v1198, %v1250
        %v1252 = vpop.f32.mrb[0].mxu0
        %v1253 = vadd.f32 %v1200, %v1252
        %v1254 = vpop.f32.mrb[0].mxu0
        %v1255 = vadd.f32 %v1202, %v1254
        %1256 = vdwg.mxu0
        %v1329 = vunpack.c.l.b16 %v569
        %v1330 = vunpack.c.h.b16 %v569
        %v1331 = vunpack.c.l.b16 %v570
        %v1332 = vunpack.c.h.b16 %v570
        %v1333 = vunpack.c.l.b16 %v571
        %v1334 = vunpack.c.h.b16 %v571
        %v1335 = vunpack.c.l.b16 %v572
        %v1336 = vunpack.c.h.b16 %v572
        %v1337 = vunpack.c.l.b16 %v573
        %v1338 = vunpack.c.h.b16 %v573
        %v1339 = vunpack.c.l.b16 %v574
        %v1340 = vunpack.c.h.b16 %v574
        %v1341 = vunpack.c.l.b16 %v575
        %v1342 = vunpack.c.h.b16 %v575
        %v1343 = vunpack.c.l.b16 %v576
        %v1344 = vunpack.c.h.b16 %v576
        %v1345 = vunpack.c.l.b16 %v577
        %v1346 = vunpack.c.h.b16 %v577
        %v1347 = vunpack.c.l.b16 %v578
        %v1348 = vunpack.c.h.b16 %v578
        %v1349 = vunpack.c.l.b16 %v579
        %v1350 = vunpack.c.h.b16 %v579
        %v1351 = vunpack.c.l.b16 %v580
        %v1352 = vunpack.c.h.b16 %v580
        %v1353 = vunpack.c.l.b16 %v581
        %v1354 = vunpack.c.h.b16 %v581
        %v1355 = vunpack.c.l.b16 %v582
        %v1356 = vunpack.c.h.b16 %v582
        %v1357 = vunpack.c.l.b16 %v583
        %v1358 = vunpack.c.h.b16 %v583
        %v1359 = vunpack.c.l.b16 %v584
        %v1360 = vunpack.c.h.b16 %v584
        %v1361 = vunpack.c.l.b16 %v585
        %v1362 = vunpack.c.h.b16 %v585
        %v1363 = vunpack.c.l.b16 %v586
        %v1364 = vunpack.c.h.b16 %v586
        %v1365 = vunpack.c.l.b16 %v587
        %v1366 = vunpack.c.h.b16 %v587
        %v1367 = vunpack.c.l.b16 %v588
        %v1368 = vunpack.c.h.b16 %v588
        %v1369 = vunpack.c.l.b16 %v589
        %v1370 = vunpack.c.h.b16 %v589
        %v1371 = vunpack.c.l.b16 %v590
        %v1372 = vunpack.c.h.b16 %v590
        %v1373 = vunpack.c.l.b16 %v591
        %v1374 = vunpack.c.h.b16 %v591
        %v1375 = vunpack.c.l.b16 %v592
        %v1376 = vunpack.c.h.b16 %v592
        %v1377 = vunpack.c.l.b16 %v593
        %v1378 = vunpack.c.h.b16 %v593
        %v1379 = vunpack.c.l.b16 %v594
        %v1380 = vunpack.c.h.b16 %v594
        %v1381 = vunpack.c.l.b16 %v595
        %v1382 = vunpack.c.h.b16 %v595
        %v1383 = vunpack.c.l.b16 %v596
        %v1384 = vunpack.c.h.b16 %v596
        %v1385 = vunpack.c.l.b16 %v597
        %v1386 = vunpack.c.h.b16 %v597
        %v1387 = vunpack.c.l.b16 %v598
        %v1388 = vunpack.c.h.b16 %v598
        %v1389 = vunpack.c.l.b16 %v599
        %v1390 = vunpack.c.h.b16 %v599
        %v1391 = vunpack.c.l.b16 %v600
        %v1392 = vunpack.c.h.b16 %v600
        %v1393 = vunpack.c.l.b16 %v601
        %v1394 = vunpack.c.h.b16 %v601
        %v1395 = vunpack.c.l.b16 %v602
        %v1396 = vunpack.c.h.b16 %v602
        %v1397 = vunpack.c.l.b16 %v603
        %v1398 = vunpack.c.h.b16 %v603
        %v1399 = vunpack.c.l.b16 %v604
        %v1400 = vunpack.c.h.b16 %v604
        %v1401 = vunpack.c.l.b16 %v605
        %v1402 = vunpack.c.h.b16 %v605
        %v1403 = vunpack.c.l.b16 %v606
        %v1404 = vunpack.c.h.b16 %v606
        %v1405 = vunpack.c.l.b16 %v607
        %v1406 = vunpack.c.h.b16 %v607
        %v1407 = vunpack.c.l.b16 %v608
        %v1408 = vunpack.c.h.b16 %v608
        %v1409 = vunpack.c.l.b16 %v609
        %v1410 = vunpack.c.h.b16 %v609
        %v1411 = vunpack.c.l.b16 %v610
        %v1412 = vunpack.c.h.b16 %v610
        %v1413 = vunpack.c.l.b16 %v611
        %v1414 = vunpack.c.h.b16 %v611
        %v1415 = vunpack.c.l.b16 %v612
        %v1416 = vunpack.c.h.b16 %v612
        %v1417 = vunpack.c.l.b16 %v613
        %v1418 = vunpack.c.h.b16 %v613
        %v1419 = vunpack.c.l.b16 %v614
        %v1420 = vunpack.c.h.b16 %v614
        %v1421 = vunpack.c.l.b16 %v615
        %v1422 = vunpack.c.h.b16 %v615
        %v1423 = vunpack.c.l.b16 %v616
        %v1424 = vunpack.c.h.b16 %v616
        %v1425 = vunpack.c.l.b16 %v617
        %v1426 = vunpack.c.h.b16 %v617
        %v1427 = vunpack.c.l.b16 %v618
        %v1428 = vunpack.c.h.b16 %v618
        %v1429 = vunpack.c.l.b16 %v619
        %v1430 = vunpack.c.h.b16 %v619
        %v1431 = vunpack.c.l.b16 %v620
        %v1432 = vunpack.c.h.b16 %v620
        %v1433 = vunpack.c.l.b16 %v621
        %v1434 = vunpack.c.h.b16 %v621
        %v1435 = vunpack.c.l.b16 %v622
        %v1436 = vunpack.c.h.b16 %v622
        %v1437 = vunpack.c.l.b16 %v623
        %v1438 = vunpack.c.h.b16 %v623
        %v1439 = vunpack.c.l.b16 %v624
        %v1440 = vunpack.c.h.b16 %v624
        %v1441 = vunpack.c.l.b16 %v625
        %v1442 = vunpack.c.h.b16 %v625
        %v1443 = vunpack.c.l.b16 %v626
        %v1444 = vunpack.c.h.b16 %v626
        %v1445 = vunpack.c.l.b16 %v627
        %v1446 = vunpack.c.h.b16 %v627
        %v1447 = vunpack.c.l.b16 %v628
        %v1448 = vunpack.c.h.b16 %v628
        %v1449 = vunpack.c.l.b16 %v629
        %v1450 = vunpack.c.h.b16 %v629
        %v1451 = vunpack.c.l.b16 %v630
        %v1452 = vunpack.c.h.b16 %v630
        %v1453 = vunpack.c.l.b16 %v631
        %v1454 = vunpack.c.h.b16 %v631
        %v1455 = vunpack.c.l.b16 %v632
        %v1456 = vunpack.c.h.b16 %v632
        %v1457 = vpack.c.b16 %v1331, %v1329
        %v1458 = vpack.c.b16 %v1332, %v1330
        %v1459 = vpack.c.b16 %v1335, %v1333
        %v1460 = vpack.c.b16 %v1336, %v1334
        %v1461 = vpack.c.b16 %v1339, %v1337
        %v1462 = vpack.c.b16 %v1340, %v1338
        %v1463 = vpack.c.b16 %v1343, %v1341
        %v1464 = vpack.c.b16 %v1344, %v1342
        %v1465 = vpack.c.b16 %v1347, %v1345
        %v1466 = vpack.c.b16 %v1348, %v1346
        %v1467 = vpack.c.b16 %v1351, %v1349
        %v1468 = vpack.c.b16 %v1352, %v1350
        %v1469 = vpack.c.b16 %v1355, %v1353
        %v1470 = vpack.c.b16 %v1356, %v1354
        %v1471 = vpack.c.b16 %v1359, %v1357
        %v1472 = vpack.c.b16 %v1360, %v1358
        %v1473 = vpack.c.b16 %v1363, %v1361
        %v1474 = vpack.c.b16 %v1364, %v1362
        %v1475 = vpack.c.b16 %v1367, %v1365
        %v1476 = vpack.c.b16 %v1368, %v1366
        %v1477 = vpack.c.b16 %v1371, %v1369
        %v1478 = vpack.c.b16 %v1372, %v1370
        %v1479 = vpack.c.b16 %v1375, %v1373
        %v1480 = vpack.c.b16 %v1376, %v1374
        %v1481 = vpack.c.b16 %v1379, %v1377
        %v1482 = vpack.c.b16 %v1380, %v1378
        %v1483 = vpack.c.b16 %v1383, %v1381
        %v1484 = vpack.c.b16 %v1384, %v1382
        %v1485 = vpack.c.b16 %v1387, %v1385
        %v1486 = vpack.c.b16 %v1388, %v1386
        %v1487 = vpack.c.b16 %v1391, %v1389
        %v1488 = vpack.c.b16 %v1392, %v1390
        %v1489 = vpack.c.b16 %v1395, %v1393
        %v1490 = vpack.c.b16 %v1396, %v1394
        %v1491 = vpack.c.b16 %v1399, %v1397
        %v1492 = vpack.c.b16 %v1400, %v1398
        %v1493 = vpack.c.b16 %v1403, %v1401
        %v1494 = vpack.c.b16 %v1404, %v1402
        %v1495 = vpack.c.b16 %v1407, %v1405
        %v1496 = vpack.c.b16 %v1408, %v1406
        %v1497 = vpack.c.b16 %v1411, %v1409
        %v1498 = vpack.c.b16 %v1412, %v1410
        %v1499 = vpack.c.b16 %v1415, %v1413
        %v1500 = vpack.c.b16 %v1416, %v1414
        %v1501 = vpack.c.b16 %v1419, %v1417
        %v1502 = vpack.c.b16 %v1420, %v1418
        %v1503 = vpack.c.b16 %v1423, %v1421
        %v1504 = vpack.c.b16 %v1424, %v1422
        %v1505 = vpack.c.b16 %v1427, %v1425
        %v1506 = vpack.c.b16 %v1428, %v1426
        %v1507 = vpack.c.b16 %v1431, %v1429
        %v1508 = vpack.c.b16 %v1432, %v1430
        %v1509 = vpack.c.b16 %v1435, %v1433
        %v1510 = vpack.c.b16 %v1436, %v1434
        %v1511 = vpack.c.b16 %v1439, %v1437
        %v1512 = vpack.c.b16 %v1440, %v1438
        %v1513 = vpack.c.b16 %v1443, %v1441
        %v1514 = vpack.c.b16 %v1444, %v1442
        %v1515 = vpack.c.b16 %v1447, %v1445
        %v1516 = vpack.c.b16 %v1448, %v1446
        %v1517 = vpack.c.b16 %v1451, %v1449
        %v1518 = vpack.c.b16 %v1452, %v1450
        %v1519 = vpack.c.b16 %v1455, %v1453
        %v1520 = vpack.c.b16 %v1456, %v1454
        %1585 = vmatprep.subr.bf16.mxu0 %v1458
        %1586 = vmatpush1.bf16.msra.mxu0 %v1457
        %1587 = vmatprep.subr.bf16.mxu0 %v1460
        %1588 = vmatpush1.bf16.msra.mxu0 %v1459
        %1589 = vmatprep.subr.bf16.mxu0 %v1462
        %1590 = vmatpush1.bf16.msra.mxu0 %v1461
        %1591 = vmatprep.subr.bf16.mxu0 %v1464
        %1592 = vmatpush1.bf16.msra.mxu0 %v1463
        %1593 = vmatprep.subr.bf16.mxu0 %v1466
        %1594 = vmatpush1.bf16.msra.mxu0 %v1465
        %1595 = vmatprep.subr.bf16.mxu0 %v1468
        %1596 = vmatpush1.bf16.msra.mxu0 %v1467
        %1597 = vmatprep.subr.bf16.mxu0 %v1470
        %1598 = vmatpush1.bf16.msra.mxu0 %v1469
        %1599 = vmatprep.subr.bf16.mxu0 %v1472
        %1600 = vmatpush1.bf16.msra.mxu0 %v1471
        %1601 = vmatprep.subr.bf16.mxu0 %v1474
        %1602 = vmatpush1.bf16.msra.mxu0 %v1473
        %1603 = vmatprep.subr.bf16.mxu0 %v1476
        %1604 = vmatpush1.bf16.msra.mxu0 %v1475
        %1605 = vmatprep.subr.bf16.mxu0 %v1478
        %1606 = vmatpush1.bf16.msra.mxu0 %v1477
        %1607 = vmatprep.subr.bf16.mxu0 %v1480
        %1608 = vmatpush1.bf16.msra.mxu0 %v1479
        %1609 = vmatprep.subr.bf16.mxu0 %v1482
        %1610 = vmatpush1.bf16.msra.mxu0 %v1481
        %1611 = vmatprep.subr.bf16.mxu0 %v1484
        %1612 = vmatpush1.bf16.msra.mxu0 %v1483
        %1613 = vmatprep.subr.bf16.mxu0 %v1486
        %1614 = vmatpush1.bf16.msra.mxu0 %v1485
        %1615 = vmatprep.subr.bf16.mxu0 %v1488
        %1616 = vmatpush1.bf16.msra.mxu0 %v1487
        %1617 = vmatprep.mubr.bf16.mxu0 %v731
        %1618 = vmatmul.mubr.bf16.gmra.mrb[0].mxu0 %v730
        %v1619 = vpop.f32.mrb[0].mxu0
        %v1620 = vadd.f32 %v1239, %v1619
        %v1621 = vpop.f32.mrb[0].mxu0
        %v1622 = vadd.f32 %v1241, %v1621
        %v1623 = vpop.f32.mrb[0].mxu0
        %v1624 = vadd.f32 %v1243, %v1623
        %v1625 = vpop.f32.mrb[0].mxu0
        %v1626 = vadd.f32 %v1245, %v1625
        %1627 = vmatprep.mubr.bf16.mxu0 %v735
        %1628 = vmatmul.mubr.bf16.gmra.mrb[0].mxu0 %v734
        %v1629 = vpop.f32.mrb[0].mxu0
        %v1630 = vadd.f32 %v1249, %v1629
        %v1631 = vpop.f32.mrb[0].mxu0
        %v1632 = vadd.f32 %v1251, %v1631
        %v1633 = vpop.f32.mrb[0].mxu0
        %v1634 = vadd.f32 %v1253, %v1633
        %v1635 = vpop.f32.mrb[0].mxu0
        %v1636 = vadd.f32 %v1255, %v1635
        %1637 = vdwg.mxu0
        %1638 = vmatprep.subr.bf16.mxu0 %v1490
        %1639 = vmatpush1.bf16.msra.mxu0 %v1489
        %1640 = vmatprep.subr.bf16.mxu0 %v1492
        %1641 = vmatpush1.bf16.msra.mxu0 %v1491
        %1642 = vmatprep.subr.bf16.mxu0 %v1494
        %1643 = vmatpush1.bf16.msra.mxu0 %v1493
        %1644 = vmatprep.subr.bf16.mxu0 %v1496
        %1645 = vmatpush1.bf16.msra.mxu0 %v1495
        %1646 = vmatprep.subr.bf16.mxu0 %v1498
        %1647 = vmatpush1.bf16.msra.mxu0 %v1497
        %1648 = vmatprep.subr.bf16.mxu0 %v1500
        %1649 = vmatpush1.bf16.msra.mxu0 %v1499
        %1650 = vmatprep.subr.bf16.mxu0 %v1502
        %1651 = vmatpush1.bf16.msra.mxu0 %v1501
        %1652 = vmatprep.subr.bf16.mxu0 %v1504
        %1653 = vmatpush1.bf16.msra.mxu0 %v1503
        %1654 = vmatprep.subr.bf16.mxu0 %v1506
        %1655 = vmatpush1.bf16.msra.mxu0 %v1505
        %1656 = vmatprep.subr.bf16.mxu0 %v1508
        %1657 = vmatpush1.bf16.msra.mxu0 %v1507
        %1658 = vmatprep.subr.bf16.mxu0 %v1510
        %1659 = vmatpush1.bf16.msra.mxu0 %v1509
        %1660 = vmatprep.subr.bf16.mxu0 %v1512
        %1661 = vmatpush1.bf16.msra.mxu0 %v1511
        %1662 = vmatprep.subr.bf16.mxu0 %v1514
        %1663 = vmatpush1.bf16.msra.mxu0 %v1513
        %1664 = vmatprep.subr.bf16.mxu0 %v1516
        %1665 = vmatpush1.bf16.msra.mxu0 %v1515
        %1666 = vmatprep.subr.bf16.mxu0 %v1518
        %1667 = vmatpush1.bf16.msra.mxu0 %v1517
        %1668 = vmatprep.subr.bf16.mxu0 %v1520
        %1669 = vmatpush1.bf16.msra.mxu0 %v1519
        %1670 = vmatprep.mubr.bf16.mxu0 %v733
        %1671 = vmatmul.mubr.bf16.gmra.mrb[0].mxu0 %v732
        %v1672 = vpop.f32.mrb[0].mxu0
        %v1673 = vadd.f32 %v1620, %v1672
        %v1674 = vpop.f32.mrb[0].mxu0
        %v1675 = vadd.f32 %v1622, %v1674
        %v1676 = vpop.f32.mrb[0].mxu0
        %v1677 = vadd.f32 %v1624, %v1676
        %v1678 = vpop.f32.mrb[0].mxu0
        %v1679 = vadd.f32 %v1626, %v1678
        %1680 = vmatprep.mubr.bf16.mxu0 %v737
        %1681 = vmatmul.mubr.bf16.gmra.mrb[0].mxu0 %v736
        %v1682 = vpop.f32.mrb[0].mxu0
        %v1683 = vadd.f32 %v1630, %v1682
        %v1684 = vpop.f32.mrb[0].mxu0
        %v1685 = vadd.f32 %v1632, %v1684
        %v1686 = vpop.f32.mrb[0].mxu0
        %v1687 = vadd.f32 %v1634, %v1686
        %v1688 = vpop.f32.mrb[0].mxu0
        %v1689 = vadd.f32 %v1636, %v1688
        %1690 = vdwg.mxu0
        %v1691 = vld [vmem:[#allocation2] sm:$0xee]
        %v1692 = vld [vmem:[#allocation2 + $0x8] sm:$0xee]
        %s1693 = scalar_lea.vmem [#allocation11], 1024
        %v1694 = vld [vmem:[%s1693] sm:$0xff]
        %v1695 = vld [vmem:[%s1693 + $0x8] sm:$0xff]
        %v1696 = vld [vmem:[%s1693 + $0x10] sm:$0xff]
        %v1697 = vld [vmem:[%s1693 + $0x18] sm:$0xff]
        %v1698 = vld [vmem:[%s1693 + $0x20] sm:$0xff]
        %v1699 = vld [vmem:[%s1693 + $0x28] sm:$0xff]
        %v1700 = vld [vmem:[%s1693 + $0x30] sm:$0xff]
        %v1701 = vld [vmem:[%s1693 + $0x38] sm:$0xff]
        %v1702 = vld [vmem:[%s1693 + $0x40] sm:$0xff]
        %v1703 = vld [vmem:[%s1693 + $0x48] sm:$0xff]
        %v1704 = vld [vmem:[%s1693 + $0x50] sm:$0xff]
        %v1705 = vld [vmem:[%s1693 + $0x58] sm:$0xff]
        %v1706 = vld [vmem:[%s1693 + $0x60] sm:$0xff]
        %v1707 = vld [vmem:[%s1693 + $0x68] sm:$0xff]
        %v1708 = vld [vmem:[%s1693 + $0x70] sm:$0xff]
        %v1709 = vld [vmem:[%s1693 + $0x78] sm:$0xff]
        %v1710 = vld [vmem:[%s1693 + $0x80] sm:$0xff]
        %v1711 = vld [vmem:[%s1693 + $0x88] sm:$0xff]
        %v1712 = vld [vmem:[%s1693 + $0x90] sm:$0xff]
        %v1713 = vld [vmem:[%s1693 + $0x98] sm:$0xff]
        %v1714 = vld [vmem:[%s1693 + $0xa0] sm:$0xff]
        %v1715 = vld [vmem:[%s1693 + $0xa8] sm:$0xff]
        %v1716 = vld [vmem:[%s1693 + $0xb0] sm:$0xff]
        %v1717 = vld [vmem:[%s1693 + $0xb8] sm:$0xff]
        %v1718 = vld [vmem:[%s1693 + $0xc0] sm:$0xff]
        %v1719 = vld [vmem:[%s1693 + $0xc8] sm:$0xff]
        %v1720 = vld [vmem:[%s1693 + $0xd0] sm:$0xff]
        %v1721 = vld [vmem:[%s1693 + $0xd8] sm:$0xff]
        %v1722 = vld [vmem:[%s1693 + $0xe0] sm:$0xff]
        %v1723 = vld [vmem:[%s1693 + $0xe8] sm:$0xff]
        %v1724 = vld [vmem:[%s1693 + $0xf0] sm:$0xff]
        %v1725 = vld [vmem:[%s1693 + $0xf8] sm:$0xff]
        %v1726 = vld [vmem:[%s1693 + $0x100] sm:$0xff]
        %v1727 = vld [vmem:[%s1693 + $0x108] sm:$0xff]
        %v1728 = vld [vmem:[%s1693 + $0x110] sm:$0xff]
        %v1729 = vld [vmem:[%s1693 + $0x118] sm:$0xff]
        %v1730 = vld [vmem:[%s1693 + $0x120] sm:$0xff]
        %v1731 = vld [vmem:[%s1693 + $0x128] sm:$0xff]
        %v1732 = vld [vmem:[%s1693 + $0x130] sm:$0xff]
        %v1733 = vld [vmem:[%s1693 + $0x138] sm:$0xff]
        %v1734 = vld [vmem:[%s1693 + $0x140] sm:$0xff]
        %v1735 = vld [vmem:[%s1693 + $0x148] sm:$0xff]
        %v1736 = vld [vmem:[%s1693 + $0x150] sm:$0xff]
        %v1737 = vld [vmem:[%s1693 + $0x158] sm:$0xff]
        %v1738 = vld [vmem:[%s1693 + $0x160] sm:$0xff]
        %v1739 = vld [vmem:[%s1693 + $0x168] sm:$0xff]
        %v1740 = vld [vmem:[%s1693 + $0x170] sm:$0xff]
        %v1741 = vld [vmem:[%s1693 + $0x178] sm:$0xff]
        %v1742 = vld [vmem:[%s1693 + $0x180] sm:$0xff]
        %v1743 = vld [vmem:[%s1693 + $0x188] sm:$0xff]
        %v1744 = vld [vmem:[%s1693 + $0x190] sm:$0xff]
        %v1745 = vld [vmem:[%s1693 + $0x198] sm:$0xff]
        %v1746 = vld [vmem:[%s1693 + $0x1a0] sm:$0xff]
        %v1747 = vld [vmem:[%s1693 + $0x1a8] sm:$0xff]
        %v1748 = vld [vmem:[%s1693 + $0x1b0] sm:$0xff]
        %v1749 = vld [vmem:[%s1693 + $0x1b8] sm:$0xff]
        %v1750 = vld [vmem:[%s1693 + $0x1c0] sm:$0xff]
        %v1751 = vld [vmem:[%s1693 + $0x1c8] sm:$0xff]
        %v1752 = vld [vmem:[%s1693 + $0x1d0] sm:$0xff]
        %v1753 = vld [vmem:[%s1693 + $0x1d8] sm:$0xff]
        %v1754 = vld [vmem:[%s1693 + $0x1e0] sm:$0xff]
        %v1755 = vld [vmem:[%s1693 + $0x1e8] sm:$0xff]
        %v1756 = vld [vmem:[%s1693 + $0x1f0] sm:$0xff]
        %v1757 = vld [vmem:[%s1693 + $0x1f8] sm:$0xff]
        %v1760 = vunpack.c.l.b16 %v1691
        %v1761 = vunpack.c.h.b16 %v1691
        %v1762 = vunpack.c.l.b16 %v1692
        %v1763 = vunpack.c.h.b16 %v1692
        %v1764 = vpack.c.b16 %v714, %v1760
        %v1765 = vpack.c.b16 %v715, %v1761
        %v1766 = vpack.c.b16 %v716, %v1762
        %v1767 = vpack.c.b16 %v717, %v1763
        %vm1768 = vcmask 1046528
        %v1769 = vrot.slane %v1764, 1
        %v1770 = vrot.slane %v734, 1
        %v1771 = vsel %vm1768, %v1769, %v1770
        %v1772 = vrot.slane %v1765, 1
        %v1773 = vrot.slane %v735, 1
        %v1774 = vsel %vm1768, %v1772, %v1773
        %v1775 = vrot.slane %v1766, 1
        %v1776 = vrot.slane %v736, 1
        %v1777 = vsel %vm1768, %v1775, %v1776
        %v1778 = vrot.slane %v1767, 1
        %v1779 = vrot.slane %v737, 1
        %v1780 = vsel %vm1768, %v1778, %v1779
        %v1781 = vrot.slane %v738, 1
        %v1782 = vsel %vm1768, %v1770, %v1781
        %v1783 = vrot.slane %v739, 1
        %v1784 = vsel %vm1768, %v1773, %v1783
        %v1785 = vrot.slane %v740, 1
        %v1786 = vsel %vm1768, %v1776, %v1785
        %v1787 = vrot.slane %v741, 1
        %v1788 = vsel %vm1768, %v1779, %v1787
        %v1861 = vunpack.c.l.b16 %v1694
        %v1862 = vunpack.c.h.b16 %v1694
        %v1863 = vunpack.c.l.b16 %v1695
        %v1864 = vunpack.c.h.b16 %v1695
        %v1865 = vunpack.c.l.b16 %v1696
        %v1866 = vunpack.c.h.b16 %v1696
        %v1867 = vunpack.c.l.b16 %v1697
        %v1868 = vunpack.c.h.b16 %v1697
        %v1869 = vunpack.c.l.b16 %v1698
        %v1870 = vunpack.c.h.b16 %v1698
        %v1871 = vunpack.c.l.b16 %v1699
        %v1872 = vunpack.c.h.b16 %v1699
        %v1873 = vunpack.c.l.b16 %v1700
        %v1874 = vunpack.c.h.b16 %v1700
        %v1875 = vunpack.c.l.b16 %v1701
        %v1876 = vunpack.c.h.b16 %v1701
        %v1877 = vunpack.c.l.b16 %v1702
        %v1878 = vunpack.c.h.b16 %v1702
        %v1879 = vunpack.c.l.b16 %v1703
        %v1880 = vunpack.c.h.b16 %v1703
        %v1881 = vunpack.c.l.b16 %v1704
        %v1882 = vunpack.c.h.b16 %v1704
        %v1883 = vunpack.c.l.b16 %v1705
        %v1884 = vunpack.c.h.b16 %v1705
        %v1885 = vunpack.c.l.b16 %v1706
        %v1886 = vunpack.c.h.b16 %v1706
        %v1887 = vunpack.c.l.b16 %v1707
        %v1888 = vunpack.c.h.b16 %v1707
        %v1889 = vunpack.c.l.b16 %v1708
        %v1890 = vunpack.c.h.b16 %v1708
        %v1891 = vunpack.c.l.b16 %v1709
        %v1892 = vunpack.c.h.b16 %v1709
        %v1893 = vunpack.c.l.b16 %v1710
        %v1894 = vunpack.c.h.b16 %v1710
        %v1895 = vunpack.c.l.b16 %v1711
        %v1896 = vunpack.c.h.b16 %v1711
        %v1897 = vunpack.c.l.b16 %v1712
        %v1898 = vunpack.c.h.b16 %v1712
        %v1899 = vunpack.c.l.b16 %v1713
        %v1900 = vunpack.c.h.b16 %v1713
        %v1901 = vunpack.c.l.b16 %v1714
        %v1902 = vunpack.c.h.b16 %v1714
        %v1903 = vunpack.c.l.b16 %v1715
        %v1904 = vunpack.c.h.b16 %v1715
        %v1905 = vunpack.c.l.b16 %v1716
        %v1906 = vunpack.c.h.b16 %v1716
        %v1907 = vunpack.c.l.b16 %v1717
        %v1908 = vunpack.c.h.b16 %v1717
        %v1909 = vunpack.c.l.b16 %v1718
        %v1910 = vunpack.c.h.b16 %v1718
        %v1911 = vunpack.c.l.b16 %v1719
        %v1912 = vunpack.c.h.b16 %v1719
        %v1913 = vunpack.c.l.b16 %v1720
        %v1914 = vunpack.c.h.b16 %v1720
        %v1915 = vunpack.c.l.b16 %v1721
        %v1916 = vunpack.c.h.b16 %v1721
        %v1917 = vunpack.c.l.b16 %v1722
        %v1918 = vunpack.c.h.b16 %v1722
        %v1919 = vunpack.c.l.b16 %v1723
        %v1920 = vunpack.c.h.b16 %v1723
        %v1921 = vunpack.c.l.b16 %v1724
        %v1922 = vunpack.c.h.b16 %v1724
        %v1923 = vunpack.c.l.b16 %v1725
        %v1924 = vunpack.c.h.b16 %v1725
        %v1925 = vunpack.c.l.b16 %v1726
        %v1926 = vunpack.c.h.b16 %v1726
        %v1927 = vunpack.c.l.b16 %v1727
        %v1928 = vunpack.c.h.b16 %v1727
        %v1929 = vunpack.c.l.b16 %v1728
        %v1930 = vunpack.c.h.b16 %v1728
        %v1931 = vunpack.c.l.b16 %v1729
        %v1932 = vunpack.c.h.b16 %v1729
        %v1933 = vunpack.c.l.b16 %v1730
        %v1934 = vunpack.c.h.b16 %v1730
        %v1935 = vunpack.c.l.b16 %v1731
        %v1936 = vunpack.c.h.b16 %v1731
        %v1937 = vunpack.c.l.b16 %v1732
        %v1938 = vunpack.c.h.b16 %v1732
        %v1939 = vunpack.c.l.b16 %v1733
        %v1940 = vunpack.c.h.b16 %v1733
        %v1941 = vunpack.c.l.b16 %v1734
        %v1942 = vunpack.c.h.b16 %v1734
        %v1943 = vunpack.c.l.b16 %v1735
        %v1944 = vunpack.c.h.b16 %v1735
        %v1945 = vunpack.c.l.b16 %v1736
        %v1946 = vunpack.c.h.b16 %v1736
        %v1947 = vunpack.c.l.b16 %v1737
        %v1948 = vunpack.c.h.b16 %v1737
        %v1949 = vunpack.c.l.b16 %v1738
        %v1950 = vunpack.c.h.b16 %v1738
        %v1951 = vunpack.c.l.b16 %v1739
        %v1952 = vunpack.c.h.b16 %v1739
        %v1953 = vunpack.c.l.b16 %v1740
        %v1954 = vunpack.c.h.b16 %v1740
        %v1955 = vunpack.c.l.b16 %v1741
        %v1956 = vunpack.c.h.b16 %v1741
        %v1957 = vunpack.c.l.b16 %v1742
        %v1958 = vunpack.c.h.b16 %v1742
        %v1959 = vunpack.c.l.b16 %v1743
        %v1960 = vunpack.c.h.b16 %v1743
        %v1961 = vunpack.c.l.b16 %v1744
        %v1962 = vunpack.c.h.b16 %v1744
        %v1963 = vunpack.c.l.b16 %v1745
        %v1964 = vunpack.c.h.b16 %v1745
        %v1965 = vunpack.c.l.b16 %v1746
        %v1966 = vunpack.c.h.b16 %v1746
        %v1967 = vunpack.c.l.b16 %v1747
        %v1968 = vunpack.c.h.b16 %v1747
        %v1969 = vunpack.c.l.b16 %v1748
        %v1970 = vunpack.c.h.b16 %v1748
        %v1971 = vunpack.c.l.b16 %v1749
        %v1972 = vunpack.c.h.b16 %v1749
        %v1973 = vunpack.c.l.b16 %v1750
        %v1974 = vunpack.c.h.b16 %v1750
        %v1975 = vunpack.c.l.b16 %v1751
        %v1976 = vunpack.c.h.b16 %v1751
        %v1977 = vunpack.c.l.b16 %v1752
        %v1978 = vunpack.c.h.b16 %v1752
        %v1979 = vunpack.c.l.b16 %v1753
        %v1980 = vunpack.c.h.b16 %v1753
        %v1981 = vunpack.c.l.b16 %v1754
        %v1982 = vunpack.c.h.b16 %v1754
        %v1983 = vunpack.c.l.b16 %v1755
        %v1984 = vunpack.c.h.b16 %v1755
        %v1985 = vunpack.c.l.b16 %v1756
        %v1986 = vunpack.c.h.b16 %v1756
        %v1987 = vunpack.c.l.b16 %v1757
        %v1988 = vunpack.c.h.b16 %v1757
        %v1989 = vpack.c.b16 %v1863, %v1861
        %v1990 = vpack.c.b16 %v1864, %v1862
        %v1991 = vpack.c.b16 %v1867, %v1865
        %v1992 = vpack.c.b16 %v1868, %v1866
        %v1993 = vpack.c.b16 %v1871, %v1869
        %v1994 = vpack.c.b16 %v1872, %v1870
        %v1995 = vpack.c.b16 %v1875, %v1873
        %v1996 = vpack.c.b16 %v1876, %v1874
        %v1997 = vpack.c.b16 %v1879, %v1877
        %v1998 = vpack.c.b16 %v1880, %v1878
        %v1999 = vpack.c.b16 %v1883, %v1881
        %v2000 = vpack.c.b16 %v1884, %v1882
        %v2001 = vpack.c.b16 %v1887, %v1885
        %v2002 = vpack.c.b16 %v1888, %v1886
        %v2003 = vpack.c.b16 %v1891, %v1889
        %v2004 = vpack.c.b16 %v1892, %v1890
        %v2005 = vpack.c.b16 %v1895, %v1893
        %v2006 = vpack.c.b16 %v1896, %v1894
        %v2007 = vpack.c.b16 %v1899, %v1897
        %v2008 = vpack.c.b16 %v1900, %v1898
        %v2009 = vpack.c.b16 %v1903, %v1901
        %v2010 = vpack.c.b16 %v1904, %v1902
        %v2011 = vpack.c.b16 %v1907, %v1905
        %v2012 = vpack.c.b16 %v1908, %v1906
        %v2013 = vpack.c.b16 %v1911, %v1909
        %v2014 = vpack.c.b16 %v1912, %v1910
        %v2015 = vpack.c.b16 %v1915, %v1913
        %v2016 = vpack.c.b16 %v1916, %v1914
        %v2017 = vpack.c.b16 %v1919, %v1917
        %v2018 = vpack.c.b16 %v1920, %v1918
        %v2019 = vpack.c.b16 %v1923, %v1921
        %v2020 = vpack.c.b16 %v1924, %v1922
        %v2021 = vpack.c.b16 %v1927, %v1925
        %v2022 = vpack.c.b16 %v1928, %v1926
        %v2023 = vpack.c.b16 %v1931, %v1929
        %v2024 = vpack.c.b16 %v1932, %v1930
        %v2025 = vpack.c.b16 %v1935, %v1933
        %v2026 = vpack.c.b16 %v1936, %v1934
        %v2027 = vpack.c.b16 %v1939, %v1937
        %v2028 = vpack.c.b16 %v1940, %v1938
        %v2029 = vpack.c.b16 %v1943, %v1941
        %v2030 = vpack.c.b16 %v1944, %v1942
        %v2031 = vpack.c.b16 %v1947, %v1945
        %v2032 = vpack.c.b16 %v1948, %v1946
        %v2033 = vpack.c.b16 %v1951, %v1949
        %v2034 = vpack.c.b16 %v1952, %v1950
        %v2035 = vpack.c.b16 %v1955, %v1953
        %v2036 = vpack.c.b16 %v1956, %v1954
        %v2037 = vpack.c.b16 %v1959, %v1957
        %v2038 = vpack.c.b16 %v1960, %v1958
        %v2039 = vpack.c.b16 %v1963, %v1961
        %v2040 = vpack.c.b16 %v1964, %v1962
        %v2041 = vpack.c.b16 %v1967, %v1965
        %v2042 = vpack.c.b16 %v1968, %v1966
        %v2043 = vpack.c.b16 %v1971, %v1969
        %v2044 = vpack.c.b16 %v1972, %v1970
        %v2045 = vpack.c.b16 %v1975, %v1973
        %v2046 = vpack.c.b16 %v1976, %v1974
        %v2047 = vpack.c.b16 %v1979, %v1977
        %v2048 = vpack.c.b16 %v1980, %v1978
        %v2049 = vpack.c.b16 %v1983, %v1981
        %v2050 = vpack.c.b16 %v1984, %v1982
        %v2051 = vpack.c.b16 %v1987, %v1985
        %v2052 = vpack.c.b16 %v1988, %v1986
        %2117 = vmatprep.subr.bf16.mxu0 %v1990
        %2118 = vmatpush1.bf16.msra.mxu0 %v1989
        %2119 = vmatprep.subr.bf16.mxu0 %v1992
        %2120 = vmatpush1.bf16.msra.mxu0 %v1991
        %2121 = vmatprep.subr.bf16.mxu0 %v1994
        %2122 = vmatpush1.bf16.msra.mxu0 %v1993
        %2123 = vmatprep.subr.bf16.mxu0 %v1996
        %2124 = vmatpush1.bf16.msra.mxu0 %v1995
        %2125 = vmatprep.subr.bf16.mxu0 %v1998
        %2126 = vmatpush1.bf16.msra.mxu0 %v1997
        %2127 = vmatprep.subr.bf16.mxu0 %v2000
        %2128 = vmatpush1.bf16.msra.mxu0 %v1999
        %2129 = vmatprep.subr.bf16.mxu0 %v2002
        %2130 = vmatpush1.bf16.msra.mxu0 %v2001
        %2131 = vmatprep.subr.bf16.mxu0 %v2004
        %2132 = vmatpush1.bf16.msra.mxu0 %v2003
        %2133 = vmatprep.subr.bf16.mxu0 %v2006
        %2134 = vmatpush1.bf16.msra.mxu0 %v2005
        %2135 = vmatprep.subr.bf16.mxu0 %v2008
        %2136 = vmatpush1.bf16.msra.mxu0 %v2007
        %2137 = vmatprep.subr.bf16.mxu0 %v2010
        %2138 = vmatpush1.bf16.msra.mxu0 %v2009
        %2139 = vmatprep.subr.bf16.mxu0 %v2012
        %2140 = vmatpush1.bf16.msra.mxu0 %v2011
        %2141 = vmatprep.subr.bf16.mxu0 %v2014
        %2142 = vmatpush1.bf16.msra.mxu0 %v2013
        %2143 = vmatprep.subr.bf16.mxu0 %v2016
        %2144 = vmatpush1.bf16.msra.mxu0 %v2015
        %2145 = vmatprep.subr.bf16.mxu0 %v2018
        %2146 = vmatpush1.bf16.msra.mxu0 %v2017
        %2147 = vmatprep.subr.bf16.mxu0 %v2020
        %2148 = vmatpush1.bf16.msra.mxu0 %v2019
        %2149 = vmatprep.mubr.bf16.mxu0 %v1774
        %2150 = vmatmul.mubr.bf16.gmra.mrb[0].mxu0 %v1771
        %v2151 = vpop.f32.mrb[0].mxu0
        %v2152 = vadd.f32 0.0, %v2151
        %v2153 = vpop.f32.mrb[0].mxu0
        %v2154 = vadd.f32 0.0, %v2153
        %v2155 = vpop.f32.mrb[0].mxu0
        %v2156 = vadd.f32 0.0, %v2155
        %v2157 = vpop.f32.mrb[0].mxu0
        %v2158 = vadd.f32 0.0, %v2157
        %2159 = vmatprep.mubr.bf16.mxu0 %v1784
        %2160 = vmatmul.mubr.bf16.gmra.mrb[0].mxu0 %v1782
        %v2161 = vpop.f32.mrb[0].mxu0
        %v2162 = vadd.f32 0.0, %v2161
        %v2163 = vpop.f32.mrb[0].mxu0
        %v2164 = vadd.f32 0.0, %v2163
        %v2165 = vpop.f32.mrb[0].mxu0
        %v2166 = vadd.f32 0.0, %v2165
        %v2167 = vpop.f32.mrb[0].mxu0
        %v2168 = vadd.f32 0.0, %v2167
        %2169 = vdwg.mxu0
        %2170 = vmatprep.subr.bf16.mxu0 %v2022
        %2171 = vmatpush1.bf16.msra.mxu0 %v2021
        %2172 = vmatprep.subr.bf16.mxu0 %v2024
        %2173 = vmatpush1.bf16.msra.mxu0 %v2023
        %2174 = vmatprep.subr.bf16.mxu0 %v2026
        %2175 = vmatpush1.bf16.msra.mxu0 %v2025
        %2176 = vmatprep.subr.bf16.mxu0 %v2028
        %2177 = vmatpush1.bf16.msra.mxu0 %v2027
        %2178 = vmatprep.subr.bf16.mxu0 %v2030
        %2179 = vmatpush1.bf16.msra.mxu0 %v2029
        %2180 = vmatprep.subr.bf16.mxu0 %v2032
        %2181 = vmatpush1.bf16.msra.mxu0 %v2031
        %2182 = vmatprep.subr.bf16.mxu0 %v2034
        %2183 = vmatpush1.bf16.msra.mxu0 %v2033
        %2184 = vmatprep.subr.bf16.mxu0 %v2036
        %2185 = vmatpush1.bf16.msra.mxu0 %v2035
        %2186 = vmatprep.subr.bf16.mxu0 %v2038
        %2187 = vmatpush1.bf16.msra.mxu0 %v2037
        %2188 = vmatprep.subr.bf16.mxu0 %v2040
        %2189 = vmatpush1.bf16.msra.mxu0 %v2039
        %2190 = vmatprep.subr.bf16.mxu0 %v2042
        %2191 = vmatpush1.bf16.msra.mxu0 %v2041
        %2192 = vmatprep.subr.bf16.mxu0 %v2044
        %2193 = vmatpush1.bf16.msra.mxu0 %v2043
        %2194 = vmatprep.subr.bf16.mxu0 %v2046
        %2195 = vmatpush1.bf16.msra.mxu0 %v2045
        %2196 = vmatprep.subr.bf16.mxu0 %v2048
        %2197 = vmatpush1.bf16.msra.mxu0 %v2047
        %2198 = vmatprep.subr.bf16.mxu0 %v2050
        %2199 = vmatpush1.bf16.msra.mxu0 %v2049
        %2200 = vmatprep.subr.bf16.mxu0 %v2052
        %2201 = vmatpush1.bf16.msra.mxu0 %v2051
        %2202 = vmatprep.mubr.bf16.mxu0 %v1780
        %2203 = vmatmul.mubr.bf16.gmra.mrb[0].mxu0 %v1777
        %v2204 = vpop.f32.mrb[0].mxu0
        %v2205 = vadd.f32 %v2152, %v2204
        %v2206 = vpop.f32.mrb[0].mxu0
        %v2207 = vadd.f32 %v2154, %v2206
        %v2208 = vpop.f32.mrb[0].mxu0
        %v2209 = vadd.f32 %v2156, %v2208
        %v2210 = vpop.f32.mrb[0].mxu0
        %v2211 = vadd.f32 %v2158, %v2210
        %2212 = vmatprep.mubr.bf16.mxu0 %v1788
        %2213 = vmatmul.mubr.bf16.gmra.mrb[0].mxu0 %v1786
        %v2214 = vpop.f32.mrb[0].mxu0
        %v2215 = vadd.f32 %v2162, %v2214
        %v2216 = vpop.f32.mrb[0].mxu0
        %v2217 = vadd.f32 %v2164, %v2216
        %v2218 = vpop.f32.mrb[0].mxu0
        %v2219 = vadd.f32 %v2166, %v2218
        %v2220 = vpop.f32.mrb[0].mxu0
        %v2221 = vadd.f32 %v2168, %v2220
        %2222 = vdwg.mxu0
        %v2223 = vadd.f32 %v1673, %v2205
        %v2224 = vadd.f32 %v1675, %v2207
        %v2225 = vadd.f32 %v1677, %v2209
        %v2226 = vadd.f32 %v1679, %v2211
        %v2227 = vadd.f32 %v1683, %v2215
        %v2228 = vadd.f32 %v1685, %v2217
        %v2229 = vadd.f32 %v1687, %v2219
        %v2230 = vadd.f32 %v1689, %v2221
        %v2231 = vld [vmem:[#allocation2 + $0x40] sm:$0x33]
        %v2232 = vld [vmem:[#allocation2 + $0x48] sm:$0x33]
        %s2233 = scalar_lea.vmem [#allocation11], 1536
        %v2234 = vld [vmem:[%s2233] sm:$0xff]
        %v2235 = vld [vmem:[%s2233 + $0x8] sm:$0xff]
        %v2236 = vld [vmem:[%s2233 + $0x10] sm:$0xff]
        %v2237 = vld [vmem:[%s2233 + $0x18] sm:$0xff]
        %v2238 = vld [vmem:[%s2233 + $0x20] sm:$0xff]
        %v2239 = vld [vmem:[%s2233 + $0x28] sm:$0xff]
        %v2240 = vld [vmem:[%s2233 + $0x30] sm:$0xff]
        %v2241 = vld [vmem:[%s2233 + $0x38] sm:$0xff]
        %v2242 = vld [vmem:[%s2233 + $0x40] sm:$0xff]
        %v2243 = vld [vmem:[%s2233 + $0x48] sm:$0xff]
        %v2244 = vld [vmem:[%s2233 + $0x50] sm:$0xff]
        %v2245 = vld [vmem:[%s2233 + $0x58] sm:$0xff]
        %v2246 = vld [vmem:[%s2233 + $0x60] sm:$0xff]
        %v2247 = vld [vmem:[%s2233 + $0x68] sm:$0xff]
        %v2248 = vld [vmem:[%s2233 + $0x70] sm:$0xff]
        %v2249 = vld [vmem:[%s2233 + $0x78] sm:$0xff]
        %v2250 = vld [vmem:[%s2233 + $0x80] sm:$0xff]
        %v2251 = vld [vmem:[%s2233 + $0x88] sm:$0xff]
        %v2252 = vld [vmem:[%s2233 + $0x90] sm:$0xff]
        %v2253 = vld [vmem:[%s2233 + $0x98] sm:$0xff]
        %v2254 = vld [vmem:[%s2233 + $0xa0] sm:$0xff]
        %v2255 = vld [vmem:[%s2233 + $0xa8] sm:$0xff]
        %v2256 = vld [vmem:[%s2233 + $0xb0] sm:$0xff]
        %v2257 = vld [vmem:[%s2233 + $0xb8] sm:$0xff]
        %v2258 = vld [vmem:[%s2233 + $0xc0] sm:$0xff]
        %v2259 = vld [vmem:[%s2233 + $0xc8] sm:$0xff]
        %v2260 = vld [vmem:[%s2233 + $0xd0] sm:$0xff]
        %v2261 = vld [vmem:[%s2233 + $0xd8] sm:$0xff]
        %v2262 = vld [vmem:[%s2233 + $0xe0] sm:$0xff]
        %v2263 = vld [vmem:[%s2233 + $0xe8] sm:$0xff]
        %v2264 = vld [vmem:[%s2233 + $0xf0] sm:$0xff]
        %v2265 = vld [vmem:[%s2233 + $0xf8] sm:$0xff]
        %v2266 = vld [vmem:[%s2233 + $0x100] sm:$0xff]
        %v2267 = vld [vmem:[%s2233 + $0x108] sm:$0xff]
        %v2268 = vld [vmem:[%s2233 + $0x110] sm:$0xff]
        %v2269 = vld [vmem:[%s2233 + $0x118] sm:$0xff]
        %v2270 = vld [vmem:[%s2233 + $0x120] sm:$0xff]
        %v2271 = vld [vmem:[%s2233 + $0x128] sm:$0xff]
        %v2272 = vld [vmem:[%s2233 + $0x130] sm:$0xff]
        %v2273 = vld [vmem:[%s2233 + $0x138] sm:$0xff]
        %v2274 = vld [vmem:[%s2233 + $0x140] sm:$0xff]
        %v2275 = vld [vmem:[%s2233 + $0x148] sm:$0xff]
        %v2276 = vld [vmem:[%s2233 + $0x150] sm:$0xff]
        %v2277 = vld [vmem:[%s2233 + $0x158] sm:$0xff]
        %v2278 = vld [vmem:[%s2233 + $0x160] sm:$0xff]
        %v2279 = vld [vmem:[%s2233 + $0x168] sm:$0xff]
        %v2280 = vld [vmem:[%s2233 + $0x170] sm:$0xff]
        %v2281 = vld [vmem:[%s2233 + $0x178] sm:$0xff]
        %v2282 = vld [vmem:[%s2233 + $0x180] sm:$0xff]
        %v2283 = vld [vmem:[%s2233 + $0x188] sm:$0xff]
        %v2284 = vld [vmem:[%s2233 + $0x190] sm:$0xff]
        %v2285 = vld [vmem:[%s2233 + $0x198] sm:$0xff]
        %v2286 = vld [vmem:[%s2233 + $0x1a0] sm:$0xff]
        %v2287 = vld [vmem:[%s2233 + $0x1a8] sm:$0xff]
        %v2288 = vld [vmem:[%s2233 + $0x1b0] sm:$0xff]
        %v2289 = vld [vmem:[%s2233 + $0x1b8] sm:$0xff]
        %v2290 = vld [vmem:[%s2233 + $0x1c0] sm:$0xff]
        %v2291 = vld [vmem:[%s2233 + $0x1c8] sm:$0xff]
        %v2292 = vld [vmem:[%s2233 + $0x1d0] sm:$0xff]
        %v2293 = vld [vmem:[%s2233 + $0x1d8] sm:$0xff]
        %v2294 = vld [vmem:[%s2233 + $0x1e0] sm:$0xff]
        %v2295 = vld [vmem:[%s2233 + $0x1e8] sm:$0xff]
        %v2296 = vld [vmem:[%s2233 + $0x1f0] sm:$0xff]
        %v2297 = vld [vmem:[%s2233 + $0x1f8] sm:$0xff]
        %v2300 = vunpack.c.l.b16 %v2231
        %v2301 = vunpack.c.h.b16 %v2231
        %v2302 = vunpack.c.l.b16 %v2232
        %v2303 = vunpack.c.h.b16 %v2232
        %v2304 = vpack.c.b16 %v2300, %v2300
        %v2305 = vpack.c.b16 %v2301, %v2301
        %v2306 = vpack.c.b16 %v2302, %v2302
        %v2307 = vpack.c.b16 %v2303, %v2303
        %vm2308 = vsmask.f32 6400
        %v2310 = vshrl.u32 %v1764, 16
        %v2312 = vrot.slane %v2310, 1
        %v2313 = vshll.u32 %v1764, 16
        %v2315 = vrot.slane %v2313, 2
        %v2316 = vor.u32 %v2312, %v2315
        %v2317 = vrot.slane %v791, 1
        %v2318 = vrot.slane %v751, 2
        %v2319 = vor.u32 %v2317, %v2318
        %v2320 = vsel %vm2308, %v2316, %v2319
        %v2322 = vshrl.u32 %v1765, 16
        %v2324 = vrot.slane %v2322, 1
        %v2325 = vshll.u32 %v1765, 16
        %v2327 = vrot.slane %v2325, 2
        %v2328 = vor.u32 %v2324, %v2327
        %v2329 = vrot.slane %v799, 1
        %v2330 = vrot.slane %v763, 2
        %v2331 = vor.u32 %v2329, %v2330
        %v2332 = vsel %vm2308, %v2328, %v2331
        %v2334 = vshrl.u32 %v1766, 16
        %v2336 = vrot.slane %v2334, 1
        %v2337 = vshll.u32 %v1766, 16
        %v2339 = vrot.slane %v2337, 2
        %v2340 = vor.u32 %v2336, %v2339
        %v2341 = vrot.slane %v807, 1
        %v2342 = vrot.slane %v775, 2
        %v2343 = vor.u32 %v2341, %v2342
        %v2344 = vsel %vm2308, %v2340, %v2343
        %v2346 = vshrl.u32 %v1767, 16
        %v2348 = vrot.slane %v2346, 1
        %v2349 = vshll.u32 %v1767, 16
        %v2351 = vrot.slane %v2349, 2
        %v2352 = vor.u32 %v2348, %v2351
        %v2353 = vrot.slane %v815, 1
        %v2354 = vrot.slane %v787, 2
        %v2355 = vor.u32 %v2353, %v2354
        %v2356 = vsel %vm2308, %v2352, %v2355
        %v2358 = vshrl.u32 %v2304, 16
        %v2360 = vrot.slane %v2358, 1
        %v2361 = vshll.u32 %v2304, 16
        %v2363 = vrot.slane %v2361, 2
        %v2364 = vor.u32 %v2360, %v2363
        %v2365 = vsel %vm2308, %v2319, %v2364
        %v2367 = vshrl.u32 %v2305, 16
        %v2369 = vrot.slane %v2367, 1
        %v2370 = vshll.u32 %v2305, 16
        %v2372 = vrot.slane %v2370, 2
        %v2373 = vor.u32 %v2369, %v2372
        %v2374 = vsel %vm2308, %v2331, %v2373
        %v2376 = vshrl.u32 %v2306, 16
        %v2378 = vrot.slane %v2376, 1
        %v2379 = vshll.u32 %v2306, 16
        %v2381 = vrot.slane %v2379, 2
        %v2382 = vor.u32 %v2378, %v2381
        %v2383 = vsel %vm2308, %v2343, %v2382
        %v2385 = vshrl.u32 %v2307, 16
        %v2387 = vrot.slane %v2385, 1
        %v2388 = vshll.u32 %v2307, 16
        %v2390 = vrot.slane %v2388, 2
        %v2391 = vor.u32 %v2387, %v2390
        %v2392 = vsel %vm2308, %v2355, %v2391
        %v2465 = vunpack.c.l.b16 %v2234
        %v2466 = vunpack.c.h.b16 %v2234
        %v2467 = vunpack.c.l.b16 %v2235
        %v2468 = vunpack.c.h.b16 %v2235
        %v2469 = vunpack.c.l.b16 %v2236
        %v2470 = vunpack.c.h.b16 %v2236
        %v2471 = vunpack.c.l.b16 %v2237
        %v2472 = vunpack.c.h.b16 %v2237
        %v2473 = vunpack.c.l.b16 %v2238
        %v2474 = vunpack.c.h.b16 %v2238
        %v2475 = vunpack.c.l.b16 %v2239
        %v2476 = vunpack.c.h.b16 %v2239
        %v2477 = vunpack.c.l.b16 %v2240
        %v2478 = vunpack.c.h.b16 %v2240
        %v2479 = vunpack.c.l.b16 %v2241
        %v2480 = vunpack.c.h.b16 %v2241
        %v2481 = vunpack.c.l.b16 %v2242
        %v2482 = vunpack.c.h.b16 %v2242
        %v2483 = vunpack.c.l.b16 %v2243
        %v2484 = vunpack.c.h.b16 %v2243
        %v2485 = vunpack.c.l.b16 %v2244
        %v2486 = vunpack.c.h.b16 %v2244
        %v2487 = vunpack.c.l.b16 %v2245
        %v2488 = vunpack.c.h.b16 %v2245
        %v2489 = vunpack.c.l.b16 %v2246
        %v2490 = vunpack.c.h.b16 %v2246
        %v2491 = vunpack.c.l.b16 %v2247
        %v2492 = vunpack.c.h.b16 %v2247
        %v2493 = vunpack.c.l.b16 %v2248
        %v2494 = vunpack.c.h.b16 %v2248
        %v2495 = vunpack.c.l.b16 %v2249
        %v2496 = vunpack.c.h.b16 %v2249
        %v2497 = vunpack.c.l.b16 %v2250
        %v2498 = vunpack.c.h.b16 %v2250
        %v2499 = vunpack.c.l.b16 %v2251
        %v2500 = vunpack.c.h.b16 %v2251
        %v2501 = vunpack.c.l.b16 %v2252
        %v2502 = vunpack.c.h.b16 %v2252
        %v2503 = vunpack.c.l.b16 %v2253
        %v2504 = vunpack.c.h.b16 %v2253
        %v2505 = vunpack.c.l.b16 %v2254
        %v2506 = vunpack.c.h.b16 %v2254
        %v2507 = vunpack.c.l.b16 %v2255
        %v2508 = vunpack.c.h.b16 %v2255
        %v2509 = vunpack.c.l.b16 %v2256
        %v2510 = vunpack.c.h.b16 %v2256
        %v2511 = vunpack.c.l.b16 %v2257
        %v2512 = vunpack.c.h.b16 %v2257
        %v2513 = vunpack.c.l.b16 %v2258
        %v2514 = vunpack.c.h.b16 %v2258
        %v2515 = vunpack.c.l.b16 %v2259
        %v2516 = vunpack.c.h.b16 %v2259
        %v2517 = vunpack.c.l.b16 %v2260
        %v2518 = vunpack.c.h.b16 %v2260
        %v2519 = vunpack.c.l.b16 %v2261
        %v2520 = vunpack.c.h.b16 %v2261
        %v2521 = vunpack.c.l.b16 %v2262
        %v2522 = vunpack.c.h.b16 %v2262
        %v2523 = vunpack.c.l.b16 %v2263
        %v2524 = vunpack.c.h.b16 %v2263
        %v2525 = vunpack.c.l.b16 %v2264
        %v2526 = vunpack.c.h.b16 %v2264
        %v2527 = vunpack.c.l.b16 %v2265
        %v2528 = vunpack.c.h.b16 %v2265
        %v2529 = vunpack.c.l.b16 %v2266
        %v2530 = vunpack.c.h.b16 %v2266
        %v2531 = vunpack.c.l.b16 %v2267
        %v2532 = vunpack.c.h.b16 %v2267
        %v2533 = vunpack.c.l.b16 %v2268
        %v2534 = vunpack.c.h.b16 %v2268
        %v2535 = vunpack.c.l.b16 %v2269
        %v2536 = vunpack.c.h.b16 %v2269
        %v2537 = vunpack.c.l.b16 %v2270
        %v2538 = vunpack.c.h.b16 %v2270
        %v2539 = vunpack.c.l.b16 %v2271
        %v2540 = vunpack.c.h.b16 %v2271
        %v2541 = vunpack.c.l.b16 %v2272
        %v2542 = vunpack.c.h.b16 %v2272
        %v2543 = vunpack.c.l.b16 %v2273
        %v2544 = vunpack.c.h.b16 %v2273
        %v2545 = vunpack.c.l.b16 %v2274
        %v2546 = vunpack.c.h.b16 %v2274
        %v2547 = vunpack.c.l.b16 %v2275
        %v2548 = vunpack.c.h.b16 %v2275
        %v2549 = vunpack.c.l.b16 %v2276
        %v2550 = vunpack.c.h.b16 %v2276
        %v2551 = vunpack.c.l.b16 %v2277
        %v2552 = vunpack.c.h.b16 %v2277
        %v2553 = vunpack.c.l.b16 %v2278
        %v2554 = vunpack.c.h.b16 %v2278
        %v2555 = vunpack.c.l.b16 %v2279
        %v2556 = vunpack.c.h.b16 %v2279
        %v2557 = vunpack.c.l.b16 %v2280
        %v2558 = vunpack.c.h.b16 %v2280
        %v2559 = vunpack.c.l.b16 %v2281
        %v2560 = vunpack.c.h.b16 %v2281
        %v2561 = vunpack.c.l.b16 %v2282
        %v2562 = vunpack.c.h.b16 %v2282
        %v2563 = vunpack.c.l.b16 %v2283
        %v2564 = vunpack.c.h.b16 %v2283
        %v2565 = vunpack.c.l.b16 %v2284
        %v2566 = vunpack.c.h.b16 %v2284
        %v2567 = vunpack.c.l.b16 %v2285
        %v2568 = vunpack.c.h.b16 %v2285
        %v2569 = vunpack.c.l.b16 %v2286
        %v2570 = vunpack.c.h.b16 %v2286
        %v2571 = vunpack.c.l.b16 %v2287
        %v2572 = vunpack.c.h.b16 %v2287
        %v2573 = vunpack.c.l.b16 %v2288
        %v2574 = vunpack.c.h.b16 %v2288
        %v2575 = vunpack.c.l.b16 %v2289
        %v2576 = vunpack.c.h.b16 %v2289
        %v2577 = vunpack.c.l.b16 %v2290
        %v2578 = vunpack.c.h.b16 %v2290
        %v2579 = vunpack.c.l.b16 %v2291
        %v2580 = vunpack.c.h.b16 %v2291
        %v2581 = vunpack.c.l.b16 %v2292
        %v2582 = vunpack.c.h.b16 %v2292
        %v2583 = vunpack.c.l.b16 %v2293
        %v2584 = vunpack.c.h.b16 %v2293
        %v2585 = vunpack.c.l.b16 %v2294
        %v2586 = vunpack.c.h.b16 %v2294
        %v2587 = vunpack.c.l.b16 %v2295
        %v2588 = vunpack.c.h.b16 %v2295
        %v2589 = vunpack.c.l.b16 %v2296
        %v2590 = vunpack.c.h.b16 %v2296
        %v2591 = vunpack.c.l.b16 %v2297
        %v2592 = vunpack.c.h.b16 %v2297
        %v2593 = vpack.c.b16 %v2467, %v2465
        %v2594 = vpack.c.b16 %v2468, %v2466
        %v2595 = vpack.c.b16 %v2471, %v2469
        %v2596 = vpack.c.b16 %v2472, %v2470
        %v2597 = vpack.c.b16 %v2475, %v2473
        %v2598 = vpack.c.b16 %v2476, %v2474
        %v2599 = vpack.c.b16 %v2479, %v2477
        %v2600 = vpack.c.b16 %v2480, %v2478
        %v2601 = vpack.c.b16 %v2483, %v2481
        %v2602 = vpack.c.b16 %v2484, %v2482
        %v2603 = vpack.c.b16 %v2487, %v2485
        %v2604 = vpack.c.b16 %v2488, %v2486
        %v2605 = vpack.c.b16 %v2491, %v2489
        %v2606 = vpack.c.b16 %v2492, %v2490
        %v2607 = vpack.c.b16 %v2495, %v2493
        %v2608 = vpack.c.b16 %v2496, %v2494
        %v2609 = vpack.c.b16 %v2499, %v2497
        %v2610 = vpack.c.b16 %v2500, %v2498
        %v2611 = vpack.c.b16 %v2503, %v2501
        %v2612 = vpack.c.b16 %v2504, %v2502
        %v2613 = vpack.c.b16 %v2507, %v2505
        %v2614 = vpack.c.b16 %v2508, %v2506
        %v2615 = vpack.c.b16 %v2511, %v2509
        %v2616 = vpack.c.b16 %v2512, %v2510
        %v2617 = vpack.c.b16 %v2515, %v2513
        %v2618 = vpack.c.b16 %v2516, %v2514
        %v2619 = vpack.c.b16 %v2519, %v2517
        %v2620 = vpack.c.b16 %v2520, %v2518
        %v2621 = vpack.c.b16 %v2523, %v2521
        %v2622 = vpack.c.b16 %v2524, %v2522
        %v2623 = vpack.c.b16 %v2527, %v2525
        %v2624 = vpack.c.b16 %v2528, %v2526
        %v2625 = vpack.c.b16 %v2531, %v2529
        %v2626 = vpack.c.b16 %v2532, %v2530
        %v2627 = vpack.c.b16 %v2535, %v2533
        %v2628 = vpack.c.b16 %v2536, %v2534
        %v2629 = vpack.c.b16 %v2539, %v2537
        %v2630 = vpack.c.b16 %v2540, %v2538
        %v2631 = vpack.c.b16 %v2543, %v2541
        %v2632 = vpack.c.b16 %v2544, %v2542
        %v2633 = vpack.c.b16 %v2547, %v2545
        %v2634 = vpack.c.b16 %v2548, %v2546
        %v2635 = vpack.c.b16 %v2551, %v2549
        %v2636 = vpack.c.b16 %v2552, %v2550
        %v2637 = vpack.c.b16 %v2555, %v2553
        %v2638 = vpack.c.b16 %v2556, %v2554
        %v2639 = vpack.c.b16 %v2559, %v2557
        %v2640 = vpack.c.b16 %v2560, %v2558
        %v2641 = vpack.c.b16 %v2563, %v2561
        %v2642 = vpack.c.b16 %v2564, %v2562
        %v2643 = vpack.c.b16 %v2567, %v2565
        %v2644 = vpack.c.b16 %v2568, %v2566
        %v2645 = vpack.c.b16 %v2571, %v2569
        %v2646 = vpack.c.b16 %v2572, %v2570
        %v2647 = vpack.c.b16 %v2575, %v2573
        %v2648 = vpack.c.b16 %v2576, %v2574
        %v2649 = vpack.c.b16 %v2579, %v2577
        %v2650 = vpack.c.b16 %v2580, %v2578
        %v2651 = vpack.c.b16 %v2583, %v2581
        %v2652 = vpack.c.b16 %v2584, %v2582
        %v2653 = vpack.c.b16 %v2587, %v2585
        %v2654 = vpack.c.b16 %v2588, %v2586
        %v2655 = vpack.c.b16 %v2591, %v2589
        %v2656 = vpack.c.b16 %v2592, %v2590
        %2721 = vmatprep.subr.bf16.mxu0 %v2594
        %2722 = vmatpush1.bf16.msra.mxu0 %v2593
        %2723 = vmatprep.subr.bf16.mxu0 %v2596
        %2724 = vmatpush1.bf16.msra.mxu0 %v2595
        %2725 = vmatprep.subr.bf16.mxu0 %v2598
        %2726 = vmatpush1.bf16.msra.mxu0 %v2597
        %2727 = vmatprep.subr.bf16.mxu0 %v2600
        %2728 = vmatpush1.bf16.msra.mxu0 %v2599
        %2729 = vmatprep.subr.bf16.mxu0 %v2602
        %2730 = vmatpush1.bf16.msra.mxu0 %v2601
        %2731 = vmatprep.subr.bf16.mxu0 %v2604
        %2732 = vmatpush1.bf16.msra.mxu0 %v2603
        %2733 = vmatprep.subr.bf16.mxu0 %v2606
        %2734 = vmatpush1.bf16.msra.mxu0 %v2605
        %2735 = vmatprep.subr.bf16.mxu0 %v2608
        %2736 = vmatpush1.bf16.msra.mxu0 %v2607
        %2737 = vmatprep.subr.bf16.mxu0 %v2610
        %2738 = vmatpush1.bf16.msra.mxu0 %v2609
        %2739 = vmatprep.subr.bf16.mxu0 %v2612
        %2740 = vmatpush1.bf16.msra.mxu0 %v2611
        %2741 = vmatprep.subr.bf16.mxu0 %v2614
        %2742 = vmatpush1.bf16.msra.mxu0 %v2613
        %2743 = vmatprep.subr.bf16.mxu0 %v2616
        %2744 = vmatpush1.bf16.msra.mxu0 %v2615
        %2745 = vmatprep.subr.bf16.mxu0 %v2618
        %2746 = vmatpush1.bf16.msra.mxu0 %v2617
        %2747 = vmatprep.subr.bf16.mxu0 %v2620
        %2748 = vmatpush1.bf16.msra.mxu0 %v2619
        %2749 = vmatprep.subr.bf16.mxu0 %v2622
        %2750 = vmatpush1.bf16.msra.mxu0 %v2621
        %2751 = vmatprep.subr.bf16.mxu0 %v2624
        %2752 = vmatpush1.bf16.msra.mxu0 %v2623
        %2753 = vmatprep.mubr.bf16.mxu0 %v2332
        %2754 = vmatmul.mubr.bf16.gmra.mrb[0].mxu0 %v2320
        %v2755 = vpop.f32.mrb[0].mxu0
        %v2756 = vadd.f32 0.0, %v2755
        %v2757 = vpop.f32.mrb[0].mxu0
        %v2758 = vadd.f32 0.0, %v2757
        %v2759 = vpop.f32.mrb[0].mxu0
        %v2760 = vadd.f32 0.0, %v2759
        %v2761 = vpop.f32.mrb[0].mxu0
        %v2762 = vadd.f32 0.0, %v2761
        %2763 = vmatprep.mubr.bf16.mxu0 %v2374
        %2764 = vmatmul.mubr.bf16.gmra.mrb[0].mxu0 %v2365
        %v2765 = vpop.f32.mrb[0].mxu0
        %v2766 = vadd.f32 0.0, %v2765
        %v2767 = vpop.f32.mrb[0].mxu0
        %v2768 = vadd.f32 0.0, %v2767
        %v2769 = vpop.f32.mrb[0].mxu0
        %v2770 = vadd.f32 0.0, %v2769
        %v2771 = vpop.f32.mrb[0].mxu0
        %v2772 = vadd.f32 0.0, %v2771
        %2773 = vdwg.mxu0
        %2774 = vmatprep.subr.bf16.mxu0 %v2626
        %2775 = vmatpush1.bf16.msra.mxu0 %v2625
        %2776 = vmatprep.subr.bf16.mxu0 %v2628
        %2777 = vmatpush1.bf16.msra.mxu0 %v2627
        %2778 = vmatprep.subr.bf16.mxu0 %v2630
        %2779 = vmatpush1.bf16.msra.mxu0 %v2629
        %2780 = vmatprep.subr.bf16.mxu0 %v2632
        %2781 = vmatpush1.bf16.msra.mxu0 %v2631
        %2782 = vmatprep.subr.bf16.mxu0 %v2634
        %2783 = vmatpush1.bf16.msra.mxu0 %v2633
        %2784 = vmatprep.subr.bf16.mxu0 %v2636
        %2785 = vmatpush1.bf16.msra.mxu0 %v2635
        %2786 = vmatprep.subr.bf16.mxu0 %v2638
        %2787 = vmatpush1.bf16.msra.mxu0 %v2637
        %2788 = vmatprep.subr.bf16.mxu0 %v2640
        %2789 = vmatpush1.bf16.msra.mxu0 %v2639
        %2790 = vmatprep.subr.bf16.mxu0 %v2642
        %2791 = vmatpush1.bf16.msra.mxu0 %v2641
        %2792 = vmatprep.subr.bf16.mxu0 %v2644
        %2793 = vmatpush1.bf16.msra.mxu0 %v2643
        %2794 = vmatprep.subr.bf16.mxu0 %v2646
        %2795 = vmatpush1.bf16.msra.mxu0 %v2645
        %2796 = vmatprep.subr.bf16.mxu0 %v2648
        %2797 = vmatpush1.bf16.msra.mxu0 %v2647
        %2798 = vmatprep.subr.bf16.mxu0 %v2650
        %2799 = vmatpush1.bf16.msra.mxu0 %v2649
        %2800 = vmatprep.subr.bf16.mxu0 %v2652
        %2801 = vmatpush1.bf16.msra.mxu0 %v2651
        %2802 = vmatprep.subr.bf16.mxu0 %v2654
        %2803 = vmatpush1.bf16.msra.mxu0 %v2653
        %2804 = vmatprep.subr.bf16.mxu0 %v2656
        %2805 = vmatpush1.bf16.msra.mxu0 %v2655
        %2806 = vmatprep.mubr.bf16.mxu0 %v2356
        %2807 = vmatmul.mubr.bf16.gmra.mrb[0].mxu0 %v2344
        %v2808 = vpop.f32.mrb[0].mxu0
        %v2809 = vadd.f32 %v2756, %v2808
        %v2810 = vpop.f32.mrb[0].mxu0
        %v2811 = vadd.f32 %v2758, %v2810
        %v2812 = vpop.f32.mrb[0].mxu0
        %v2813 = vadd.f32 %v2760, %v2812
        %v2814 = vpop.f32.mrb[0].mxu0
        %v2815 = vadd.f32 %v2762, %v2814
        %2816 = vmatprep.mubr.bf16.mxu0 %v2392
        %2817 = vmatmul.mubr.bf16.gmra.mrb[0].mxu0 %v2383
        %v2818 = vpop.f32.mrb[0].mxu0
        %v2819 = vadd.f32 %v2766, %v2818
        %v2820 = vpop.f32.mrb[0].mxu0
        %v2821 = vadd.f32 %v2768, %v2820
        %v2822 = vpop.f32.mrb[0].mxu0
        %v2823 = vadd.f32 %v2770, %v2822
        %v2824 = vpop.f32.mrb[0].mxu0
        %v2825 = vadd.f32 %v2772, %v2824
        %2826 = vdwg.mxu0
        %v2827 = vadd.f32 %v2223, %v2809
        %v2828 = vadd.f32 %v2224, %v2811
        %v2829 = vadd.f32 %v2225, %v2813
        %v2830 = vadd.f32 %v2226, %v2815
        %v2831 = vadd.f32 %v2227, %v2819
        %v2832 = vadd.f32 %v2228, %v2821
        %v2833 = vadd.f32 %v2229, %v2823
        %v2834 = vadd.f32 %v2230, %v2825
        %v2835 = vld [vmem:[#allocation2] sm:$0xcc]
        %v2836 = vld [vmem:[#allocation2 + $0x8] sm:$0xcc]
        %s2837 = scalar_lea.vmem [#allocation11], 2048
        %v2838 = vld [vmem:[%s2837] sm:$0xff]
        %v2839 = vld [vmem:[%s2837 + $0x8] sm:$0xff]
        %v2840 = vld [vmem:[%s2837 + $0x10] sm:$0xff]
        %v2841 = vld [vmem:[%s2837 + $0x18] sm:$0xff]
        %v2842 = vld [vmem:[%s2837 + $0x20] sm:$0xff]
        %v2843 = vld [vmem:[%s2837 + $0x28] sm:$0xff]
        %v2844 = vld [vmem:[%s2837 + $0x30] sm:$0xff]
        %v2845 = vld [vmem:[%s2837 + $0x38] sm:$0xff]
        %v2846 = vld [vmem:[%s2837 + $0x40] sm:$0xff]
        %v2847 = vld [vmem:[%s2837 + $0x48] sm:$0xff]
        %v2848 = vld [vmem:[%s2837 + $0x50] sm:$0xff]
        %v2849 = vld [vmem:[%s2837 + $0x58] sm:$0xff]
        %v2850 = vld [vmem:[%s2837 + $0x60] sm:$0xff]
        %v2851 = vld [vmem:[%s2837 + $0x68] sm:$0xff]
        %v2852 = vld [vmem:[%s2837 + $0x70] sm:$0xff]
        %v2853 = vld [vmem:[%s2837 + $0x78] sm:$0xff]
        %v2854 = vld [vmem:[%s2837 + $0x80] sm:$0xff]
        %v2855 = vld [vmem:[%s2837 + $0x88] sm:$0xff]
        %v2856 = vld [vmem:[%s2837 + $0x90] sm:$0xff]
        %v2857 = vld [vmem:[%s2837 + $0x98] sm:$0xff]
        %v2858 = vld [vmem:[%s2837 + $0xa0] sm:$0xff]
        %v2859 = vld [vmem:[%s2837 + $0xa8] sm:$0xff]
        %v2860 = vld [vmem:[%s2837 + $0xb0] sm:$0xff]
        %v2861 = vld [vmem:[%s2837 + $0xb8] sm:$0xff]
        %v2862 = vld [vmem:[%s2837 + $0xc0] sm:$0xff]
        %v2863 = vld [vmem:[%s2837 + $0xc8] sm:$0xff]
        %v2864 = vld [vmem:[%s2837 + $0xd0] sm:$0xff]
        %v2865 = vld [vmem:[%s2837 + $0xd8] sm:$0xff]
        %v2866 = vld [vmem:[%s2837 + $0xe0] sm:$0xff]
        %v2867 = vld [vmem:[%s2837 + $0xe8] sm:$0xff]
        %v2868 = vld [vmem:[%s2837 + $0xf0] sm:$0xff]
        %v2869 = vld [vmem:[%s2837 + $0xf8] sm:$0xff]
        %v2870 = vld [vmem:[%s2837 + $0x100] sm:$0xff]
        %v2871 = vld [vmem:[%s2837 + $0x108] sm:$0xff]
        %v2872 = vld [vmem:[%s2837 + $0x110] sm:$0xff]
        %v2873 = vld [vmem:[%s2837 + $0x118] sm:$0xff]
        %v2874 = vld [vmem:[%s2837 + $0x120] sm:$0xff]
        %v2875 = vld [vmem:[%s2837 + $0x128] sm:$0xff]
        %v2876 = vld [vmem:[%s2837 + $0x130] sm:$0xff]
        %v2877 = vld [vmem:[%s2837 + $0x138] sm:$0xff]
        %v2878 = vld [vmem:[%s2837 + $0x140] sm:$0xff]
        %v2879 = vld [vmem:[%s2837 + $0x148] sm:$0xff]
        %v2880 = vld [vmem:[%s2837 + $0x150] sm:$0xff]
        %v2881 = vld [vmem:[%s2837 + $0x158] sm:$0xff]
        %v2882 = vld [vmem:[%s2837 + $0x160] sm:$0xff]
        %v2883 = vld [vmem:[%s2837 + $0x168] sm:$0xff]
        %v2884 = vld [vmem:[%s2837 + $0x170] sm:$0xff]
        %v2885 = vld [vmem:[%s2837 + $0x178] sm:$0xff]
        %v2886 = vld [vmem:[%s2837 + $0x180] sm:$0xff]
        %v2887 = vld [vmem:[%s2837 + $0x188] sm:$0xff]
        %v2888 = vld [vmem:[%s2837 + $0x190] sm:$0xff]
        %v2889 = vld [vmem:[%s2837 + $0x198] sm:$0xff]
        %v2890 = vld [vmem:[%s2837 + $0x1a0] sm:$0xff]
        %v2891 = vld [vmem:[%s2837 + $0x1a8] sm:$0xff]
        %v2892 = vld [vmem:[%s2837 + $0x1b0] sm:$0xff]
        %v2893 = vld [vmem:[%s2837 + $0x1b8] sm:$0xff]
        %v2894 = vld [vmem:[%s2837 + $0x1c0] sm:$0xff]
        %v2895 = vld [vmem:[%s2837 + $0x1c8] sm:$0xff]
        %v2896 = vld [vmem:[%s2837 + $0x1d0] sm:$0xff]
        %v2897 = vld [vmem:[%s2837 + $0x1d8] sm:$0xff]
        %v2898 = vld [vmem:[%s2837 + $0x1e0] sm:$0xff]
        %v2899 = vld [vmem:[%s2837 + $0x1e8] sm:$0xff]
        %v2900 = vld [vmem:[%s2837 + $0x1f0] sm:$0xff]
        %v2901 = vld [vmem:[%s2837 + $0x1f8] sm:$0xff]
        %v2904 = vunpack.c.l.b16 %v2835
        %v2905 = vunpack.c.h.b16 %v2835
        %v2906 = vunpack.c.l.b16 %v2836
        %v2907 = vunpack.c.h.b16 %v2836
        %v2908 = vpack.c.b16 %v714, %v2904
        %v2909 = vpack.c.b16 %v715, %v2905
        %v2910 = vpack.c.b16 %v716, %v2906
        %v2911 = vpack.c.b16 %v717, %v2907
        %vm2912 = vcmask 1045504
        %v2913 = vrot.slane %v2908, 2
        %v2914 = vrot.slane %v734, 2
        %v2915 = vsel %vm2912, %v2913, %v2914
        %v2916 = vrot.slane %v2909, 2
        %v2917 = vrot.slane %v735, 2
        %v2918 = vsel %vm2912, %v2916, %v2917
        %v2919 = vrot.slane %v2910, 2
        %v2920 = vrot.slane %v736, 2
        %v2921 = vsel %vm2912, %v2919, %v2920
        %v2922 = vrot.slane %v2911, 2
        %v2923 = vrot.slane %v737, 2
        %v2924 = vsel %vm2912, %v2922, %v2923
        %v2925 = vrot.slane %v2304, 2
        %v2926 = vsel %vm2912, %v2914, %v2925
        %v2927 = vrot.slane %v2305, 2
        %v2928 = vsel %vm2912, %v2917, %v2927
        %v2929 = vrot.slane %v2306, 2
        %v2930 = vsel %vm2912, %v2920, %v2929
        %v2931 = vrot.slane %v2307, 2
        %v2932 = vsel %vm2912, %v2923, %v2931
        %v3005 = vunpack.c.l.b16 %v2838
        %v3006 = vunpack.c.h.b16 %v2838
        %v3007 = vunpack.c.l.b16 %v2839
        %v3008 = vunpack.c.h.b16 %v2839
        %v3009 = vunpack.c.l.b16 %v2840
        %v3010 = vunpack.c.h.b16 %v2840
        %v3011 = vunpack.c.l.b16 %v2841
        %v3012 = vunpack.c.h.b16 %v2841
        %v3013 = vunpack.c.l.b16 %v2842
        %v3014 = vunpack.c.h.b16 %v2842
        %v3015 = vunpack.c.l.b16 %v2843
        %v3016 = vunpack.c.h.b16 %v2843
        %v3017 = vunpack.c.l.b16 %v2844
        %v3018 = vunpack.c.h.b16 %v2844
        %v3019 = vunpack.c.l.b16 %v2845
        %v3020 = vunpack.c.h.b16 %v2845
        %v3021 = vunpack.c.l.b16 %v2846
        %v3022 = vunpack.c.h.b16 %v2846
        %v3023 = vunpack.c.l.b16 %v2847
        %v3024 = vunpack.c.h.b16 %v2847
        %v3025 = vunpack.c.l.b16 %v2848
        %v3026 = vunpack.c.h.b16 %v2848
        %v3027 = vunpack.c.l.b16 %v2849
        %v3028 = vunpack.c.h.b16 %v2849
        %v3029 = vunpack.c.l.b16 %v2850
        %v3030 = vunpack.c.h.b16 %v2850
        %v3031 = vunpack.c.l.b16 %v2851
        %v3032 = vunpack.c.h.b16 %v2851
        %v3033 = vunpack.c.l.b16 %v2852
        %v3034 = vunpack.c.h.b16 %v2852
        %v3035 = vunpack.c.l.b16 %v2853
        %v3036 = vunpack.c.h.b16 %v2853
        %v3037 = vunpack.c.l.b16 %v2854
        %v3038 = vunpack.c.h.b16 %v2854
        %v3039 = vunpack.c.l.b16 %v2855
        %v3040 = vunpack.c.h.b16 %v2855
        %v3041 = vunpack.c.l.b16 %v2856
        %v3042 = vunpack.c.h.b16 %v2856
        %v3043 = vunpack.c.l.b16 %v2857
        %v3044 = vunpack.c.h.b16 %v2857
        %v3045 = vunpack.c.l.b16 %v2858
        %v3046 = vunpack.c.h.b16 %v2858
        %v3047 = vunpack.c.l.b16 %v2859
        %v3048 = vunpack.c.h.b16 %v2859
        %v3049 = vunpack.c.l.b16 %v2860
        %v3050 = vunpack.c.h.b16 %v2860
        %v3051 = vunpack.c.l.b16 %v2861
        %v3052 = vunpack.c.h.b16 %v2861
        %v3053 = vunpack.c.l.b16 %v2862
        %v3054 = vunpack.c.h.b16 %v2862
        %v3055 = vunpack.c.l.b16 %v2863
        %v3056 = vunpack.c.h.b16 %v2863
        %v3057 = vunpack.c.l.b16 %v2864
        %v3058 = vunpack.c.h.b16 %v2864
        %v3059 = vunpack.c.l.b16 %v2865
        %v3060 = vunpack.c.h.b16 %v2865
        %v3061 = vunpack.c.l.b16 %v2866
        %v3062 = vunpack.c.h.b16 %v2866
        %v3063 = vunpack.c.l.b16 %v2867
        %v3064 = vunpack.c.h.b16 %v2867
        %v3065 = vunpack.c.l.b16 %v2868
        %v3066 = vunpack.c.h.b16 %v2868
        %v3067 = vunpack.c.l.b16 %v2869
        %v3068 = vunpack.c.h.b16 %v2869
        %v3069 = vunpack.c.l.b16 %v2870
        %v3070 = vunpack.c.h.b16 %v2870
        %v3071 = vunpack.c.l.b16 %v2871
        %v3072 = vunpack.c.h.b16 %v2871
        %v3073 = vunpack.c.l.b16 %v2872
        %v3074 = vunpack.c.h.b16 %v2872
        %v3075 = vunpack.c.l.b16 %v2873
        %v3076 = vunpack.c.h.b16 %v2873
        %v3077 = vunpack.c.l.b16 %v2874
        %v3078 = vunpack.c.h.b16 %v2874
        %v3079 = vunpack.c.l.b16 %v2875
        %v3080 = vunpack.c.h.b16 %v2875
        %v3081 = vunpack.c.l.b16 %v2876
        %v3082 = vunpack.c.h.b16 %v2876
        %v3083 = vunpack.c.l.b16 %v2877
        %v3084 = vunpack.c.h.b16 %v2877
        %v3085 = vunpack.c.l.b16 %v2878
        %v3086 = vunpack.c.h.b16 %v2878
        %v3087 = vunpack.c.l.b16 %v2879
        %v3088 = vunpack.c.h.b16 %v2879
        %v3089 = vunpack.c.l.b16 %v2880
        %v3090 = vunpack.c.h.b16 %v2880
        %v3091 = vunpack.c.l.b16 %v2881
        %v3092 = vunpack.c.h.b16 %v2881
        %v3093 = vunpack.c.l.b16 %v2882
        %v3094 = vunpack.c.h.b16 %v2882
        %v3095 = vunpack.c.l.b16 %v2883
        %v3096 = vunpack.c.h.b16 %v2883
        %v3097 = vunpack.c.l.b16 %v2884
        %v3098 = vunpack.c.h.b16 %v2884
        %v3099 = vunpack.c.l.b16 %v2885
        %v3100 = vunpack.c.h.b16 %v2885
        %v3101 = vunpack.c.l.b16 %v2886
        %v3102 = vunpack.c.h.b16 %v2886
        %v3103 = vunpack.c.l.b16 %v2887
        %v3104 = vunpack.c.h.b16 %v2887
        %v3105 = vunpack.c.l.b16 %v2888
        %v3106 = vunpack.c.h.b16 %v2888
        %v3107 = vunpack.c.l.b16 %v2889
        %v3108 = vunpack.c.h.b16 %v2889
        %v3109 = vunpack.c.l.b16 %v2890
        %v3110 = vunpack.c.h.b16 %v2890
        %v3111 = vunpack.c.l.b16 %v2891
        %v3112 = vunpack.c.h.b16 %v2891
        %v3113 = vunpack.c.l.b16 %v2892
        %v3114 = vunpack.c.h.b16 %v2892
        %v3115 = vunpack.c.l.b16 %v2893
        %v3116 = vunpack.c.h.b16 %v2893
        %v3117 = vunpack.c.l.b16 %v2894
        %v3118 = vunpack.c.h.b16 %v2894
        %v3119 = vunpack.c.l.b16 %v2895
        %v3120 = vunpack.c.h.b16 %v2895
        %v3121 = vunpack.c.l.b16 %v2896
        %v3122 = vunpack.c.h.b16 %v2896
        %v3123 = vunpack.c.l.b16 %v2897
        %v3124 = vunpack.c.h.b16 %v2897
        %v3125 = vunpack.c.l.b16 %v2898
        %v3126 = vunpack.c.h.b16 %v2898
        %v3127 = vunpack.c.l.b16 %v2899
        %v3128 = vunpack.c.h.b16 %v2899
        %v3129 = vunpack.c.l.b16 %v2900
        %v3130 = vunpack.c.h.b16 %v2900
        %v3131 = vunpack.c.l.b16 %v2901
        %v3132 = vunpack.c.h.b16 %v2901
        %v3133 = vpack.c.b16 %v3007, %v3005
        %v3134 = vpack.c.b16 %v3008, %v3006
        %v3135 = vpack.c.b16 %v3011, %v3009
        %v3136 = vpack.c.b16 %v3012, %v3010
        %v3137 = vpack.c.b16 %v3015, %v3013
        %v3138 = vpack.c.b16 %v3016, %v3014
        %v3139 = vpack.c.b16 %v3019, %v3017
        %v3140 = vpack.c.b16 %v3020, %v3018
        %v3141 = vpack.c.b16 %v3023, %v3021
        %v3142 = vpack.c.b16 %v3024, %v3022
        %v3143 = vpack.c.b16 %v3027, %v3025
        %v3144 = vpack.c.b16 %v3028, %v3026
        %v3145 = vpack.c.b16 %v3031, %v3029
        %v3146 = vpack.c.b16 %v3032, %v3030
        %v3147 = vpack.c.b16 %v3035, %v3033
        %v3148 = vpack.c.b16 %v3036, %v3034
        %v3149 = vpack.c.b16 %v3039, %v3037
        %v3150 = vpack.c.b16 %v3040, %v3038
        %v3151 = vpack.c.b16 %v3043, %v3041
        %v3152 = vpack.c.b16 %v3044, %v3042
        %v3153 = vpack.c.b16 %v3047, %v3045
        %v3154 = vpack.c.b16 %v3048, %v3046
        %v3155 = vpack.c.b16 %v3051, %v3049
        %v3156 = vpack.c.b16 %v3052, %v3050
        %v3157 = vpack.c.b16 %v3055, %v3053
        %v3158 = vpack.c.b16 %v3056, %v3054
        %v3159 = vpack.c.b16 %v3059, %v3057
        %v3160 = vpack.c.b16 %v3060, %v3058
        %v3161 = vpack.c.b16 %v3063, %v3061
        %v3162 = vpack.c.b16 %v3064, %v3062
        %v3163 = vpack.c.b16 %v3067, %v3065
        %v3164 = vpack.c.b16 %v3068, %v3066
        %v3165 = vpack.c.b16 %v3071, %v3069
        %v3166 = vpack.c.b16 %v3072, %v3070
        %v3167 = vpack.c.b16 %v3075, %v3073
        %v3168 = vpack.c.b16 %v3076, %v3074
        %v3169 = vpack.c.b16 %v3079, %v3077
        %v3170 = vpack.c.b16 %v3080, %v3078
        %v3171 = vpack.c.b16 %v3083, %v3081
        %v3172 = vpack.c.b16 %v3084, %v3082
        %v3173 = vpack.c.b16 %v3087, %v3085
        %v3174 = vpack.c.b16 %v3088, %v3086
        %v3175 = vpack.c.b16 %v3091, %v3089
        %v3176 = vpack.c.b16 %v3092, %v3090
        %v3177 = vpack.c.b16 %v3095, %v3093
        %v3178 = vpack.c.b16 %v3096, %v3094
        %v3179 = vpack.c.b16 %v3099, %v3097
        %v3180 = vpack.c.b16 %v3100, %v3098
        %v3181 = vpack.c.b16 %v3103, %v3101
        %v3182 = vpack.c.b16 %v3104, %v3102
        %v3183 = vpack.c.b16 %v3107, %v3105
        %v3184 = vpack.c.b16 %v3108, %v3106
        %v3185 = vpack.c.b16 %v3111, %v3109
        %v3186 = vpack.c.b16 %v3112, %v3110
        %v3187 = vpack.c.b16 %v3115, %v3113
        %v3188 = vpack.c.b16 %v3116, %v3114
        %v3189 = vpack.c.b16 %v3119, %v3117
        %v3190 = vpack.c.b16 %v3120, %v3118
        %v3191 = vpack.c.b16 %v3123, %v3121
        %v3192 = vpack.c.b16 %v3124, %v3122
        %v3193 = vpack.c.b16 %v3127, %v3125
        %v3194 = vpack.c.b16 %v3128, %v3126
        %v3195 = vpack.c.b16 %v3131, %v3129
        %v3196 = vpack.c.b16 %v3132, %v3130
        %3261 = vmatprep.subr.bf16.mxu0 %v3134
        %3262 = vmatpush1.bf16.msra.mxu0 %v3133
        %3263 = vmatprep.subr.bf16.mxu0 %v3136
        %3264 = vmatpush1.bf16.msra.mxu0 %v3135
        %3265 = vmatprep.subr.bf16.mxu0 %v3138
        %3266 = vmatpush1.bf16.msra.mxu0 %v3137
        %3267 = vmatprep.subr.bf16.mxu0 %v3140
        %3268 = vmatpush1.bf16.msra.mxu0 %v3139
        %3269 = vmatprep.subr.bf16.mxu0 %v3142
        %3270 = vmatpush1.bf16.msra.mxu0 %v3141
        %3271 = vmatprep.subr.bf16.mxu0 %v3144
        %3272 = vmatpush1.bf16.msra.mxu0 %v3143
        %3273 = vmatprep.subr.bf16.mxu0 %v3146
        %3274 = vmatpush1.bf16.msra.mxu0 %v3145
        %3275 = vmatprep.subr.bf16.mxu0 %v3148
        %3276 = vmatpush1.bf16.msra.mxu0 %v3147
        %3277 = vmatprep.subr.bf16.mxu0 %v3150
        %3278 = vmatpush1.bf16.msra.mxu0 %v3149
        %3279 = vmatprep.subr.bf16.mxu0 %v3152
        %3280 = vmatpush1.bf16.msra.mxu0 %v3151
        %3281 = vmatprep.subr.bf16.mxu0 %v3154
        %3282 = vmatpush1.bf16.msra.mxu0 %v3153
        %3283 = vmatprep.subr.bf16.mxu0 %v3156
        %3284 = vmatpush1.bf16.msra.mxu0 %v3155
        %3285 = vmatprep.subr.bf16.mxu0 %v3158
        %3286 = vmatpush1.bf16.msra.mxu0 %v3157
        %3287 = vmatprep.subr.bf16.mxu0 %v3160
        %3288 = vmatpush1.bf16.msra.mxu0 %v3159
        %3289 = vmatprep.subr.bf16.mxu0 %v3162
        %3290 = vmatpush1.bf16.msra.mxu0 %v3161
        %3291 = vmatprep.subr.bf16.mxu0 %v3164
        %3292 = vmatpush1.bf16.msra.mxu0 %v3163
        %3293 = vmatprep.mubr.bf16.mxu0 %v2918
        %3294 = vmatmul.mubr.bf16.gmra.mrb[0].mxu0 %v2915
        %v3295 = vpop.f32.mrb[0].mxu0
        %v3296 = vadd.f32 0.0, %v3295
        %v3297 = vpop.f32.mrb[0].mxu0
        %v3298 = vadd.f32 0.0, %v3297
        %v3299 = vpop.f32.mrb[0].mxu0
        %v3300 = vadd.f32 0.0, %v3299
        %v3301 = vpop.f32.mrb[0].mxu0
        %v3302 = vadd.f32 0.0, %v3301
        %3303 = vmatprep.mubr.bf16.mxu0 %v2928
        %3304 = vmatmul.mubr.bf16.gmra.mrb[0].mxu0 %v2926
        %v3305 = vpop.f32.mrb[0].mxu0
        %v3306 = vadd.f32 0.0, %v3305
        %v3307 = vpop.f32.mrb[0].mxu0
        %v3308 = vadd.f32 0.0, %v3307
        %v3309 = vpop.f32.mrb[0].mxu0
        %v3310 = vadd.f32 0.0, %v3309
        %v3311 = vpop.f32.mrb[0].mxu0
        %v3312 = vadd.f32 0.0, %v3311
        %3313 = vdwg.mxu0
        %3314 = vmatprep.subr.bf16.mxu0 %v3166
        %3315 = vmatpush1.bf16.msra.mxu0 %v3165
        %3316 = vmatprep.subr.bf16.mxu0 %v3168
        %3317 = vmatpush1.bf16.msra.mxu0 %v3167
        %3318 = vmatprep.subr.bf16.mxu0 %v3170
        %3319 = vmatpush1.bf16.msra.mxu0 %v3169
        %3320 = vmatprep.subr.bf16.mxu0 %v3172
        %3321 = vmatpush1.bf16.msra.mxu0 %v3171
        %3322 = vmatprep.subr.bf16.mxu0 %v3174
        %3323 = vmatpush1.bf16.msra.mxu0 %v3173
        %3324 = vmatprep.subr.bf16.mxu0 %v3176
        %3325 = vmatpush1.bf16.msra.mxu0 %v3175
        %3326 = vmatprep.subr.bf16.mxu0 %v3178
        %3327 = vmatpush1.bf16.msra.mxu0 %v3177
        %3328 = vmatprep.subr.bf16.mxu0 %v3180
        %3329 = vmatpush1.bf16.msra.mxu0 %v3179
        %3330 = vmatprep.subr.bf16.mxu0 %v3182
        %3331 = vmatpush1.bf16.msra.mxu0 %v3181
        %3332 = vmatprep.subr.bf16.mxu0 %v3184
        %3333 = vmatpush1.bf16.msra.mxu0 %v3183
        %3334 = vmatprep.subr.bf16.mxu0 %v3186
        %3335 = vmatpush1.bf16.msra.mxu0 %v3185
        %3336 = vmatprep.subr.bf16.mxu0 %v3188
        %3337 = vmatpush1.bf16.msra.mxu0 %v3187
        %3338 = vmatprep.subr.bf16.mxu0 %v3190
        %3339 = vmatpush1.bf16.msra.mxu0 %v3189
        %3340 = vmatprep.subr.bf16.mxu0 %v3192
        %3341 = vmatpush1.bf16.msra.mxu0 %v3191
        %3342 = vmatprep.subr.bf16.mxu0 %v3194
        %3343 = vmatpush1.bf16.msra.mxu0 %v3193
        %3344 = vmatprep.subr.bf16.mxu0 %v3196
        %3345 = vmatpush1.bf16.msra.mxu0 %v3195
        %3346 = vmatprep.mubr.bf16.mxu0 %v2924
        %3347 = vmatmul.mubr.bf16.gmra.mrb[0].mxu0 %v2921
        %v3348 = vpop.f32.mrb[0].mxu0
        %v3349 = vadd.f32 %v3296, %v3348
        %v3350 = vpop.f32.mrb[0].mxu0
        %v3351 = vadd.f32 %v3298, %v3350
        %v3352 = vpop.f32.mrb[0].mxu0
        %v3353 = vadd.f32 %v3300, %v3352
        %v3354 = vpop.f32.mrb[0].mxu0
        %v3355 = vadd.f32 %v3302, %v3354
        %3356 = vmatprep.mubr.bf16.mxu0 %v2932
        %3357 = vmatmul.mubr.bf16.gmra.mrb[0].mxu0 %v2930
        %v3358 = vpop.f32.mrb[0].mxu0
        %v3359 = vadd.f32 %v3306, %v3358
        %v3360 = vpop.f32.mrb[0].mxu0
        %v3361 = vadd.f32 %v3308, %v3360
        %v3362 = vpop.f32.mrb[0].mxu0
        %v3363 = vadd.f32 %v3310, %v3362
        %v3364 = vpop.f32.mrb[0].mxu0
        %v3365 = vadd.f32 %v3312, %v3364
        %3366 = vdwg.mxu0
        %v3367 = vadd.f32 %v2827, %v3349
        %v3368 = vadd.f32 %v2828, %v3351
        %v3369 = vadd.f32 %v2829, %v3353
        %v3370 = vadd.f32 %v2830, %v3355
        %v3371 = vadd.f32 %v2831, %v3359
        %v3372 = vadd.f32 %v2832, %v3361
        %v3373 = vadd.f32 %v2833, %v3363
        %v3374 = vadd.f32 %v2834, %v3365
        %v3375 = vld [vmem:[#allocation3] sm:$0xf]
        %v3376 = vld [vmem:[#allocation3 + $0x4] sm:$0xf]
        %v3377 = vld [vmem:[#allocation3 + $0x8] sm:$0xf]
        %v3378 = vld [vmem:[#allocation3 + $0xc] sm:$0xf]
        %v3379 = vld [vmem:[#allocation3 + $0x10] sm:$0x1]
        %v3380 = vld [vmem:[#allocation3] sm:$0xe]
        %v3381 = vld [vmem:[#allocation3 + $0x10] sm:$0x3]
        %v3382 = vld [vmem:[#allocation3] sm:$0xc]
        %v3387 = vunpack.c.l.b16 %v3375
        %v3388 = vunpack.c.l.b16 %v3376
        %v3389 = vunpack.c.l.b16 %v3377
        %v3390 = vunpack.c.l.b16 %v3378
        %v3391 = vpack.c.b16 %v3388, %v3387
        %v3392 = vpack.c.b16 %v3390, %v3389
        %v3394 = vunpack.c.l.b16 %v3379
        %v3395 = vpack.c.b16 %v3394, %v3394
        %v3397 = vshrl.u32 %v3391, 16
        %v3399 = vshll.u32 %v3391, 16
        %v3401 = vrot.slane %v3399, 1
        %v3402 = vor.u32 %v3397, %v3401
        %v3404 = vshll.u32 %v3392, 16
        %v3406 = vrot.slane %v3404, 1
        %v3407 = vsel %vm742, %v3402, %v3406
        %v3408 = vshrl.u32 %v3392, 16
        %v3410 = vor.u32 %v3408, %v3406
        %v3412 = vshll.u32 %v3395, 16
        %v3414 = vrot.slane %v3412, 1
        %v3415 = vsel %vm742, %v3410, %v3414
        %3416 = vrot.lane.b32.xlu0 %v3407, 64
        %v3417 = vpop.permute.xlu0 %3416
        %3418 = vrot.lane.b32.xlu0 %v3415, 64
        %v3419 = vpop.permute.xlu0 %3418
        %v3421 = vunpack.c.l.b16 %v3380
        %v3422 = vpack.c.b16 %v3388, %v3421
        %v3423 = vrot.slane %v3422, 1
        %v3424 = vrot.slane %v3392, 1
        %v3425 = vsel %vm1768, %v3423, %v3424
        %v3426 = vrot.slane %v3395, 1
        %v3427 = vsel %vm1768, %v3424, %v3426
        %v3429 = vunpack.c.l.b16 %v3381
        %v3430 = vpack.c.b16 %v3429, %v3429
        %v3432 = vshrl.u32 %v3422, 16
        %v3434 = vrot.slane %v3432, 1
        %v3435 = vshll.u32 %v3422, 16
        %v3437 = vrot.slane %v3435, 2
        %v3438 = vor.u32 %v3434, %v3437
        %v3439 = vrot.slane %v3408, 1
        %v3440 = vrot.slane %v3404, 2
        %v3441 = vor.u32 %v3439, %v3440
        %v3442 = vsel %vm2308, %v3438, %v3441
        %v3444 = vshrl.u32 %v3430, 16
        %v3446 = vrot.slane %v3444, 1
        %v3447 = vshll.u32 %v3430, 16
        %v3449 = vrot.slane %v3447, 2
        %v3450 = vor.u32 %v3446, %v3449
        %v3451 = vsel %vm2308, %v3441, %v3450
        %3452 = vrot.lane.b32.xlu0 %v3442, 64
        %v3453 = vpop.permute.xlu0 %3452
        %3454 = vrot.lane.b32.xlu0 %v3451, 64
        %v3455 = vpop.permute.xlu0 %3454
        %v3457 = vunpack.c.l.b16 %v3382
        %v3458 = vpack.c.b16 %v3388, %v3457
        %v3459 = vrot.slane %v3458, 2
        %v3460 = vrot.slane %v3392, 2
        %v3461 = vsel %vm2912, %v3459, %v3460
        %v3462 = vrot.slane %v3430, 2
        %v3463 = vsel %vm2912, %v3460, %v3462
        %vm3464 = vcmask 523264
        %v3466 = vsel %vm3464, %v3391, %v3417
        %v3469 = vsel %vm3464, %v3392, %v3419
        %v3473 = vsel %vm3464, %v3425, %v3453
        %v3477 = vsel %vm3464, %v3427, %v3455
        %v3479 = vld [vmem:[#allocation12] sm:$0xff]
        %v3480 = vld [vmem:[#allocation12 + $0x8] sm:$0xff]
        %v3481 = vld [vmem:[#allocation12 + $0x10] sm:$0xff]
        %v3482 = vld [vmem:[#allocation12 + $0x18] sm:$0xff]
        %v3483 = vld [vmem:[#allocation12 + $0x20] sm:$0xff]
        %v3484 = vld [vmem:[#allocation12 + $0x28] sm:$0xff]
        %v3485 = vld [vmem:[#allocation12 + $0x30] sm:$0xff]
        %v3486 = vld [vmem:[#allocation12 + $0x38] sm:$0xff]
        %v3487 = vld [vmem:[#allocation12 + $0x40] sm:$0xff]
        %v3488 = vld [vmem:[#allocation12 + $0x48] sm:$0xff]
        %v3489 = vld [vmem:[#allocation12 + $0x50] sm:$0xff]
        %v3490 = vld [vmem:[#allocation12 + $0x58] sm:$0xff]
        %v3491 = vld [vmem:[#allocation12 + $0x60] sm:$0xff]
        %v3492 = vld [vmem:[#allocation12 + $0x68] sm:$0xff]
        %v3493 = vld [vmem:[#allocation12 + $0x70] sm:$0xff]
        %v3494 = vld [vmem:[#allocation12 + $0x78] sm:$0xff]
        %v3495 = vld [vmem:[#allocation12 + $0x80] sm:$0xff]
        %v3496 = vld [vmem:[#allocation12 + $0x88] sm:$0xff]
        %v3497 = vld [vmem:[#allocation12 + $0x90] sm:$0xff]
        %v3498 = vld [vmem:[#allocation12 + $0x98] sm:$0xff]
        %v3499 = vld [vmem:[#allocation12 + $0xa0] sm:$0xff]
        %v3500 = vld [vmem:[#allocation12 + $0xa8] sm:$0xff]
        %v3501 = vld [vmem:[#allocation12 + $0xb0] sm:$0xff]
        %v3502 = vld [vmem:[#allocation12 + $0xb8] sm:$0xff]
        %v3503 = vld [vmem:[#allocation12 + $0xc0] sm:$0xff]
        %v3504 = vld [vmem:[#allocation12 + $0xc8] sm:$0xff]
        %v3505 = vld [vmem:[#allocation12 + $0xd0] sm:$0xff]
        %v3506 = vld [vmem:[#allocation12 + $0xd8] sm:$0xff]
        %v3507 = vld [vmem:[#allocation12 + $0xe0] sm:$0xff]
        %v3508 = vld [vmem:[#allocation12 + $0xe8] sm:$0xff]
        %v3509 = vld [vmem:[#allocation12 + $0xf0] sm:$0xff]
        %v3510 = vld [vmem:[#allocation12 + $0xf8] sm:$0xff]
        %v3511 = vld [vmem:[#allocation12 + $0x100] sm:$0xff]
        %v3512 = vld [vmem:[#allocation12 + $0x108] sm:$0xff]
        %v3513 = vld [vmem:[#allocation12 + $0x110] sm:$0xff]
        %v3514 = vld [vmem:[#allocation12 + $0x118] sm:$0xff]
        %v3515 = vld [vmem:[#allocation12 + $0x120] sm:$0xff]
        %v3516 = vld [vmem:[#allocation12 + $0x128] sm:$0xff]
        %v3517 = vld [vmem:[#allocation12 + $0x130] sm:$0xff]
        %v3518 = vld [vmem:[#allocation12 + $0x138] sm:$0xff]
        %v3559 = vunpack.c.l.b16 %v3479
        %v3560 = vunpack.c.h.b16 %v3479
        %v3561 = vunpack.c.l.b16 %v3480
        %v3562 = vunpack.c.h.b16 %v3480
        %v3563 = vunpack.c.l.b16 %v3481
        %v3564 = vunpack.c.h.b16 %v3481
        %v3565 = vunpack.c.l.b16 %v3482
        %v3566 = vunpack.c.h.b16 %v3482
        %v3567 = vunpack.c.l.b16 %v3483
        %v3568 = vunpack.c.h.b16 %v3483
        %v3569 = vunpack.c.l.b16 %v3484
        %v3570 = vunpack.c.h.b16 %v3484
        %v3571 = vunpack.c.l.b16 %v3485
        %v3572 = vunpack.c.h.b16 %v3485
        %v3573 = vunpack.c.l.b16 %v3486
        %v3574 = vunpack.c.h.b16 %v3486
        %v3575 = vunpack.c.l.b16 %v3487
        %v3576 = vunpack.c.h.b16 %v3487
        %v3577 = vunpack.c.l.b16 %v3488
        %v3578 = vunpack.c.h.b16 %v3488
        %v3579 = vunpack.c.l.b16 %v3489
        %v3580 = vunpack.c.h.b16 %v3489
        %v3581 = vunpack.c.l.b16 %v3490
        %v3582 = vunpack.c.h.b16 %v3490
        %v3583 = vunpack.c.l.b16 %v3491
        %v3584 = vunpack.c.h.b16 %v3491
        %v3585 = vunpack.c.l.b16 %v3492
        %v3586 = vunpack.c.h.b16 %v3492
        %v3587 = vunpack.c.l.b16 %v3493
        %v3588 = vunpack.c.h.b16 %v3493
        %v3589 = vunpack.c.l.b16 %v3494
        %v3590 = vunpack.c.h.b16 %v3494
        %v3591 = vunpack.c.l.b16 %v3495
        %v3592 = vunpack.c.h.b16 %v3495
        %v3593 = vunpack.c.l.b16 %v3496
        %v3594 = vunpack.c.h.b16 %v3496
        %v3595 = vunpack.c.l.b16 %v3497
        %v3596 = vunpack.c.h.b16 %v3497
        %v3597 = vunpack.c.l.b16 %v3498
        %v3598 = vunpack.c.h.b16 %v3498
        %v3599 = vunpack.c.l.b16 %v3499
        %v3600 = vunpack.c.h.b16 %v3499
        %v3601 = vunpack.c.l.b16 %v3500
        %v3602 = vunpack.c.h.b16 %v3500
        %v3603 = vunpack.c.l.b16 %v3501
        %v3604 = vunpack.c.h.b16 %v3501
        %v3605 = vunpack.c.l.b16 %v3502
        %v3606 = vunpack.c.h.b16 %v3502
        %v3607 = vunpack.c.l.b16 %v3503
        %v3608 = vunpack.c.h.b16 %v3503
        %v3609 = vunpack.c.l.b16 %v3504
        %v3610 = vunpack.c.h.b16 %v3504
        %v3611 = vunpack.c.l.b16 %v3505
        %v3612 = vunpack.c.h.b16 %v3505
        %v3613 = vunpack.c.l.b16 %v3506
        %v3614 = vunpack.c.h.b16 %v3506
        %v3615 = vunpack.c.l.b16 %v3507
        %v3616 = vunpack.c.h.b16 %v3507
        %v3617 = vunpack.c.l.b16 %v3508
        %v3618 = vunpack.c.h.b16 %v3508
        %v3619 = vunpack.c.l.b16 %v3509
        %v3620 = vunpack.c.h.b16 %v3509
        %v3621 = vunpack.c.l.b16 %v3510
        %v3622 = vunpack.c.h.b16 %v3510
        %v3623 = vunpack.c.l.b16 %v3511
        %v3624 = vunpack.c.h.b16 %v3511
        %v3625 = vunpack.c.l.b16 %v3512
        %v3626 = vunpack.c.h.b16 %v3512
        %v3627 = vunpack.c.l.b16 %v3513
        %v3628 = vunpack.c.h.b16 %v3513
        %v3629 = vunpack.c.l.b16 %v3514
        %v3630 = vunpack.c.h.b16 %v3514
        %v3631 = vunpack.c.l.b16 %v3515
        %v3632 = vunpack.c.h.b16 %v3515
        %v3633 = vunpack.c.l.b16 %v3516
        %v3634 = vunpack.c.h.b16 %v3516
        %v3635 = vunpack.c.l.b16 %v3517
        %v3636 = vunpack.c.h.b16 %v3517
        %v3637 = vunpack.c.l.b16 %v3518
        %v3638 = vunpack.c.h.b16 %v3518
        %v3639 = vpack.c.b16 %v3561, %v3559
        %v3640 = vpack.c.b16 %v3562, %v3560
        %v3641 = vpack.c.b16 %v3565, %v3563
        %v3642 = vpack.c.b16 %v3566, %v3564
        %v3643 = vpack.c.b16 %v3569, %v3567
        %v3644 = vpack.c.b16 %v3570, %v3568
        %v3645 = vpack.c.b16 %v3573, %v3571
        %v3646 = vpack.c.b16 %v3574, %v3572
        %v3647 = vpack.c.b16 %v3577, %v3575
        %v3648 = vpack.c.b16 %v3578, %v3576
        %v3649 = vpack.c.b16 %v3581, %v3579
        %v3650 = vpack.c.b16 %v3582, %v3580
        %v3651 = vpack.c.b16 %v3585, %v3583
        %v3652 = vpack.c.b16 %v3586, %v3584
        %v3653 = vpack.c.b16 %v3589, %v3587
        %v3654 = vpack.c.b16 %v3590, %v3588
        %v3655 = vpack.c.b16 %v3593, %v3591
        %v3656 = vpack.c.b16 %v3594, %v3592
        %v3657 = vpack.c.b16 %v3597, %v3595
        %v3658 = vpack.c.b16 %v3598, %v3596
        %v3659 = vpack.c.b16 %v3601, %v3599
        %v3660 = vpack.c.b16 %v3602, %v3600
        %v3661 = vpack.c.b16 %v3605, %v3603
        %v3662 = vpack.c.b16 %v3606, %v3604
        %v3663 = vpack.c.b16 %v3609, %v3607
        %v3664 = vpack.c.b16 %v3610, %v3608
        %v3665 = vpack.c.b16 %v3613, %v3611
        %v3666 = vpack.c.b16 %v3614, %v3612
        %v3667 = vpack.c.b16 %v3617, %v3615
        %v3668 = vpack.c.b16 %v3618, %v3616
        %v3669 = vpack.c.b16 %v3621, %v3619
        %v3670 = vpack.c.b16 %v3622, %v3620
        %v3671 = vpack.c.b16 %v3625, %v3623
        %v3672 = vpack.c.b16 %v3626, %v3624
        %v3673 = vpack.c.b16 %v3629, %v3627
        %v3674 = vpack.c.b16 %v3630, %v3628
        %v3675 = vpack.c.b16 %v3633, %v3631
        %v3676 = vpack.c.b16 %v3634, %v3632
        %v3677 = vpack.c.b16 %v3637, %v3635
        %v3678 = vpack.c.b16 %v3638, %v3636
        %v3720 = vsel %vm3464, %v3461, 0
        %v3723 = vsel %vm3464, %v3463, 0
        %3725 = vmatprep.subr.bf16.mxu0 %v3640
        %3726 = vmatpush1.bf16.msra.mxu0 %v3639
        %3727 = vmatprep.subr.bf16.mxu0 %v3642
        %3728 = vmatpush1.bf16.msra.mxu0 %v3641
        %3729 = vmatprep.subr.bf16.mxu0 %v3644
        %3730 = vmatpush1.bf16.msra.mxu0 %v3643
        %3731 = vmatprep.subr.bf16.mxu0 %v3646
        %3732 = vmatpush1.bf16.msra.mxu0 %v3645
        %3733 = vmatprep.subr.bf16.mxu0 %v3648
        %3734 = vmatpush1.bf16.msra.mxu0 %v3647
        %3735 = vmatprep.subr.bf16.mxu0 %v3650
        %3736 = vmatpush1.bf16.msra.mxu0 %v3649
        %3737 = vmatprep.subr.bf16.mxu0 %v3652
        %3738 = vmatpush1.bf16.msra.mxu0 %v3651
        %3739 = vmatprep.subr.bf16.mxu0 %v3654
        %3740 = vmatpush1.bf16.msra.mxu0 %v3653
        %3741 = vmatprep.subr.bf16.mxu0 %v3656
        %3742 = vmatpush1.bf16.msra.mxu0 %v3655
        %3743 = vmatprep.subr.bf16.mxu0 %v3658
        %3744 = vmatpush1.bf16.msra.mxu0 %v3657
        %3745 = vmatprep.subr.bf16.mxu0 %v3660
        %3746 = vmatpush1.bf16.msra.mxu0 %v3659
        %3747 = vmatprep.subr.bf16.mxu0 %v3662
        %3748 = vmatpush1.bf16.msra.mxu0 %v3661
        %3749 = vmatprep.subr.bf16.mxu0 %v3664
        %3750 = vmatpush1.bf16.msra.mxu0 %v3663
        %3751 = vmatprep.subr.bf16.mxu0 %v3666
        %3752 = vmatpush1.bf16.msra.mxu0 %v3665
        %3753 = vmatprep.subr.bf16.mxu0 %v3668
        %3754 = vmatpush1.bf16.msra.mxu0 %v3667
        %3755 = vmatprep.subr.bf16.mxu0 %v3670
        %3756 = vmatpush1.bf16.msra.mxu0 %v3669
        %3757 = vmatprep.mubr.bf16.mxu0 %v3473
        %3758 = vmatmul.mubr.bf16.gmra.mrb[0].mxu0 %v3466
        %v3759 = vpop.f32.mrb[0].mxu0
        %v3760 = vadd.f32 0.0, %v3759
        %v3761 = vpop.f32.mrb[0].mxu0
        %v3762 = vadd.f32 0.0, %v3761
        %v3763 = vpop.f32.mrb[0].mxu0
        %v3764 = vadd.f32 0.0, %v3763
        %v3765 = vpop.f32.mrb[0].mxu0
        %v3766 = vadd.f32 0.0, %v3765
        %3767 = vmatprep.mubr.bf16.mxu0 %v3477
        %3768 = vmatmul.mubr.bf16.gmra.mrb[0].mxu0 %v3469
        %v3769 = vpop.f32.mrb[0].mxu0
        %v3770 = vadd.f32 0.0, %v3769
        %v3771 = vpop.f32.mrb[0].mxu0
        %v3772 = vadd.f32 0.0, %v3771
        %v3773 = vpop.f32.mrb[0].mxu0
        %v3774 = vadd.f32 0.0, %v3773
        %v3775 = vpop.f32.mrb[0].mxu0
        %v3776 = vadd.f32 0.0, %v3775
        %3777 = vdwg.mxu0
        %3778 = vmatprep.subr.bf16.mxu0 %v3672
        %3779 = vmatpush1.bf16.msra.mxu0 %v3671
        %3780 = vmatprep.subr.bf16.mxu0 %v3674
        %3781 = vmatpush1.bf16.msra.mxu0 %v3673
        %3782 = vmatprep.subr.bf16.mxu0 %v3676
        %3783 = vmatpush1.bf16.msra.mxu0 %v3675
        %3784 = vmatprep.subr.bf16.mxu0 %v3678
        %3785 = vmatpush1.bf16.msra.mxu0 %v3677
        %3786 = vmatprep.subr.bf16.mxu0 0
        %3787 = vmatpush1.bf16.msra.mxu0 0
        %3788 = vmatprep.subr.bf16.mxu0 0
        %3789 = vmatpush1.bf16.msra.mxu0 0
        %3790 = vmatprep.subr.bf16.mxu0 0
        %3791 = vmatpush1.bf16.msra.mxu0 0
        %3792 = vmatprep.subr.bf16.mxu0 0
        %3793 = vmatpush1.bf16.msra.mxu0 0
        %3794 = vmatprep.subr.bf16.mxu0 0
        %3795 = vmatpush1.bf16.msra.mxu0 0
        %3796 = vmatprep.subr.bf16.mxu0 0
        %3797 = vmatpush1.bf16.msra.mxu0 0
        %3798 = vmatprep.subr.bf16.mxu0 0
        %3799 = vmatpush1.bf16.msra.mxu0 0
        %3800 = vmatprep.subr.bf16.mxu0 0
        %3801 = vmatpush1.bf16.msra.mxu0 0
        %3802 = vmatprep.subr.bf16.mxu0 0
        %3803 = vmatpush1.bf16.msra.mxu0 0
        %3804 = vmatprep.subr.bf16.mxu0 0
        %3805 = vmatpush1.bf16.msra.mxu0 0
        %3806 = vmatprep.subr.bf16.mxu0 0
        %3807 = vmatpush1.bf16.msra.mxu0 0
        %3808 = vmatprep.subr.bf16.mxu0 0
        %3809 = vmatpush1.bf16.msra.mxu0 0
        %3810 = vmatprep.mubr.bf16.mxu0 0
        %3811 = vmatmul.mubr.bf16.gmra.mrb[0].mxu0 %v3720
        %v3812 = vpop.f32.mrb[0].mxu0
        %v3813 = vadd.f32 %v3760, %v3812
        %v3814 = vpop.f32.mrb[0].mxu0
        %v3815 = vadd.f32 %v3762, %v3814
        %v3816 = vpop.f32.mrb[0].mxu0
        %v3817 = vadd.f32 %v3764, %v3816
        %v3818 = vpop.f32.mrb[0].mxu0
        %v3819 = vadd.f32 %v3766, %v3818
        %3820 = vmatprep.mubr.bf16.mxu0 0
        %3821 = vmatmul.mubr.bf16.gmra.mrb[0].mxu0 %v3723
        %v3822 = vpop.f32.mrb[0].mxu0
        %v3823 = vadd.f32 %v3770, %v3822
        %v3824 = vpop.f32.mrb[0].mxu0
        %v3825 = vadd.f32 %v3772, %v3824
        %v3826 = vpop.f32.mrb[0].mxu0
        %v3827 = vadd.f32 %v3774, %v3826
        %v3828 = vpop.f32.mrb[0].mxu0
        %v3829 = vadd.f32 %v3776, %v3828
        %3830 = vdwg.mxu0
        %v3831 = vadd.f32 %v3367, %v3813
        %v3832 = vadd.f32 %v3368, %v3815
        %v3833 = vadd.f32 %v3369, %v3817
        %v3834 = vadd.f32 %v3370, %v3819
        %v3835 = vadd.f32 %v3371, %v3823
        %v3836 = vadd.f32 %v3372, %v3825
        %v3837 = vadd.f32 %v3373, %v3827
        %v3838 = vadd.f32 %v3374, %v3829
        %v3839 = vld [vmem:[#allocation14] sm:$0x3]
        %v3841 = vlaneseq
        %v3842 = vshrl.u32 %v3841, 7
        %v3843 = vsub.s32 0, %v3842
        %v3844 = vrot.slane %v3839, %v3843
        %v3845 = vlaneseq
        %v3846 = vshrl.u32 %v3845, 7
        %v3847 = vsub.s32 1, %v3846
        %v3848 = vrot.slane %v3839, %v3847
        %v3851 = vadd.f32 %v3831, %v3844
        %v3852 = vadd.f32 %v3832, %v3848
        %v3853 = vadd.f32 %v3833, %v3844
        %v3854 = vadd.f32 %v3834, %v3848
        %v3855 = vadd.f32 %v3835, %v3844
        %v3856 = vadd.f32 %v3836, %v3848
        %v3857 = vadd.f32 %v3837, %v3844
        %v3858 = vadd.f32 %v3838, %v3848
        %v3859 = vmax.f32 %v3851, 0.0
        %v3860 = vmax.f32 %v3852, 0.0
        %v3861 = vmax.f32 %v3853, 0.0
        %v3862 = vmax.f32 %v3854, 0.0
        %v3863 = vmax.f32 %v3855, 0.0
        %v3864 = vmax.f32 %v3856, 0.0
        %v3865 = vmax.f32 %v3857, 0.0
        %v3866 = vmax.f32 %v3858, 0.0
        %v3867 = vpack.c.bf16 %v3861, %v3859
        %v3868 = vpack.c.bf16 %v3862, %v3860
        %v3869 = vpack.c.bf16 %v3865, %v3863
        %v3870 = vpack.c.bf16 %v3866, %v3864
        %v3875 = vunpack.c.l.b16 %v3867
        %v3876 = vunpack.c.l.b16 %v3868
        %v3877 = vunpack.c.h.b16 %v3867
        %v3878 = vunpack.c.h.b16 %v3868
        %v3879 = vunpack.c.l.b16 %v3869
        %v3880 = vunpack.c.l.b16 %v3870
        %v3881 = vunpack.c.h.b16 %v3869
        %v3882 = vunpack.c.h.b16 %v3870
        %v3883 = vpack.c.b16 %v3876, %v3875
        %v3884 = vpack.c.b16 %v3878, %v3877
        %v3885 = vpack.c.b16 %v3880, %v3879
        %v3886 = vpack.c.b16 %v3882, %v3881
        %vm3887 = vsmask.f32 4368
        %vm3888 = vmor %vm454, %vm3887
        %v3890 = vshrl.u32 %v3883, 16
        %v3892 = vrot.slane %v3890, 7
        %v3893 = vshll.u32 %v3883, 16
        %v3895 = vor.u32 %v3892, %v3893
        %v3896 = vrot.slane %v3892, 4
        %v3898 = vshrl.u32 %v3884, 16
        %v3900 = vrot.slane %v3898, 7
        %v3901 = vshll.u32 %v3884, 16
        %v3903 = vor.u32 %v3900, %v3901
        %v3904 = vsel %vm3888, %v3896, %v3903
        %v3905 = vrot.slane %v3900, 4
        %v3907 = vshrl.u32 %v3885, 16
        %v3909 = vrot.slane %v3907, 7
        %v3910 = vshll.u32 %v3885, 16
        %v3912 = vor.u32 %v3909, %v3910
        %v3913 = vsel %vm3888, %v3905, %v3912
        %v3914 = vrot.slane %v3909, 4
        %v3916 = vshrl.u32 %v3886, 16
        %v3918 = vrot.slane %v3916, 7
        %v3919 = vshll.u32 %v3886, 16
        %v3921 = vor.u32 %v3918, %v3919
        %v3922 = vsel %vm3888, %v3914, %v3921
        %v3923 = vrot.slane %v3918, 4
        %vm3929 = vcmask 1043456
        %vm3930 = vmand %vm3929, %vm463
        %vm3931 = vcmask 1047556
        %vm3932 = vmand %vm3931, %vm465
        %vm3933 = vmor %vm3932, %vm3930
        %v3934 = vld [vmem:[#allocation4] sm:$0xff]
        %v3935 = vsel %vm3933, %v3895, %v3934
        %3936 = vst [vmem:[#allocation4] sm:$0xff] %v3935
        %3937 = vst [vmem:[#allocation4 + $0x8] sm:$0xff] %v3904
        %3938 = vst [vmem:[#allocation4 + $0x10] sm:$0xff] %v3913
        %3939 = vst [vmem:[#allocation4 + $0x18] sm:$0xff] %v3922
        %v3940 = vld [vmem:[#allocation4 + $0x20] sm:$0x11]
        %v3941 = vsel %vm459, %v3923, %v3940
        %3942 = vst [vmem:[#allocation4 + $0x20] sm:$0x11] %v3941
        %v3943 = vld [vmem:[#allocation4] sm:$0xff]
        %v3944 = vld [vmem:[#allocation4 + $0x8] sm:$0xff]
        %v3945 = vld [vmem:[#allocation4 + $0x10] sm:$0xff]
        %v3946 = vld [vmem:[#allocation4 + $0x18] sm:$0xff]
        %v3947 = vld [vmem:[#allocation15] sm:$0xf]
        %v3948 = vld [vmem:[#allocation15 + $0x4] sm:$0xf]
        %v3949 = vld [vmem:[#allocation15 + $0x8] sm:$0xf]
        %v3950 = vld [vmem:[#allocation15 + $0xc] sm:$0xf]
        %v3951 = vld [vmem:[#allocation15 + $0x10] sm:$0xf]
        %v3952 = vld [vmem:[#allocation15 + $0x14] sm:$0xf]
        %v3953 = vld [vmem:[#allocation15 + $0x18] sm:$0xf]
        %v3954 = vld [vmem:[#allocation15 + $0x1c] sm:$0xf]
        %v3955 = vld [vmem:[#allocation15 + $0x20] sm:$0xf]
        %v3956 = vld [vmem:[#allocation15 + $0x24] sm:$0xf]
        %v3957 = vld [vmem:[#allocation15 + $0x28] sm:$0xf]
        %v3958 = vld [vmem:[#allocation15 + $0x2c] sm:$0xf]
        %v3959 = vld [vmem:[#allocation15 + $0x30] sm:$0xf]
        %v3960 = vld [vmem:[#allocation15 + $0x34] sm:$0xf]
        %v3961 = vld [vmem:[#allocation15 + $0x38] sm:$0xf]
        %v3962 = vld [vmem:[#allocation15 + $0x3c] sm:$0xf]
        %v3963 = vld [vmem:[#allocation15 + $0x40] sm:$0xf]
        %v3964 = vld [vmem:[#allocation15 + $0x44] sm:$0xf]
        %v3965 = vld [vmem:[#allocation15 + $0x48] sm:$0xf]
        %v3966 = vld [vmem:[#allocation15 + $0x4c] sm:$0xf]
        %v3967 = vld [vmem:[#allocation15 + $0x50] sm:$0xf]
        %v3968 = vld [vmem:[#allocation15 + $0x54] sm:$0xf]
        %v3969 = vld [vmem:[#allocation15 + $0x58] sm:$0xf]
        %v3970 = vld [vmem:[#allocation15 + $0x5c] sm:$0xf]
        %v3971 = vld [vmem:[#allocation15 + $0x60] sm:$0xf]
        %v3972 = vld [vmem:[#allocation15 + $0x64] sm:$0xf]
        %v3973 = vld [vmem:[#allocation15 + $0x68] sm:$0xf]
        %v3974 = vld [vmem:[#allocation15 + $0x6c] sm:$0xf]
        %v3975 = vld [vmem:[#allocation15 + $0x70] sm:$0xf]
        %v3976 = vld [vmem:[#allocation15 + $0x74] sm:$0xf]
        %v3977 = vld [vmem:[#allocation15 + $0x78] sm:$0xf]
        %v3978 = vld [vmem:[#allocation15 + $0x7c] sm:$0xf]
        %v3979 = vld [vmem:[#allocation4 + $0x20] sm:$0x11]
        %s3980 = scalar_lea.vmem [#allocation15], 128
        %v3981 = vld [vmem:[%s3980] sm:$0xf]
        %v3982 = vld [vmem:[%s3980 + $0x4] sm:$0xf]
        %v3983 = vld [vmem:[%s3980 + $0x8] sm:$0xf]
        %v3984 = vld [vmem:[%s3980 + $0xc] sm:$0xf]
        %v3985 = vld [vmem:[%s3980 + $0x10] sm:$0xf]
        %v3986 = vld [vmem:[%s3980 + $0x14] sm:$0xf]
        %v3987 = vld [vmem:[%s3980 + $0x18] sm:$0xf]
        %v3988 = vld [vmem:[%s3980 + $0x1c] sm:$0xf]
        %v3989 = vld [vmem:[%s3980 + $0x20] sm:$0xf]
        %v3990 = vld [vmem:[%s3980 + $0x24] sm:$0xf]
        %v3991 = vld [vmem:[%s3980 + $0x28] sm:$0xf]
        %v3992 = vld [vmem:[%s3980 + $0x2c] sm:$0xf]
        %v3993 = vld [vmem:[%s3980 + $0x30] sm:$0xf]
        %v3994 = vld [vmem:[%s3980 + $0x34] sm:$0xf]
        %v3995 = vld [vmem:[%s3980 + $0x38] sm:$0xf]
        %v3996 = vld [vmem:[%s3980 + $0x3c] sm:$0xf]
        %v3997 = vld [vmem:[%s3980 + $0x40] sm:$0xf]
        %v3998 = vld [vmem:[%s3980 + $0x44] sm:$0xf]
        %v3999 = vld [vmem:[%s3980 + $0x48] sm:$0xf]
        %v4000 = vld [vmem:[%s3980 + $0x4c] sm:$0xf]
        %v4001 = vld [vmem:[%s3980 + $0x50] sm:$0xf]
        %v4002 = vld [vmem:[%s3980 + $0x54] sm:$0xf]
        %v4003 = vld [vmem:[%s3980 + $0x58] sm:$0xf]
        %v4004 = vld [vmem:[%s3980 + $0x5c] sm:$0xf]
        %v4005 = vld [vmem:[%s3980 + $0x60] sm:$0xf]
        %v4006 = vld [vmem:[%s3980 + $0x64] sm:$0xf]
        %v4007 = vld [vmem:[%s3980 + $0x68] sm:$0xf]
        %v4008 = vld [vmem:[%s3980 + $0x6c] sm:$0xf]
        %v4009 = vld [vmem:[%s3980 + $0x70] sm:$0xf]
        %v4010 = vld [vmem:[%s3980 + $0x74] sm:$0xf]
        %v4011 = vld [vmem:[%s3980 + $0x78] sm:$0xf]
        %v4012 = vld [vmem:[%s3980 + $0x7c] sm:$0xf]
        %v4018 = vunpack.c.l.b16 %v3943
        %v4019 = vunpack.c.h.b16 %v3943
        %v4020 = vunpack.c.l.b16 %v3944
        %v4021 = vunpack.c.h.b16 %v3944
        %v4022 = vunpack.c.l.b16 %v3945
        %v4023 = vunpack.c.h.b16 %v3945
        %v4024 = vunpack.c.l.b16 %v3946
        %v4025 = vunpack.c.h.b16 %v3946
        %v4026 = vunpack.c.l.b16 %v3979
        %v4027 = vunpack.c.h.b16 %v3979
        %v4028 = vpack.c.b16 %v4020, %v4018
        %v4029 = vpack.c.b16 %v4021, %v4019
        %v4030 = vpack.c.b16 %v4024, %v4022
        %v4031 = vpack.c.b16 %v4025, %v4023
        %v4032 = vpack.c.b16 %v4026, %v4026
        %v4033 = vpack.c.b16 %v4027, %v4027
        %v4035 = vshrl.u32 %v4028, 16
        %v4037 = vshll.u32 %v4028, 16
        %v4039 = vrot.slane %v4037, 1
        %v4040 = vor.u32 %v4035, %v4039
        %v4042 = vshll.u32 %v4030, 16
        %v4044 = vrot.slane %v4042, 1
        %v4045 = vsel %vm742, %v4040, %v4044
        %v4047 = vshrl.u32 %v4029, 16
        %v4049 = vshll.u32 %v4029, 16
        %v4051 = vrot.slane %v4049, 1
        %v4052 = vor.u32 %v4047, %v4051
        %v4054 = vshll.u32 %v4031, 16
        %v4056 = vrot.slane %v4054, 1
        %v4057 = vsel %vm742, %v4052, %v4056
        %v4058 = vshrl.u32 %v4030, 16
        %v4060 = vor.u32 %v4058, %v4044
        %v4062 = vshll.u32 %v4032, 16
        %v4064 = vrot.slane %v4062, 1
        %v4065 = vsel %vm742, %v4060, %v4064
        %v4066 = vshrl.u32 %v4031, 16
        %v4068 = vor.u32 %v4066, %v4056
        %v4070 = vshll.u32 %v4033, 16
        %v4072 = vrot.slane %v4070, 1
        %v4073 = vsel %vm742, %v4068, %v4072
        %v4110 = vunpack.c.l.b16 %v3981
        %v4111 = vunpack.c.l.b16 %v3982
        %v4112 = vunpack.c.l.b16 %v3983
        %v4113 = vunpack.c.l.b16 %v3984
        %v4114 = vunpack.c.l.b16 %v3985
        %v4115 = vunpack.c.l.b16 %v3986
        %v4116 = vunpack.c.l.b16 %v3987
        %v4117 = vunpack.c.l.b16 %v3988
        %v4118 = vunpack.c.l.b16 %v3989
        %v4119 = vunpack.c.l.b16 %v3990
        %v4120 = vunpack.c.l.b16 %v3991
        %v4121 = vunpack.c.l.b16 %v3992
        %v4122 = vunpack.c.l.b16 %v3993
        %v4123 = vunpack.c.l.b16 %v3994
        %v4124 = vunpack.c.l.b16 %v3995
        %v4125 = vunpack.c.l.b16 %v3996
        %v4126 = vunpack.c.l.b16 %v3997
        %v4127 = vunpack.c.l.b16 %v3998
        %v4128 = vunpack.c.l.b16 %v3999
        %v4129 = vunpack.c.l.b16 %v4000
        %v4130 = vunpack.c.l.b16 %v4001
        %v4131 = vunpack.c.l.b16 %v4002
        %v4132 = vunpack.c.l.b16 %v4003
        %v4133 = vunpack.c.l.b16 %v4004
        %v4134 = vunpack.c.l.b16 %v4005
        %v4135 = vunpack.c.l.b16 %v4006
        %v4136 = vunpack.c.l.b16 %v4007
        %v4137 = vunpack.c.l.b16 %v4008
        %v4138 = vunpack.c.l.b16 %v4009
        %v4139 = vunpack.c.l.b16 %v4010
        %v4140 = vunpack.c.l.b16 %v4011
        %v4141 = vunpack.c.l.b16 %v4012
        %v4142 = vpack.c.b16 %v4111, %v4110
        %v4143 = vpack.c.b16 %v4113, %v4112
        %v4144 = vpack.c.b16 %v4115, %v4114
        %v4145 = vpack.c.b16 %v4117, %v4116
        %v4146 = vpack.c.b16 %v4119, %v4118
        %v4147 = vpack.c.b16 %v4121, %v4120
        %v4148 = vpack.c.b16 %v4123, %v4122
        %v4149 = vpack.c.b16 %v4125, %v4124
        %v4150 = vpack.c.b16 %v4127, %v4126
        %v4151 = vpack.c.b16 %v4129, %v4128
        %v4152 = vpack.c.b16 %v4131, %v4130
        %v4153 = vpack.c.b16 %v4133, %v4132
        %v4154 = vpack.c.b16 %v4135, %v4134
        %v4155 = vpack.c.b16 %v4137, %v4136
        %v4156 = vpack.c.b16 %v4139, %v4138
        %v4157 = vpack.c.b16 %v4141, %v4140
        %4174 = vmatprep.subr.bf16.mxu0 0
        %4175 = vmatpush1.bf16.msra.mxu0 %v4142
        %4176 = vmatprep.subr.bf16.mxu0 0
        %4177 = vmatpush1.bf16.msra.mxu0 %v4143
        %4178 = vmatprep.subr.bf16.mxu0 0
        %4179 = vmatpush1.bf16.msra.mxu0 %v4144
        %4180 = vmatprep.subr.bf16.mxu0 0
        %4181 = vmatpush1.bf16.msra.mxu0 %v4145
        %4182 = vmatprep.subr.bf16.mxu0 0
        %4183 = vmatpush1.bf16.msra.mxu0 %v4146
        %4184 = vmatprep.subr.bf16.mxu0 0
        %4185 = vmatpush1.bf16.msra.mxu0 %v4147
        %4186 = vmatprep.subr.bf16.mxu0 0
        %4187 = vmatpush1.bf16.msra.mxu0 %v4148
        %4188 = vmatprep.subr.bf16.mxu0 0
        %4189 = vmatpush1.bf16.msra.mxu0 %v4149
        %4190 = vmatprep.subr.bf16.mxu0 0
        %4191 = vmatpush1.bf16.msra.mxu0 %v4150
        %4192 = vmatprep.subr.bf16.mxu0 0
        %4193 = vmatpush1.bf16.msra.mxu0 %v4151
        %4194 = vmatprep.subr.bf16.mxu0 0
        %4195 = vmatpush1.bf16.msra.mxu0 %v4152
        %4196 = vmatprep.subr.bf16.mxu0 0
        %4197 = vmatpush1.bf16.msra.mxu0 %v4153
        %4198 = vmatprep.subr.bf16.mxu0 0
        %4199 = vmatpush1.bf16.msra.mxu0 %v4154
        %4200 = vmatprep.subr.bf16.mxu0 0
        %4201 = vmatpush1.bf16.msra.mxu0 %v4155
        %4202 = vmatprep.subr.bf16.mxu0 0
        %4203 = vmatpush1.bf16.msra.mxu0 %v4156
        %4204 = vmatprep.subr.bf16.mxu0 0
        %4205 = vmatpush1.bf16.msra.mxu0 %v4157
        %4206 = vmatprep.mubr.bf16.mxu0 %v4057
        %4207 = vmatmul.mubr.bf16.gmra.mrb[0].mxu0 %v4045
        %v4208 = vpop.f32.mrb[0].mxu0
        %v4209 = vadd.f32 0.0, %v4208
        %v4210 = vpop.f32.mrb[0].mxu0
        %v4211 = vpop.f32.mrb[0].mxu0
        %v4212 = vadd.f32 0.0, %v4211
        %v4213 = vpop.f32.mrb[0].mxu0
        %4214 = vmatprep.mubr.bf16.mxu0 %v4073
        %4215 = vmatmul.mubr.bf16.gmra.mrb[0].mxu0 %v4065
        %v4216 = vpop.f32.mrb[0].mxu0
        %v4217 = vadd.f32 0.0, %v4216
        %v4218 = vpop.f32.mrb[0].mxu0
        %v4219 = vpop.f32.mrb[0].mxu0
        %v4220 = vadd.f32 0.0, %v4219
        %v4221 = vpop.f32.mrb[0].mxu0
        %4222 = vdwg.mxu0
        %v4259 = vunpack.c.l.b16 %v3947
        %v4260 = vunpack.c.l.b16 %v3948
        %v4261 = vunpack.c.l.b16 %v3949
        %v4262 = vunpack.c.l.b16 %v3950
        %v4263 = vunpack.c.l.b16 %v3951
        %v4264 = vunpack.c.l.b16 %v3952
        %v4265 = vunpack.c.l.b16 %v3953
        %v4266 = vunpack.c.l.b16 %v3954
        %v4267 = vunpack.c.l.b16 %v3955
        %v4268 = vunpack.c.l.b16 %v3956
        %v4269 = vunpack.c.l.b16 %v3957
        %v4270 = vunpack.c.l.b16 %v3958
        %v4271 = vunpack.c.l.b16 %v3959
        %v4272 = vunpack.c.l.b16 %v3960
        %v4273 = vunpack.c.l.b16 %v3961
        %v4274 = vunpack.c.l.b16 %v3962
        %v4275 = vunpack.c.l.b16 %v3963
        %v4276 = vunpack.c.l.b16 %v3964
        %v4277 = vunpack.c.l.b16 %v3965
        %v4278 = vunpack.c.l.b16 %v3966
        %v4279 = vunpack.c.l.b16 %v3967
        %v4280 = vunpack.c.l.b16 %v3968
        %v4281 = vunpack.c.l.b16 %v3969
        %v4282 = vunpack.c.l.b16 %v3970
        %v4283 = vunpack.c.l.b16 %v3971
        %v4284 = vunpack.c.l.b16 %v3972
        %v4285 = vunpack.c.l.b16 %v3973
        %v4286 = vunpack.c.l.b16 %v3974
        %v4287 = vunpack.c.l.b16 %v3975
        %v4288 = vunpack.c.l.b16 %v3976
        %v4289 = vunpack.c.l.b16 %v3977
        %v4290 = vunpack.c.l.b16 %v3978
        %v4291 = vpack.c.b16 %v4260, %v4259
        %v4292 = vpack.c.b16 %v4262, %v4261
        %v4293 = vpack.c.b16 %v4264, %v4263
        %v4294 = vpack.c.b16 %v4266, %v4265
        %v4295 = vpack.c.b16 %v4268, %v4267
        %v4296 = vpack.c.b16 %v4270, %v4269
        %v4297 = vpack.c.b16 %v4272, %v4271
        %v4298 = vpack.c.b16 %v4274, %v4273
        %v4299 = vpack.c.b16 %v4276, %v4275
        %v4300 = vpack.c.b16 %v4278, %v4277
        %v4301 = vpack.c.b16 %v4280, %v4279
        %v4302 = vpack.c.b16 %v4282, %v4281
        %v4303 = vpack.c.b16 %v4284, %v4283
        %v4304 = vpack.c.b16 %v4286, %v4285
        %v4305 = vpack.c.b16 %v4288, %v4287
        %v4306 = vpack.c.b16 %v4290, %v4289
        %4323 = vmatprep.subr.bf16.mxu0 0
        %4324 = vmatpush1.bf16.msra.mxu0 %v4291
        %4325 = vmatprep.subr.bf16.mxu0 0
        %4326 = vmatpush1.bf16.msra.mxu0 %v4292
        %4327 = vmatprep.subr.bf16.mxu0 0
        %4328 = vmatpush1.bf16.msra.mxu0 %v4293
        %4329 = vmatprep.subr.bf16.mxu0 0
        %4330 = vmatpush1.bf16.msra.mxu0 %v4294
        %4331 = vmatprep.subr.bf16.mxu0 0
        %4332 = vmatpush1.bf16.msra.mxu0 %v4295
        %4333 = vmatprep.subr.bf16.mxu0 0
        %4334 = vmatpush1.bf16.msra.mxu0 %v4296
        %4335 = vmatprep.subr.bf16.mxu0 0
        %4336 = vmatpush1.bf16.msra.mxu0 %v4297
        %4337 = vmatprep.subr.bf16.mxu0 0
        %4338 = vmatpush1.bf16.msra.mxu0 %v4298
        %4339 = vmatprep.subr.bf16.mxu0 0
        %4340 = vmatpush1.bf16.msra.mxu0 %v4299
        %4341 = vmatprep.subr.bf16.mxu0 0
        %4342 = vmatpush1.bf16.msra.mxu0 %v4300
        %4343 = vmatprep.subr.bf16.mxu0 0
        %4344 = vmatpush1.bf16.msra.mxu0 %v4301
        %4345 = vmatprep.subr.bf16.mxu0 0
        %4346 = vmatpush1.bf16.msra.mxu0 %v4302
        %4347 = vmatprep.subr.bf16.mxu0 0
        %4348 = vmatpush1.bf16.msra.mxu0 %v4303
        %4349 = vmatprep.subr.bf16.mxu0 0
        %4350 = vmatpush1.bf16.msra.mxu0 %v4304
        %4351 = vmatprep.subr.bf16.mxu0 0
        %4352 = vmatpush1.bf16.msra.mxu0 %v4305
        %4353 = vmatprep.subr.bf16.mxu0 0
        %4354 = vmatpush1.bf16.msra.mxu0 %v4306
        %4355 = vmatprep.mubr.bf16.mxu0 %v4029
        %4356 = vmatmul.mubr.bf16.gmra.mrb[0].mxu0 %v4028
        %v4357 = vpop.f32.mrb[0].mxu0
        %v4358 = vadd.f32 %v4209, %v4357
        %v4359 = vpop.f32.mrb[0].mxu0
        %v4360 = vpop.f32.mrb[0].mxu0
        %v4361 = vadd.f32 %v4212, %v4360
        %v4362 = vpop.f32.mrb[0].mxu0
        %4363 = vmatprep.mubr.bf16.mxu0 %v4031
        %4364 = vmatmul.mubr.bf16.gmra.mrb[0].mxu0 %v4030
        %v4365 = vpop.f32.mrb[0].mxu0
        %v4366 = vadd.f32 %v4217, %v4365
        %v4367 = vpop.f32.mrb[0].mxu0
        %v4368 = vpop.f32.mrb[0].mxu0
        %v4369 = vadd.f32 %v4220, %v4368
        %v4370 = vpop.f32.mrb[0].mxu0
        %4371 = vdwg.mxu0
        %v4372 = vld [vmem:[#allocation4] sm:$0xee]
        %s4373 = scalar_lea.vmem [#allocation15], 256
        %v4374 = vld [vmem:[%s4373] sm:$0xf]
        %v4375 = vld [vmem:[%s4373 + $0x4] sm:$0xf]
        %v4376 = vld [vmem:[%s4373 + $0x8] sm:$0xf]
        %v4377 = vld [vmem:[%s4373 + $0xc] sm:$0xf]
        %v4378 = vld [vmem:[%s4373 + $0x10] sm:$0xf]
        %v4379 = vld [vmem:[%s4373 + $0x14] sm:$0xf]
        %v4380 = vld [vmem:[%s4373 + $0x18] sm:$0xf]
        %v4381 = vld [vmem:[%s4373 + $0x1c] sm:$0xf]
        %v4382 = vld [vmem:[%s4373 + $0x20] sm:$0xf]
        %v4383 = vld [vmem:[%s4373 + $0x24] sm:$0xf]
        %v4384 = vld [vmem:[%s4373 + $0x28] sm:$0xf]
        %v4385 = vld [vmem:[%s4373 + $0x2c] sm:$0xf]
        %v4386 = vld [vmem:[%s4373 + $0x30] sm:$0xf]
        %v4387 = vld [vmem:[%s4373 + $0x34] sm:$0xf]
        %v4388 = vld [vmem:[%s4373 + $0x38] sm:$0xf]
        %v4389 = vld [vmem:[%s4373 + $0x3c] sm:$0xf]
        %v4390 = vld [vmem:[%s4373 + $0x40] sm:$0xf]
        %v4391 = vld [vmem:[%s4373 + $0x44] sm:$0xf]
        %v4392 = vld [vmem:[%s4373 + $0x48] sm:$0xf]
        %v4393 = vld [vmem:[%s4373 + $0x4c] sm:$0xf]
        %v4394 = vld [vmem:[%s4373 + $0x50] sm:$0xf]
        %v4395 = vld [vmem:[%s4373 + $0x54] sm:$0xf]
        %v4396 = vld [vmem:[%s4373 + $0x58] sm:$0xf]
        %v4397 = vld [vmem:[%s4373 + $0x5c] sm:$0xf]
        %v4398 = vld [vmem:[%s4373 + $0x60] sm:$0xf]
        %v4399 = vld [vmem:[%s4373 + $0x64] sm:$0xf]
        %v4400 = vld [vmem:[%s4373 + $0x68] sm:$0xf]
        %v4401 = vld [vmem:[%s4373 + $0x6c] sm:$0xf]
        %v4402 = vld [vmem:[%s4373 + $0x70] sm:$0xf]
        %v4403 = vld [vmem:[%s4373 + $0x74] sm:$0xf]
        %v4404 = vld [vmem:[%s4373 + $0x78] sm:$0xf]
        %v4405 = vld [vmem:[%s4373 + $0x7c] sm:$0xf]
        %v4407 = vunpack.c.l.b16 %v4372
        %v4408 = vunpack.c.h.b16 %v4372
        %v4409 = vpack.c.b16 %v4020, %v4407
        %v4410 = vpack.c.b16 %v4021, %v4408
        %v4411 = vrot.slane %v4409, 1
        %v4412 = vrot.slane %v4030, 1
        %v4413 = vsel %vm1768, %v4411, %v4412
        %v4414 = vrot.slane %v4410, 1
        %v4415 = vrot.slane %v4031, 1
        %v4416 = vsel %vm1768, %v4414, %v4415
        %v4417 = vrot.slane %v4032, 1
        %v4418 = vsel %vm1768, %v4412, %v4417
        %v4419 = vrot.slane %v4033, 1
        %v4420 = vsel %vm1768, %v4415, %v4419
        %v4457 = vunpack.c.l.b16 %v4374
        %v4458 = vunpack.c.l.b16 %v4375
        %v4459 = vunpack.c.l.b16 %v4376
        %v4460 = vunpack.c.l.b16 %v4377
        %v4461 = vunpack.c.l.b16 %v4378
        %v4462 = vunpack.c.l.b16 %v4379
        %v4463 = vunpack.c.l.b16 %v4380
        %v4464 = vunpack.c.l.b16 %v4381
        %v4465 = vunpack.c.l.b16 %v4382
        %v4466 = vunpack.c.l.b16 %v4383
        %v4467 = vunpack.c.l.b16 %v4384
        %v4468 = vunpack.c.l.b16 %v4385
        %v4469 = vunpack.c.l.b16 %v4386
        %v4470 = vunpack.c.l.b16 %v4387
        %v4471 = vunpack.c.l.b16 %v4388
        %v4472 = vunpack.c.l.b16 %v4389
        %v4473 = vunpack.c.l.b16 %v4390
        %v4474 = vunpack.c.l.b16 %v4391
        %v4475 = vunpack.c.l.b16 %v4392
        %v4476 = vunpack.c.l.b16 %v4393
        %v4477 = vunpack.c.l.b16 %v4394
        %v4478 = vunpack.c.l.b16 %v4395
        %v4479 = vunpack.c.l.b16 %v4396
        %v4480 = vunpack.c.l.b16 %v4397
        %v4481 = vunpack.c.l.b16 %v4398
        %v4482 = vunpack.c.l.b16 %v4399
        %v4483 = vunpack.c.l.b16 %v4400
        %v4484 = vunpack.c.l.b16 %v4401
        %v4485 = vunpack.c.l.b16 %v4402
        %v4486 = vunpack.c.l.b16 %v4403
        %v4487 = vunpack.c.l.b16 %v4404
        %v4488 = vunpack.c.l.b16 %v4405
        %v4489 = vpack.c.b16 %v4458, %v4457
        %v4490 = vpack.c.b16 %v4460, %v4459
        %v4491 = vpack.c.b16 %v4462, %v4461
        %v4492 = vpack.c.b16 %v4464, %v4463
        %v4493 = vpack.c.b16 %v4466, %v4465
        %v4494 = vpack.c.b16 %v4468, %v4467
        %v4495 = vpack.c.b16 %v4470, %v4469
        %v4496 = vpack.c.b16 %v4472, %v4471
        %v4497 = vpack.c.b16 %v4474, %v4473
        %v4498 = vpack.c.b16 %v4476, %v4475
        %v4499 = vpack.c.b16 %v4478, %v4477
        %v4500 = vpack.c.b16 %v4480, %v4479
        %v4501 = vpack.c.b16 %v4482, %v4481
        %v4502 = vpack.c.b16 %v4484, %v4483
        %v4503 = vpack.c.b16 %v4486, %v4485
        %v4504 = vpack.c.b16 %v4488, %v4487
        %4521 = vmatprep.subr.bf16.mxu0 0
        %4522 = vmatpush1.bf16.msra.mxu0 %v4489
        %4523 = vmatprep.subr.bf16.mxu0 0
        %4524 = vmatpush1.bf16.msra.mxu0 %v4490
        %4525 = vmatprep.subr.bf16.mxu0 0
        %4526 = vmatpush1.bf16.msra.mxu0 %v4491
        %4527 = vmatprep.subr.bf16.mxu0 0
        %4528 = vmatpush1.bf16.msra.mxu0 %v4492
        %4529 = vmatprep.subr.bf16.mxu0 0
        %4530 = vmatpush1.bf16.msra.mxu0 %v4493
        %4531 = vmatprep.subr.bf16.mxu0 0
        %4532 = vmatpush1.bf16.msra.mxu0 %v4494
        %4533 = vmatprep.subr.bf16.mxu0 0
        %4534 = vmatpush1.bf16.msra.mxu0 %v4495
        %4535 = vmatprep.subr.bf16.mxu0 0
        %4536 = vmatpush1.bf16.msra.mxu0 %v4496
        %4537 = vmatprep.subr.bf16.mxu0 0
        %4538 = vmatpush1.bf16.msra.mxu0 %v4497
        %4539 = vmatprep.subr.bf16.mxu0 0
        %4540 = vmatpush1.bf16.msra.mxu0 %v4498
        %4541 = vmatprep.subr.bf16.mxu0 0
        %4542 = vmatpush1.bf16.msra.mxu0 %v4499
        %4543 = vmatprep.subr.bf16.mxu0 0
        %4544 = vmatpush1.bf16.msra.mxu0 %v4500
        %4545 = vmatprep.subr.bf16.mxu0 0
        %4546 = vmatpush1.bf16.msra.mxu0 %v4501
        %4547 = vmatprep.subr.bf16.mxu0 0
        %4548 = vmatpush1.bf16.msra.mxu0 %v4502
        %4549 = vmatprep.subr.bf16.mxu0 0
        %4550 = vmatpush1.bf16.msra.mxu0 %v4503
        %4551 = vmatprep.subr.bf16.mxu0 0
        %4552 = vmatpush1.bf16.msra.mxu0 %v4504
        %4553 = vmatprep.mubr.bf16.mxu0 %v4416
        %4554 = vmatmul.mubr.bf16.gmra.mrb[0].mxu0 %v4413
        %v4555 = vpop.f32.mrb[0].mxu0
        %v4556 = vadd.f32 0.0, %v4555
        %v4557 = vpop.f32.mrb[0].mxu0
        %v4558 = vpop.f32.mrb[0].mxu0
        %v4559 = vadd.f32 0.0, %v4558
        %v4560 = vpop.f32.mrb[0].mxu0
        %4561 = vmatprep.mubr.bf16.mxu0 %v4420
        %4562 = vmatmul.mubr.bf16.gmra.mrb[0].mxu0 %v4418
        %v4563 = vpop.f32.mrb[0].mxu0
        %v4564 = vadd.f32 0.0, %v4563
        %v4565 = vpop.f32.mrb[0].mxu0
        %v4566 = vpop.f32.mrb[0].mxu0
        %v4567 = vadd.f32 0.0, %v4566
        %v4568 = vpop.f32.mrb[0].mxu0
        %4569 = vdwg.mxu0
        %v4570 = vadd.f32 %v4358, %v4556
        %v4571 = vadd.f32 %v4361, %v4559
        %v4572 = vadd.f32 %v4366, %v4564
        %v4573 = vadd.f32 %v4369, %v4567
        %v4574 = vld [vmem:[#allocation17] sm:$0x1]
        %v4576 = vlaneseq
        %v4577 = vshrl.u32 %v4576, 7
        %v4578 = vsub.s32 0, %v4577
        %v4579 = vrot.slane %v4574, %v4578
        %v4581 = vadd.f32 %v4570, %v4579
        %v4582 = vadd.f32 %v4571, %v4579
        %v4583 = vadd.f32 %v4572, %v4579
        %v4584 = vadd.f32 %v4573, %v4579
        %s4585 = sld [smem:[#allocation18 + $0x1]]
        %vm4586 = vcmp.ge.f32.partialorder %v4581, 0.0
        %vm4587 = vcmp.ge.f32.partialorder %v4582, 0.0
        %vm4588 = vcmp.ge.f32.partialorder %v4583, 0.0
        %vm4589 = vcmp.ge.f32.partialorder %v4584, 0.0
        %v4590 = vstv %s4585
        %v4591 = vmul.f32 %v4590, %v4581
        %v4592 = vmul.f32 %v4590, %v4582
        %v4593 = vmul.f32 %v4590, %v4583
        %v4594 = vmul.f32 %v4590, %v4584
        %v4595 = vsel %vm4586, %v4581, %v4591
        %v4596 = vsel %vm4587, %v4582, %v4592
        %v4597 = vsel %vm4588, %v4583, %v4593
        %v4598 = vsel %vm4589, %v4584, %v4594
        %4599 = vst.msk [vmem:[%s443] sm:$0xff] %vm3464, %v4595
        %4600 = vst.msk [vmem:[%s443 + $0x8] sm:$0xff] %vm3464, %v4596
        %4601 = vst.msk [vmem:[%s443 + $0x10] sm:$0xff] %vm3464, %v4597
        %4602 = vst.msk [vmem:[%s443 + $0x18] sm:$0xff] %vm3464, %v4598
        %s4603 = sand.u32 %s217, 1
        %s4604 = scalar_lea.sflag [#allocation7], %s4603
        %s4605 = sand.u32 %s217, 1
        %s4606 = smul.addr %s4605, 32
        %s4607 = scalar_lea.vmem [#allocation19], %s4606
        // Predicated region
        $region85: #{_lambda_.5} parent=51 // pred_check
          %p4608 = pneg %p227
        $region86: #{_lambda_.5} parent=51 // pred_check_branch
          %4610 = sbr.rel (%p4608) target = $region88
        $region87: #{_lambda_.5} parent=51 // pred_region
          %s4612 = ssub.s32 512, 512
          %4613 = vsyncadd %s4604, %s4612
          %s4614 = smul.addr %s31, 4
          %s4615 = smul.addr %s4614, 128
          %s4616 = scalar_lea.hbm %s8, %s4615
          %s4617 = sshll.u32 %s4607, 4
          %s4618 = int_to_ptr.vmem [resolvable:$true] %s4617
          %4623 = dma.vmem_to_hbm [thread:$0]  %s4618, 512, %s4616, %s4604, 128, 128, 8
        $region88: #{_lambda_.5} parent=51 // pred_fallthru
          _
      $region52: #{_lambda_.5} parent=5 // pred_fallthru
        _
      %p4624 = scmp.le.s32.totalorder 2, %s26
      // Predicated region
      $region89: #{_lambda_.5} parent=5 // pred_check
        %p4625 = pneg %p4624
      $region90: #{_lambda_.5} parent=5 // pred_check_branch
        %4627 = sbr.rel (%p4625) target = $region92
      $region91: #{_lambda_.5} parent=5 // pred_region
        %s4628 = ssub.s32 %s26, 2
        // Predicated region
        $region93: #{_lambda_.5} parent=91 // pred_check
          %p4629 = pneg %p233
        $region94: #{_lambda_.5} parent=91 // pred_check_branch
          %4631 = sbr.rel (%p4629) target = $region96
        $region95: #{_lambda_.5} parent=91 // pred_region
          %s4632 = sand.u32 %s218, 1
          %s4633 = scalar_lea.sflag [#allocation7], %s4632
          %s4634 = sand.u32 %s218, 1
          %s4635 = smul.addr %s4634, 32
          %s4636 = scalar_lea.vmem [#allocation19], %s4635
          %4637 = dma.done %s4633, 512
        $region96: #{_lambda_.5} parent=91 // pred_fallthru
          _
      $region92: #{_lambda_.5} parent=5 // pred_fallthru
        _
    $region6: #{_lambda_.5} parent=1 // loop_footer
      %s30 = sadd.s32 1, %s26
    $region7: #{_lambda_.5} parent=1 // loop_footer_branch
      %25 = sbr.rel target = $region3
    $region8: #{_lambda_.5} parent=1 // loop_exit
      _
    %4638 = vsyncpa [#allocation6], 1
    %s4639 = scalar_lea.sflag [#allocation6], 1
    %4640 = vsyncpa %s4639, 1
    %4641 = vsyncpa [#allocation10], 1
    %s4642 = scalar_lea.sflag [#allocation10], 1
    %4643 = vsyncpa %s4642, 1
    %4644 = vsyncpa [#allocation13], 1
    %4645 = vsyncpa [#allocation16], 1
    %4646 = vsyncpa [#allocation7], 1
    %s4647 = scalar_lea.sflag [#allocation7], 1
    %4648 = vsyncpa %s4647, 1
    %4649 = vsyncpa [#allocation8], 1
    %s4650 = scalar_lea.sflag [#allocation8], 1
    %4651 = vsyncpa %s4650, 1

</llo_original>
